<compile_context>
chip_gen: v6e
topology: v6e:2x2x1
jax: 0.10.0
libtpu: 0.0.40
codegen_flags: <defaults>
</compile_context>

<pallas_src>
import functools

import jax
import jax.numpy as jnp
from jax.experimental import pallas as pl
from jax.experimental.pallas import tpu as pltpu

NEG_INF = -1e30


def _round_up(x, m):
    return (x + m - 1) // m * m


def _edge_compute_dtype():
    """bf16 edge math only where the VPU/EUP support it natively (v6e / v7x)."""
    try:
        kind = jax.devices()[0].device_kind.lower()
    except Exception:
        return jnp.float32
    return jnp.bfloat16 if ("v6" in kind or "v7" in kind) else jnp.float32


def _vmem_limit_bytes(P, TM, Din, HF, H, cbytes):
    """Right-sized scoped-VMEM request (review: don't ask for 64 MiB on v7x)."""
    resident = 4 * (2 * P * Din + Din * HF + 2 * H * Din + HF)      # x, x_t, W, Bl, Br, bias
    pipelined = 2 * (TM * P * 1 + TM * HF * 4)                      # int8 adj + f32 out (double-buffered)
    scratch = P * HF * cbytes + 8 * P * 4 + P * 128 * 4             # feat, el_t, er (lane-padded)
    temps = 8 * TM * P * 4                                          # per-head (TM, P) edge temporaries
    est = 2 * (resident + pipelined + scratch + temps)              # 2x margin for compiler scratch
    return int(min(48 * 1024 * 1024, max(16 * 1024 * 1024, est)))


def _gat_kernel(x_ref, xt_ref, w_ref, bl_ref, br_ref, bias_ref, adj_ref, ag_ref,
                out_ref, feat_scr, elt_scr, er_scr, *, compute_dtype):
    H, P = elt_scr.shape
    HF = feat_scr.shape[1]
    F = HF // H
    TM = adj_ref.shape[0]
    cdt = compute_dtype

    # ---- one-shot projection into persistent VMEM scratch (single launch, no
    #      inter-stage HBM traffic, single-buffered residency) -----------------
    @pl.when(pl.program_id(0) == 0)
    def _():
        feat32 = jnp.dot(x_ref[...], w_ref[...], preferred_element_type=jnp.float32)
        feat_scr[...] = feat32.astype(cdt)                       # (P, H*F)
        er_scr[...] = jnp.dot(x_ref[...], br_ref[...],           # (P, H) dst scores
                              preferred_element_type=jnp.float32)
        elt_scr[...] = jnp.dot(bl_ref[...], xt_ref[...],         # (H, P) src scores (already transposed)
                               preferred_element_type=jnp.float32)

    i = pl.program_id(0)
    row0 = pl.multiple_of(i * TM, TM)

    a_gat = ag_ref[0]                                            # GATConv PReLU slope (SMEM scalar)

    adj_c = adj_ref[...].astype(jnp.float32).astype(cdt)         # (TM, P) in {0,1}
    neg_mask = (1.0 - adj_c) * NEG_INF                           # hoisted: 0 on edges, -1e30 off
    er_tile = er_scr[pl.ds(row0, TM), :].astype(cdt)             # (TM, H)
    el_all = elt_scr[...].astype(cdt)                            # (H, P)
    feat_all = feat_scr[...]                                     # (P, H*F), cdt

    outs = []
    # TODO(synk): for larger H / N convert this static loop to lax.fori_loop
    #             (bounded per-head live ranges) and add a flash-style src axis.
    for h in range(H):                                           # static unroll, H=4
        e = er_tile[:, h:h + 1] + el_all[h:h + 1, :]             # (TM, P) broadcast add
        e = jnp.where(e >= 0, e, 0.2 * e)                        # leaky_relu(0.2)
        e = e + neg_mask                                         # single mask pass
        m = jnp.max(e, axis=1, keepdims=True)
        p = jnp.exp(e - m) * adj_c                               # masked exp
        s = jnp.sum(p.astype(jnp.float32), axis=1, keepdims=True)        # f32 accumulation
        inv = pl.reciprocal(jnp.maximum(s, 1e-30), approx=True)          # EUP, f32
        inv = jnp.where(s > 0.0, inv, 0.0)                       # zero in-degree -> alpha = 0
        alpha = p * inv.astype(cdt)                              # (TM, P), cdt
        rst = jnp.dot(alpha, feat_all[:, h * F:(h + 1) * F],     # MXU aggregate, f32 acc
                      preferred_element_type=jnp.float32)        # (TM, F)
        outs.append(rst)

    rst_all = jnp.concatenate(outs, axis=1) + bias_ref[...]      # (TM, H*F): lane-dense store
    out_ref[...] = jnp.where(rst_all >= 0, rst_all, a_gat * rst_all)     # GATConv PReLU


def graph_attention_forward(x, adj, params, num_dis, num_drug, compute_dtype=None):
    """x: (N, Din) concat of [disease; drug] features; adj[dst, src] in {0,1}.
    Returns (dis_out, drug_out)."""
    if compute_dtype is None:
        compute_dtype = _edge_compute_dtype()

    N, Din = x.shape
    H, F = params["attn_l"].shape
    HF = H * F

    P = _round_up(N, 128)              # pad node axis -> lane-dense adj/e tiles
    TM = 128                           # dst-row tile (multiple of 8, divides P)
    grid_rows = P // TM

    x_p = jnp.zeros((P, Din), jnp.float32).at[:N].set(x.astype(jnp.float32))
    adj_p = jnp.zeros((P, P), jnp.int8).at[:N, :N].set(adj.astype(jnp.int8))

    # Fold attention vectors through the fc weight so el/er come from single
    # matmuls, with the src-side scores produced already transposed (H, P).
    W = params["W"].astype(jnp.float32)                              # (Din, H*F)
    Wr = W.reshape(Din, H, F)
    Bl = jnp.einsum("hf,dhf->hd", params["attn_l"].astype(jnp.float32), Wr)   # (H, Din)
    Br = jnp.einsum("hf,dhf->dh", params["attn_r"].astype(jnp.float32), Wr)   # (Din, H)
    bias_flat = params["bias"].reshape(1, HF).astype(jnp.float32)

    cbytes = jnp.dtype(compute_dtype).itemsize
    vmem_limit = _vmem_limit_bytes(P, TM, Din, HF, H, cbytes)

    out_heads = pl.pallas_call(
        functools.partial(_gat_kernel, compute_dtype=compute_dtype),
        out_shape=jax.ShapeDtypeStruct((P, HF), jnp.float32),
        grid=(grid_rows,),
        in_specs=[
            pl.BlockSpec((P, Din), lambda i: (0, 0)),     # x      (resident, read at step 0)
            pl.BlockSpec((Din, P), lambda i: (0, 0)),     # x^T    (resident, read at step 0)
            pl.BlockSpec((Din, HF), lambda i: (0, 0)),    # W
            pl.BlockSpec((H, Din), lambda i: (0, 0)),     # Bl (folded attn_l)
            pl.BlockSpec((Din, H), lambda i: (0, 0)),     # Br (folded attn_r)
            pl.BlockSpec((1, HF), lambda i: (0, 0)),      # bias (flattened)
            pl.BlockSpec((TM, P), lambda i: (i, 0)),      # adjacency tile, int8
            pl.BlockSpec(memory_space=pltpu.MemorySpace.SMEM),   # prelu_gat scalar
        ],
        out_specs=pl.BlockSpec((TM, HF), lambda i: (i, 0)),
        scratch_shapes=[
            pltpu.VMEM((P, HF), compute_dtype),           # feat (persistent across tiles)
            pltpu.VMEM((H, P), jnp.float32),              # el^T
            pltpu.VMEM((P, H), jnp.float32),              # er
        ],
        compiler_params=pltpu.CompilerParams(
            # "arbitrary": the step-0 projection into scratch requires sequential
            # grid execution; see TODO above re: CORE_PARALLEL on v7x.
            dimension_semantics=("arbitrary",),
            vmem_limit_bytes=vmem_limit),
    )(x_p, x_p.T, W, Bl, Br, bias_flat, adj_p, params["prelu_gat"].reshape(1))

    # Head-mean + outer PReLU: tiny (N, H*F) XLA ops, keeps the kernel's stores
    # 64 lanes wide instead of 16.
    rst = out_heads[:N].reshape(N, H, F)
    mean = jnp.mean(rst, axis=1)
    a_out = params["prelu_out"].reshape(())
    out = jnp.where(mean >= 0, mean, a_out * mean)
    return out[:num_dis], out[num_dis:num_dis + num_drug]


def _reference(x, adj, params):
    """Pure-JAX reference of the same forward semantics (exact f32 math)."""
    H, F = params["attn_l"].shape
    N = x.shape[0]
    a_gat = params["prelu_gat"].reshape(())
    a_out = params["prelu_out"].reshape(())
    feat = (x @ params["W"]).reshape(N, H, F)
    el = jnp.sum(feat * params["attn_l"][None], axis=-1)          # (N, H)
    er = jnp.sum(feat * params["attn_r"][None], axis=-1)          # (N, H)
    e = er[:, None, :] + el[None, :, :]                           # (dst, src, H)
    e = jnp.where(e >= 0, e, 0.2 * e)
    e = jnp.where(adj[..., None] > 0, e, NEG_INF)
    p = jnp.exp(e - jnp.max(e, axis=1, keepdims=True)) * adj[..., None]
    s = jnp.sum(p, axis=1, keepdims=True)
    alpha = jnp.where(s > 0, p / jnp.maximum(s, 1e-30), 0.0)
    rst = jnp.einsum("dsh,shf->dhf", alpha, feat) + params["bias"][None]
    rst = jnp.where(rst >= 0, rst, a_gat * rst)
    m = jnp.mean(rst, axis=1)
    return jnp.where(m >= 0, m, a_out * m)


if __name__ == "__main__":
    # Small, deterministic problem; N=300 -> padded to 384 -> 3 dst tiles of 128.
    num_dis, num_drug = 120, 180
    N = num_dis + num_drug
    in_feats, out_feats, num_heads = 32, 16, 4

    key = jax.random.PRNGKey(0)
    ks = jax.random.split(key, 8)

    x_dis = jax.random.normal(ks[0], (num_dis, in_feats), jnp.float32)
    x_drug = jax.random.normal(ks[1], (num_drug, in_feats), jnp.float32)
    x = jnp.concatenate([x_dis, x_drug], axis=0)      # cat of inputs.values()

    # Dense adjacency mask of the homogeneous graph, adj[dst, src] in {0,1}.
    adj = (jax.random.uniform(ks[2], (N, N)) < 0.1).astype(jnp.float32)
    # Force a couple of zero in-degree destinations (allow_zero_in_degree path).
    adj = adj.at[7, :].set(0.0).at[num_dis + 11, :].set(0.0)

    scale = 1.0 / jnp.sqrt(jnp.float32(in_feats))
    params = {
        "W": jax.random.normal(ks[3], (in_feats, num_heads * out_feats),
                               jnp.float32) * scale,              # fc weight (transposed)
        "attn_l": jax.random.normal(ks[4], (num_heads, out_feats), jnp.float32) * 0.1,
        "attn_r": jax.random.normal(ks[5], (num_heads, out_feats), jnp.float32) * 0.1,
        "bias": jax.random.normal(ks[6], (num_heads, out_feats), jnp.float32) * 0.01,
        "prelu_gat": jnp.full((1,), 0.25, jnp.float32),           # GATConv PReLU init
        "prelu_out": jnp.full((1,), 0.25, jnp.float32),           # outer PReLU init
    }

    cdt = _edge_compute_dtype()
    dis_out, drug_out = graph_attention_forward(x, adj, params, num_dis, num_drug,
                                                compute_dtype=cdt)
    jax.block_until_ready((dis_out, drug_out))

    ref = _reference(x, adj, params)
    tol = 1e-2 if cdt == jnp.bfloat16 else 2e-3      # bf16 edge math on v6e/v7x only
    assert dis_out.shape == (num_dis, out_feats)
    assert drug_out.shape == (num_drug, out_feats)
    assert jnp.allclose(dis_out, ref[:num_dis], rtol=tol, atol=tol)
    assert jnp.allclose(drug_out, ref[num_dis:N], rtol=tol, atol=tol)
    print("KERNEL_OK")
</pallas_src>

<mosaic_0001>
module attributes {stable_mosaic.version = 11 : i64} {
  func.func @_gat_kernel(%arg0: i32, %arg1: memref<384x32xf32, #tpu.memory_space<vmem>>, %arg2: memref<32x384xf32, #tpu.memory_space<vmem>>, %arg3: memref<32x64xf32, #tpu.memory_space<vmem>>, %arg4: memref<4x32xf32, #tpu.memory_space<vmem>>, %arg5: memref<32x4xf32, #tpu.memory_space<vmem>>, %arg6: memref<1x64xf32, #tpu.memory_space<vmem>>, %arg7: memref<128x384xi8, #tpu.memory_space<vmem>>, %arg8: memref<1xf32, #tpu.memory_space<smem>>, %arg9: memref<128x64xf32, #tpu.memory_space<vmem>>, %arg10: memref<384x64xf32, #tpu.memory_space<vmem>>, %arg11: memref<4x384xf32, #tpu.memory_space<vmem>>, %arg12: memref<384x4xf32, #tpu.memory_space<vmem>>) attributes {dimension_semantics = [#tpu.dimension_semantics<arbitrary>], iteration_bounds = array<i64: 3>, scalar_prefetch = 0 : i64, scratch_operands = 3 : i64, tpu.core_type = #tpu.core_type<tc>, window_params = [{pipeline_mode = #tpu.pipeline_mode<synchronous>, transform_indices = @transform_0, window_bounds = array<i64: 384, 32>}, {pipeline_mode = #tpu.pipeline_mode<synchronous>, transform_indices = @transform_1, window_bounds = array<i64: 32, 384>}, {pipeline_mode = #tpu.pipeline_mode<synchronous>, transform_indices = @transform_2, window_bounds = array<i64: 32, 64>}, {pipeline_mode = #tpu.pipeline_mode<synchronous>, transform_indices = @transform_3, window_bounds = array<i64: 4, 32>}, {pipeline_mode = #tpu.pipeline_mode<synchronous>, transform_indices = @transform_4, window_bounds = array<i64: 32, 4>}, {pipeline_mode = #tpu.pipeline_mode<synchronous>, transform_indices = @transform_5, window_bounds = array<i64: 1, 64>}, {transform_indices = @transform_6, window_bounds = array<i64: 128, 384>}, {transform_indices = @transform_7, window_bounds = array<i64: 1>}, {transform_indices = @transform_8, window_bounds = array<i64: 128, 64>}]} {
    %c0_i32 = arith.constant 0 : i32
    %0 = arith.cmpi eq, %arg0, %c0_i32 : i32
    %1 = arith.extui %0 : i1 to i32
    %c0_i32_0 = arith.constant 0 : i32
    %2 = arith.cmpi ne, %1, %c0_i32_0 : i32
    scf.if %2 {
      %c0_46 = arith.constant 0 : index
      %c0_47 = arith.constant 0 : index
      %146 = vector.load %arg1[%c0_46, %c0_47] : memref<384x32xf32, #tpu.memory_space<vmem>>, vector<384x32xf32>
      %c0_48 = arith.constant 0 : index
      %c0_49 = arith.constant 0 : index
      %147 = vector.load %arg3[%c0_48, %c0_49] : memref<32x64xf32, #tpu.memory_space<vmem>>, vector<32x64xf32>
      %cst_50 = arith.constant dense<0.000000e+00> : vector<384x64xf32>
      %148 = tpu.matmul %146, %147, %cst_50 {dimension_numbers = #tpu.dot_dimension_numbers<[1], [0], [0], [1], [0, 0, 1, 1], [], []>} : vector<384x32xf32>, vector<32x64xf32>, vector<384x64xf32> -> vector<384x64xf32>
      %c0_51 = arith.constant 0 : index
      %c0_52 = arith.constant 0 : index
      %149 = vector.load %arg10[%c0_51, %c0_52] : memref<384x64xf32, #tpu.memory_space<vmem>>, vector<384x64xf32>
      tpu.vector_store %arg10[%c0_51, %c0_52], %148 {strides = array<i32>} : memref<384x64xf32, #tpu.memory_space<vmem>>, vector<384x64xf32>,
      %c0_53 = arith.constant 0 : index
      %c0_54 = arith.constant 0 : index
      %150 = vector.load %arg1[%c0_53, %c0_54] : memref<384x32xf32, #tpu.memory_space<vmem>>, vector<384x32xf32>
      %c0_55 = arith.constant 0 : index
      %c0_56 = arith.constant 0 : index
      %151 = vector.load %arg5[%c0_55, %c0_56] : memref<32x4xf32, #tpu.memory_space<vmem>>, vector<32x4xf32>
      %cst_57 = arith.constant dense<0.000000e+00> : vector<384x4xf32>
      %152 = tpu.matmul %150, %151, %cst_57 {dimension_numbers = #tpu.dot_dimension_numbers<[1], [0], [0], [1], [0, 0, 1, 1], [], []>} : vector<384x32xf32>, vector<32x4xf32>, vector<384x4xf32> -> vector<384x4xf32>
      %c0_58 = arith.constant 0 : index
      %c0_59 = arith.constant 0 : index
      %153 = vector.load %arg12[%c0_58, %c0_59] : memref<384x4xf32, #tpu.memory_space<vmem>>, vector<384x4xf32>
      tpu.vector_store %arg12[%c0_58, %c0_59], %152 {strides = array<i32>} : memref<384x4xf32, #tpu.memory_space<vmem>>, vector<384x4xf32>,
      %c0_60 = arith.constant 0 : index
      %c0_61 = arith.constant 0 : index
      %154 = vector.load %arg4[%c0_60, %c0_61] : memref<4x32xf32, #tpu.memory_space<vmem>>, vector<4x32xf32>
      %c0_62 = arith.constant 0 : index
      %c0_63 = arith.constant 0 : index
      %155 = vector.load %arg2[%c0_62, %c0_63] : memref<32x384xf32, #tpu.memory_space<vmem>>, vector<32x384xf32>
      %cst_64 = arith.constant dense<0.000000e+00> : vector<4x384xf32>
      %156 = tpu.matmul %154, %155, %cst_64 {dimension_numbers = #tpu.dot_dimension_numbers<[1], [0], [0], [1], [0, 0, 1, 1], [], []>} : vector<4x32xf32>, vector<32x384xf32>, vector<4x384xf32> -> vector<4x384xf32>
      %c0_65 = arith.constant 0 : index
      %c0_66 = arith.constant 0 : index
      %157 = vector.load %arg11[%c0_65, %c0_66] : memref<4x384xf32, #tpu.memory_space<vmem>>, vector<4x384xf32>
      tpu.vector_store %arg11[%c0_65, %c0_66], %156 {strides = array<i32>} : memref<4x384xf32, #tpu.memory_space<vmem>>, vector<4x384xf32>,
    } else {
    }
    %c128_i32 = arith.constant 128 : i32
    %3 = arith.muli %arg0, %c128_i32 : i32
    %4 = tpu.assume_multiple %3, 128 : i32
    %c0 = arith.constant 0 : index
    %5 = memref.load %arg8[%c0] : memref<1xf32, #tpu.memory_space<smem>>
    %c0_1 = arith.constant 0 : index
    %c0_2 = arith.constant 0 : index
    %6 = vector.load %arg7[%c0_1, %c0_2] : memref<128x384xi8, #tpu.memory_space<vmem>>, vector<128x384xi8>
    %7 = arith.sitofp %6 : vector<128x384xi8> to vector<128x384xf32>
    %cst = arith.constant 1.000000e+00 : f32
    %8 = vector.broadcast %cst : f32 to vector<128x384xf32>
    %9 = arith.subf %8, %7 : vector<128x384xf32>
    %cst_3 = arith.constant -1.000000e+30 : f32
    %10 = vector.broadcast %cst_3 : f32 to vector<128x384xf32>
    %11 = arith.mulf %9, %10 : vector<128x384xf32>
    %12 = arith.index_cast %4 : i32 to index
    %c0_4 = arith.constant 0 : index
    %13 = vector.load %arg12[%12, %c0_4] : memref<384x4xf32, #tpu.memory_space<vmem>>, vector<128x4xf32>
    %c0_5 = arith.constant 0 : index
    %c0_6 = arith.constant 0 : index
    %14 = vector.load %arg11[%c0_5, %c0_6] : memref<4x384xf32, #tpu.memory_space<vmem>>, vector<4x384xf32>
    %c0_7 = arith.constant 0 : index
    %c0_8 = arith.constant 0 : index
    %15 = vector.load %arg10[%c0_7, %c0_8] : memref<384x64xf32, #tpu.memory_space<vmem>>, vector<384x64xf32>
    %16 = vector.extract_strided_slice %13 {offsets = [0, 0], sizes = [128, 1], strides = [1, 1]} : vector<128x4xf32> to vector<128x1xf32>
    %17 = vector.extract_strided_slice %14 {offsets = [0, 0], sizes = [1, 384], strides = [1, 1]} : vector<4x384xf32> to vector<1x384xf32>
    %18 = vector.broadcast %16 : vector<128x1xf32> to vector<128x384xf32>
    %19 = vector.broadcast %17 : vector<1x384xf32> to vector<128x384xf32>
    %20 = arith.addf %18, %19 : vector<128x384xf32>
    %cst_9 = arith.constant 0.000000e+00 : f32
    %21 = vector.broadcast %cst_9 : f32 to vector<128x384xf32>
    %22 = arith.cmpf oge, %20, %21 : vector<128x384xf32>
    %cst_10 = arith.constant 2.000000e-01 : f32
    %23 = vector.broadcast %cst_10 : f32 to vector<128x384xf32>
    %24 = arith.mulf %23, %20 : vector<128x384xf32>
    %25 = arith.select %22, %20, %24 : vector<128x384xi1>, vector<128x384xf32>
    %26 = arith.addf %25, %11 : vector<128x384xf32>
    %cst_11 = arith.constant dense<0xFF800000> : vector<128xf32>
    %27 = vector.multi_reduction <maximumf>, %26, %cst_11 [1] : vector<128x384xf32> to vector<128xf32>
    %28 = vector.shape_cast %27 : vector<128xf32> to vector<128x1xf32>
    %29 = vector.broadcast %28 : vector<128x1xf32> to vector<128x384xf32>
    %30 = arith.subf %26, %29 : vector<128x384xf32>
    %31 = math.exp %30 : vector<128x384xf32>
    %32 = arith.mulf %31, %7 : vector<128x384xf32>
    %cst_12 = arith.constant dense<0.000000e+00> : vector<128xf32>
    %33 = vector.multi_reduction <add>, %32, %cst_12 [1] : vector<128x384xf32> to vector<128xf32>
    %34 = vector.shape_cast %33 : vector<128xf32> to vector<128x1xf32>
    %cst_13 = arith.constant 1.000000e-30 : f32
    %35 = vector.broadcast %cst_13 : f32 to vector<128x1xf32>
    %36 = arith.maximumf %34, %35 : vector<128x1xf32>
    %37 = tpu.reciprocal %36 {approx = true} : vector<128x1xf32> -> vector<128x1xf32>
    %cst_14 = arith.constant 0.000000e+00 : f32
    %38 = vector.broadcast %cst_14 : f32 to vector<128x1xf32>
    %39 = arith.cmpf ogt, %34, %38 : vector<128x1xf32>
    %cst_15 = arith.constant 0.000000e+00 : f32
    %40 = vector.broadcast %cst_15 : f32 to vector<128x1xf32>
    %41 = arith.select %39, %37, %40 : vector<128x1xi1>, vector<128x1xf32>
    %42 = vector.broadcast %41 : vector<128x1xf32> to vector<128x384xf32>
    %43 = arith.mulf %32, %42 : vector<128x384xf32>
    %44 = vector.extract_strided_slice %15 {offsets = [0, 0], sizes = [384, 16], strides = [1, 1]} : vector<384x64xf32> to vector<384x16xf32>
    %cst_16 = arith.constant dense<0.000000e+00> : vector<128x16xf32>
    %45 = tpu.matmul %43, %44, %cst_16 {dimension_numbers = #tpu.dot_dimension_numbers<[1], [0], [0], [1], [0, 0, 1, 1], [], []>} : vector<128x384xf32>, vector<384x16xf32>, vector<128x16xf32> -> vector<128x16xf32>
    %46 = vector.extract_strided_slice %13 {offsets = [0, 1], sizes = [128, 1], strides = [1, 1]} : vector<128x4xf32> to vector<128x1xf32>
    %47 = vector.extract_strided_slice %14 {offsets = [1, 0], sizes = [1, 384], strides = [1, 1]} : vector<4x384xf32> to vector<1x384xf32>
    %48 = vector.broadcast %46 : vector<128x1xf32> to vector<128x384xf32>
    %49 = vector.broadcast %47 : vector<1x384xf32> to vector<128x384xf32>
    %50 = arith.addf %48, %49 : vector<128x384xf32>
    %cst_17 = arith.constant 0.000000e+00 : f32
    %51 = vector.broadcast %cst_17 : f32 to vector<128x384xf32>
    %52 = arith.cmpf oge, %50, %51 : vector<128x384xf32>
    %cst_18 = arith.constant 2.000000e-01 : f32
    %53 = vector.broadcast %cst_18 : f32 to vector<128x384xf32>
    %54 = arith.mulf %53, %50 : vector<128x384xf32>
    %55 = arith.select %52, %50, %54 : vector<128x384xi1>, vector<128x384xf32>
    %56 = arith.addf %55, %11 : vector<128x384xf32>
    %cst_19 = arith.constant dense<0xFF800000> : vector<128xf32>
    %57 = vector.multi_reduction <maximumf>, %56, %cst_19 [1] : vector<128x384xf32> to vector<128xf32>
    %58 = vector.shape_cast %57 : vector<128xf32> to vector<128x1xf32>
    %59 = vector.broadcast %58 : vector<128x1xf32> to vector<128x384xf32>
    %60 = arith.subf %56, %59 : vector<128x384xf32>
    %61 = math.exp %60 : vector<128x384xf32>
    %62 = arith.mulf %61, %7 : vector<128x384xf32>
    %cst_20 = arith.constant dense<0.000000e+00> : vector<128xf32>
    %63 = vector.multi_reduction <add>, %62, %cst_20 [1] : vector<128x384xf32> to vector<128xf32>
    %64 = vector.shape_cast %63 : vector<128xf32> to vector<128x1xf32>
    %cst_21 = arith.constant 1.000000e-30 : f32
    %65 = vector.broadcast %cst_21 : f32 to vector<128x1xf32>
    %66 = arith.maximumf %64, %65 : vector<128x1xf32>
    %67 = tpu.reciprocal %66 {approx = true} : vector<128x1xf32> -> vector<128x1xf32>
    %cst_22 = arith.constant 0.000000e+00 : f32
    %68 = vector.broadcast %cst_22 : f32 to vector<128x1xf32>
    %69 = arith.cmpf ogt, %64, %68 : vector<128x1xf32>
    %cst_23 = arith.constant 0.000000e+00 : f32
    %70 = vector.broadcast %cst_23 : f32 to vector<128x1xf32>
    %71 = arith.select %69, %67, %70 : vector<128x1xi1>, vector<128x1xf32>
    %72 = vector.broadcast %71 : vector<128x1xf32> to vector<128x384xf32>
    %73 = arith.mulf %62, %72 : vector<128x384xf32>
    %74 = vector.extract_strided_slice %15 {offsets = [0, 16], sizes = [384, 16], strides = [1, 1]} : vector<384x64xf32> to vector<384x16xf32>
    %cst_24 = arith.constant dense<0.000000e+00> : vector<128x16xf32>
    %75 = tpu.matmul %73, %74, %cst_24 {dimension_numbers = #tpu.dot_dimension_numbers<[1], [0], [0], [1], [0, 0, 1, 1], [], []>} : vector<128x384xf32>, vector<384x16xf32>, vector<128x16xf32> -> vector<128x16xf32>
    %76 = vector.extract_strided_slice %13 {offsets = [0, 2], sizes = [128, 1], strides = [1, 1]} : vector<128x4xf32> to vector<128x1xf32>
    %77 = vector.extract_strided_slice %14 {offsets = [2, 0], sizes = [1, 384], strides = [1, 1]} : vector<4x384xf32> to vector<1x384xf32>
    %78 = vector.broadcast %76 : vector<128x1xf32> to vector<128x384xf32>
    %79 = vector.broadcast %77 : vector<1x384xf32> to vector<128x384xf32>
    %80 = arith.addf %78, %79 : vector<128x384xf32>
    %cst_25 = arith.constant 0.000000e+00 : f32
    %81 = vector.broadcast %cst_25 : f32 to vector<128x384xf32>
    %82 = arith.cmpf oge, %80, %81 : vector<128x384xf32>
    %cst_26 = arith.constant 2.000000e-01 : f32
    %83 = vector.broadcast %cst_26 : f32 to vector<128x384xf32>
    %84 = arith.mulf %83, %80 : vector<128x384xf32>
    %85 = arith.select %82, %80, %84 : vector<128x384xi1>, vector<128x384xf32>
    %86 = arith.addf %85, %11 : vector<128x384xf32>
    %cst_27 = arith.constant dense<0xFF800000> : vector<128xf32>
    %87 = vector.multi_reduction <maximumf>, %86, %cst_27 [1] : vector<128x384xf32> to vector<128xf32>
    %88 = vector.shape_cast %87 : vector<128xf32> to vector<128x1xf32>
    %89 = vector.broadcast %88 : vector<128x1xf32> to vector<128x384xf32>
    %90 = arith.subf %86, %89 : vector<128x384xf32>
    %91 = math.exp %90 : vector<128x384xf32>
    %92 = arith.mulf %91, %7 : vector<128x384xf32>
    %cst_28 = arith.constant dense<0.000000e+00> : vector<128xf32>
    %93 = vector.multi_reduction <add>, %92, %cst_28 [1] : vector<128x384xf32> to vector<128xf32>
    %94 = vector.shape_cast %93 : vector<128xf32> to vector<128x1xf32>
    %cst_29 = arith.constant 1.000000e-30 : f32
    %95 = vector.broadcast %cst_29 : f32 to vector<128x1xf32>
    %96 = arith.maximumf %94, %95 : vector<128x1xf32>
    %97 = tpu.reciprocal %96 {approx = true} : vector<128x1xf32> -> vector<128x1xf32>
    %cst_30 = arith.constant 0.000000e+00 : f32
    %98 = vector.broadcast %cst_30 : f32 to vector<128x1xf32>
    %99 = arith.cmpf ogt, %94, %98 : vector<128x1xf32>
    %cst_31 = arith.constant 0.000000e+00 : f32
    %100 = vector.broadcast %cst_31 : f32 to vector<128x1xf32>
    %101 = arith.select %99, %97, %100 : vector<128x1xi1>, vector<128x1xf32>
    %102 = vector.broadcast %101 : vector<128x1xf32> to vector<128x384xf32>
    %103 = arith.mulf %92, %102 : vector<128x384xf32>
    %104 = vector.extract_strided_slice %15 {offsets = [0, 32], sizes = [384, 16], strides = [1, 1]} : vector<384x64xf32> to vector<384x16xf32>
    %cst_32 = arith.constant dense<0.000000e+00> : vector<128x16xf32>
    %105 = tpu.matmul %103, %104, %cst_32 {dimension_numbers = #tpu.dot_dimension_numbers<[1], [0], [0], [1], [0, 0, 1, 1], [], []>} : vector<128x384xf32>, vector<384x16xf32>, vector<128x16xf32> -> vector<128x16xf32>
    %106 = vector.extract_strided_slice %13 {offsets = [0, 3], sizes = [128, 1], strides = [1, 1]} : vector<128x4xf32> to vector<128x1xf32>
    %107 = vector.extract_strided_slice %14 {offsets = [3, 0], sizes = [1, 384], strides = [1, 1]} : vector<4x384xf32> to vector<1x384xf32>
    %108 = vector.broadcast %106 : vector<128x1xf32> to vector<128x384xf32>
    %109 = vector.broadcast %107 : vector<1x384xf32> to vector<128x384xf32>
    %110 = arith.addf %108, %109 : vector<128x384xf32>
    %cst_33 = arith.constant 0.000000e+00 : f32
    %111 = vector.broadcast %cst_33 : f32 to vector<128x384xf32>
    %112 = arith.cmpf oge, %110, %111 : vector<128x384xf32>
    %cst_34 = arith.constant 2.000000e-01 : f32
    %113 = vector.broadcast %cst_34 : f32 to vector<128x384xf32>
    %114 = arith.mulf %113, %110 : vector<128x384xf32>
    %115 = arith.select %112, %110, %114 : vector<128x384xi1>, vector<128x384xf32>
    %116 = arith.addf %115, %11 : vector<128x384xf32>
    %cst_35 = arith.constant dense<0xFF800000> : vector<128xf32>
    %117 = vector.multi_reduction <maximumf>, %116, %cst_35 [1] : vector<128x384xf32> to vector<128xf32>
    %118 = vector.shape_cast %117 : vector<128xf32> to vector<128x1xf32>
    %119 = vector.broadcast %118 : vector<128x1xf32> to vector<128x384xf32>
    %120 = arith.subf %116, %119 : vector<128x384xf32>
    %121 = math.exp %120 : vector<128x384xf32>
    %122 = arith.mulf %121, %7 : vector<128x384xf32>
    %cst_36 = arith.constant dense<0.000000e+00> : vector<128xf32>
    %123 = vector.multi_reduction <add>, %122, %cst_36 [1] : vector<128x384xf32> to vector<128xf32>
    %124 = vector.shape_cast %123 : vector<128xf32> to vector<128x1xf32>
    %cst_37 = arith.constant 1.000000e-30 : f32
    %125 = vector.broadcast %cst_37 : f32 to vector<128x1xf32>
    %126 = arith.maximumf %124, %125 : vector<128x1xf32>
    %127 = tpu.reciprocal %126 {approx = true} : vector<128x1xf32> -> vector<128x1xf32>
    %cst_38 = arith.constant 0.000000e+00 : f32
    %128 = vector.broadcast %cst_38 : f32 to vector<128x1xf32>
    %129 = arith.cmpf ogt, %124, %128 : vector<128x1xf32>
    %cst_39 = arith.constant 0.000000e+00 : f32
    %130 = vector.broadcast %cst_39 : f32 to vector<128x1xf32>
    %131 = arith.select %129, %127, %130 : vector<128x1xi1>, vector<128x1xf32>
    %132 = vector.broadcast %131 : vector<128x1xf32> to vector<128x384xf32>
    %133 = arith.mulf %122, %132 : vector<128x384xf32>
    %134 = vector.extract_strided_slice %15 {offsets = [0, 48], sizes = [384, 16], strides = [1, 1]} : vector<384x64xf32> to vector<384x16xf32>
    %cst_40 = arith.constant dense<0.000000e+00> : vector<128x16xf32>
    %135 = tpu.matmul %133, %134, %cst_40 {dimension_numbers = #tpu.dot_dimension_numbers<[1], [0], [0], [1], [0, 0, 1, 1], [], []>} : vector<128x384xf32>, vector<384x16xf32>, vector<128x16xf32> -> vector<128x16xf32>
    %136 = tpu.concatenate %45, %75, %105, %135 in 1 : vector<128x16xf32>, vector<128x16xf32>, vector<128x16xf32>, vector<128x16xf32> -> vector<128x64xf32>
    %c0_41 = arith.constant 0 : index
    %c0_42 = arith.constant 0 : index
    %137 = vector.load %arg6[%c0_41, %c0_42] : memref<1x64xf32, #tpu.memory_space<vmem>>, vector<1x64xf32>
    %138 = vector.broadcast %137 : vector<1x64xf32> to vector<128x64xf32>
    %139 = arith.addf %136, %138 : vector<128x64xf32>
    %cst_43 = arith.constant 0.000000e+00 : f32
    %140 = vector.broadcast %cst_43 : f32 to vector<128x64xf32>
    %141 = arith.cmpf oge, %139, %140 : vector<128x64xf32>
    %142 = vector.broadcast %5 : f32 to vector<128x64xf32>
    %143 = arith.mulf %142, %139 : vector<128x64xf32>
    %144 = arith.select %141, %139, %143 : vector<128x64xi1>, vector<128x64xf32>
    %c0_44 = arith.constant 0 : index
    %c0_45 = arith.constant 0 : index
    %145 = vector.load %arg9[%c0_44, %c0_45] : memref<128x64xf32, #tpu.memory_space<vmem>>, vector<128x64xf32>
    tpu.vector_store %arg9[%c0_44, %c0_45], %144 {strides = array<i32>} : memref<128x64xf32, #tpu.memory_space<vmem>>, vector<128x64xf32>,
    return
  }
  func.func @transform_0(%arg0: i32) -> (i32, i32) {
    %c0_i32 = arith.constant 0 : i32
    %c0_i32_0 = arith.constant 0 : i32
    %c0_i32_1 = arith.constant 0 : i32
    return %c0_i32, %c0_i32_0 : i32, i32
  }
  func.func @transform_1(%arg0: i32) -> (i32, i32) {
    %c0_i32 = arith.constant 0 : i32
    %c0_i32_0 = arith.constant 0 : i32
    %c0_i32_1 = arith.constant 0 : i32
    return %c0_i32, %c0_i32_0 : i32, i32
  }
  func.func @transform_2(%arg0: i32) -> (i32, i32) {
    %c0_i32 = arith.constant 0 : i32
    %c0_i32_0 = arith.constant 0 : i32
    %c0_i32_1 = arith.constant 0 : i32
    return %c0_i32, %c0_i32_0 : i32, i32
  }
  func.func @transform_3(%arg0: i32) -> (i32, i32) {
    %c0_i32 = arith.constant 0 : i32
    %c0_i32_0 = arith.constant 0 : i32
    %c0_i32_1 = arith.constant 0 : i32
    return %c0_i32, %c0_i32_0 : i32, i32
  }
  func.func @transform_4(%arg0: i32) -> (i32, i32) {
    %c0_i32 = arith.constant 0 : i32
    %c0_i32_0 = arith.constant 0 : i32
    %c0_i32_1 = arith.constant 0 : i32
    return %c0_i32, %c0_i32_0 : i32, i32
  }
  func.func @transform_5(%arg0: i32) -> (i32, i32) {
    %c0_i32 = arith.constant 0 : i32
    %c0_i32_0 = arith.constant 0 : i32
    %c0_i32_1 = arith.constant 0 : i32
    return %c0_i32, %c0_i32_0 : i32, i32
  }
  func.func @transform_6(%arg0: i32) -> (i32, i32) {
    %c0_i32 = arith.constant 0 : i32
    %c0_i32_0 = arith.constant 0 : i32
    return %arg0, %c0_i32 : i32, i32
  }
  func.func @transform_7(%arg0: i32) -> i32 {
    %c0_i32 = arith.constant 0 : i32
    %c0_i32_0 = arith.constant 0 : i32
    return %c0_i32 : i32
  }
  func.func @transform_8(%arg0: i32) -> (i32, i32) {
    %c0_i32 = arith.constant 0 : i32
    %c0_i32_0 = arith.constant 0 : i32
    return %arg0, %c0_i32 : i32, i32
  }
}

</mosaic_0001>

<llo_original>
// kernel: tpu_custom_call.1
$region0: #{tpu_custom_call.1}
  #allocation0 [shape = 'u32[]', space=smem, size = 0x4, offset = 0x4, fixed_abs, tag = 'smem constant byte address 0x4 - core index']
  #allocation1 [shape = 'u32[144,128]{1,0:T(1,128)}', space=vmem, size = 0x12000, scoped, tag = 'internal scratch']
  #allocation2 [shape = 'f32[384,64]{1,0:T(8,128)}', space=vmem, size = 0x30000, scoped, tag = 'scratch operand']
  #allocation3 [shape = 'f32[4,384]{1,0:T(4,128)}', space=vmem, size = 0x1800, scoped, tag = 'scratch operand']
  #allocation4 [shape = 'f32[384,4]{1,0:T(8,128)}', space=vmem, size = 0x30000, scoped, tag = 'scratch operand']
  #allocation5 [shape = 'f32[1]{0:T(128)S(6)}', space=smem, size = 0x200, scoped, tag = 'scoped memory for tpu_custom_call.1']
  %s0 = inlined_call_operand.vmem [shape: f32[384,32], index: 0, kind: input, shape index: {}]
  %s1 = inlined_call_operand.vmem [shape: f32[32,384], index: 1, kind: input, shape index: {}]
  %s2 = inlined_call_operand.vmem [shape: f32[32,64], index: 2, kind: input, shape index: {}]
  %s3 = inlined_call_operand.vmem [shape: f32[4,32], index: 3, kind: input, shape index: {}]
  %s4 = inlined_call_operand.vmem [shape: f32[32,4], index: 4, kind: input, shape index: {}]
  %s5 = inlined_call_operand.vmem [shape: f32[1,64], index: 5, kind: input, shape index: {}]
  %s6 = inlined_call_operand.vmem [shape: s8[384,384], index: 6, kind: input, shape index: {}]
  %s7 = inlined_call_operand.<no memory space> [shape: f32[1], index: 7, kind: input, shape index: {}]
  %s8 = inlined_call_operand.vmem [shape: f32[384,64], index: 8, kind: output, shape index: {}]
  %s9 = sld [smem:[#allocation0]]
  $region69: #{tpu_custom_call.1} parent=0
    _
  %s11 = ssub.s32 1, %s9
  %s12 = scalar_select 0, %s11, %s9
  %13 = sst [smem:[#allocation5]] %s7
  loop: start=0, step=1, limit=5
  $region2: #{tpu_custom_call.1} parent=0 // loop_pre_header
    _
  $region3: #{tpu_custom_call.1} parent=0 // loop_header
    %s15 = sphi 0, %s19
    %p16 = scmp.ge.s32.totalorder %s15, 5
    %s23 = sphi 0, %s23
    %s25 = sphi 0, %s23
    %s26 = sphi 0, %s25
    %s40 = sphi 0, %s26
    %s44 = sphi 0, %s44
    %s46 = sphi 0, %s44
    %s47 = sphi 0, %s46
    %s61 = sphi 0, %s47
    %s65 = sphi 0, %s65
    %s67 = sphi 0, %s65
    %s68 = sphi 0, %s67
    %s82 = sphi 0, %s68
    %s86 = sphi 0, %s86
    %s88 = sphi 0, %s86
    %s89 = sphi 0, %s88
    %s103 = sphi 0, %s89
    %s107 = sphi 0, %s107
    %s109 = sphi 0, %s107
    %s110 = sphi 0, %s109
    %s124 = sphi 0, %s110
    %s128 = sphi 0, %s128
    %s130 = sphi 0, %s128
    %s131 = sphi 0, %s130
    %s145 = sphi 0, %s131
    %s151 = sphi 0, %s153
    %s154 = sphi 0, %s151
    %s155 = sphi 0, %s154
    %s171 = sphi 0, %s155
    %s175 = sphi 0, %s175
    %s177 = sphi 0, %s175
    %s178 = sphi 0, %s177
    %s192 = sphi 0, %s178
    %s198 = sphi 0, %s200
    %s201 = sphi 0, %s198
    %s202 = sphi 0, %s201
    %s218 = sphi 0, %s202
  $region4: #{tpu_custom_call.1} parent=0 // loop_header_branch
    %18 = sbr.rel (%p16) target = $region8
  $region5: #{tpu_custom_call.1} parent=0 // loop_body
    %s20 = ssub.s32 %s15, 1
    %s21 = ssub.s32 %s15, 2
    %s22 = sadd.s32 %s15, 1
    %s24 = sadd.s32 %s23, 1
    %p27 = scmp.eq.s32.totalorder %s15, 2
    %p28 = scmp.ne.s32.totalorder %s23, %s25
    %p29 = scmp.eq.s32.totalorder %s15, 0
    %p30 = por %p28, %p29
    %p31 = scmp.ne.s32.totalorder %s23, %s25
    %p32 = scmp.eq.s32.totalorder %s20, 2
    %p33 = por %p31, %p32
    %p34 = scmp.ne.s32.totalorder %s25, %s26
    %p35 = scmp.eq.s32.totalorder %s20, 0
    %p36 = por %p34, %p35
    %p37 = scmp.ne.s32.totalorder %s25, %s26
    %p38 = scmp.eq.s32.totalorder %s21, 2
    %p39 = por %p37, %p38
    %p41 = scmp.ne.s32.totalorder %s26, %s40
    %p42 = scmp.eq.s32.totalorder %s21, 0
    %p43 = por %p41, %p42
    %s45 = sadd.s32 %s44, 1
    %p48 = scmp.eq.s32.totalorder %s15, 2
    %p49 = scmp.ne.s32.totalorder %s44, %s46
    %p50 = scmp.eq.s32.totalorder %s15, 0
    %p51 = por %p49, %p50
    %p52 = scmp.ne.s32.totalorder %s44, %s46
    %p53 = scmp.eq.s32.totalorder %s20, 2
    %p54 = por %p52, %p53
    %p55 = scmp.ne.s32.totalorder %s46, %s47
    %p56 = scmp.eq.s32.totalorder %s20, 0
    %p57 = por %p55, %p56
    %p58 = scmp.ne.s32.totalorder %s46, %s47
    %p59 = scmp.eq.s32.totalorder %s21, 2
    %p60 = por %p58, %p59
    %p62 = scmp.ne.s32.totalorder %s47, %s61
    %p63 = scmp.eq.s32.totalorder %s21, 0
    %p64 = por %p62, %p63
    %s66 = sadd.s32 %s65, 1
    %p69 = scmp.eq.s32.totalorder %s15, 2
    %p70 = scmp.ne.s32.totalorder %s65, %s67
    %p71 = scmp.eq.s32.totalorder %s15, 0
    %p72 = por %p70, %p71
    %p73 = scmp.ne.s32.totalorder %s65, %s67
    %p74 = scmp.eq.s32.totalorder %s20, 2
    %p75 = por %p73, %p74
    %p76 = scmp.ne.s32.totalorder %s67, %s68
    %p77 = scmp.eq.s32.totalorder %s20, 0
    %p78 = por %p76, %p77
    %p79 = scmp.ne.s32.totalorder %s67, %s68
    %p80 = scmp.eq.s32.totalorder %s21, 2
    %p81 = por %p79, %p80
    %p83 = scmp.ne.s32.totalorder %s68, %s82
    %p84 = scmp.eq.s32.totalorder %s21, 0
    %p85 = por %p83, %p84
    %s87 = sadd.s32 %s86, 1
    %p90 = scmp.eq.s32.totalorder %s15, 2
    %p91 = scmp.ne.s32.totalorder %s86, %s88
    %p92 = scmp.eq.s32.totalorder %s15, 0
    %p93 = por %p91, %p92
    %p94 = scmp.ne.s32.totalorder %s86, %s88
    %p95 = scmp.eq.s32.totalorder %s20, 2
    %p96 = por %p94, %p95
    %p97 = scmp.ne.s32.totalorder %s88, %s89
    %p98 = scmp.eq.s32.totalorder %s20, 0
    %p99 = por %p97, %p98
    %p100 = scmp.ne.s32.totalorder %s88, %s89
    %p101 = scmp.eq.s32.totalorder %s21, 2
    %p102 = por %p100, %p101
    %p104 = scmp.ne.s32.totalorder %s89, %s103
    %p105 = scmp.eq.s32.totalorder %s21, 0
    %p106 = por %p104, %p105
    %s108 = sadd.s32 %s107, 1
    %p111 = scmp.eq.s32.totalorder %s15, 2
    %p112 = scmp.ne.s32.totalorder %s107, %s109
    %p113 = scmp.eq.s32.totalorder %s15, 0
    %p114 = por %p112, %p113
    %p115 = scmp.ne.s32.totalorder %s107, %s109
    %p116 = scmp.eq.s32.totalorder %s20, 2
    %p117 = por %p115, %p116
    %p118 = scmp.ne.s32.totalorder %s109, %s110
    %p119 = scmp.eq.s32.totalorder %s20, 0
    %p120 = por %p118, %p119
    %p121 = scmp.ne.s32.totalorder %s109, %s110
    %p122 = scmp.eq.s32.totalorder %s21, 2
    %p123 = por %p121, %p122
    %p125 = scmp.ne.s32.totalorder %s110, %s124
    %p126 = scmp.eq.s32.totalorder %s21, 0
    %p127 = por %p125, %p126
    %s129 = sadd.s32 %s128, 1
    %p132 = scmp.eq.s32.totalorder %s15, 2
    %p133 = scmp.ne.s32.totalorder %s128, %s130
    %p134 = scmp.eq.s32.totalorder %s15, 0
    %p135 = por %p133, %p134
    %p136 = scmp.ne.s32.totalorder %s128, %s130
    %p137 = scmp.eq.s32.totalorder %s20, 2
    %p138 = por %p136, %p137
    %p139 = scmp.ne.s32.totalorder %s130, %s131
    %p140 = scmp.eq.s32.totalorder %s20, 0
    %p141 = por %p139, %p140
    %p142 = scmp.ne.s32.totalorder %s130, %s131
    %p143 = scmp.eq.s32.totalorder %s21, 2
    %p144 = por %p142, %p143
    %p146 = scmp.ne.s32.totalorder %s131, %s145
    %p147 = scmp.eq.s32.totalorder %s21, 0
    %p148 = por %p146, %p147
    %s149 = ssub.s32 %s15, %s22
    %p150 = scmp.eq.s32.totalorder %s149, 0
    %s152 = sadd.s32 %s151, 1
    %s153 = scalar_select %p150, %s151, %s152
    %p156 = pneg %p150
    %p157 = scmp.eq.s32.totalorder %s15, 2
    %p158 = por %p156, %p157
    %p159 = scmp.ne.s32.totalorder %s151, %s154
    %p160 = scmp.eq.s32.totalorder %s15, 0
    %p161 = por %p159, %p160
    %p162 = scmp.ne.s32.totalorder %s151, %s154
    %p163 = scmp.eq.s32.totalorder %s20, 2
    %p164 = por %p162, %p163
    %p165 = scmp.ne.s32.totalorder %s154, %s155
    %p166 = scmp.eq.s32.totalorder %s20, 0
    %p167 = por %p165, %p166
    %p168 = scmp.ne.s32.totalorder %s154, %s155
    %p169 = scmp.eq.s32.totalorder %s21, 2
    %p170 = por %p168, %p169
    %p172 = scmp.ne.s32.totalorder %s155, %s171
    %p173 = scmp.eq.s32.totalorder %s21, 0
    %p174 = por %p172, %p173
    %s176 = sadd.s32 %s175, 1
    %p179 = scmp.eq.s32.totalorder %s15, 2
    %p180 = scmp.ne.s32.totalorder %s175, %s177
    %p181 = scmp.eq.s32.totalorder %s15, 0
    %p182 = por %p180, %p181
    %p183 = scmp.ne.s32.totalorder %s175, %s177
    %p184 = scmp.eq.s32.totalorder %s20, 2
    %p185 = por %p183, %p184
    %p186 = scmp.ne.s32.totalorder %s177, %s178
    %p187 = scmp.eq.s32.totalorder %s20, 0
    %p188 = por %p186, %p187
    %p189 = scmp.ne.s32.totalorder %s177, %s178
    %p190 = scmp.eq.s32.totalorder %s21, 2
    %p191 = por %p189, %p190
    %p193 = scmp.ne.s32.totalorder %s178, %s192
    %p194 = scmp.eq.s32.totalorder %s21, 0
    %p195 = por %p193, %p194
    %s196 = ssub.s32 %s15, %s22
    %p197 = scmp.eq.s32.totalorder %s196, 0
    %s199 = sadd.s32 %s198, 1
    %s200 = scalar_select %p197, %s198, %s199
    %p203 = pneg %p197
    %p204 = scmp.eq.s32.totalorder %s15, 2
    %p205 = por %p203, %p204
    %p206 = scmp.ne.s32.totalorder %s198, %s201
    %p207 = scmp.eq.s32.totalorder %s15, 0
    %p208 = por %p206, %p207
    %p209 = scmp.ne.s32.totalorder %s198, %s201
    %p210 = scmp.eq.s32.totalorder %s20, 2
    %p211 = por %p209, %p210
    %p212 = scmp.ne.s32.totalorder %s201, %s202
    %p213 = scmp.eq.s32.totalorder %s20, 0
    %p214 = por %p212, %p213
    %p215 = scmp.ne.s32.totalorder %s201, %s202
    %p216 = scmp.eq.s32.totalorder %s21, 2
    %p217 = por %p215, %p216
    %p219 = scmp.ne.s32.totalorder %s202, %s218
    %p220 = scmp.eq.s32.totalorder %s21, 0
    %p221 = por %p219, %p220
    %p222 = scmp.le.s32.totalorder 1, %s15
    %p223 = scmp.lt.s32.totalorder %s15, 4
    %p224 = pnand %p222, %p223
    %p225 = pneg %p224
    // Predicated region
    $region9: #{tpu_custom_call.1} parent=5 // pred_check
      _
    $region10: #{tpu_custom_call.1} parent=5 // pred_check_branch
      %227 = sbr.rel (%p224) target = $region12
    $region11: #{tpu_custom_call.1} parent=5 // pred_region
      %s228 = ssub.s32 %s15, 1
      // Predicated region
      $region13: #{tpu_custom_call.1} parent=11 // pred_check
        %p229 = pneg %p36
      $region14: #{tpu_custom_call.1} parent=11 // pred_check_branch
        %231 = sbr.rel (%p229) target = $region16
      $region15: #{tpu_custom_call.1} parent=11 // pred_region
        _
      $region16: #{tpu_custom_call.1} parent=11 // pred_fallthru
        _
      // Predicated region
      $region17: #{tpu_custom_call.1} parent=11 // pred_check
        %p232 = pneg %p57
      $region18: #{tpu_custom_call.1} parent=11 // pred_check_branch
        %234 = sbr.rel (%p232) target = $region20
      $region19: #{tpu_custom_call.1} parent=11 // pred_region
        _
      $region20: #{tpu_custom_call.1} parent=11 // pred_fallthru
        _
      // Predicated region
      $region21: #{tpu_custom_call.1} parent=11 // pred_check
        %p235 = pneg %p78
      $region22: #{tpu_custom_call.1} parent=11 // pred_check_branch
        %237 = sbr.rel (%p235) target = $region24
      $region23: #{tpu_custom_call.1} parent=11 // pred_region
        _
      $region24: #{tpu_custom_call.1} parent=11 // pred_fallthru
        _
      // Predicated region
      $region25: #{tpu_custom_call.1} parent=11 // pred_check
        %p238 = pneg %p99
      $region26: #{tpu_custom_call.1} parent=11 // pred_check_branch
        %240 = sbr.rel (%p238) target = $region28
      $region27: #{tpu_custom_call.1} parent=11 // pred_region
        _
      $region28: #{tpu_custom_call.1} parent=11 // pred_fallthru
        _
      // Predicated region
      $region29: #{tpu_custom_call.1} parent=11 // pred_check
        %p241 = pneg %p120
      $region30: #{tpu_custom_call.1} parent=11 // pred_check_branch
        %243 = sbr.rel (%p241) target = $region32
      $region31: #{tpu_custom_call.1} parent=11 // pred_region
        _
      $region32: #{tpu_custom_call.1} parent=11 // pred_fallthru
        _
      // Predicated region
      $region33: #{tpu_custom_call.1} parent=11 // pred_check
        %p244 = pneg %p141
      $region34: #{tpu_custom_call.1} parent=11 // pred_check_branch
        %246 = sbr.rel (%p244) target = $region36
      $region35: #{tpu_custom_call.1} parent=11 // pred_region
        _
      $region36: #{tpu_custom_call.1} parent=11 // pred_fallthru
        _
      // Predicated region
      $region37: #{tpu_custom_call.1} parent=11 // pred_check
        %p247 = pneg %p188
      $region38: #{tpu_custom_call.1} parent=11 // pred_check_branch
        %249 = sbr.rel (%p247) target = $region40
      $region39: #{tpu_custom_call.1} parent=11 // pred_region
        _
      $region40: #{tpu_custom_call.1} parent=11 // pred_fallthru
        _
    $region12: #{tpu_custom_call.1} parent=5 // pred_fallthru
      _
    %p250 = scmp.lt.s32.totalorder %s15, 3
    // Predicated region
    $region41: #{tpu_custom_call.1} parent=5 // pred_check
      %p251 = pneg %p250
    $region42: #{tpu_custom_call.1} parent=5 // pred_check_branch
      %253 = sbr.rel (%p251) target = $region44
    $region43: #{tpu_custom_call.1} parent=5 // pred_region
      // Predicated region
      $region45: #{tpu_custom_call.1} parent=43 // pred_check
        %p254 = pneg %p161
      $region46: #{tpu_custom_call.1} parent=43 // pred_check_branch
        %256 = sbr.rel (%p254) target = $region48
      $region47: #{tpu_custom_call.1} parent=43 // pred_region
        %s257 = smul.u32 4, %s15
        %p258 = scmp.lt.s32.totalorder %s257, 11
        %s259 = scalar_select %p258, %s257, 11
        %s260 = smul.addr %s259, 3
        %s261 = smul.addr %s260, 8
        %s262 = scalar_lea.vmem %s6, %s261
        %s263 = smul.u32 4, %s15
      $region48: #{tpu_custom_call.1} parent=43 // pred_fallthru
        _
    $region44: #{tpu_custom_call.1} parent=5 // pred_fallthru
      _
    %p264 = scmp.le.s32.totalorder 1, %s15
    %p265 = scmp.lt.s32.totalorder %s15, 4
    %p266 = pnand %p264, %p265
    %p267 = pneg %p266
    // Predicated region
    $region49: #{tpu_custom_call.1} parent=5 // pred_check
      _
    $region50: #{tpu_custom_call.1} parent=5 // pred_check_branch
      %269 = sbr.rel (%p266) target = $region52
    $region51: #{tpu_custom_call.1} parent=5 // pred_region
      %s270 = ssub.s32 %s15, 1
      %p271 = pneg %p36
      %p272 = pneg %p33
      %p273 = pneg %p57
      %p274 = pneg %p54
      %p275 = pneg %p78
      %p276 = pneg %p75
      %p277 = pneg %p99
      %p278 = pneg %p96
      %p279 = pneg %p120
      %p280 = pneg %p117
      %p281 = pneg %p141
      %p282 = pneg %p138
      %s283 = smul.u32 4, %s20
      %p284 = scmp.lt.s32.totalorder %s283, 11
      %s285 = scalar_select %p284, %s283, 11
      %s286 = smul.addr %s285, 3
      %s287 = smul.addr %s286, 8
      %s288 = scalar_lea.vmem %s6, %s287
      %p289 = pneg %p167
      %p290 = pneg %p164
      %p291 = pneg %p188
      %p292 = pneg %p185
      %p293 = pneg %p214
      %p294 = pneg %p211
      %s295 = smul.u32 16, %s20
      %p296 = scmp.lt.s32.totalorder %s295, 47
      %s297 = scalar_select %p296, %s295, 47
      %s298 = smul.addr %s297, 8
      %s299 = scalar_lea.vmem %s8, %s298
      %s300 = smul.u32 4, %s20
      %p301 = scmp.lt.s32.totalorder %s300, 11
      %s302 = scalar_select %p301, %s300, 11
      %s303 = smul.addr %s302, 3
      %s304 = smul.addr %s303, 8
      %s305 = scalar_lea.vmem %s6, %s304
      %s306 = smul.u32 4, %s20
      %s307 = smul.u32 16, %s20
      %p308 = scmp.lt.s32.totalorder %s307, 47
      %s309 = scalar_select %p308, %s307, 47
      %s310 = smul.addr %s309, 8
      %s311 = scalar_lea.vmem %s8, %s310
      %s312 = smul.u32 16, %s20
      %p313 = scmp.eq.s32.totalorder %s20, 0
      // Predicated region
      $region53: #{tpu_custom_call.1} parent=51 // pred_check
        %p314 = pneg %p313
      $region54: #{tpu_custom_call.1} parent=51 // pred_check_branch
        %316 = sbr.rel (%p314) target = $region56
      $region55: #{tpu_custom_call.1} parent=51 // pred_region
        %v317 = vld [vmem:[%s0] sm:$0xff]
        %v318 = vld [vmem:[%s0 + $0x8] sm:$0xff]
        %v319 = vld [vmem:[%s0 + $0x10] sm:$0xff]
        %v320 = vld [vmem:[%s0 + $0x18] sm:$0xff]
        %v321 = vld [vmem:[%s0 + $0x20] sm:$0xff]
        %v322 = vld [vmem:[%s0 + $0x28] sm:$0xff]
        %v323 = vld [vmem:[%s0 + $0x30] sm:$0xff]
        %v324 = vld [vmem:[%s0 + $0x38] sm:$0xff]
        %v325 = vld [vmem:[%s0 + $0x40] sm:$0xff]
        %v326 = vld [vmem:[%s0 + $0x48] sm:$0xff]
        %v327 = vld [vmem:[%s0 + $0x50] sm:$0xff]
        %v328 = vld [vmem:[%s0 + $0x58] sm:$0xff]
        %v329 = vld [vmem:[%s0 + $0x60] sm:$0xff]
        %v330 = vld [vmem:[%s0 + $0x68] sm:$0xff]
        %v331 = vld [vmem:[%s0 + $0x70] sm:$0xff]
        %v332 = vld [vmem:[%s0 + $0x78] sm:$0xff]
        %v333 = vld [vmem:[%s0 + $0x80] sm:$0xff]
        %v334 = vld [vmem:[%s0 + $0x88] sm:$0xff]
        %v335 = vld [vmem:[%s0 + $0x90] sm:$0xff]
        %v336 = vld [vmem:[%s0 + $0x98] sm:$0xff]
        %v337 = vld [vmem:[%s0 + $0xa0] sm:$0xff]
        %v338 = vld [vmem:[%s0 + $0xa8] sm:$0xff]
        %v339 = vld [vmem:[%s0 + $0xb0] sm:$0xff]
        %v340 = vld [vmem:[%s0 + $0xb8] sm:$0xff]
        %v341 = vld [vmem:[%s0 + $0xc0] sm:$0xff]
        %v342 = vld [vmem:[%s0 + $0xc8] sm:$0xff]
        %v343 = vld [vmem:[%s0 + $0xd0] sm:$0xff]
        %v344 = vld [vmem:[%s0 + $0xd8] sm:$0xff]
        %v345 = vld [vmem:[%s0 + $0xe0] sm:$0xff]
        %v346 = vld [vmem:[%s0 + $0xe8] sm:$0xff]
        %v347 = vld [vmem:[%s0 + $0xf0] sm:$0xff]
        %v348 = vld [vmem:[%s0 + $0xf8] sm:$0xff]
        %v349 = vld [vmem:[%s0 + $0x100] sm:$0xff]
        %v350 = vld [vmem:[%s0 + $0x108] sm:$0xff]
        %v351 = vld [vmem:[%s0 + $0x110] sm:$0xff]
        %v352 = vld [vmem:[%s0 + $0x118] sm:$0xff]
        %v353 = vld [vmem:[%s0 + $0x120] sm:$0xff]
        %v354 = vld [vmem:[%s0 + $0x128] sm:$0xff]
        %v355 = vld [vmem:[%s0 + $0x130] sm:$0xff]
        %v356 = vld [vmem:[%s0 + $0x138] sm:$0xff]
        %v357 = vld [vmem:[%s0 + $0x140] sm:$0xff]
        %v358 = vld [vmem:[%s0 + $0x148] sm:$0xff]
        %v359 = vld [vmem:[%s0 + $0x150] sm:$0xff]
        %v360 = vld [vmem:[%s0 + $0x158] sm:$0xff]
        %v361 = vld [vmem:[%s0 + $0x160] sm:$0xff]
        %v362 = vld [vmem:[%s0 + $0x168] sm:$0xff]
        %v363 = vld [vmem:[%s0 + $0x170] sm:$0xff]
        %v364 = vld [vmem:[%s0 + $0x178] sm:$0xff]
        %v365 = vld [vmem:[%s2] sm:$0xff]
        %v366 = vld [vmem:[%s2 + $0x8] sm:$0xff]
        %v367 = vld [vmem:[%s2 + $0x10] sm:$0xff]
        %v368 = vld [vmem:[%s2 + $0x18] sm:$0xff]
        %vm369 = vcmask 261120
        %v371 = vsel %vm369, %v317, 0
        %v374 = vsel %vm369, %v318, 0
        %v377 = vsel %vm369, %v319, 0
        %v380 = vsel %vm369, %v320, 0
        %v383 = vsel %vm369, %v321, 0
        %v386 = vsel %vm369, %v322, 0
        %v389 = vsel %vm369, %v323, 0
        %v392 = vsel %vm369, %v324, 0
        %v395 = vsel %vm369, %v325, 0
        %v398 = vsel %vm369, %v326, 0
        %v401 = vsel %vm369, %v327, 0
        %v404 = vsel %vm369, %v328, 0
        %v407 = vsel %vm369, %v329, 0
        %v410 = vsel %vm369, %v330, 0
        %v413 = vsel %vm369, %v331, 0
        %v416 = vsel %vm369, %v332, 0
        %v419 = vsel %vm369, %v333, 0
        %v422 = vsel %vm369, %v334, 0
        %v425 = vsel %vm369, %v335, 0
        %v428 = vsel %vm369, %v336, 0
        %v431 = vsel %vm369, %v337, 0
        %v434 = vsel %vm369, %v338, 0
        %v437 = vsel %vm369, %v339, 0
        %v440 = vsel %vm369, %v340, 0
        %v443 = vsel %vm369, %v341, 0
        %v446 = vsel %vm369, %v342, 0
        %v449 = vsel %vm369, %v343, 0
        %v452 = vsel %vm369, %v344, 0
        %v455 = vsel %vm369, %v345, 0
        %v458 = vsel %vm369, %v346, 0
        %v461 = vsel %vm369, %v347, 0
        %v464 = vsel %vm369, %v348, 0
        %v467 = vsel %vm369, %v349, 0
        %v470 = vsel %vm369, %v350, 0
        %v473 = vsel %vm369, %v351, 0
        %v476 = vsel %vm369, %v352, 0
        %v479 = vsel %vm369, %v353, 0
        %v482 = vsel %vm369, %v354, 0
        %v485 = vsel %vm369, %v355, 0
        %v488 = vsel %vm369, %v356, 0
        %v491 = vsel %vm369, %v357, 0
        %v494 = vsel %vm369, %v358, 0
        %v497 = vsel %vm369, %v359, 0
        %v500 = vsel %vm369, %v360, 0
        %v503 = vsel %vm369, %v361, 0
        %v506 = vsel %vm369, %v362, 0
        %v509 = vsel %vm369, %v363, 0
        %v512 = vsel %vm369, %v364, 0
        %514 = vmatprep.subr.mxu0 0.0
        %515 = vmatpush1.msra.mxu0 0.0
        %516 = vmatprep.subr.mxu0 0.0
        %517 = vmatpush1.msra.mxu0 0.0
        %518 = vmatprep.subr.mxu0 0.0
        %519 = vmatpush1.msra.mxu0 0.0
        %520 = vmatprep.subr.mxu0 0.0
        %521 = vmatpush1.msra.mxu0 0.0
        %522 = vmatprep.subr.mxu0 0.0
        %523 = vmatpush1.msra.mxu0 0.0
        %524 = vmatprep.subr.mxu0 0.0
        %525 = vmatpush1.msra.mxu0 0.0
        %526 = vmatprep.subr.mxu0 0.0
        %527 = vmatpush1.msra.mxu0 0.0
        %528 = vmatprep.subr.mxu0 0.0
        %529 = vmatpush1.msra.mxu0 0.0
        %530 = vmatprep.subr.mxu0 0.0
        %531 = vmatpush1.msra.mxu0 0.0
        %532 = vmatprep.subr.mxu0 0.0
        %533 = vmatpush1.msra.mxu0 0.0
        %534 = vmatprep.subr.mxu0 0.0
        %535 = vmatpush1.msra.mxu0 0.0
        %536 = vmatprep.subr.mxu0 0.0
        %537 = vmatpush1.msra.mxu0 0.0
        %538 = vmatprep.subr.mxu0 0.0
        %539 = vmatpush1.msra.mxu0 %v368
        %540 = vmatprep.subr.mxu0 0.0
        %541 = vmatpush1.msra.mxu0 %v367
        %542 = vmatprep.subr.mxu0 0.0
        %543 = vmatpush1.msra.mxu0 %v366
        %544 = vmatprep.subr.mxu0 0.0
        %545 = vmatpush1.msra.mxu0 %v365
        %546 = vmatprep.subr.mxu0 0.0
        %547 = vmatpush2.msra.mxu0 0.0
        %548 = vmatprep.subr.mxu0 0.0
        %549 = vmatpush2.msra.mxu0 0.0
        %550 = vmatprep.subr.mxu0 0.0
        %551 = vmatpush2.msra.mxu0 0.0
        %552 = vmatprep.subr.mxu0 0.0
        %553 = vmatpush2.msra.mxu0 0.0
        %554 = vmatprep.subr.mxu0 0.0
        %555 = vmatpush2.msra.mxu0 0.0
        %556 = vmatprep.subr.mxu0 0.0
        %557 = vmatpush2.msra.mxu0 0.0
        %558 = vmatprep.subr.mxu0 0.0
        %559 = vmatpush2.msra.mxu0 0.0
        %560 = vmatprep.subr.mxu0 0.0
        %561 = vmatpush2.msra.mxu0 0.0
        %562 = vmatprep.subr.mxu0 0.0
        %563 = vmatpush2.msra.mxu0 0.0
        %564 = vmatprep.subr.mxu0 0.0
        %565 = vmatpush2.msra.mxu0 0.0
        %566 = vmatprep.subr.mxu0 0.0
        %567 = vmatpush2.msra.mxu0 0.0
        %568 = vmatprep.subr.mxu0 0.0
        %569 = vmatpush2.msra.mxu0 0.0
        %570 = vmatprep.subr.mxu0 0.0
        %571 = vmatpush2.msra.mxu0 0.0
        %572 = vmatprep.subr.mxu0 0.0
        %573 = vmatpush2.msra.mxu0 0.0
        %574 = vmatprep.subr.mxu0 0.0
        %575 = vmatpush2.msra.mxu0 0.0
        %576 = vmatprep.subr.mxu0 0.0
        %577 = vmatpush2.msra.mxu0 0.0
        %578 = vmatprep.mubr.f32.mxu0 0.0
        %579 = vmatmul.mubr.f32.gmra.mxu0 %v371
        %v580 = vpop.f32.mrf.mxu0
        %v581 = vadd.f32 0.0, %v580
        %v582 = vpop.f32.mrf.mxu0
        %583 = vmatprep.mubr.f32.mxu0 0.0
        %584 = vmatmul.mubr.f32.gmra.mxu0 %v374
        %v585 = vpop.f32.mrf.mxu0
        %v586 = vadd.f32 0.0, %v585
        %v587 = vpop.f32.mrf.mxu0
        %588 = vmatprep.mubr.f32.mxu0 0.0
        %589 = vmatmul.mubr.f32.gmra.mxu0 %v377
        %v590 = vpop.f32.mrf.mxu0
        %v591 = vadd.f32 0.0, %v590
        %v592 = vpop.f32.mrf.mxu0
        %593 = vmatprep.mubr.f32.mxu0 0.0
        %594 = vmatmul.mubr.f32.gmra.mxu0 %v380
        %v595 = vpop.f32.mrf.mxu0
        %v596 = vadd.f32 0.0, %v595
        %v597 = vpop.f32.mrf.mxu0
        %598 = vmatprep.mubr.f32.mxu0 0.0
        %599 = vmatmul.mubr.f32.gmra.mxu0 %v383
        %v600 = vpop.f32.mrf.mxu0
        %v601 = vadd.f32 0.0, %v600
        %v602 = vpop.f32.mrf.mxu0
        %603 = vmatprep.mubr.f32.mxu0 0.0
        %604 = vmatmul.mubr.f32.gmra.mxu0 %v386
        %v605 = vpop.f32.mrf.mxu0
        %v606 = vadd.f32 0.0, %v605
        %v607 = vpop.f32.mrf.mxu0
        %608 = vmatprep.mubr.f32.mxu0 0.0
        %609 = vmatmul.mubr.f32.gmra.mxu0 %v389
        %v610 = vpop.f32.mrf.mxu0
        %v611 = vadd.f32 0.0, %v610
        %v612 = vpop.f32.mrf.mxu0
        %613 = vmatprep.mubr.f32.mxu0 0.0
        %614 = vmatmul.mubr.f32.gmra.mxu0 %v392
        %v615 = vpop.f32.mrf.mxu0
        %v616 = vadd.f32 0.0, %v615
        %v617 = vpop.f32.mrf.mxu0
        %618 = vmatprep.mubr.f32.mxu0 0.0
        %619 = vmatmul.mubr.f32.gmra.mxu0 %v395
        %v620 = vpop.f32.mrf.mxu0
        %v621 = vadd.f32 0.0, %v620
        %v622 = vpop.f32.mrf.mxu0
        %623 = vmatprep.mubr.f32.mxu0 0.0
        %624 = vmatmul.mubr.f32.gmra.mxu0 %v398
        %v625 = vpop.f32.mrf.mxu0
        %v626 = vadd.f32 0.0, %v625
        %v627 = vpop.f32.mrf.mxu0
        %628 = vmatprep.mubr.f32.mxu0 0.0
        %629 = vmatmul.mubr.f32.gmra.mxu0 %v401
        %v630 = vpop.f32.mrf.mxu0
        %v631 = vadd.f32 0.0, %v630
        %v632 = vpop.f32.mrf.mxu0
        %633 = vmatprep.mubr.f32.mxu0 0.0
        %634 = vmatmul.mubr.f32.gmra.mxu0 %v404
        %v635 = vpop.f32.mrf.mxu0
        %v636 = vadd.f32 0.0, %v635
        %v637 = vpop.f32.mrf.mxu0
        %638 = vmatprep.mubr.f32.mxu0 0.0
        %639 = vmatmul.mubr.f32.gmra.mxu0 %v407
        %v640 = vpop.f32.mrf.mxu0
        %v641 = vadd.f32 0.0, %v640
        %v642 = vpop.f32.mrf.mxu0
        %643 = vmatprep.mubr.f32.mxu0 0.0
        %644 = vmatmul.mubr.f32.gmra.mxu0 %v410
        %v645 = vpop.f32.mrf.mxu0
        %v646 = vadd.f32 0.0, %v645
        %v647 = vpop.f32.mrf.mxu0
        %648 = vmatprep.mubr.f32.mxu0 0.0
        %649 = vmatmul.mubr.f32.gmra.mxu0 %v413
        %v650 = vpop.f32.mrf.mxu0
        %v651 = vadd.f32 0.0, %v650
        %v652 = vpop.f32.mrf.mxu0
        %653 = vmatprep.mubr.f32.mxu0 0.0
        %654 = vmatmul.mubr.f32.gmra.mxu0 %v416
        %v655 = vpop.f32.mrf.mxu0
        %v656 = vadd.f32 0.0, %v655
        %v657 = vpop.f32.mrf.mxu0
        %658 = vmatprep.mubr.f32.mxu0 0.0
        %659 = vmatmul.mubr.f32.gmra.mxu0 %v419
        %v660 = vpop.f32.mrf.mxu0
        %v661 = vadd.f32 0.0, %v660
        %v662 = vpop.f32.mrf.mxu0
        %663 = vmatprep.mubr.f32.mxu0 0.0
        %664 = vmatmul.mubr.f32.gmra.mxu0 %v422
        %v665 = vpop.f32.mrf.mxu0
        %v666 = vadd.f32 0.0, %v665
        %v667 = vpop.f32.mrf.mxu0
        %668 = vmatprep.mubr.f32.mxu0 0.0
        %669 = vmatmul.mubr.f32.gmra.mxu0 %v425
        %v670 = vpop.f32.mrf.mxu0
        %v671 = vadd.f32 0.0, %v670
        %v672 = vpop.f32.mrf.mxu0
        %673 = vmatprep.mubr.f32.mxu0 0.0
        %674 = vmatmul.mubr.f32.gmra.mxu0 %v428
        %v675 = vpop.f32.mrf.mxu0
        %v676 = vadd.f32 0.0, %v675
        %v677 = vpop.f32.mrf.mxu0
        %678 = vmatprep.mubr.f32.mxu0 0.0
        %679 = vmatmul.mubr.f32.gmra.mxu0 %v431
        %v680 = vpop.f32.mrf.mxu0
        %v681 = vadd.f32 0.0, %v680
        %v682 = vpop.f32.mrf.mxu0
        %683 = vmatprep.mubr.f32.mxu0 0.0
        %684 = vmatmul.mubr.f32.gmra.mxu0 %v434
        %v685 = vpop.f32.mrf.mxu0
        %v686 = vadd.f32 0.0, %v685
        %v687 = vpop.f32.mrf.mxu0
        %688 = vmatprep.mubr.f32.mxu0 0.0
        %689 = vmatmul.mubr.f32.gmra.mxu0 %v437
        %v690 = vpop.f32.mrf.mxu0
        %v691 = vadd.f32 0.0, %v690
        %v692 = vpop.f32.mrf.mxu0
        %693 = vmatprep.mubr.f32.mxu0 0.0
        %694 = vmatmul.mubr.f32.gmra.mxu0 %v440
        %v695 = vpop.f32.mrf.mxu0
        %v696 = vadd.f32 0.0, %v695
        %v697 = vpop.f32.mrf.mxu0
        %698 = vmatprep.mubr.f32.mxu0 0.0
        %699 = vmatmul.mubr.f32.gmra.mxu0 %v443
        %v700 = vpop.f32.mrf.mxu0
        %v701 = vadd.f32 0.0, %v700
        %v702 = vpop.f32.mrf.mxu0
        %703 = vmatprep.mubr.f32.mxu0 0.0
        %704 = vmatmul.mubr.f32.gmra.mxu0 %v446
        %v705 = vpop.f32.mrf.mxu0
        %v706 = vadd.f32 0.0, %v705
        %v707 = vpop.f32.mrf.mxu0
        %708 = vmatprep.mubr.f32.mxu0 0.0
        %709 = vmatmul.mubr.f32.gmra.mxu0 %v449
        %v710 = vpop.f32.mrf.mxu0
        %v711 = vadd.f32 0.0, %v710
        %v712 = vpop.f32.mrf.mxu0
        %713 = vmatprep.mubr.f32.mxu0 0.0
        %714 = vmatmul.mubr.f32.gmra.mxu0 %v452
        %v715 = vpop.f32.mrf.mxu0
        %v716 = vadd.f32 0.0, %v715
        %v717 = vpop.f32.mrf.mxu0
        %718 = vmatprep.mubr.f32.mxu0 0.0
        %719 = vmatmul.mubr.f32.gmra.mxu0 %v455
        %v720 = vpop.f32.mrf.mxu0
        %v721 = vadd.f32 0.0, %v720
        %v722 = vpop.f32.mrf.mxu0
        %723 = vmatprep.mubr.f32.mxu0 0.0
        %724 = vmatmul.mubr.f32.gmra.mxu0 %v458
        %v725 = vpop.f32.mrf.mxu0
        %v726 = vadd.f32 0.0, %v725
        %v727 = vpop.f32.mrf.mxu0
        %728 = vmatprep.mubr.f32.mxu0 0.0
        %729 = vmatmul.mubr.f32.gmra.mxu0 %v461
        %v730 = vpop.f32.mrf.mxu0
        %v731 = vadd.f32 0.0, %v730
        %v732 = vpop.f32.mrf.mxu0
        %733 = vmatprep.mubr.f32.mxu0 0.0
        %734 = vmatmul.mubr.f32.gmra.mxu0 %v464
        %v735 = vpop.f32.mrf.mxu0
        %v736 = vadd.f32 0.0, %v735
        %v737 = vpop.f32.mrf.mxu0
        %738 = vmatprep.mubr.f32.mxu0 0.0
        %739 = vmatmul.mubr.f32.gmra.mxu0 %v467
        %v740 = vpop.f32.mrf.mxu0
        %v741 = vadd.f32 0.0, %v740
        %v742 = vpop.f32.mrf.mxu0
        %743 = vmatprep.mubr.f32.mxu0 0.0
        %744 = vmatmul.mubr.f32.gmra.mxu0 %v470
        %v745 = vpop.f32.mrf.mxu0
        %v746 = vadd.f32 0.0, %v745
        %v747 = vpop.f32.mrf.mxu0
        %748 = vmatprep.mubr.f32.mxu0 0.0
        %749 = vmatmul.mubr.f32.gmra.mxu0 %v473
        %v750 = vpop.f32.mrf.mxu0
        %v751 = vadd.f32 0.0, %v750
        %v752 = vpop.f32.mrf.mxu0
        %753 = vmatprep.mubr.f32.mxu0 0.0
        %754 = vmatmul.mubr.f32.gmra.mxu0 %v476
        %v755 = vpop.f32.mrf.mxu0
        %v756 = vadd.f32 0.0, %v755
        %v757 = vpop.f32.mrf.mxu0
        %758 = vmatprep.mubr.f32.mxu0 0.0
        %759 = vmatmul.mubr.f32.gmra.mxu0 %v479
        %v760 = vpop.f32.mrf.mxu0
        %v761 = vadd.f32 0.0, %v760
        %v762 = vpop.f32.mrf.mxu0
        %763 = vmatprep.mubr.f32.mxu0 0.0
        %764 = vmatmul.mubr.f32.gmra.mxu0 %v482
        %v765 = vpop.f32.mrf.mxu0
        %v766 = vadd.f32 0.0, %v765
        %v767 = vpop.f32.mrf.mxu0
        %768 = vmatprep.mubr.f32.mxu0 0.0
        %769 = vmatmul.mubr.f32.gmra.mxu0 %v485
        %v770 = vpop.f32.mrf.mxu0
        %v771 = vadd.f32 0.0, %v770
        %v772 = vpop.f32.mrf.mxu0
        %773 = vmatprep.mubr.f32.mxu0 0.0
        %774 = vmatmul.mubr.f32.gmra.mxu0 %v488
        %v775 = vpop.f32.mrf.mxu0
        %v776 = vadd.f32 0.0, %v775
        %v777 = vpop.f32.mrf.mxu0
        %778 = vmatprep.mubr.f32.mxu0 0.0
        %779 = vmatmul.mubr.f32.gmra.mxu0 %v491
        %v780 = vpop.f32.mrf.mxu0
        %v781 = vadd.f32 0.0, %v780
        %v782 = vpop.f32.mrf.mxu0
        %783 = vmatprep.mubr.f32.mxu0 0.0
        %784 = vmatmul.mubr.f32.gmra.mxu0 %v494
        %v785 = vpop.f32.mrf.mxu0
        %v786 = vadd.f32 0.0, %v785
        %v787 = vpop.f32.mrf.mxu0
        %788 = vmatprep.mubr.f32.mxu0 0.0
        %789 = vmatmul.mubr.f32.gmra.mxu0 %v497
        %v790 = vpop.f32.mrf.mxu0
        %v791 = vadd.f32 0.0, %v790
        %v792 = vpop.f32.mrf.mxu0
        %793 = vmatprep.mubr.f32.mxu0 0.0
        %794 = vmatmul.mubr.f32.gmra.mxu0 %v500
        %v795 = vpop.f32.mrf.mxu0
        %v796 = vadd.f32 0.0, %v795
        %v797 = vpop.f32.mrf.mxu0
        %798 = vmatprep.mubr.f32.mxu0 0.0
        %799 = vmatmul.mubr.f32.gmra.mxu0 %v503
        %v800 = vpop.f32.mrf.mxu0
        %v801 = vadd.f32 0.0, %v800
        %v802 = vpop.f32.mrf.mxu0
        %803 = vmatprep.mubr.f32.mxu0 0.0
        %804 = vmatmul.mubr.f32.gmra.mxu0 %v506
        %v805 = vpop.f32.mrf.mxu0
        %v806 = vadd.f32 0.0, %v805
        %v807 = vpop.f32.mrf.mxu0
        %808 = vmatprep.mubr.f32.mxu0 0.0
        %809 = vmatmul.mubr.f32.gmra.mxu0 %v509
        %v810 = vpop.f32.mrf.mxu0
        %v811 = vadd.f32 0.0, %v810
        %v812 = vpop.f32.mrf.mxu0
        %813 = vmatprep.mubr.f32.mxu0 0.0
        %814 = vmatmul.mubr.f32.gmra.mxu0 %v512
        %v815 = vpop.f32.mrf.mxu0
        %v816 = vadd.f32 0.0, %v815
        %v817 = vpop.f32.mrf.mxu0
        %818 = vdwg.mxu0
        %vm819 = vcmask 523264
        %820 = vst.msk [vmem:[#allocation2] sm:$0xff] %vm819, %v581
        %821 = vst.msk [vmem:[#allocation2 + $0x8] sm:$0xff] %vm819, %v586
        %822 = vst.msk [vmem:[#allocation2 + $0x10] sm:$0xff] %vm819, %v591
        %823 = vst.msk [vmem:[#allocation2 + $0x18] sm:$0xff] %vm819, %v596
        %824 = vst.msk [vmem:[#allocation2 + $0x20] sm:$0xff] %vm819, %v601
        %825 = vst.msk [vmem:[#allocation2 + $0x28] sm:$0xff] %vm819, %v606
        %826 = vst.msk [vmem:[#allocation2 + $0x30] sm:$0xff] %vm819, %v611
        %827 = vst.msk [vmem:[#allocation2 + $0x38] sm:$0xff] %vm819, %v616
        %828 = vst.msk [vmem:[#allocation2 + $0x40] sm:$0xff] %vm819, %v621
        %829 = vst.msk [vmem:[#allocation2 + $0x48] sm:$0xff] %vm819, %v626
        %830 = vst.msk [vmem:[#allocation2 + $0x50] sm:$0xff] %vm819, %v631
        %831 = vst.msk [vmem:[#allocation2 + $0x58] sm:$0xff] %vm819, %v636
        %832 = vst.msk [vmem:[#allocation2 + $0x60] sm:$0xff] %vm819, %v641
        %833 = vst.msk [vmem:[#allocation2 + $0x68] sm:$0xff] %vm819, %v646
        %834 = vst.msk [vmem:[#allocation2 + $0x70] sm:$0xff] %vm819, %v651
        %835 = vst.msk [vmem:[#allocation2 + $0x78] sm:$0xff] %vm819, %v656
        %836 = vst.msk [vmem:[#allocation2 + $0x80] sm:$0xff] %vm819, %v661
        %837 = vst.msk [vmem:[#allocation2 + $0x88] sm:$0xff] %vm819, %v666
        %838 = vst.msk [vmem:[#allocation2 + $0x90] sm:$0xff] %vm819, %v671
        %839 = vst.msk [vmem:[#allocation2 + $0x98] sm:$0xff] %vm819, %v676
        %840 = vst.msk [vmem:[#allocation2 + $0xa0] sm:$0xff] %vm819, %v681
        %841 = vst.msk [vmem:[#allocation2 + $0xa8] sm:$0xff] %vm819, %v686
        %842 = vst.msk [vmem:[#allocation2 + $0xb0] sm:$0xff] %vm819, %v691
        %843 = vst.msk [vmem:[#allocation2 + $0xb8] sm:$0xff] %vm819, %v696
        %844 = vst.msk [vmem:[#allocation2 + $0xc0] sm:$0xff] %vm819, %v701
        %845 = vst.msk [vmem:[#allocation2 + $0xc8] sm:$0xff] %vm819, %v706
        %846 = vst.msk [vmem:[#allocation2 + $0xd0] sm:$0xff] %vm819, %v711
        %847 = vst.msk [vmem:[#allocation2 + $0xd8] sm:$0xff] %vm819, %v716
        %848 = vst.msk [vmem:[#allocation2 + $0xe0] sm:$0xff] %vm819, %v721
        %849 = vst.msk [vmem:[#allocation2 + $0xe8] sm:$0xff] %vm819, %v726
        %850 = vst.msk [vmem:[#allocation2 + $0xf0] sm:$0xff] %vm819, %v731
        %851 = vst.msk [vmem:[#allocation2 + $0xf8] sm:$0xff] %vm819, %v736
        %852 = vst.msk [vmem:[#allocation2 + $0x100] sm:$0xff] %vm819, %v741
        %853 = vst.msk [vmem:[#allocation2 + $0x108] sm:$0xff] %vm819, %v746
        %854 = vst.msk [vmem:[#allocation2 + $0x110] sm:$0xff] %vm819, %v751
        %855 = vst.msk [vmem:[#allocation2 + $0x118] sm:$0xff] %vm819, %v756
        %856 = vst.msk [vmem:[#allocation2 + $0x120] sm:$0xff] %vm819, %v761
        %857 = vst.msk [vmem:[#allocation2 + $0x128] sm:$0xff] %vm819, %v766
        %858 = vst.msk [vmem:[#allocation2 + $0x130] sm:$0xff] %vm819, %v771
        %859 = vst.msk [vmem:[#allocation2 + $0x138] sm:$0xff] %vm819, %v776
        %860 = vst.msk [vmem:[#allocation2 + $0x140] sm:$0xff] %vm819, %v781
        %861 = vst.msk [vmem:[#allocation2 + $0x148] sm:$0xff] %vm819, %v786
        %862 = vst.msk [vmem:[#allocation2 + $0x150] sm:$0xff] %vm819, %v791
        %863 = vst.msk [vmem:[#allocation2 + $0x158] sm:$0xff] %vm819, %v796
        %864 = vst.msk [vmem:[#allocation2 + $0x160] sm:$0xff] %vm819, %v801
        %865 = vst.msk [vmem:[#allocation2 + $0x168] sm:$0xff] %vm819, %v806
        %866 = vst.msk [vmem:[#allocation2 + $0x170] sm:$0xff] %vm819, %v811
        %867 = vst.msk [vmem:[#allocation2 + $0x178] sm:$0xff] %vm819, %v816
        %v868 = vld [vmem:[%s0] sm:$0xff]
        %v869 = vld [vmem:[%s0 + $0x8] sm:$0xff]
        %v870 = vld [vmem:[%s0 + $0x10] sm:$0xff]
        %v871 = vld [vmem:[%s0 + $0x18] sm:$0xff]
        %v872 = vld [vmem:[%s0 + $0x20] sm:$0xff]
        %v873 = vld [vmem:[%s0 + $0x28] sm:$0xff]
        %v874 = vld [vmem:[%s0 + $0x30] sm:$0xff]
        %v875 = vld [vmem:[%s0 + $0x38] sm:$0xff]
        %v876 = vld [vmem:[%s0 + $0x40] sm:$0xff]
        %v877 = vld [vmem:[%s0 + $0x48] sm:$0xff]
        %v878 = vld [vmem:[%s0 + $0x50] sm:$0xff]
        %v879 = vld [vmem:[%s0 + $0x58] sm:$0xff]
        %v880 = vld [vmem:[%s0 + $0x60] sm:$0xff]
        %v881 = vld [vmem:[%s0 + $0x68] sm:$0xff]
        %v882 = vld [vmem:[%s0 + $0x70] sm:$0xff]
        %v883 = vld [vmem:[%s0 + $0x78] sm:$0xff]
        %v884 = vld [vmem:[%s0 + $0x80] sm:$0xff]
        %v885 = vld [vmem:[%s0 + $0x88] sm:$0xff]
        %v886 = vld [vmem:[%s0 + $0x90] sm:$0xff]
        %v887 = vld [vmem:[%s0 + $0x98] sm:$0xff]
        %v888 = vld [vmem:[%s0 + $0xa0] sm:$0xff]
        %v889 = vld [vmem:[%s0 + $0xa8] sm:$0xff]
        %v890 = vld [vmem:[%s0 + $0xb0] sm:$0xff]
        %v891 = vld [vmem:[%s0 + $0xb8] sm:$0xff]
        %v892 = vld [vmem:[%s0 + $0xc0] sm:$0xff]
        %v893 = vld [vmem:[%s0 + $0xc8] sm:$0xff]
        %v894 = vld [vmem:[%s0 + $0xd0] sm:$0xff]
        %v895 = vld [vmem:[%s0 + $0xd8] sm:$0xff]
        %v896 = vld [vmem:[%s0 + $0xe0] sm:$0xff]
        %v897 = vld [vmem:[%s0 + $0xe8] sm:$0xff]
        %v898 = vld [vmem:[%s0 + $0xf0] sm:$0xff]
        %v899 = vld [vmem:[%s0 + $0xf8] sm:$0xff]
        %v900 = vld [vmem:[%s0 + $0x100] sm:$0xff]
        %v901 = vld [vmem:[%s0 + $0x108] sm:$0xff]
        %v902 = vld [vmem:[%s0 + $0x110] sm:$0xff]
        %v903 = vld [vmem:[%s0 + $0x118] sm:$0xff]
        %v904 = vld [vmem:[%s0 + $0x120] sm:$0xff]
        %v905 = vld [vmem:[%s0 + $0x128] sm:$0xff]
        %v906 = vld [vmem:[%s0 + $0x130] sm:$0xff]
        %v907 = vld [vmem:[%s0 + $0x138] sm:$0xff]
        %v908 = vld [vmem:[%s0 + $0x140] sm:$0xff]
        %v909 = vld [vmem:[%s0 + $0x148] sm:$0xff]
        %v910 = vld [vmem:[%s0 + $0x150] sm:$0xff]
        %v911 = vld [vmem:[%s0 + $0x158] sm:$0xff]
        %v912 = vld [vmem:[%s0 + $0x160] sm:$0xff]
        %v913 = vld [vmem:[%s0 + $0x168] sm:$0xff]
        %v914 = vld [vmem:[%s0 + $0x170] sm:$0xff]
        %v915 = vld [vmem:[%s0 + $0x178] sm:$0xff]
        %v916 = vld [vmem:[%s4] sm:$0xff]
        %v917 = vld [vmem:[%s4 + $0x8] sm:$0xff]
        %v918 = vld [vmem:[%s4 + $0x10] sm:$0xff]
        %v919 = vld [vmem:[%s4 + $0x18] sm:$0xff]
        %v921 = vsel %vm369, %v868, 0
        %v924 = vsel %vm369, %v869, 0
        %v927 = vsel %vm369, %v870, 0
        %v930 = vsel %vm369, %v871, 0
        %v933 = vsel %vm369, %v872, 0
        %v936 = vsel %vm369, %v873, 0
        %v939 = vsel %vm369, %v874, 0
        %v942 = vsel %vm369, %v875, 0
        %v945 = vsel %vm369, %v876, 0
        %v948 = vsel %vm369, %v877, 0
        %v951 = vsel %vm369, %v878, 0
        %v954 = vsel %vm369, %v879, 0
        %v957 = vsel %vm369, %v880, 0
        %v960 = vsel %vm369, %v881, 0
        %v963 = vsel %vm369, %v882, 0
        %v966 = vsel %vm369, %v883, 0
        %v969 = vsel %vm369, %v884, 0
        %v972 = vsel %vm369, %v885, 0
        %v975 = vsel %vm369, %v886, 0
        %v978 = vsel %vm369, %v887, 0
        %v981 = vsel %vm369, %v888, 0
        %v984 = vsel %vm369, %v889, 0
        %v987 = vsel %vm369, %v890, 0
        %v990 = vsel %vm369, %v891, 0
        %v993 = vsel %vm369, %v892, 0
        %v996 = vsel %vm369, %v893, 0
        %v999 = vsel %vm369, %v894, 0
        %v1002 = vsel %vm369, %v895, 0
        %v1005 = vsel %vm369, %v896, 0
        %v1008 = vsel %vm369, %v897, 0
        %v1011 = vsel %vm369, %v898, 0
        %v1014 = vsel %vm369, %v899, 0
        %v1017 = vsel %vm369, %v900, 0
        %v1020 = vsel %vm369, %v901, 0
        %v1023 = vsel %vm369, %v902, 0
        %v1026 = vsel %vm369, %v903, 0
        %v1029 = vsel %vm369, %v904, 0
        %v1032 = vsel %vm369, %v905, 0
        %v1035 = vsel %vm369, %v906, 0
        %v1038 = vsel %vm369, %v907, 0
        %v1041 = vsel %vm369, %v908, 0
        %v1044 = vsel %vm369, %v909, 0
        %v1047 = vsel %vm369, %v910, 0
        %v1050 = vsel %vm369, %v911, 0
        %v1053 = vsel %vm369, %v912, 0
        %v1056 = vsel %vm369, %v913, 0
        %v1059 = vsel %vm369, %v914, 0
        %v1062 = vsel %vm369, %v915, 0
        %1064 = vmatprep.subr.mxu0 0.0
        %1065 = vmatpush1.msra.mxu0 0.0
        %1066 = vmatprep.subr.mxu0 0.0
        %1067 = vmatpush1.msra.mxu0 0.0
        %1068 = vmatprep.subr.mxu0 0.0
        %1069 = vmatpush1.msra.mxu0 0.0
        %1070 = vmatprep.subr.mxu0 0.0
        %1071 = vmatpush1.msra.mxu0 0.0
        %1072 = vmatprep.subr.mxu0 0.0
        %1073 = vmatpush1.msra.mxu0 0.0
        %1074 = vmatprep.subr.mxu0 0.0
        %1075 = vmatpush1.msra.mxu0 0.0
        %1076 = vmatprep.subr.mxu0 0.0
        %1077 = vmatpush1.msra.mxu0 0.0
        %1078 = vmatprep.subr.mxu0 0.0
        %1079 = vmatpush1.msra.mxu0 0.0
        %1080 = vmatprep.subr.mxu0 0.0
        %1081 = vmatpush1.msra.mxu0 0.0
        %1082 = vmatprep.subr.mxu0 0.0
        %1083 = vmatpush1.msra.mxu0 0.0
        %1084 = vmatprep.subr.mxu0 0.0
        %1085 = vmatpush1.msra.mxu0 0.0
        %1086 = vmatprep.subr.mxu0 0.0
        %1087 = vmatpush1.msra.mxu0 0.0
        %1088 = vmatprep.subr.mxu0 0.0
        %1089 = vmatpush1.msra.mxu0 %v919
        %1090 = vmatprep.subr.mxu0 0.0
        %1091 = vmatpush1.msra.mxu0 %v918
        %1092 = vmatprep.subr.mxu0 0.0
        %1093 = vmatpush1.msra.mxu0 %v917
        %1094 = vmatprep.subr.mxu0 0.0
        %1095 = vmatpush1.msra.mxu0 %v916
        %1096 = vmatprep.subr.mxu0 0.0
        %1097 = vmatpush2.msra.mxu0 0.0
        %1098 = vmatprep.subr.mxu0 0.0
        %1099 = vmatpush2.msra.mxu0 0.0
        %1100 = vmatprep.subr.mxu0 0.0
        %1101 = vmatpush2.msra.mxu0 0.0
        %1102 = vmatprep.subr.mxu0 0.0
        %1103 = vmatpush2.msra.mxu0 0.0
        %1104 = vmatprep.subr.mxu0 0.0
        %1105 = vmatpush2.msra.mxu0 0.0
        %1106 = vmatprep.subr.mxu0 0.0
        %1107 = vmatpush2.msra.mxu0 0.0
        %1108 = vmatprep.subr.mxu0 0.0
        %1109 = vmatpush2.msra.mxu0 0.0
        %1110 = vmatprep.subr.mxu0 0.0
        %1111 = vmatpush2.msra.mxu0 0.0
        %1112 = vmatprep.subr.mxu0 0.0
        %1113 = vmatpush2.msra.mxu0 0.0
        %1114 = vmatprep.subr.mxu0 0.0
        %1115 = vmatpush2.msra.mxu0 0.0
        %1116 = vmatprep.subr.mxu0 0.0
        %1117 = vmatpush2.msra.mxu0 0.0
        %1118 = vmatprep.subr.mxu0 0.0
        %1119 = vmatpush2.msra.mxu0 0.0
        %1120 = vmatprep.subr.mxu0 0.0
        %1121 = vmatpush2.msra.mxu0 0.0
        %1122 = vmatprep.subr.mxu0 0.0
        %1123 = vmatpush2.msra.mxu0 0.0
        %1124 = vmatprep.subr.mxu0 0.0
        %1125 = vmatpush2.msra.mxu0 0.0
        %1126 = vmatprep.subr.mxu0 0.0
        %1127 = vmatpush2.msra.mxu0 0.0
        %1128 = vmatprep.mubr.f32.mxu0 0.0
        %1129 = vmatmul.mubr.f32.gmra.mxu0 %v921
        %v1130 = vpop.f32.mrf.mxu0
        %v1131 = vadd.f32 0.0, %v1130
        %v1132 = vpop.f32.mrf.mxu0
        %1133 = vmatprep.mubr.f32.mxu0 0.0
        %1134 = vmatmul.mubr.f32.gmra.mxu0 %v924
        %v1135 = vpop.f32.mrf.mxu0
        %v1136 = vadd.f32 0.0, %v1135
        %v1137 = vpop.f32.mrf.mxu0
        %1138 = vmatprep.mubr.f32.mxu0 0.0
        %1139 = vmatmul.mubr.f32.gmra.mxu0 %v927
        %v1140 = vpop.f32.mrf.mxu0
        %v1141 = vadd.f32 0.0, %v1140
        %v1142 = vpop.f32.mrf.mxu0
        %1143 = vmatprep.mubr.f32.mxu0 0.0
        %1144 = vmatmul.mubr.f32.gmra.mxu0 %v930
        %v1145 = vpop.f32.mrf.mxu0
        %v1146 = vadd.f32 0.0, %v1145
        %v1147 = vpop.f32.mrf.mxu0
        %1148 = vmatprep.mubr.f32.mxu0 0.0
        %1149 = vmatmul.mubr.f32.gmra.mxu0 %v933
        %v1150 = vpop.f32.mrf.mxu0
        %v1151 = vadd.f32 0.0, %v1150
        %v1152 = vpop.f32.mrf.mxu0
        %1153 = vmatprep.mubr.f32.mxu0 0.0
        %1154 = vmatmul.mubr.f32.gmra.mxu0 %v936
        %v1155 = vpop.f32.mrf.mxu0
        %v1156 = vadd.f32 0.0, %v1155
        %v1157 = vpop.f32.mrf.mxu0
        %1158 = vmatprep.mubr.f32.mxu0 0.0
        %1159 = vmatmul.mubr.f32.gmra.mxu0 %v939
        %v1160 = vpop.f32.mrf.mxu0
        %v1161 = vadd.f32 0.0, %v1160
        %v1162 = vpop.f32.mrf.mxu0
        %1163 = vmatprep.mubr.f32.mxu0 0.0
        %1164 = vmatmul.mubr.f32.gmra.mxu0 %v942
        %v1165 = vpop.f32.mrf.mxu0
        %v1166 = vadd.f32 0.0, %v1165
        %v1167 = vpop.f32.mrf.mxu0
        %1168 = vmatprep.mubr.f32.mxu0 0.0
        %1169 = vmatmul.mubr.f32.gmra.mxu0 %v945
        %v1170 = vpop.f32.mrf.mxu0
        %v1171 = vadd.f32 0.0, %v1170
        %v1172 = vpop.f32.mrf.mxu0
        %1173 = vmatprep.mubr.f32.mxu0 0.0
        %1174 = vmatmul.mubr.f32.gmra.mxu0 %v948
        %v1175 = vpop.f32.mrf.mxu0
        %v1176 = vadd.f32 0.0, %v1175
        %v1177 = vpop.f32.mrf.mxu0
        %1178 = vmatprep.mubr.f32.mxu0 0.0
        %1179 = vmatmul.mubr.f32.gmra.mxu0 %v951
        %v1180 = vpop.f32.mrf.mxu0
        %v1181 = vadd.f32 0.0, %v1180
        %v1182 = vpop.f32.mrf.mxu0
        %1183 = vmatprep.mubr.f32.mxu0 0.0
        %1184 = vmatmul.mubr.f32.gmra.mxu0 %v954
        %v1185 = vpop.f32.mrf.mxu0
        %v1186 = vadd.f32 0.0, %v1185
        %v1187 = vpop.f32.mrf.mxu0
        %1188 = vmatprep.mubr.f32.mxu0 0.0
        %1189 = vmatmul.mubr.f32.gmra.mxu0 %v957
        %v1190 = vpop.f32.mrf.mxu0
        %v1191 = vadd.f32 0.0, %v1190
        %v1192 = vpop.f32.mrf.mxu0
        %1193 = vmatprep.mubr.f32.mxu0 0.0
        %1194 = vmatmul.mubr.f32.gmra.mxu0 %v960
        %v1195 = vpop.f32.mrf.mxu0
        %v1196 = vadd.f32 0.0, %v1195
        %v1197 = vpop.f32.mrf.mxu0
        %1198 = vmatprep.mubr.f32.mxu0 0.0
        %1199 = vmatmul.mubr.f32.gmra.mxu0 %v963
        %v1200 = vpop.f32.mrf.mxu0
        %v1201 = vadd.f32 0.0, %v1200
        %v1202 = vpop.f32.mrf.mxu0
        %1203 = vmatprep.mubr.f32.mxu0 0.0
        %1204 = vmatmul.mubr.f32.gmra.mxu0 %v966
        %v1205 = vpop.f32.mrf.mxu0
        %v1206 = vadd.f32 0.0, %v1205
        %v1207 = vpop.f32.mrf.mxu0
        %1208 = vmatprep.mubr.f32.mxu0 0.0
        %1209 = vmatmul.mubr.f32.gmra.mxu0 %v969
        %v1210 = vpop.f32.mrf.mxu0
        %v1211 = vadd.f32 0.0, %v1210
        %v1212 = vpop.f32.mrf.mxu0
        %1213 = vmatprep.mubr.f32.mxu0 0.0
        %1214 = vmatmul.mubr.f32.gmra.mxu0 %v972
        %v1215 = vpop.f32.mrf.mxu0
        %v1216 = vadd.f32 0.0, %v1215
        %v1217 = vpop.f32.mrf.mxu0
        %1218 = vmatprep.mubr.f32.mxu0 0.0
        %1219 = vmatmul.mubr.f32.gmra.mxu0 %v975
        %v1220 = vpop.f32.mrf.mxu0
        %v1221 = vadd.f32 0.0, %v1220
        %v1222 = vpop.f32.mrf.mxu0
        %1223 = vmatprep.mubr.f32.mxu0 0.0
        %1224 = vmatmul.mubr.f32.gmra.mxu0 %v978
        %v1225 = vpop.f32.mrf.mxu0
        %v1226 = vadd.f32 0.0, %v1225
        %v1227 = vpop.f32.mrf.mxu0
        %1228 = vmatprep.mubr.f32.mxu0 0.0
        %1229 = vmatmul.mubr.f32.gmra.mxu0 %v981
        %v1230 = vpop.f32.mrf.mxu0
        %v1231 = vadd.f32 0.0, %v1230
        %v1232 = vpop.f32.mrf.mxu0
        %1233 = vmatprep.mubr.f32.mxu0 0.0
        %1234 = vmatmul.mubr.f32.gmra.mxu0 %v984
        %v1235 = vpop.f32.mrf.mxu0
        %v1236 = vadd.f32 0.0, %v1235
        %v1237 = vpop.f32.mrf.mxu0
        %1238 = vmatprep.mubr.f32.mxu0 0.0
        %1239 = vmatmul.mubr.f32.gmra.mxu0 %v987
        %v1240 = vpop.f32.mrf.mxu0
        %v1241 = vadd.f32 0.0, %v1240
        %v1242 = vpop.f32.mrf.mxu0
        %1243 = vmatprep.mubr.f32.mxu0 0.0
        %1244 = vmatmul.mubr.f32.gmra.mxu0 %v990
        %v1245 = vpop.f32.mrf.mxu0
        %v1246 = vadd.f32 0.0, %v1245
        %v1247 = vpop.f32.mrf.mxu0
        %1248 = vmatprep.mubr.f32.mxu0 0.0
        %1249 = vmatmul.mubr.f32.gmra.mxu0 %v993
        %v1250 = vpop.f32.mrf.mxu0
        %v1251 = vadd.f32 0.0, %v1250
        %v1252 = vpop.f32.mrf.mxu0
        %1253 = vmatprep.mubr.f32.mxu0 0.0
        %1254 = vmatmul.mubr.f32.gmra.mxu0 %v996
        %v1255 = vpop.f32.mrf.mxu0
        %v1256 = vadd.f32 0.0, %v1255
        %v1257 = vpop.f32.mrf.mxu0
        %1258 = vmatprep.mubr.f32.mxu0 0.0
        %1259 = vmatmul.mubr.f32.gmra.mxu0 %v999
        %v1260 = vpop.f32.mrf.mxu0
        %v1261 = vadd.f32 0.0, %v1260
        %v1262 = vpop.f32.mrf.mxu0
        %1263 = vmatprep.mubr.f32.mxu0 0.0
        %1264 = vmatmul.mubr.f32.gmra.mxu0 %v1002
        %v1265 = vpop.f32.mrf.mxu0
        %v1266 = vadd.f32 0.0, %v1265
        %v1267 = vpop.f32.mrf.mxu0
        %1268 = vmatprep.mubr.f32.mxu0 0.0
        %1269 = vmatmul.mubr.f32.gmra.mxu0 %v1005
        %v1270 = vpop.f32.mrf.mxu0
        %v1271 = vadd.f32 0.0, %v1270
        %v1272 = vpop.f32.mrf.mxu0
        %1273 = vmatprep.mubr.f32.mxu0 0.0
        %1274 = vmatmul.mubr.f32.gmra.mxu0 %v1008
        %v1275 = vpop.f32.mrf.mxu0
        %v1276 = vadd.f32 0.0, %v1275
        %v1277 = vpop.f32.mrf.mxu0
        %1278 = vmatprep.mubr.f32.mxu0 0.0
        %1279 = vmatmul.mubr.f32.gmra.mxu0 %v1011
        %v1280 = vpop.f32.mrf.mxu0
        %v1281 = vadd.f32 0.0, %v1280
        %v1282 = vpop.f32.mrf.mxu0
        %1283 = vmatprep.mubr.f32.mxu0 0.0
        %1284 = vmatmul.mubr.f32.gmra.mxu0 %v1014
        %v1285 = vpop.f32.mrf.mxu0
        %v1286 = vadd.f32 0.0, %v1285
        %v1287 = vpop.f32.mrf.mxu0
        %1288 = vmatprep.mubr.f32.mxu0 0.0
        %1289 = vmatmul.mubr.f32.gmra.mxu0 %v1017
        %v1290 = vpop.f32.mrf.mxu0
        %v1291 = vadd.f32 0.0, %v1290
        %v1292 = vpop.f32.mrf.mxu0
        %1293 = vmatprep.mubr.f32.mxu0 0.0
        %1294 = vmatmul.mubr.f32.gmra.mxu0 %v1020
        %v1295 = vpop.f32.mrf.mxu0
        %v1296 = vadd.f32 0.0, %v1295
        %v1297 = vpop.f32.mrf.mxu0
        %1298 = vmatprep.mubr.f32.mxu0 0.0
        %1299 = vmatmul.mubr.f32.gmra.mxu0 %v1023
        %v1300 = vpop.f32.mrf.mxu0
        %v1301 = vadd.f32 0.0, %v1300
        %v1302 = vpop.f32.mrf.mxu0
        %1303 = vmatprep.mubr.f32.mxu0 0.0
        %1304 = vmatmul.mubr.f32.gmra.mxu0 %v1026
        %v1305 = vpop.f32.mrf.mxu0
        %v1306 = vadd.f32 0.0, %v1305
        %v1307 = vpop.f32.mrf.mxu0
        %1308 = vmatprep.mubr.f32.mxu0 0.0
        %1309 = vmatmul.mubr.f32.gmra.mxu0 %v1029
        %v1310 = vpop.f32.mrf.mxu0
        %v1311 = vadd.f32 0.0, %v1310
        %v1312 = vpop.f32.mrf.mxu0
        %1313 = vmatprep.mubr.f32.mxu0 0.0
        %1314 = vmatmul.mubr.f32.gmra.mxu0 %v1032
        %v1315 = vpop.f32.mrf.mxu0
        %v1316 = vadd.f32 0.0, %v1315
        %v1317 = vpop.f32.mrf.mxu0
        %1318 = vmatprep.mubr.f32.mxu0 0.0
        %1319 = vmatmul.mubr.f32.gmra.mxu0 %v1035
        %v1320 = vpop.f32.mrf.mxu0
        %v1321 = vadd.f32 0.0, %v1320
        %v1322 = vpop.f32.mrf.mxu0
        %1323 = vmatprep.mubr.f32.mxu0 0.0
        %1324 = vmatmul.mubr.f32.gmra.mxu0 %v1038
        %v1325 = vpop.f32.mrf.mxu0
        %v1326 = vadd.f32 0.0, %v1325
        %v1327 = vpop.f32.mrf.mxu0
        %1328 = vmatprep.mubr.f32.mxu0 0.0
        %1329 = vmatmul.mubr.f32.gmra.mxu0 %v1041
        %v1330 = vpop.f32.mrf.mxu0
        %v1331 = vadd.f32 0.0, %v1330
        %v1332 = vpop.f32.mrf.mxu0
        %1333 = vmatprep.mubr.f32.mxu0 0.0
        %1334 = vmatmul.mubr.f32.gmra.mxu0 %v1044
        %v1335 = vpop.f32.mrf.mxu0
        %v1336 = vadd.f32 0.0, %v1335
        %v1337 = vpop.f32.mrf.mxu0
        %1338 = vmatprep.mubr.f32.mxu0 0.0
        %1339 = vmatmul.mubr.f32.gmra.mxu0 %v1047
        %v1340 = vpop.f32.mrf.mxu0
        %v1341 = vadd.f32 0.0, %v1340
        %v1342 = vpop.f32.mrf.mxu0
        %1343 = vmatprep.mubr.f32.mxu0 0.0
        %1344 = vmatmul.mubr.f32.gmra.mxu0 %v1050
        %v1345 = vpop.f32.mrf.mxu0
        %v1346 = vadd.f32 0.0, %v1345
        %v1347 = vpop.f32.mrf.mxu0
        %1348 = vmatprep.mubr.f32.mxu0 0.0
        %1349 = vmatmul.mubr.f32.gmra.mxu0 %v1053
        %v1350 = vpop.f32.mrf.mxu0
        %v1351 = vadd.f32 0.0, %v1350
        %v1352 = vpop.f32.mrf.mxu0
        %1353 = vmatprep.mubr.f32.mxu0 0.0
        %1354 = vmatmul.mubr.f32.gmra.mxu0 %v1056
        %v1355 = vpop.f32.mrf.mxu0
        %v1356 = vadd.f32 0.0, %v1355
        %v1357 = vpop.f32.mrf.mxu0
        %1358 = vmatprep.mubr.f32.mxu0 0.0
        %1359 = vmatmul.mubr.f32.gmra.mxu0 %v1059
        %v1360 = vpop.f32.mrf.mxu0
        %v1361 = vadd.f32 0.0, %v1360
        %v1362 = vpop.f32.mrf.mxu0
        %1363 = vmatprep.mubr.f32.mxu0 0.0
        %1364 = vmatmul.mubr.f32.gmra.mxu0 %v1062
        %v1365 = vpop.f32.mrf.mxu0
        %v1366 = vadd.f32 0.0, %v1365
        %v1367 = vpop.f32.mrf.mxu0
        %1368 = vdwg.mxu0
        %vm1369 = vcmask 31744
        %1370 = vst.msk [vmem:[#allocation4] sm:$0xff] %vm1369, %v1131
        %1371 = vst.msk [vmem:[#allocation4 + $0x8] sm:$0xff] %vm1369, %v1136
        %1372 = vst.msk [vmem:[#allocation4 + $0x10] sm:$0xff] %vm1369, %v1141
        %1373 = vst.msk [vmem:[#allocation4 + $0x18] sm:$0xff] %vm1369, %v1146
        %1374 = vst.msk [vmem:[#allocation4 + $0x20] sm:$0xff] %vm1369, %v1151
        %1375 = vst.msk [vmem:[#allocation4 + $0x28] sm:$0xff] %vm1369, %v1156
        %1376 = vst.msk [vmem:[#allocation4 + $0x30] sm:$0xff] %vm1369, %v1161
        %1377 = vst.msk [vmem:[#allocation4 + $0x38] sm:$0xff] %vm1369, %v1166
        %1378 = vst.msk [vmem:[#allocation4 + $0x40] sm:$0xff] %vm1369, %v1171
        %1379 = vst.msk [vmem:[#allocation4 + $0x48] sm:$0xff] %vm1369, %v1176
        %1380 = vst.msk [vmem:[#allocation4 + $0x50] sm:$0xff] %vm1369, %v1181
        %1381 = vst.msk [vmem:[#allocation4 + $0x58] sm:$0xff] %vm1369, %v1186
        %1382 = vst.msk [vmem:[#allocation4 + $0x60] sm:$0xff] %vm1369, %v1191
        %1383 = vst.msk [vmem:[#allocation4 + $0x68] sm:$0xff] %vm1369, %v1196
        %1384 = vst.msk [vmem:[#allocation4 + $0x70] sm:$0xff] %vm1369, %v1201
        %1385 = vst.msk [vmem:[#allocation4 + $0x78] sm:$0xff] %vm1369, %v1206
        %1386 = vst.msk [vmem:[#allocation4 + $0x80] sm:$0xff] %vm1369, %v1211
        %1387 = vst.msk [vmem:[#allocation4 + $0x88] sm:$0xff] %vm1369, %v1216
        %1388 = vst.msk [vmem:[#allocation4 + $0x90] sm:$0xff] %vm1369, %v1221
        %1389 = vst.msk [vmem:[#allocation4 + $0x98] sm:$0xff] %vm1369, %v1226
        %1390 = vst.msk [vmem:[#allocation4 + $0xa0] sm:$0xff] %vm1369, %v1231
        %1391 = vst.msk [vmem:[#allocation4 + $0xa8] sm:$0xff] %vm1369, %v1236
        %1392 = vst.msk [vmem:[#allocation4 + $0xb0] sm:$0xff] %vm1369, %v1241
        %1393 = vst.msk [vmem:[#allocation4 + $0xb8] sm:$0xff] %vm1369, %v1246
        %1394 = vst.msk [vmem:[#allocation4 + $0xc0] sm:$0xff] %vm1369, %v1251
        %1395 = vst.msk [vmem:[#allocation4 + $0xc8] sm:$0xff] %vm1369, %v1256
        %1396 = vst.msk [vmem:[#allocation4 + $0xd0] sm:$0xff] %vm1369, %v1261
        %1397 = vst.msk [vmem:[#allocation4 + $0xd8] sm:$0xff] %vm1369, %v1266
        %1398 = vst.msk [vmem:[#allocation4 + $0xe0] sm:$0xff] %vm1369, %v1271
        %1399 = vst.msk [vmem:[#allocation4 + $0xe8] sm:$0xff] %vm1369, %v1276
        %1400 = vst.msk [vmem:[#allocation4 + $0xf0] sm:$0xff] %vm1369, %v1281
        %1401 = vst.msk [vmem:[#allocation4 + $0xf8] sm:$0xff] %vm1369, %v1286
        %1402 = vst.msk [vmem:[#allocation4 + $0x100] sm:$0xff] %vm1369, %v1291
        %1403 = vst.msk [vmem:[#allocation4 + $0x108] sm:$0xff] %vm1369, %v1296
        %1404 = vst.msk [vmem:[#allocation4 + $0x110] sm:$0xff] %vm1369, %v1301
        %1405 = vst.msk [vmem:[#allocation4 + $0x118] sm:$0xff] %vm1369, %v1306
        %1406 = vst.msk [vmem:[#allocation4 + $0x120] sm:$0xff] %vm1369, %v1311
        %1407 = vst.msk [vmem:[#allocation4 + $0x128] sm:$0xff] %vm1369, %v1316
        %1408 = vst.msk [vmem:[#allocation4 + $0x130] sm:$0xff] %vm1369, %v1321
        %1409 = vst.msk [vmem:[#allocation4 + $0x138] sm:$0xff] %vm1369, %v1326
        %1410 = vst.msk [vmem:[#allocation4 + $0x140] sm:$0xff] %vm1369, %v1331
        %1411 = vst.msk [vmem:[#allocation4 + $0x148] sm:$0xff] %vm1369, %v1336
        %1412 = vst.msk [vmem:[#allocation4 + $0x150] sm:$0xff] %vm1369, %v1341
        %1413 = vst.msk [vmem:[#allocation4 + $0x158] sm:$0xff] %vm1369, %v1346
        %1414 = vst.msk [vmem:[#allocation4 + $0x160] sm:$0xff] %vm1369, %v1351
        %1415 = vst.msk [vmem:[#allocation4 + $0x168] sm:$0xff] %vm1369, %v1356
        %1416 = vst.msk [vmem:[#allocation4 + $0x170] sm:$0xff] %vm1369, %v1361
        %1417 = vst.msk [vmem:[#allocation4 + $0x178] sm:$0xff] %vm1369, %v1366
        %v1418 = vld [vmem:[%s3] sm:$0xf]
        %v1419 = vld [vmem:[%s1] sm:$0xff]
        %v1420 = vld [vmem:[%s1 + $0x8] sm:$0xff]
        %v1421 = vld [vmem:[%s1 + $0x10] sm:$0xff]
        %v1422 = vld [vmem:[%s1 + $0x18] sm:$0xff]
        %v1423 = vld [vmem:[%s1 + $0x20] sm:$0xff]
        %v1424 = vld [vmem:[%s1 + $0x28] sm:$0xff]
        %v1425 = vld [vmem:[%s1 + $0x30] sm:$0xff]
        %v1426 = vld [vmem:[%s1 + $0x38] sm:$0xff]
        %v1427 = vld [vmem:[%s1 + $0x40] sm:$0xff]
        %v1428 = vld [vmem:[%s1 + $0x48] sm:$0xff]
        %v1429 = vld [vmem:[%s1 + $0x50] sm:$0xff]
        %v1430 = vld [vmem:[%s1 + $0x58] sm:$0xff]
        %v1432 = vsel %vm369, %v1418, 0
        %1434 = vmatprep.subr.mxu0 0.0
        %1435 = vmatpush1.msra.mxu0 0.0
        %1436 = vmatprep.subr.mxu0 0.0
        %1437 = vmatpush1.msra.mxu0 0.0
        %1438 = vmatprep.subr.mxu0 0.0
        %1439 = vmatpush1.msra.mxu0 0.0
        %1440 = vmatprep.subr.mxu0 0.0
        %1441 = vmatpush1.msra.mxu0 0.0
        %1442 = vmatprep.subr.mxu0 0.0
        %1443 = vmatpush1.msra.mxu0 0.0
        %1444 = vmatprep.subr.mxu0 0.0
        %1445 = vmatpush1.msra.mxu0 0.0
        %1446 = vmatprep.subr.mxu0 0.0
        %1447 = vmatpush1.msra.mxu0 0.0
        %1448 = vmatprep.subr.mxu0 0.0
        %1449 = vmatpush1.msra.mxu0 0.0
        %1450 = vmatprep.subr.mxu0 0.0
        %1451 = vmatpush1.msra.mxu0 0.0
        %1452 = vmatprep.subr.mxu0 0.0
        %1453 = vmatpush1.msra.mxu0 0.0
        %1454 = vmatprep.subr.mxu0 0.0
        %1455 = vmatpush1.msra.mxu0 0.0
        %1456 = vmatprep.subr.mxu0 0.0
        %1457 = vmatpush1.msra.mxu0 0.0
        %1458 = vmatprep.subr.mxu0 %v1429
        %1459 = vmatpush1.msra.mxu0 %v1428
        %1460 = vmatprep.subr.mxu0 %v1426
        %1461 = vmatpush1.msra.mxu0 %v1425
        %1462 = vmatprep.subr.mxu0 %v1423
        %1463 = vmatpush1.msra.mxu0 %v1422
        %1464 = vmatprep.subr.mxu0 %v1420
        %1465 = vmatpush1.msra.mxu0 %v1419
        %1466 = vmatprep.subr.mxu0 0.0
        %1467 = vmatpush2.msra.mxu0 0.0
        %1468 = vmatprep.subr.mxu0 0.0
        %1469 = vmatpush2.msra.mxu0 0.0
        %1470 = vmatprep.subr.mxu0 0.0
        %1471 = vmatpush2.msra.mxu0 0.0
        %1472 = vmatprep.subr.mxu0 0.0
        %1473 = vmatpush2.msra.mxu0 0.0
        %1474 = vmatprep.subr.mxu0 0.0
        %1475 = vmatpush2.msra.mxu0 0.0
        %1476 = vmatprep.subr.mxu0 0.0
        %1477 = vmatpush2.msra.mxu0 0.0
        %1478 = vmatprep.subr.mxu0 0.0
        %1479 = vmatpush2.msra.mxu0 0.0
        %1480 = vmatprep.subr.mxu0 0.0
        %1481 = vmatpush2.msra.mxu0 0.0
        %1482 = vmatprep.subr.mxu0 0.0
        %1483 = vmatpush2.msra.mxu0 0.0
        %1484 = vmatprep.subr.mxu0 0.0
        %1485 = vmatpush2.msra.mxu0 0.0
        %1486 = vmatprep.subr.mxu0 0.0
        %1487 = vmatpush2.msra.mxu0 0.0
        %1488 = vmatprep.subr.mxu0 0.0
        %1489 = vmatpush2.msra.mxu0 0.0
        %1490 = vmatprep.subr.mxu0 0.0
        %1491 = vmatpush2.msra.mxu0 0.0
        %1492 = vmatprep.subr.mxu0 0.0
        %1493 = vmatpush2.msra.mxu0 0.0
        %1494 = vmatprep.subr.mxu0 0.0
        %1495 = vmatpush2.msra.mxu0 0.0
        %1496 = vmatprep.subr.mxu0 0.0
        %1497 = vmatpush2.msra.mxu0 0.0
        %1498 = vmatprep.mubr.f32.mxu0 0.0
        %1499 = vmatmul.mubr.f32.gmra.mxu0 %v1432
        %v1500 = vpop.f32.mrf.mxu0
        %v1501 = vadd.f32 0.0, %v1500
        %v1502 = vpop.f32.mrf.mxu0
        %v1503 = vadd.f32 0.0, %v1502
        %1504 = vdwg.mxu0
        %1505 = vmatprep.subr.mxu0 0.0
        %1506 = vmatpush1.msra.mxu0 0.0
        %1507 = vmatprep.subr.mxu0 0.0
        %1508 = vmatpush1.msra.mxu0 0.0
        %1509 = vmatprep.subr.mxu0 0.0
        %1510 = vmatpush1.msra.mxu0 0.0
        %1511 = vmatprep.subr.mxu0 0.0
        %1512 = vmatpush1.msra.mxu0 0.0
        %1513 = vmatprep.subr.mxu0 0.0
        %1514 = vmatpush1.msra.mxu0 0.0
        %1515 = vmatprep.subr.mxu0 0.0
        %1516 = vmatpush1.msra.mxu0 0.0
        %1517 = vmatprep.subr.mxu0 0.0
        %1518 = vmatpush1.msra.mxu0 0.0
        %1519 = vmatprep.subr.mxu0 0.0
        %1520 = vmatpush1.msra.mxu0 0.0
        %1521 = vmatprep.subr.mxu0 0.0
        %1522 = vmatpush1.msra.mxu0 0.0
        %1523 = vmatprep.subr.mxu0 0.0
        %1524 = vmatpush1.msra.mxu0 0.0
        %1525 = vmatprep.subr.mxu0 0.0
        %1526 = vmatpush1.msra.mxu0 0.0
        %1527 = vmatprep.subr.mxu0 0.0
        %1528 = vmatpush1.msra.mxu0 0.0
        %1529 = vmatprep.subr.mxu0 0.0
        %1530 = vmatpush1.msra.mxu0 %v1430
        %1531 = vmatprep.subr.mxu0 0.0
        %1532 = vmatpush1.msra.mxu0 %v1427
        %1533 = vmatprep.subr.mxu0 0.0
        %1534 = vmatpush1.msra.mxu0 %v1424
        %1535 = vmatprep.subr.mxu0 0.0
        %1536 = vmatpush1.msra.mxu0 %v1421
        %1537 = vmatprep.subr.mxu0 0.0
        %1538 = vmatpush2.msra.mxu0 0.0
        %1539 = vmatprep.subr.mxu0 0.0
        %1540 = vmatpush2.msra.mxu0 0.0
        %1541 = vmatprep.subr.mxu0 0.0
        %1542 = vmatpush2.msra.mxu0 0.0
        %1543 = vmatprep.subr.mxu0 0.0
        %1544 = vmatpush2.msra.mxu0 0.0
        %1545 = vmatprep.subr.mxu0 0.0
        %1546 = vmatpush2.msra.mxu0 0.0
        %1547 = vmatprep.subr.mxu0 0.0
        %1548 = vmatpush2.msra.mxu0 0.0
        %1549 = vmatprep.subr.mxu0 0.0
        %1550 = vmatpush2.msra.mxu0 0.0
        %1551 = vmatprep.subr.mxu0 0.0
        %1552 = vmatpush2.msra.mxu0 0.0
        %1553 = vmatprep.subr.mxu0 0.0
        %1554 = vmatpush2.msra.mxu0 0.0
        %1555 = vmatprep.subr.mxu0 0.0
        %1556 = vmatpush2.msra.mxu0 0.0
        %1557 = vmatprep.subr.mxu0 0.0
        %1558 = vmatpush2.msra.mxu0 0.0
        %1559 = vmatprep.subr.mxu0 0.0
        %1560 = vmatpush2.msra.mxu0 0.0
        %1561 = vmatprep.subr.mxu0 0.0
        %1562 = vmatpush2.msra.mxu0 0.0
        %1563 = vmatprep.subr.mxu0 0.0
        %1564 = vmatpush2.msra.mxu0 0.0
        %1565 = vmatprep.subr.mxu0 0.0
        %1566 = vmatpush2.msra.mxu0 0.0
        %1567 = vmatprep.subr.mxu0 0.0
        %1568 = vmatpush2.msra.mxu0 0.0
        %1569 = vmatprep.mubr.f32.mxu0 0.0
        %1570 = vmatmul.mubr.f32.gmra.mxu0 %v1432
        %v1571 = vpop.f32.mrf.mxu0
        %v1572 = vadd.f32 0.0, %v1571
        %v1573 = vpop.f32.mrf.mxu0
        %1574 = vdwg.mxu0
        %v1577 = vcombine.low %v1501, %v1503
        %1579 = vst [vmem:[#allocation3] sm:$0xff] %v1577
        %1580 = vst [vmem:[#allocation3 + $0x8] sm:$0xf] %v1572
      $region56: #{tpu_custom_call.1} parent=51 // pred_fallthru
        _
      %s1581 = smul.u32 %s20, 128
      %s1582 = sld [smem:[#allocation5]]
      %v1583 = vld [vmem:[%s305] sm:$0xff]
      %v1584 = vld [vmem:[%s305 + $0x8] sm:$0xff]
      %v1585 = vld [vmem:[%s305 + $0x10] sm:$0xff]
      %v1586 = vld [vmem:[%s305 + $0x18] sm:$0xff]
      %v1587 = vld [vmem:[%s305 + $0x20] sm:$0xff]
      %v1588 = vld [vmem:[%s305 + $0x28] sm:$0xff]
      %v1589 = vld [vmem:[%s305 + $0x30] sm:$0xff]
      %v1590 = vld [vmem:[%s305 + $0x38] sm:$0xff]
      %v1591 = vld [vmem:[%s305 + $0x40] sm:$0xff]
      %v1592 = vld [vmem:[%s305 + $0x48] sm:$0xff]
      %v1593 = vld [vmem:[%s305 + $0x50] sm:$0xff]
      %v1594 = vld [vmem:[%s305 + $0x58] sm:$0xff]
      %v1595 = vunpack.c.0.s8 %v1583
      %v1596 = vunpack.c.0.s8 %v1584
      %v1597 = vunpack.c.0.s8 %v1585
      %v1598 = vunpack.c.1.s8 %v1583
      %v1599 = vunpack.c.1.s8 %v1584
      %v1600 = vunpack.c.1.s8 %v1585
      %v1601 = vunpack.c.2.s8 %v1583
      %v1602 = vunpack.c.2.s8 %v1584
      %v1603 = vunpack.c.2.s8 %v1585
      %v1604 = vunpack.c.3.s8 %v1583
      %v1605 = vunpack.c.3.s8 %v1584
      %v1606 = vunpack.c.3.s8 %v1585
      %v1607 = vunpack.c.0.s8 %v1586
      %v1608 = vunpack.c.0.s8 %v1587
      %v1609 = vunpack.c.0.s8 %v1588
      %v1610 = vunpack.c.1.s8 %v1586
      %v1611 = vunpack.c.1.s8 %v1587
      %v1612 = vunpack.c.1.s8 %v1588
      %v1613 = vunpack.c.2.s8 %v1586
      %v1614 = vunpack.c.2.s8 %v1587
      %v1615 = vunpack.c.2.s8 %v1588
      %v1616 = vunpack.c.3.s8 %v1586
      %v1617 = vunpack.c.3.s8 %v1587
      %v1618 = vunpack.c.3.s8 %v1588
      %v1619 = vunpack.c.0.s8 %v1589
      %v1620 = vunpack.c.0.s8 %v1590
      %v1621 = vunpack.c.0.s8 %v1591
      %v1622 = vunpack.c.1.s8 %v1589
      %v1623 = vunpack.c.1.s8 %v1590
      %v1624 = vunpack.c.1.s8 %v1591
      %v1625 = vunpack.c.2.s8 %v1589
      %v1626 = vunpack.c.2.s8 %v1590
      %v1627 = vunpack.c.2.s8 %v1591
      %v1628 = vunpack.c.3.s8 %v1589
      %v1629 = vunpack.c.3.s8 %v1590
      %v1630 = vunpack.c.3.s8 %v1591
      %v1631 = vunpack.c.0.s8 %v1592
      %v1632 = vunpack.c.0.s8 %v1593
      %v1633 = vunpack.c.0.s8 %v1594
      %v1634 = vunpack.c.1.s8 %v1592
      %v1635 = vunpack.c.1.s8 %v1593
      %v1636 = vunpack.c.1.s8 %v1594
      %v1637 = vunpack.c.2.s8 %v1592
      %v1638 = vunpack.c.2.s8 %v1593
      %v1639 = vunpack.c.2.s8 %v1594
      %v1640 = vunpack.c.3.s8 %v1592
      %v1641 = vunpack.c.3.s8 %v1593
      %v1642 = vunpack.c.3.s8 %v1594
      %v1643 = vcvt.s32.f32 %v1595
      %v1644 = vcvt.s32.f32 %v1596
      %v1645 = vcvt.s32.f32 %v1597
      %v1646 = vcvt.s32.f32 %v1598
      %v1647 = vcvt.s32.f32 %v1599
      %v1648 = vcvt.s32.f32 %v1600
      %v1649 = vcvt.s32.f32 %v1601
      %v1650 = vcvt.s32.f32 %v1602
      %v1651 = vcvt.s32.f32 %v1603
      %v1652 = vcvt.s32.f32 %v1604
      %v1653 = vcvt.s32.f32 %v1605
      %v1654 = vcvt.s32.f32 %v1606
      %v1655 = vcvt.s32.f32 %v1607
      %v1656 = vcvt.s32.f32 %v1608
      %v1657 = vcvt.s32.f32 %v1609
      %v1658 = vcvt.s32.f32 %v1610
      %v1659 = vcvt.s32.f32 %v1611
      %v1660 = vcvt.s32.f32 %v1612
      %v1661 = vcvt.s32.f32 %v1613
      %v1662 = vcvt.s32.f32 %v1614
      %v1663 = vcvt.s32.f32 %v1615
      %v1664 = vcvt.s32.f32 %v1616
      %v1665 = vcvt.s32.f32 %v1617
      %v1666 = vcvt.s32.f32 %v1618
      %v1667 = vcvt.s32.f32 %v1619
      %v1668 = vcvt.s32.f32 %v1620
      %v1669 = vcvt.s32.f32 %v1621
      %v1670 = vcvt.s32.f32 %v1622
      %v1671 = vcvt.s32.f32 %v1623
      %v1672 = vcvt.s32.f32 %v1624
      %v1673 = vcvt.s32.f32 %v1625
      %v1674 = vcvt.s32.f32 %v1626
      %v1675 = vcvt.s32.f32 %v1627
      %v1676 = vcvt.s32.f32 %v1628
      %v1677 = vcvt.s32.f32 %v1629
      %v1678 = vcvt.s32.f32 %v1630
      %v1679 = vcvt.s32.f32 %v1631
      %v1680 = vcvt.s32.f32 %v1632
      %v1681 = vcvt.s32.f32 %v1633
      %v1682 = vcvt.s32.f32 %v1634
      %v1683 = vcvt.s32.f32 %v1635
      %v1684 = vcvt.s32.f32 %v1636
      %v1685 = vcvt.s32.f32 %v1637
      %v1686 = vcvt.s32.f32 %v1638
      %v1687 = vcvt.s32.f32 %v1639
      %v1688 = vcvt.s32.f32 %v1640
      %v1689 = vcvt.s32.f32 %v1641
      %v1690 = vcvt.s32.f32 %v1642
      %v1691 = vsub.f32 1.0, %v1643
      %v1692 = vsub.f32 1.0, %v1644
      %v1693 = vsub.f32 1.0, %v1645
      %v1694 = vsub.f32 1.0, %v1646
      %v1695 = vsub.f32 1.0, %v1647
      %v1696 = vsub.f32 1.0, %v1648
      %v1697 = vsub.f32 1.0, %v1649
      %v1698 = vsub.f32 1.0, %v1650
      %v1699 = vsub.f32 1.0, %v1651
      %v1700 = vsub.f32 1.0, %v1652
      %v1701 = vsub.f32 1.0, %v1653
      %v1702 = vsub.f32 1.0, %v1654
      %v1703 = vsub.f32 1.0, %v1655
      %v1704 = vsub.f32 1.0, %v1656
      %v1705 = vsub.f32 1.0, %v1657
      %v1706 = vsub.f32 1.0, %v1658
      %v1707 = vsub.f32 1.0, %v1659
      %v1708 = vsub.f32 1.0, %v1660
      %v1709 = vsub.f32 1.0, %v1661
      %v1710 = vsub.f32 1.0, %v1662
      %v1711 = vsub.f32 1.0, %v1663
      %v1712 = vsub.f32 1.0, %v1664
      %v1713 = vsub.f32 1.0, %v1665
      %v1714 = vsub.f32 1.0, %v1666
      %v1715 = vsub.f32 1.0, %v1667
      %v1716 = vsub.f32 1.0, %v1668
      %v1717 = vsub.f32 1.0, %v1669
      %v1718 = vsub.f32 1.0, %v1670
      %v1719 = vsub.f32 1.0, %v1671
      %v1720 = vsub.f32 1.0, %v1672
      %v1721 = vsub.f32 1.0, %v1673
      %v1722 = vsub.f32 1.0, %v1674
      %v1723 = vsub.f32 1.0, %v1675
      %v1724 = vsub.f32 1.0, %v1676
      %v1725 = vsub.f32 1.0, %v1677
      %v1726 = vsub.f32 1.0, %v1678
      %v1727 = vsub.f32 1.0, %v1679
      %v1728 = vsub.f32 1.0, %v1680
      %v1729 = vsub.f32 1.0, %v1681
      %v1730 = vsub.f32 1.0, %v1682
      %v1731 = vsub.f32 1.0, %v1683
      %v1732 = vsub.f32 1.0, %v1684
      %v1733 = vsub.f32 1.0, %v1685
      %v1734 = vsub.f32 1.0, %v1686
      %v1735 = vsub.f32 1.0, %v1687
      %v1736 = vsub.f32 1.0, %v1688
      %v1737 = vsub.f32 1.0, %v1689
      %v1738 = vsub.f32 1.0, %v1690
      %v1739 = vmul.f32 %v1691, -1e+30
      %v1740 = vmul.f32 %v1692, -1e+30
      %v1741 = vmul.f32 %v1693, -1e+30
      %v1742 = vmul.f32 %v1694, -1e+30
      %v1743 = vmul.f32 %v1695, -1e+30
      %v1744 = vmul.f32 %v1696, -1e+30
      %v1745 = vmul.f32 %v1697, -1e+30
      %v1746 = vmul.f32 %v1698, -1e+30
      %v1747 = vmul.f32 %v1699, -1e+30
      %v1748 = vmul.f32 %v1700, -1e+30
      %v1749 = vmul.f32 %v1701, -1e+30
      %v1750 = vmul.f32 %v1702, -1e+30
      %v1751 = vmul.f32 %v1703, -1e+30
      %v1752 = vmul.f32 %v1704, -1e+30
      %v1753 = vmul.f32 %v1705, -1e+30
      %v1754 = vmul.f32 %v1706, -1e+30
      %v1755 = vmul.f32 %v1707, -1e+30
      %v1756 = vmul.f32 %v1708, -1e+30
      %v1757 = vmul.f32 %v1709, -1e+30
      %v1758 = vmul.f32 %v1710, -1e+30
      %v1759 = vmul.f32 %v1711, -1e+30
      %v1760 = vmul.f32 %v1712, -1e+30
      %v1761 = vmul.f32 %v1713, -1e+30
      %v1762 = vmul.f32 %v1714, -1e+30
      %v1763 = vmul.f32 %v1715, -1e+30
      %v1764 = vmul.f32 %v1716, -1e+30
      %v1765 = vmul.f32 %v1717, -1e+30
      %v1766 = vmul.f32 %v1718, -1e+30
      %v1767 = vmul.f32 %v1719, -1e+30
      %v1768 = vmul.f32 %v1720, -1e+30
      %v1769 = vmul.f32 %v1721, -1e+30
      %v1770 = vmul.f32 %v1722, -1e+30
      %v1771 = vmul.f32 %v1723, -1e+30
      %v1772 = vmul.f32 %v1724, -1e+30
      %v1773 = vmul.f32 %v1725, -1e+30
      %v1774 = vmul.f32 %v1726, -1e+30
      %v1775 = vmul.f32 %v1727, -1e+30
      %v1776 = vmul.f32 %v1728, -1e+30
      %v1777 = vmul.f32 %v1729, -1e+30
      %v1778 = vmul.f32 %v1730, -1e+30
      %v1779 = vmul.f32 %v1731, -1e+30
      %v1780 = vmul.f32 %v1732, -1e+30
      %v1781 = vmul.f32 %v1733, -1e+30
      %v1782 = vmul.f32 %v1734, -1e+30
      %v1783 = vmul.f32 %v1735, -1e+30
      %v1784 = vmul.f32 %v1736, -1e+30
      %v1785 = vmul.f32 %v1737, -1e+30
      %v1786 = vmul.f32 %v1738, -1e+30
      %s1787 = scalar_lea.vmem [#allocation4], %s1581
      %v1788 = vld [vmem:[%s1787] sm:$0xff]
      %v1789 = vld [vmem:[%s1787 + $0x8] sm:$0xff]
      %v1790 = vld [vmem:[%s1787 + $0x10] sm:$0xff]
      %v1791 = vld [vmem:[%s1787 + $0x18] sm:$0xff]
      %v1792 = vld [vmem:[%s1787 + $0x20] sm:$0xff]
      %v1793 = vld [vmem:[%s1787 + $0x28] sm:$0xff]
      %v1794 = vld [vmem:[%s1787 + $0x30] sm:$0xff]
      %v1795 = vld [vmem:[%s1787 + $0x38] sm:$0xff]
      %v1796 = vld [vmem:[%s1787 + $0x40] sm:$0xff]
      %v1797 = vld [vmem:[%s1787 + $0x48] sm:$0xff]
      %v1798 = vld [vmem:[%s1787 + $0x50] sm:$0xff]
      %v1799 = vld [vmem:[%s1787 + $0x58] sm:$0xff]
      %v1800 = vld [vmem:[%s1787 + $0x60] sm:$0xff]
      %v1801 = vld [vmem:[%s1787 + $0x68] sm:$0xff]
      %v1802 = vld [vmem:[%s1787 + $0x70] sm:$0xff]
      %v1803 = vld [vmem:[%s1787 + $0x78] sm:$0xff]
      %v1804 = vld [vmem:[#allocation3] sm:$0xff]
      %v1805 = vld [vmem:[#allocation3 + $0x8] sm:$0xf]
      %v1806 = vld [vmem:[#allocation2] sm:$0xff]
      %v1807 = vld [vmem:[#allocation2 + $0x8] sm:$0xff]
      %v1808 = vld [vmem:[#allocation2 + $0x10] sm:$0xff]
      %v1809 = vld [vmem:[#allocation2 + $0x18] sm:$0xff]
      %v1810 = vld [vmem:[#allocation2 + $0x20] sm:$0xff]
      %v1811 = vld [vmem:[#allocation2 + $0x28] sm:$0xff]
      %v1812 = vld [vmem:[#allocation2 + $0x30] sm:$0xff]
      %v1813 = vld [vmem:[#allocation2 + $0x38] sm:$0xff]
      %v1814 = vld [vmem:[#allocation2 + $0x40] sm:$0xff]
      %v1815 = vld [vmem:[#allocation2 + $0x48] sm:$0xff]
      %v1816 = vld [vmem:[#allocation2 + $0x50] sm:$0xff]
      %v1817 = vld [vmem:[#allocation2 + $0x58] sm:$0xff]
      %v1818 = vld [vmem:[#allocation2 + $0x60] sm:$0xff]
      %v1819 = vld [vmem:[#allocation2 + $0x68] sm:$0xff]
      %v1820 = vld [vmem:[#allocation2 + $0x70] sm:$0xff]
      %v1821 = vld [vmem:[#allocation2 + $0x78] sm:$0xff]
      %v1822 = vld [vmem:[#allocation2 + $0x80] sm:$0xff]
      %v1823 = vld [vmem:[#allocation2 + $0x88] sm:$0xff]
      %v1824 = vld [vmem:[#allocation2 + $0x90] sm:$0xff]
      %v1825 = vld [vmem:[#allocation2 + $0x98] sm:$0xff]
      %v1826 = vld [vmem:[#allocation2 + $0xa0] sm:$0xff]
      %v1827 = vld [vmem:[#allocation2 + $0xa8] sm:$0xff]
      %v1828 = vld [vmem:[#allocation2 + $0xb0] sm:$0xff]
      %v1829 = vld [vmem:[#allocation2 + $0xb8] sm:$0xff]
      %v1830 = vld [vmem:[#allocation2 + $0xc0] sm:$0xff]
      %v1831 = vld [vmem:[#allocation2 + $0xc8] sm:$0xff]
      %v1832 = vld [vmem:[#allocation2 + $0xd0] sm:$0xff]
      %v1833 = vld [vmem:[#allocation2 + $0xd8] sm:$0xff]
      %v1834 = vld [vmem:[#allocation2 + $0xe0] sm:$0xff]
      %v1835 = vld [vmem:[#allocation2 + $0xe8] sm:$0xff]
      %v1836 = vld [vmem:[#allocation2 + $0xf0] sm:$0xff]
      %v1837 = vld [vmem:[#allocation2 + $0xf8] sm:$0xff]
      %v1838 = vld [vmem:[#allocation2 + $0x100] sm:$0xff]
      %v1839 = vld [vmem:[#allocation2 + $0x108] sm:$0xff]
      %v1840 = vld [vmem:[#allocation2 + $0x110] sm:$0xff]
      %v1841 = vld [vmem:[#allocation2 + $0x118] sm:$0xff]
      %v1842 = vld [vmem:[#allocation2 + $0x120] sm:$0xff]
      %v1843 = vld [vmem:[#allocation2 + $0x128] sm:$0xff]
      %v1844 = vld [vmem:[#allocation2 + $0x130] sm:$0xff]
      %v1845 = vld [vmem:[#allocation2 + $0x138] sm:$0xff]
      %v1846 = vld [vmem:[#allocation2 + $0x140] sm:$0xff]
      %v1847 = vld [vmem:[#allocation2 + $0x148] sm:$0xff]
      %v1848 = vld [vmem:[#allocation2 + $0x150] sm:$0xff]
      %v1849 = vld [vmem:[#allocation2 + $0x158] sm:$0xff]
      %v1850 = vld [vmem:[#allocation2 + $0x160] sm:$0xff]
      %v1851 = vld [vmem:[#allocation2 + $0x168] sm:$0xff]
      %v1852 = vld [vmem:[#allocation2 + $0x170] sm:$0xff]
      %v1853 = vld [vmem:[#allocation2 + $0x178] sm:$0xff]
      %1855 = vset.pattern.permute.xlu0 0
      %1856 = vperm.xlu0 %1855, %v1788
      %v1857 = vpop.permute.xlu0 %1856
      %1860 = vset.pattern.permute.xlu0 0
      %1861 = vperm.xlu0 %1860, %v1789
      %v1862 = vpop.permute.xlu0 %1861
      %1865 = vset.pattern.permute.xlu0 0
      %1866 = vperm.xlu0 %1865, %v1790
      %v1867 = vpop.permute.xlu0 %1866
      %1870 = vset.pattern.permute.xlu0 0
      %1871 = vperm.xlu0 %1870, %v1791
      %v1872 = vpop.permute.xlu0 %1871
      %1875 = vset.pattern.permute.xlu0 0
      %1876 = vperm.xlu0 %1875, %v1792
      %v1877 = vpop.permute.xlu0 %1876
      %1880 = vset.pattern.permute.xlu0 0
      %1881 = vperm.xlu0 %1880, %v1793
      %v1882 = vpop.permute.xlu0 %1881
      %1885 = vset.pattern.permute.xlu0 0
      %1886 = vperm.xlu0 %1885, %v1794
      %v1887 = vpop.permute.xlu0 %1886
      %1890 = vset.pattern.permute.xlu0 0
      %1891 = vperm.xlu0 %1890, %v1795
      %v1892 = vpop.permute.xlu0 %1891
      %1895 = vset.pattern.permute.xlu0 0
      %1896 = vperm.xlu0 %1895, %v1796
      %v1897 = vpop.permute.xlu0 %1896
      %1900 = vset.pattern.permute.xlu0 0
      %1901 = vperm.xlu0 %1900, %v1797
      %v1902 = vpop.permute.xlu0 %1901
      %1905 = vset.pattern.permute.xlu0 0
      %1906 = vperm.xlu0 %1905, %v1798
      %v1907 = vpop.permute.xlu0 %1906
      %1910 = vset.pattern.permute.xlu0 0
      %1911 = vperm.xlu0 %1910, %v1799
      %v1912 = vpop.permute.xlu0 %1911
      %1915 = vset.pattern.permute.xlu0 0
      %1916 = vperm.xlu0 %1915, %v1800
      %v1917 = vpop.permute.xlu0 %1916
      %1920 = vset.pattern.permute.xlu0 0
      %1921 = vperm.xlu0 %1920, %v1801
      %v1922 = vpop.permute.xlu0 %1921
      %1925 = vset.pattern.permute.xlu0 0
      %1926 = vperm.xlu0 %1925, %v1802
      %v1927 = vpop.permute.xlu0 %1926
      %1930 = vset.pattern.permute.xlu0 0
      %1931 = vperm.xlu0 %1930, %v1803
      %v1932 = vpop.permute.xlu0 %1931
      %v1936 = vlaneseq
      %v1937 = vshrl.u32 %v1936, 7
      %v1938 = vsub.s32 0, %v1937
      %v1939 = vrot.slane %v1804, %v1938
      %v1940 = vlaneseq
      %v1941 = vshrl.u32 %v1940, 7
      %v1942 = vsub.s32 4, %v1941
      %v1943 = vrot.slane %v1804, %v1942
      %v1944 = vlaneseq
      %v1945 = vshrl.u32 %v1944, 7
      %v1946 = vsub.s32 0, %v1945
      %v1947 = vrot.slane %v1805, %v1946
      %v1951 = vlaneseq
      %v1952 = vshrl.u32 %v1951, 7
      %v1953 = vsub.s32 0, %v1952
      %v1954 = vrot.slane %v1939, %v1953
      %v1955 = vlaneseq
      %v1956 = vshrl.u32 %v1955, 7
      %v1957 = vsub.s32 0, %v1956
      %v1958 = vrot.slane %v1943, %v1957
      %v1959 = vlaneseq
      %v1960 = vshrl.u32 %v1959, 7
      %v1961 = vsub.s32 0, %v1960
      %v1962 = vrot.slane %v1947, %v1961
      %v1963 = vadd.f32 %v1857, %v1954
      %v1964 = vadd.f32 %v1857, %v1958
      %v1965 = vadd.f32 %v1857, %v1962
      %v1966 = vadd.f32 %v1862, %v1954
      %v1967 = vadd.f32 %v1862, %v1958
      %v1968 = vadd.f32 %v1862, %v1962
      %v1969 = vadd.f32 %v1867, %v1954
      %v1970 = vadd.f32 %v1867, %v1958
      %v1971 = vadd.f32 %v1867, %v1962
      %v1972 = vadd.f32 %v1872, %v1954
      %v1973 = vadd.f32 %v1872, %v1958
      %v1974 = vadd.f32 %v1872, %v1962
      %v1975 = vadd.f32 %v1877, %v1954
      %v1976 = vadd.f32 %v1877, %v1958
      %v1977 = vadd.f32 %v1877, %v1962
      %v1978 = vadd.f32 %v1882, %v1954
      %v1979 = vadd.f32 %v1882, %v1958
      %v1980 = vadd.f32 %v1882, %v1962
      %v1981 = vadd.f32 %v1887, %v1954
      %v1982 = vadd.f32 %v1887, %v1958
      %v1983 = vadd.f32 %v1887, %v1962
      %v1984 = vadd.f32 %v1892, %v1954
      %v1985 = vadd.f32 %v1892, %v1958
      %v1986 = vadd.f32 %v1892, %v1962
      %v1987 = vadd.f32 %v1897, %v1954
      %v1988 = vadd.f32 %v1897, %v1958
      %v1989 = vadd.f32 %v1897, %v1962
      %v1990 = vadd.f32 %v1902, %v1954
      %v1991 = vadd.f32 %v1902, %v1958
      %v1992 = vadd.f32 %v1902, %v1962
      %v1993 = vadd.f32 %v1907, %v1954
      %v1994 = vadd.f32 %v1907, %v1958
      %v1995 = vadd.f32 %v1907, %v1962
      %v1996 = vadd.f32 %v1912, %v1954
      %v1997 = vadd.f32 %v1912, %v1958
      %v1998 = vadd.f32 %v1912, %v1962
      %v1999 = vadd.f32 %v1917, %v1954
      %v2000 = vadd.f32 %v1917, %v1958
      %v2001 = vadd.f32 %v1917, %v1962
      %v2002 = vadd.f32 %v1922, %v1954
      %v2003 = vadd.f32 %v1922, %v1958
      %v2004 = vadd.f32 %v1922, %v1962
      %v2005 = vadd.f32 %v1927, %v1954
      %v2006 = vadd.f32 %v1927, %v1958
      %v2007 = vadd.f32 %v1927, %v1962
      %v2008 = vadd.f32 %v1932, %v1954
      %v2009 = vadd.f32 %v1932, %v1958
      %v2010 = vadd.f32 %v1932, %v1962
      %vm2011 = vcmp.ge.f32.partialorder %v1963, 0.0
      %vm2012 = vcmp.ge.f32.partialorder %v1964, 0.0
      %vm2013 = vcmp.ge.f32.partialorder %v1965, 0.0
      %vm2014 = vcmp.ge.f32.partialorder %v1966, 0.0
      %vm2015 = vcmp.ge.f32.partialorder %v1967, 0.0
      %vm2016 = vcmp.ge.f32.partialorder %v1968, 0.0
      %vm2017 = vcmp.ge.f32.partialorder %v1969, 0.0
      %vm2018 = vcmp.ge.f32.partialorder %v1970, 0.0
      %vm2019 = vcmp.ge.f32.partialorder %v1971, 0.0
      %vm2020 = vcmp.ge.f32.partialorder %v1972, 0.0
      %vm2021 = vcmp.ge.f32.partialorder %v1973, 0.0
      %vm2022 = vcmp.ge.f32.partialorder %v1974, 0.0
      %vm2023 = vcmp.ge.f32.partialorder %v1975, 0.0
      %vm2024 = vcmp.ge.f32.partialorder %v1976, 0.0
      %vm2025 = vcmp.ge.f32.partialorder %v1977, 0.0
      %vm2026 = vcmp.ge.f32.partialorder %v1978, 0.0
      %vm2027 = vcmp.ge.f32.partialorder %v1979, 0.0
      %vm2028 = vcmp.ge.f32.partialorder %v1980, 0.0
      %vm2029 = vcmp.ge.f32.partialorder %v1981, 0.0
      %vm2030 = vcmp.ge.f32.partialorder %v1982, 0.0
      %vm2031 = vcmp.ge.f32.partialorder %v1983, 0.0
      %vm2032 = vcmp.ge.f32.partialorder %v1984, 0.0
      %vm2033 = vcmp.ge.f32.partialorder %v1985, 0.0
      %vm2034 = vcmp.ge.f32.partialorder %v1986, 0.0
      %vm2035 = vcmp.ge.f32.partialorder %v1987, 0.0
      %vm2036 = vcmp.ge.f32.partialorder %v1988, 0.0
      %vm2037 = vcmp.ge.f32.partialorder %v1989, 0.0
      %vm2038 = vcmp.ge.f32.partialorder %v1990, 0.0
      %vm2039 = vcmp.ge.f32.partialorder %v1991, 0.0
      %vm2040 = vcmp.ge.f32.partialorder %v1992, 0.0
      %vm2041 = vcmp.ge.f32.partialorder %v1993, 0.0
      %vm2042 = vcmp.ge.f32.partialorder %v1994, 0.0
      %vm2043 = vcmp.ge.f32.partialorder %v1995, 0.0
      %vm2044 = vcmp.ge.f32.partialorder %v1996, 0.0
      %vm2045 = vcmp.ge.f32.partialorder %v1997, 0.0
      %vm2046 = vcmp.ge.f32.partialorder %v1998, 0.0
      %vm2047 = vcmp.ge.f32.partialorder %v1999, 0.0
      %vm2048 = vcmp.ge.f32.partialorder %v2000, 0.0
      %vm2049 = vcmp.ge.f32.partialorder %v2001, 0.0
      %vm2050 = vcmp.ge.f32.partialorder %v2002, 0.0
      %vm2051 = vcmp.ge.f32.partialorder %v2003, 0.0
      %vm2052 = vcmp.ge.f32.partialorder %v2004, 0.0
      %vm2053 = vcmp.ge.f32.partialorder %v2005, 0.0
      %vm2054 = vcmp.ge.f32.partialorder %v2006, 0.0
      %vm2055 = vcmp.ge.f32.partialorder %v2007, 0.0
      %vm2056 = vcmp.ge.f32.partialorder %v2008, 0.0
      %vm2057 = vcmp.ge.f32.partialorder %v2009, 0.0
      %vm2058 = vcmp.ge.f32.partialorder %v2010, 0.0
      %v2059 = vmul.f32 %v1963, 0.2
      %v2060 = vmul.f32 %v1964, 0.2
      %v2061 = vmul.f32 %v1965, 0.2
      %v2062 = vmul.f32 %v1966, 0.2
      %v2063 = vmul.f32 %v1967, 0.2
      %v2064 = vmul.f32 %v1968, 0.2
      %v2065 = vmul.f32 %v1969, 0.2
      %v2066 = vmul.f32 %v1970, 0.2
      %v2067 = vmul.f32 %v1971, 0.2
      %v2068 = vmul.f32 %v1972, 0.2
      %v2069 = vmul.f32 %v1973, 0.2
      %v2070 = vmul.f32 %v1974, 0.2
      %v2071 = vmul.f32 %v1975, 0.2
      %v2072 = vmul.f32 %v1976, 0.2
      %v2073 = vmul.f32 %v1977, 0.2
      %v2074 = vmul.f32 %v1978, 0.2
      %v2075 = vmul.f32 %v1979, 0.2
      %v2076 = vmul.f32 %v1980, 0.2
      %v2077 = vmul.f32 %v1981, 0.2
      %v2078 = vmul.f32 %v1982, 0.2
      %v2079 = vmul.f32 %v1983, 0.2
      %v2080 = vmul.f32 %v1984, 0.2
      %v2081 = vmul.f32 %v1985, 0.2
      %v2082 = vmul.f32 %v1986, 0.2
      %v2083 = vmul.f32 %v1987, 0.2
      %v2084 = vmul.f32 %v1988, 0.2
      %v2085 = vmul.f32 %v1989, 0.2
      %v2086 = vmul.f32 %v1990, 0.2
      %v2087 = vmul.f32 %v1991, 0.2
      %v2088 = vmul.f32 %v1992, 0.2
      %v2089 = vmul.f32 %v1993, 0.2
      %v2090 = vmul.f32 %v1994, 0.2
      %v2091 = vmul.f32 %v1995, 0.2
      %v2092 = vmul.f32 %v1996, 0.2
      %v2093 = vmul.f32 %v1997, 0.2
      %v2094 = vmul.f32 %v1998, 0.2
      %v2095 = vmul.f32 %v1999, 0.2
      %v2096 = vmul.f32 %v2000, 0.2
      %v2097 = vmul.f32 %v2001, 0.2
      %v2098 = vmul.f32 %v2002, 0.2
      %v2099 = vmul.f32 %v2003, 0.2
      %v2100 = vmul.f32 %v2004, 0.2
      %v2101 = vmul.f32 %v2005, 0.2
      %v2102 = vmul.f32 %v2006, 0.2
      %v2103 = vmul.f32 %v2007, 0.2
      %v2104 = vmul.f32 %v2008, 0.2
      %v2105 = vmul.f32 %v2009, 0.2
      %v2106 = vmul.f32 %v2010, 0.2
      %v2107 = vsel %vm2011, %v1963, %v2059
      %v2108 = vsel %vm2012, %v1964, %v2060
      %v2109 = vsel %vm2013, %v1965, %v2061
      %v2110 = vsel %vm2014, %v1966, %v2062
      %v2111 = vsel %vm2015, %v1967, %v2063
      %v2112 = vsel %vm2016, %v1968, %v2064
      %v2113 = vsel %vm2017, %v1969, %v2065
      %v2114 = vsel %vm2018, %v1970, %v2066
      %v2115 = vsel %vm2019, %v1971, %v2067
      %v2116 = vsel %vm2020, %v1972, %v2068
      %v2117 = vsel %vm2021, %v1973, %v2069
      %v2118 = vsel %vm2022, %v1974, %v2070
      %v2119 = vsel %vm2023, %v1975, %v2071
      %v2120 = vsel %vm2024, %v1976, %v2072
      %v2121 = vsel %vm2025, %v1977, %v2073
      %v2122 = vsel %vm2026, %v1978, %v2074
      %v2123 = vsel %vm2027, %v1979, %v2075
      %v2124 = vsel %vm2028, %v1980, %v2076
      %v2125 = vsel %vm2029, %v1981, %v2077
      %v2126 = vsel %vm2030, %v1982, %v2078
      %v2127 = vsel %vm2031, %v1983, %v2079
      %v2128 = vsel %vm2032, %v1984, %v2080
      %v2129 = vsel %vm2033, %v1985, %v2081
      %v2130 = vsel %vm2034, %v1986, %v2082
      %v2131 = vsel %vm2035, %v1987, %v2083
      %v2132 = vsel %vm2036, %v1988, %v2084
      %v2133 = vsel %vm2037, %v1989, %v2085
      %v2134 = vsel %vm2038, %v1990, %v2086
      %v2135 = vsel %vm2039, %v1991, %v2087
      %v2136 = vsel %vm2040, %v1992, %v2088
      %v2137 = vsel %vm2041, %v1993, %v2089
      %v2138 = vsel %vm2042, %v1994, %v2090
      %v2139 = vsel %vm2043, %v1995, %v2091
      %v2140 = vsel %vm2044, %v1996, %v2092
      %v2141 = vsel %vm2045, %v1997, %v2093
      %v2142 = vsel %vm2046, %v1998, %v2094
      %v2143 = vsel %vm2047, %v1999, %v2095
      %v2144 = vsel %vm2048, %v2000, %v2096
      %v2145 = vsel %vm2049, %v2001, %v2097
      %v2146 = vsel %vm2050, %v2002, %v2098
      %v2147 = vsel %vm2051, %v2003, %v2099
      %v2148 = vsel %vm2052, %v2004, %v2100
      %v2149 = vsel %vm2053, %v2005, %v2101
      %v2150 = vsel %vm2054, %v2006, %v2102
      %v2151 = vsel %vm2055, %v2007, %v2103
      %v2152 = vsel %vm2056, %v2008, %v2104
      %v2153 = vsel %vm2057, %v2009, %v2105
      %v2154 = vsel %vm2058, %v2010, %v2106
      %v2155 = vadd.f32 %v2107, %v1739
      %v2156 = vadd.f32 %v2108, %v1740
      %v2157 = vadd.f32 %v2109, %v1741
      %v2158 = vadd.f32 %v2110, %v1742
      %v2159 = vadd.f32 %v2111, %v1743
      %v2160 = vadd.f32 %v2112, %v1744
      %v2161 = vadd.f32 %v2113, %v1745
      %v2162 = vadd.f32 %v2114, %v1746
      %v2163 = vadd.f32 %v2115, %v1747
      %v2164 = vadd.f32 %v2116, %v1748
      %v2165 = vadd.f32 %v2117, %v1749
      %v2166 = vadd.f32 %v2118, %v1750
      %v2167 = vadd.f32 %v2119, %v1751
      %v2168 = vadd.f32 %v2120, %v1752
      %v2169 = vadd.f32 %v2121, %v1753
      %v2170 = vadd.f32 %v2122, %v1754
      %v2171 = vadd.f32 %v2123, %v1755
      %v2172 = vadd.f32 %v2124, %v1756
      %v2173 = vadd.f32 %v2125, %v1757
      %v2174 = vadd.f32 %v2126, %v1758
      %v2175 = vadd.f32 %v2127, %v1759
      %v2176 = vadd.f32 %v2128, %v1760
      %v2177 = vadd.f32 %v2129, %v1761
      %v2178 = vadd.f32 %v2130, %v1762
      %v2179 = vadd.f32 %v2131, %v1763
      %v2180 = vadd.f32 %v2132, %v1764
      %v2181 = vadd.f32 %v2133, %v1765
      %v2182 = vadd.f32 %v2134, %v1766
      %v2183 = vadd.f32 %v2135, %v1767
      %v2184 = vadd.f32 %v2136, %v1768
      %v2185 = vadd.f32 %v2137, %v1769
      %v2186 = vadd.f32 %v2138, %v1770
      %v2187 = vadd.f32 %v2139, %v1771
      %v2188 = vadd.f32 %v2140, %v1772
      %v2189 = vadd.f32 %v2141, %v1773
      %v2190 = vadd.f32 %v2142, %v1774
      %v2191 = vadd.f32 %v2143, %v1775
      %v2192 = vadd.f32 %v2144, %v1776
      %v2193 = vadd.f32 %v2145, %v1777
      %v2194 = vadd.f32 %v2146, %v1778
      %v2195 = vadd.f32 %v2147, %v1779
      %v2196 = vadd.f32 %v2148, %v1780
      %v2197 = vadd.f32 %v2149, %v1781
      %v2198 = vadd.f32 %v2150, %v1782
      %v2199 = vadd.f32 %v2151, %v1783
      %v2200 = vadd.f32 %v2152, %v1784
      %v2201 = vadd.f32 %v2153, %v1785
      %v2202 = vadd.f32 %v2154, %v1786
      %v2203 = vmax.f32 %v2155, %v2156
      %v2204 = vmax.f32 %v2203, %v2157
      %2205 = vmax.xlane.f32.xlu0 %v2204
      %v2206 = vpop.xlane.xlu0 %2205
      %v2207 = vmax.f32 %v2158, %v2159
      %v2208 = vmax.f32 %v2207, %v2160
      %2209 = vmax.xlane.f32.xlu0 %v2208
      %v2210 = vpop.xlane.xlu0 %2209
      %v2211 = vmax.f32 %v2161, %v2162
      %v2212 = vmax.f32 %v2211, %v2163
      %2213 = vmax.xlane.f32.xlu0 %v2212
      %v2214 = vpop.xlane.xlu0 %2213
      %v2215 = vmax.f32 %v2164, %v2165
      %v2216 = vmax.f32 %v2215, %v2166
      %2217 = vmax.xlane.f32.xlu0 %v2216
      %v2218 = vpop.xlane.xlu0 %2217
      %v2219 = vmax.f32 %v2167, %v2168
      %v2220 = vmax.f32 %v2219, %v2169
      %2221 = vmax.xlane.f32.xlu0 %v2220
      %v2222 = vpop.xlane.xlu0 %2221
      %v2223 = vmax.f32 %v2170, %v2171
      %v2224 = vmax.f32 %v2223, %v2172
      %2225 = vmax.xlane.f32.xlu0 %v2224
      %v2226 = vpop.xlane.xlu0 %2225
      %v2227 = vmax.f32 %v2173, %v2174
      %v2228 = vmax.f32 %v2227, %v2175
      %2229 = vmax.xlane.f32.xlu0 %v2228
      %v2230 = vpop.xlane.xlu0 %2229
      %v2231 = vmax.f32 %v2176, %v2177
      %v2232 = vmax.f32 %v2231, %v2178
      %2233 = vmax.xlane.f32.xlu0 %v2232
      %v2234 = vpop.xlane.xlu0 %2233
      %v2235 = vmax.f32 %v2179, %v2180
      %v2236 = vmax.f32 %v2235, %v2181
      %2237 = vmax.xlane.f32.xlu0 %v2236
      %v2238 = vpop.xlane.xlu0 %2237
      %v2239 = vmax.f32 %v2182, %v2183
      %v2240 = vmax.f32 %v2239, %v2184
      %2241 = vmax.xlane.f32.xlu0 %v2240
      %v2242 = vpop.xlane.xlu0 %2241
      %v2243 = vmax.f32 %v2185, %v2186
      %v2244 = vmax.f32 %v2243, %v2187
      %2245 = vmax.xlane.f32.xlu0 %v2244
      %v2246 = vpop.xlane.xlu0 %2245
      %v2247 = vmax.f32 %v2188, %v2189
      %v2248 = vmax.f32 %v2247, %v2190
      %2249 = vmax.xlane.f32.xlu0 %v2248
      %v2250 = vpop.xlane.xlu0 %2249
      %v2251 = vmax.f32 %v2191, %v2192
      %v2252 = vmax.f32 %v2251, %v2193
      %2253 = vmax.xlane.f32.xlu0 %v2252
      %v2254 = vpop.xlane.xlu0 %2253
      %v2255 = vmax.f32 %v2194, %v2195
      %v2256 = vmax.f32 %v2255, %v2196
      %2257 = vmax.xlane.f32.xlu0 %v2256
      %v2258 = vpop.xlane.xlu0 %2257
      %v2259 = vmax.f32 %v2197, %v2198
      %v2260 = vmax.f32 %v2259, %v2199
      %2261 = vmax.xlane.f32.xlu0 %v2260
      %v2262 = vpop.xlane.xlu0 %2261
      %v2263 = vmax.f32 %v2200, %v2201
      %v2264 = vmax.f32 %v2263, %v2202
      %2265 = vmax.xlane.f32.xlu0 %v2264
      %v2266 = vpop.xlane.xlu0 %2265
      %v2267 = vsub.f32 %v2155, %v2206
      %v2268 = vsub.f32 %v2156, %v2206
      %v2269 = vsub.f32 %v2157, %v2206
      %v2270 = vsub.f32 %v2158, %v2210
      %v2271 = vsub.f32 %v2159, %v2210
      %v2272 = vsub.f32 %v2160, %v2210
      %v2273 = vsub.f32 %v2161, %v2214
      %v2274 = vsub.f32 %v2162, %v2214
      %v2275 = vsub.f32 %v2163, %v2214
      %v2276 = vsub.f32 %v2164, %v2218
      %v2277 = vsub.f32 %v2165, %v2218
      %v2278 = vsub.f32 %v2166, %v2218
      %v2279 = vsub.f32 %v2167, %v2222
      %v2280 = vsub.f32 %v2168, %v2222
      %v2281 = vsub.f32 %v2169, %v2222
      %v2282 = vsub.f32 %v2170, %v2226
      %v2283 = vsub.f32 %v2171, %v2226
      %v2284 = vsub.f32 %v2172, %v2226
      %v2285 = vsub.f32 %v2173, %v2230
      %v2286 = vsub.f32 %v2174, %v2230
      %v2287 = vsub.f32 %v2175, %v2230
      %v2288 = vsub.f32 %v2176, %v2234
      %v2289 = vsub.f32 %v2177, %v2234
      %v2290 = vsub.f32 %v2178, %v2234
      %v2291 = vsub.f32 %v2179, %v2238
      %v2292 = vsub.f32 %v2180, %v2238
      %v2293 = vsub.f32 %v2181, %v2238
      %v2294 = vsub.f32 %v2182, %v2242
      %v2295 = vsub.f32 %v2183, %v2242
      %v2296 = vsub.f32 %v2184, %v2242
      %v2297 = vsub.f32 %v2185, %v2246
      %v2298 = vsub.f32 %v2186, %v2246
      %v2299 = vsub.f32 %v2187, %v2246
      %v2300 = vsub.f32 %v2188, %v2250
      %v2301 = vsub.f32 %v2189, %v2250
      %v2302 = vsub.f32 %v2190, %v2250
      %v2303 = vsub.f32 %v2191, %v2254
      %v2304 = vsub.f32 %v2192, %v2254
      %v2305 = vsub.f32 %v2193, %v2254
      %v2306 = vsub.f32 %v2194, %v2258
      %v2307 = vsub.f32 %v2195, %v2258
      %v2308 = vsub.f32 %v2196, %v2258
      %v2309 = vsub.f32 %v2197, %v2262
      %v2310 = vsub.f32 %v2198, %v2262
      %v2311 = vsub.f32 %v2199, %v2262
      %v2312 = vsub.f32 %v2200, %v2266
      %v2313 = vsub.f32 %v2201, %v2266
      %v2314 = vsub.f32 %v2202, %v2266
      %v2315 = vmul.f32 %v2267, 1.442695
      %v2316 = vpow.pop %v2315
      %v2317 = vmul.f32 %v2268, 1.442695
      %v2318 = vpow.pop %v2317
      %v2319 = vmul.f32 %v2269, 1.442695
      %v2320 = vpow.pop %v2319
      %v2321 = vmul.f32 %v2270, 1.442695
      %v2322 = vpow.pop %v2321
      %v2323 = vmul.f32 %v2271, 1.442695
      %v2324 = vpow.pop %v2323
      %v2325 = vmul.f32 %v2272, 1.442695
      %v2326 = vpow.pop %v2325
      %v2327 = vmul.f32 %v2273, 1.442695
      %v2328 = vpow.pop %v2327
      %v2329 = vmul.f32 %v2274, 1.442695
      %v2330 = vpow.pop %v2329
      %v2331 = vmul.f32 %v2275, 1.442695
      %v2332 = vpow.pop %v2331
      %v2333 = vmul.f32 %v2276, 1.442695
      %v2334 = vpow.pop %v2333
      %v2335 = vmul.f32 %v2277, 1.442695
      %v2336 = vpow.pop %v2335
      %v2337 = vmul.f32 %v2278, 1.442695
      %v2338 = vpow.pop %v2337
      %v2339 = vmul.f32 %v2279, 1.442695
      %v2340 = vpow.pop %v2339
      %v2341 = vmul.f32 %v2280, 1.442695
      %v2342 = vpow.pop %v2341
      %v2343 = vmul.f32 %v2281, 1.442695
      %v2344 = vpow.pop %v2343
      %v2345 = vmul.f32 %v2282, 1.442695
      %v2346 = vpow.pop %v2345
      %v2347 = vmul.f32 %v2283, 1.442695
      %v2348 = vpow.pop %v2347
      %v2349 = vmul.f32 %v2284, 1.442695
      %v2350 = vpow.pop %v2349
      %v2351 = vmul.f32 %v2285, 1.442695
      %v2352 = vpow.pop %v2351
      %v2353 = vmul.f32 %v2286, 1.442695
      %v2354 = vpow.pop %v2353
      %v2355 = vmul.f32 %v2287, 1.442695
      %v2356 = vpow.pop %v2355
      %v2357 = vmul.f32 %v2288, 1.442695
      %v2358 = vpow.pop %v2357
      %v2359 = vmul.f32 %v2289, 1.442695
      %v2360 = vpow.pop %v2359
      %v2361 = vmul.f32 %v2290, 1.442695
      %v2362 = vpow.pop %v2361
      %v2363 = vmul.f32 %v2291, 1.442695
      %v2364 = vpow.pop %v2363
      %v2365 = vmul.f32 %v2292, 1.442695
      %v2366 = vpow.pop %v2365
      %v2367 = vmul.f32 %v2293, 1.442695
      %v2368 = vpow.pop %v2367
      %v2369 = vmul.f32 %v2294, 1.442695
      %v2370 = vpow.pop %v2369
      %v2371 = vmul.f32 %v2295, 1.442695
      %v2372 = vpow.pop %v2371
      %v2373 = vmul.f32 %v2296, 1.442695
      %v2374 = vpow.pop %v2373
      %v2375 = vmul.f32 %v2297, 1.442695
      %v2376 = vpow.pop %v2375
      %v2377 = vmul.f32 %v2298, 1.442695
      %v2378 = vpow.pop %v2377
      %v2379 = vmul.f32 %v2299, 1.442695
      %v2380 = vpow.pop %v2379
      %v2381 = vmul.f32 %v2300, 1.442695
      %v2382 = vpow.pop %v2381
      %v2383 = vmul.f32 %v2301, 1.442695
      %v2384 = vpow.pop %v2383
      %v2385 = vmul.f32 %v2302, 1.442695
      %v2386 = vpow.pop %v2385
      %v2387 = vmul.f32 %v2303, 1.442695
      %v2388 = vpow.pop %v2387
      %v2389 = vmul.f32 %v2304, 1.442695
      %v2390 = vpow.pop %v2389
      %v2391 = vmul.f32 %v2305, 1.442695
      %v2392 = vpow.pop %v2391
      %v2393 = vmul.f32 %v2306, 1.442695
      %v2394 = vpow.pop %v2393
      %v2395 = vmul.f32 %v2307, 1.442695
      %v2396 = vpow.pop %v2395
      %v2397 = vmul.f32 %v2308, 1.442695
      %v2398 = vpow.pop %v2397
      %v2399 = vmul.f32 %v2309, 1.442695
      %v2400 = vpow.pop %v2399
      %v2401 = vmul.f32 %v2310, 1.442695
      %v2402 = vpow.pop %v2401
      %v2403 = vmul.f32 %v2311, 1.442695
      %v2404 = vpow.pop %v2403
      %v2405 = vmul.f32 %v2312, 1.442695
      %v2406 = vpow.pop %v2405
      %v2407 = vmul.f32 %v2313, 1.442695
      %v2408 = vpow.pop %v2407
      %v2409 = vmul.f32 %v2314, 1.442695
      %v2410 = vpow.pop %v2409
      %v2411 = vmul.f32 %v2316, %v1643
      %v2412 = vmul.f32 %v2318, %v1644
      %v2413 = vmul.f32 %v2320, %v1645
      %v2414 = vmul.f32 %v2322, %v1646
      %v2415 = vmul.f32 %v2324, %v1647
      %v2416 = vmul.f32 %v2326, %v1648
      %v2417 = vmul.f32 %v2328, %v1649
      %v2418 = vmul.f32 %v2330, %v1650
      %v2419 = vmul.f32 %v2332, %v1651
      %v2420 = vmul.f32 %v2334, %v1652
      %v2421 = vmul.f32 %v2336, %v1653
      %v2422 = vmul.f32 %v2338, %v1654
      %v2423 = vmul.f32 %v2340, %v1655
      %v2424 = vmul.f32 %v2342, %v1656
      %v2425 = vmul.f32 %v2344, %v1657
      %v2426 = vmul.f32 %v2346, %v1658
      %v2427 = vmul.f32 %v2348, %v1659
      %v2428 = vmul.f32 %v2350, %v1660
      %v2429 = vmul.f32 %v2352, %v1661
      %v2430 = vmul.f32 %v2354, %v1662
      %v2431 = vmul.f32 %v2356, %v1663
      %v2432 = vmul.f32 %v2358, %v1664
      %v2433 = vmul.f32 %v2360, %v1665
      %v2434 = vmul.f32 %v2362, %v1666
      %v2435 = vmul.f32 %v2364, %v1667
      %v2436 = vmul.f32 %v2366, %v1668
      %v2437 = vmul.f32 %v2368, %v1669
      %v2438 = vmul.f32 %v2370, %v1670
      %v2439 = vmul.f32 %v2372, %v1671
      %v2440 = vmul.f32 %v2374, %v1672
      %v2441 = vmul.f32 %v2376, %v1673
      %v2442 = vmul.f32 %v2378, %v1674
      %v2443 = vmul.f32 %v2380, %v1675
      %v2444 = vmul.f32 %v2382, %v1676
      %v2445 = vmul.f32 %v2384, %v1677
      %v2446 = vmul.f32 %v2386, %v1678
      %v2447 = vmul.f32 %v2388, %v1679
      %v2448 = vmul.f32 %v2390, %v1680
      %v2449 = vmul.f32 %v2392, %v1681
      %v2450 = vmul.f32 %v2394, %v1682
      %v2451 = vmul.f32 %v2396, %v1683
      %v2452 = vmul.f32 %v2398, %v1684
      %v2453 = vmul.f32 %v2400, %v1685
      %v2454 = vmul.f32 %v2402, %v1686
      %v2455 = vmul.f32 %v2404, %v1687
      %v2456 = vmul.f32 %v2406, %v1688
      %v2457 = vmul.f32 %v2408, %v1689
      %v2458 = vmul.f32 %v2410, %v1690
      %v2459 = vadd.f32 %v2411, %v2412
      %v2460 = vadd.f32 %v2459, %v2413
      %2461 = vadd.xlane.f32.xlu0 %v2460
      %v2462 = vpop.xlane.xlu0 %2461
      %v2463 = vadd.f32 %v2414, %v2415
      %v2464 = vadd.f32 %v2463, %v2416
      %2465 = vadd.xlane.f32.xlu0 %v2464
      %v2466 = vpop.xlane.xlu0 %2465
      %v2467 = vadd.f32 %v2417, %v2418
      %v2468 = vadd.f32 %v2467, %v2419
      %2469 = vadd.xlane.f32.xlu0 %v2468
      %v2470 = vpop.xlane.xlu0 %2469
      %v2471 = vadd.f32 %v2420, %v2421
      %v2472 = vadd.f32 %v2471, %v2422
      %2473 = vadd.xlane.f32.xlu0 %v2472
      %v2474 = vpop.xlane.xlu0 %2473
      %v2475 = vadd.f32 %v2423, %v2424
      %v2476 = vadd.f32 %v2475, %v2425
      %2477 = vadd.xlane.f32.xlu0 %v2476
      %v2478 = vpop.xlane.xlu0 %2477
      %v2479 = vadd.f32 %v2426, %v2427
      %v2480 = vadd.f32 %v2479, %v2428
      %2481 = vadd.xlane.f32.xlu0 %v2480
      %v2482 = vpop.xlane.xlu0 %2481
      %v2483 = vadd.f32 %v2429, %v2430
      %v2484 = vadd.f32 %v2483, %v2431
      %2485 = vadd.xlane.f32.xlu0 %v2484
      %v2486 = vpop.xlane.xlu0 %2485
      %v2487 = vadd.f32 %v2432, %v2433
      %v2488 = vadd.f32 %v2487, %v2434
      %2489 = vadd.xlane.f32.xlu0 %v2488
      %v2490 = vpop.xlane.xlu0 %2489
      %v2491 = vadd.f32 %v2435, %v2436
      %v2492 = vadd.f32 %v2491, %v2437
      %2493 = vadd.xlane.f32.xlu0 %v2492
      %v2494 = vpop.xlane.xlu0 %2493
      %v2495 = vadd.f32 %v2438, %v2439
      %v2496 = vadd.f32 %v2495, %v2440
      %2497 = vadd.xlane.f32.xlu0 %v2496
      %v2498 = vpop.xlane.xlu0 %2497
      %v2499 = vadd.f32 %v2441, %v2442
      %v2500 = vadd.f32 %v2499, %v2443
      %2501 = vadd.xlane.f32.xlu0 %v2500
      %v2502 = vpop.xlane.xlu0 %2501
      %v2503 = vadd.f32 %v2444, %v2445
      %v2504 = vadd.f32 %v2503, %v2446
      %2505 = vadd.xlane.f32.xlu0 %v2504
      %v2506 = vpop.xlane.xlu0 %2505
      %v2507 = vadd.f32 %v2447, %v2448
      %v2508 = vadd.f32 %v2507, %v2449
      %2509 = vadd.xlane.f32.xlu0 %v2508
      %v2510 = vpop.xlane.xlu0 %2509
      %v2511 = vadd.f32 %v2450, %v2451
      %v2512 = vadd.f32 %v2511, %v2452
      %2513 = vadd.xlane.f32.xlu0 %v2512
      %v2514 = vpop.xlane.xlu0 %2513
      %v2515 = vadd.f32 %v2453, %v2454
      %v2516 = vadd.f32 %v2515, %v2455
      %2517 = vadd.xlane.f32.xlu0 %v2516
      %v2518 = vpop.xlane.xlu0 %2517
      %v2519 = vadd.f32 %v2456, %v2457
      %v2520 = vadd.f32 %v2519, %v2458
      %2521 = vadd.xlane.f32.xlu0 %v2520
      %v2522 = vpop.xlane.xlu0 %2521
      %v2523 = vmax.f32 %v2462, 1e-30
      %v2524 = vmax.f32 %v2466, 1e-30
      %v2525 = vmax.f32 %v2470, 1e-30
      %v2526 = vmax.f32 %v2474, 1e-30
      %v2527 = vmax.f32 %v2478, 1e-30
      %v2528 = vmax.f32 %v2482, 1e-30
      %v2529 = vmax.f32 %v2486, 1e-30
      %v2530 = vmax.f32 %v2490, 1e-30
      %v2531 = vmax.f32 %v2494, 1e-30
      %v2532 = vmax.f32 %v2498, 1e-30
      %v2533 = vmax.f32 %v2502, 1e-30
      %v2534 = vmax.f32 %v2506, 1e-30
      %v2535 = vmax.f32 %v2510, 1e-30
      %v2536 = vmax.f32 %v2514, 1e-30
      %v2537 = vmax.f32 %v2518, 1e-30
      %v2538 = vmax.f32 %v2522, 1e-30
      %v2539 = vrcp.pop %v2523
      %v2540 = vrcp.pop %v2524
      %v2541 = vrcp.pop %v2525
      %v2542 = vrcp.pop %v2526
      %v2543 = vrcp.pop %v2527
      %v2544 = vrcp.pop %v2528
      %v2545 = vrcp.pop %v2529
      %v2546 = vrcp.pop %v2530
      %v2547 = vrcp.pop %v2531
      %v2548 = vrcp.pop %v2532
      %v2549 = vrcp.pop %v2533
      %v2550 = vrcp.pop %v2534
      %v2551 = vrcp.pop %v2535
      %v2552 = vrcp.pop %v2536
      %v2553 = vrcp.pop %v2537
      %v2554 = vrcp.pop %v2538
      %vm2555 = vcmp.gt.f32.partialorder %v2462, 0.0
      %vm2556 = vcmp.gt.f32.partialorder %v2466, 0.0
      %vm2557 = vcmp.gt.f32.partialorder %v2470, 0.0
      %vm2558 = vcmp.gt.f32.partialorder %v2474, 0.0
      %vm2559 = vcmp.gt.f32.partialorder %v2478, 0.0
      %vm2560 = vcmp.gt.f32.partialorder %v2482, 0.0
      %vm2561 = vcmp.gt.f32.partialorder %v2486, 0.0
      %vm2562 = vcmp.gt.f32.partialorder %v2490, 0.0
      %vm2563 = vcmp.gt.f32.partialorder %v2494, 0.0
      %vm2564 = vcmp.gt.f32.partialorder %v2498, 0.0
      %vm2565 = vcmp.gt.f32.partialorder %v2502, 0.0
      %vm2566 = vcmp.gt.f32.partialorder %v2506, 0.0
      %vm2567 = vcmp.gt.f32.partialorder %v2510, 0.0
      %vm2568 = vcmp.gt.f32.partialorder %v2514, 0.0
      %vm2569 = vcmp.gt.f32.partialorder %v2518, 0.0
      %vm2570 = vcmp.gt.f32.partialorder %v2522, 0.0
      %v2571 = vsel %vm2555, %v2539, 0.0
      %v2572 = vsel %vm2556, %v2540, 0.0
      %v2573 = vsel %vm2557, %v2541, 0.0
      %v2574 = vsel %vm2558, %v2542, 0.0
      %v2575 = vsel %vm2559, %v2543, 0.0
      %v2576 = vsel %vm2560, %v2544, 0.0
      %v2577 = vsel %vm2561, %v2545, 0.0
      %v2578 = vsel %vm2562, %v2546, 0.0
      %v2579 = vsel %vm2563, %v2547, 0.0
      %v2580 = vsel %vm2564, %v2548, 0.0
      %v2581 = vsel %vm2565, %v2549, 0.0
      %v2582 = vsel %vm2566, %v2550, 0.0
      %v2583 = vsel %vm2567, %v2551, 0.0
      %v2584 = vsel %vm2568, %v2552, 0.0
      %v2585 = vsel %vm2569, %v2553, 0.0
      %v2586 = vsel %vm2570, %v2554, 0.0
      %v2587 = vmul.f32 %v2411, %v2571
      %v2588 = vmul.f32 %v2412, %v2571
      %v2589 = vmul.f32 %v2413, %v2571
      %v2590 = vmul.f32 %v2414, %v2572
      %v2591 = vmul.f32 %v2415, %v2572
      %v2592 = vmul.f32 %v2416, %v2572
      %v2593 = vmul.f32 %v2417, %v2573
      %v2594 = vmul.f32 %v2418, %v2573
      %v2595 = vmul.f32 %v2419, %v2573
      %v2596 = vmul.f32 %v2420, %v2574
      %v2597 = vmul.f32 %v2421, %v2574
      %v2598 = vmul.f32 %v2422, %v2574
      %v2599 = vmul.f32 %v2423, %v2575
      %v2600 = vmul.f32 %v2424, %v2575
      %v2601 = vmul.f32 %v2425, %v2575
      %v2602 = vmul.f32 %v2426, %v2576
      %v2603 = vmul.f32 %v2427, %v2576
      %v2604 = vmul.f32 %v2428, %v2576
      %v2605 = vmul.f32 %v2429, %v2577
      %v2606 = vmul.f32 %v2430, %v2577
      %v2607 = vmul.f32 %v2431, %v2577
      %v2608 = vmul.f32 %v2432, %v2578
      %v2609 = vmul.f32 %v2433, %v2578
      %v2610 = vmul.f32 %v2434, %v2578
      %v2611 = vmul.f32 %v2435, %v2579
      %v2612 = vmul.f32 %v2436, %v2579
      %v2613 = vmul.f32 %v2437, %v2579
      %v2614 = vmul.f32 %v2438, %v2580
      %v2615 = vmul.f32 %v2439, %v2580
      %v2616 = vmul.f32 %v2440, %v2580
      %v2617 = vmul.f32 %v2441, %v2581
      %v2618 = vmul.f32 %v2442, %v2581
      %v2619 = vmul.f32 %v2443, %v2581
      %v2620 = vmul.f32 %v2444, %v2582
      %v2621 = vmul.f32 %v2445, %v2582
      %v2622 = vmul.f32 %v2446, %v2582
      %v2623 = vmul.f32 %v2447, %v2583
      %v2624 = vmul.f32 %v2448, %v2583
      %v2625 = vmul.f32 %v2449, %v2583
      %v2626 = vmul.f32 %v2450, %v2584
      %v2627 = vmul.f32 %v2451, %v2584
      %v2628 = vmul.f32 %v2452, %v2584
      %v2629 = vmul.f32 %v2453, %v2585
      %v2630 = vmul.f32 %v2454, %v2585
      %v2631 = vmul.f32 %v2455, %v2585
      %v2632 = vmul.f32 %v2456, %v2586
      %v2633 = vmul.f32 %v2457, %v2586
      %v2634 = vmul.f32 %v2458, %v2586
      %2635 = vmatprep.subr.mxu0 0.0
      %2636 = vmatpush1.msra.mxu0 %v1821
      %2637 = vmatprep.subr.mxu0 0.0
      %2638 = vmatpush1.msra.mxu0 %v1820
      %2639 = vmatprep.subr.mxu0 0.0
      %2640 = vmatpush1.msra.mxu0 %v1819
      %2641 = vmatprep.subr.mxu0 0.0
      %2642 = vmatpush1.msra.mxu0 %v1818
      %2643 = vmatprep.subr.mxu0 0.0
      %2644 = vmatpush1.msra.mxu0 %v1817
      %2645 = vmatprep.subr.mxu0 0.0
      %2646 = vmatpush1.msra.mxu0 %v1816
      %2647 = vmatprep.subr.mxu0 0.0
      %2648 = vmatpush1.msra.mxu0 %v1815
      %2649 = vmatprep.subr.mxu0 0.0
      %2650 = vmatpush1.msra.mxu0 %v1814
      %2651 = vmatprep.subr.mxu0 0.0
      %2652 = vmatpush1.msra.mxu0 %v1813
      %2653 = vmatprep.subr.mxu0 0.0
      %2654 = vmatpush1.msra.mxu0 %v1812
      %2655 = vmatprep.subr.mxu0 0.0
      %2656 = vmatpush1.msra.mxu0 %v1811
      %2657 = vmatprep.subr.mxu0 0.0
      %2658 = vmatpush1.msra.mxu0 %v1810
      %2659 = vmatprep.subr.mxu0 0.0
      %2660 = vmatpush1.msra.mxu0 %v1809
      %2661 = vmatprep.subr.mxu0 0.0
      %2662 = vmatpush1.msra.mxu0 %v1808
      %2663 = vmatprep.subr.mxu0 0.0
      %2664 = vmatpush1.msra.mxu0 %v1807
      %2665 = vmatprep.subr.mxu0 0.0
      %2666 = vmatpush1.msra.mxu0 %v1806
      %2667 = vmatprep.subr.mxu0 0.0
      %2668 = vmatpush2.msra.mxu0 %v1837
      %2669 = vmatprep.subr.mxu0 0.0
      %2670 = vmatpush2.msra.mxu0 %v1836
      %2671 = vmatprep.subr.mxu0 0.0
      %2672 = vmatpush2.msra.mxu0 %v1835
      %2673 = vmatprep.subr.mxu0 0.0
      %2674 = vmatpush2.msra.mxu0 %v1834
      %2675 = vmatprep.subr.mxu0 0.0
      %2676 = vmatpush2.msra.mxu0 %v1833
      %2677 = vmatprep.subr.mxu0 0.0
      %2678 = vmatpush2.msra.mxu0 %v1832
      %2679 = vmatprep.subr.mxu0 0.0
      %2680 = vmatpush2.msra.mxu0 %v1831
      %2681 = vmatprep.subr.mxu0 0.0
      %2682 = vmatpush2.msra.mxu0 %v1830
      %2683 = vmatprep.subr.mxu0 0.0
      %2684 = vmatpush2.msra.mxu0 %v1829
      %2685 = vmatprep.subr.mxu0 0.0
      %2686 = vmatpush2.msra.mxu0 %v1828
      %2687 = vmatprep.subr.mxu0 0.0
      %2688 = vmatpush2.msra.mxu0 %v1827
      %2689 = vmatprep.subr.mxu0 0.0
      %2690 = vmatpush2.msra.mxu0 %v1826
      %2691 = vmatprep.subr.mxu0 0.0
      %2692 = vmatpush2.msra.mxu0 %v1825
      %2693 = vmatprep.subr.mxu0 0.0
      %2694 = vmatpush2.msra.mxu0 %v1824
      %2695 = vmatprep.subr.mxu0 0.0
      %2696 = vmatpush2.msra.mxu0 %v1823
      %2697 = vmatprep.subr.mxu0 0.0
      %2698 = vmatpush2.msra.mxu0 %v1822
      %2699 = vmatprep.mubr.f32.mxu0 %v2588
      %2700 = vmatmul.mubr.f32.gmra.mxu0 %v2587
      %v2701 = vpop.f32.mrf.mxu0
      %v2702 = vadd.f32 0.0, %v2701
      %v2703 = vpop.f32.mrf.mxu0
      %2704 = vmatprep.mubr.f32.mxu0 %v2591
      %2705 = vmatmul.mubr.f32.gmra.mxu0 %v2590
      %v2706 = vpop.f32.mrf.mxu0
      %v2707 = vadd.f32 0.0, %v2706
      %v2708 = vpop.f32.mrf.mxu0
      %2709 = vmatprep.mubr.f32.mxu0 %v2594
      %2710 = vmatmul.mubr.f32.gmra.mxu0 %v2593
      %v2711 = vpop.f32.mrf.mxu0
      %v2712 = vadd.f32 0.0, %v2711
      %v2713 = vpop.f32.mrf.mxu0
      %2714 = vmatprep.mubr.f32.mxu0 %v2597
      %2715 = vmatmul.mubr.f32.gmra.mxu0 %v2596
      %v2716 = vpop.f32.mrf.mxu0
      %v2717 = vadd.f32 0.0, %v2716
      %v2718 = vpop.f32.mrf.mxu0
      %2719 = vmatprep.mubr.f32.mxu0 %v2600
      %2720 = vmatmul.mubr.f32.gmra.mxu0 %v2599
      %v2721 = vpop.f32.mrf.mxu0
      %v2722 = vadd.f32 0.0, %v2721
      %v2723 = vpop.f32.mrf.mxu0
      %2724 = vmatprep.mubr.f32.mxu0 %v2603
      %2725 = vmatmul.mubr.f32.gmra.mxu0 %v2602
      %v2726 = vpop.f32.mrf.mxu0
      %v2727 = vadd.f32 0.0, %v2726
      %v2728 = vpop.f32.mrf.mxu0
      %2729 = vmatprep.mubr.f32.mxu0 %v2606
      %2730 = vmatmul.mubr.f32.gmra.mxu0 %v2605
      %v2731 = vpop.f32.mrf.mxu0
      %v2732 = vadd.f32 0.0, %v2731
      %v2733 = vpop.f32.mrf.mxu0
      %2734 = vmatprep.mubr.f32.mxu0 %v2609
      %2735 = vmatmul.mubr.f32.gmra.mxu0 %v2608
      %v2736 = vpop.f32.mrf.mxu0
      %v2737 = vadd.f32 0.0, %v2736
      %v2738 = vpop.f32.mrf.mxu0
      %2739 = vmatprep.mubr.f32.mxu0 %v2612
      %2740 = vmatmul.mubr.f32.gmra.mxu0 %v2611
      %v2741 = vpop.f32.mrf.mxu0
      %v2742 = vadd.f32 0.0, %v2741
      %v2743 = vpop.f32.mrf.mxu0
      %2744 = vmatprep.mubr.f32.mxu0 %v2615
      %2745 = vmatmul.mubr.f32.gmra.mxu0 %v2614
      %v2746 = vpop.f32.mrf.mxu0
      %v2747 = vadd.f32 0.0, %v2746
      %v2748 = vpop.f32.mrf.mxu0
      %2749 = vmatprep.mubr.f32.mxu0 %v2618
      %2750 = vmatmul.mubr.f32.gmra.mxu0 %v2617
      %v2751 = vpop.f32.mrf.mxu0
      %v2752 = vadd.f32 0.0, %v2751
      %v2753 = vpop.f32.mrf.mxu0
      %2754 = vmatprep.mubr.f32.mxu0 %v2621
      %2755 = vmatmul.mubr.f32.gmra.mxu0 %v2620
      %v2756 = vpop.f32.mrf.mxu0
      %v2757 = vadd.f32 0.0, %v2756
      %v2758 = vpop.f32.mrf.mxu0
      %2759 = vmatprep.mubr.f32.mxu0 %v2624
      %2760 = vmatmul.mubr.f32.gmra.mxu0 %v2623
      %v2761 = vpop.f32.mrf.mxu0
      %v2762 = vadd.f32 0.0, %v2761
      %v2763 = vpop.f32.mrf.mxu0
      %2764 = vmatprep.mubr.f32.mxu0 %v2627
      %2765 = vmatmul.mubr.f32.gmra.mxu0 %v2626
      %v2766 = vpop.f32.mrf.mxu0
      %v2767 = vadd.f32 0.0, %v2766
      %v2768 = vpop.f32.mrf.mxu0
      %2769 = vmatprep.mubr.f32.mxu0 %v2630
      %2770 = vmatmul.mubr.f32.gmra.mxu0 %v2629
      %v2771 = vpop.f32.mrf.mxu0
      %v2772 = vadd.f32 0.0, %v2771
      %v2773 = vpop.f32.mrf.mxu0
      %2774 = vmatprep.mubr.f32.mxu0 %v2633
      %2775 = vmatmul.mubr.f32.gmra.mxu0 %v2632
      %v2776 = vpop.f32.mrf.mxu0
      %v2777 = vadd.f32 0.0, %v2776
      %v2778 = vpop.f32.mrf.mxu0
      %2779 = vdwg.mxu0
      %2780 = vmatprep.subr.mxu0 0.0
      %2781 = vmatpush1.msra.mxu0 %v1853
      %2782 = vmatprep.subr.mxu0 0.0
      %2783 = vmatpush1.msra.mxu0 %v1852
      %2784 = vmatprep.subr.mxu0 0.0
      %2785 = vmatpush1.msra.mxu0 %v1851
      %2786 = vmatprep.subr.mxu0 0.0
      %2787 = vmatpush1.msra.mxu0 %v1850
      %2788 = vmatprep.subr.mxu0 0.0
      %2789 = vmatpush1.msra.mxu0 %v1849
      %2790 = vmatprep.subr.mxu0 0.0
      %2791 = vmatpush1.msra.mxu0 %v1848
      %2792 = vmatprep.subr.mxu0 0.0
      %2793 = vmatpush1.msra.mxu0 %v1847
      %2794 = vmatprep.subr.mxu0 0.0
      %2795 = vmatpush1.msra.mxu0 %v1846
      %2796 = vmatprep.subr.mxu0 0.0
      %2797 = vmatpush1.msra.mxu0 %v1845
      %2798 = vmatprep.subr.mxu0 0.0
      %2799 = vmatpush1.msra.mxu0 %v1844
      %2800 = vmatprep.subr.mxu0 0.0
      %2801 = vmatpush1.msra.mxu0 %v1843
      %2802 = vmatprep.subr.mxu0 0.0
      %2803 = vmatpush1.msra.mxu0 %v1842
      %2804 = vmatprep.subr.mxu0 0.0
      %2805 = vmatpush1.msra.mxu0 %v1841
      %2806 = vmatprep.subr.mxu0 0.0
      %2807 = vmatpush1.msra.mxu0 %v1840
      %2808 = vmatprep.subr.mxu0 0.0
      %2809 = vmatpush1.msra.mxu0 %v1839
      %2810 = vmatprep.subr.mxu0 0.0
      %2811 = vmatpush1.msra.mxu0 %v1838
      %2812 = vmatprep.subr.mxu0 0.0
      %2813 = vmatpush2.msra.mxu0 0.0
      %2814 = vmatprep.subr.mxu0 0.0
      %2815 = vmatpush2.msra.mxu0 0.0
      %2816 = vmatprep.subr.mxu0 0.0
      %2817 = vmatpush2.msra.mxu0 0.0
      %2818 = vmatprep.subr.mxu0 0.0
      %2819 = vmatpush2.msra.mxu0 0.0
      %2820 = vmatprep.subr.mxu0 0.0
      %2821 = vmatpush2.msra.mxu0 0.0
      %2822 = vmatprep.subr.mxu0 0.0
      %2823 = vmatpush2.msra.mxu0 0.0
      %2824 = vmatprep.subr.mxu0 0.0
      %2825 = vmatpush2.msra.mxu0 0.0
      %2826 = vmatprep.subr.mxu0 0.0
      %2827 = vmatpush2.msra.mxu0 0.0
      %2828 = vmatprep.subr.mxu0 0.0
      %2829 = vmatpush2.msra.mxu0 0.0
      %2830 = vmatprep.subr.mxu0 0.0
      %2831 = vmatpush2.msra.mxu0 0.0
      %2832 = vmatprep.subr.mxu0 0.0
      %2833 = vmatpush2.msra.mxu0 0.0
      %2834 = vmatprep.subr.mxu0 0.0
      %2835 = vmatpush2.msra.mxu0 0.0
      %2836 = vmatprep.subr.mxu0 0.0
      %2837 = vmatpush2.msra.mxu0 0.0
      %2838 = vmatprep.subr.mxu0 0.0
      %2839 = vmatpush2.msra.mxu0 0.0
      %2840 = vmatprep.subr.mxu0 0.0
      %2841 = vmatpush2.msra.mxu0 0.0
      %2842 = vmatprep.subr.mxu0 0.0
      %2843 = vmatpush2.msra.mxu0 0.0
      %2844 = vmatprep.mubr.f32.mxu0 0.0
      %2845 = vmatmul.mubr.f32.gmra.mxu0 %v2589
      %v2846 = vpop.f32.mrf.mxu0
      %v2847 = vadd.f32 %v2702, %v2846
      %v2848 = vpop.f32.mrf.mxu0
      %2849 = vmatprep.mubr.f32.mxu0 0.0
      %2850 = vmatmul.mubr.f32.gmra.mxu0 %v2592
      %v2851 = vpop.f32.mrf.mxu0
      %v2852 = vadd.f32 %v2707, %v2851
      %v2853 = vpop.f32.mrf.mxu0
      %2854 = vmatprep.mubr.f32.mxu0 0.0
      %2855 = vmatmul.mubr.f32.gmra.mxu0 %v2595
      %v2856 = vpop.f32.mrf.mxu0
      %v2857 = vadd.f32 %v2712, %v2856
      %v2858 = vpop.f32.mrf.mxu0
      %2859 = vmatprep.mubr.f32.mxu0 0.0
      %2860 = vmatmul.mubr.f32.gmra.mxu0 %v2598
      %v2861 = vpop.f32.mrf.mxu0
      %v2862 = vadd.f32 %v2717, %v2861
      %v2863 = vpop.f32.mrf.mxu0
      %2864 = vmatprep.mubr.f32.mxu0 0.0
      %2865 = vmatmul.mubr.f32.gmra.mxu0 %v2601
      %v2866 = vpop.f32.mrf.mxu0
      %v2867 = vadd.f32 %v2722, %v2866
      %v2868 = vpop.f32.mrf.mxu0
      %2869 = vmatprep.mubr.f32.mxu0 0.0
      %2870 = vmatmul.mubr.f32.gmra.mxu0 %v2604
      %v2871 = vpop.f32.mrf.mxu0
      %v2872 = vadd.f32 %v2727, %v2871
      %v2873 = vpop.f32.mrf.mxu0
      %2874 = vmatprep.mubr.f32.mxu0 0.0
      %2875 = vmatmul.mubr.f32.gmra.mxu0 %v2607
      %v2876 = vpop.f32.mrf.mxu0
      %v2877 = vadd.f32 %v2732, %v2876
      %v2878 = vpop.f32.mrf.mxu0
      %2879 = vmatprep.mubr.f32.mxu0 0.0
      %2880 = vmatmul.mubr.f32.gmra.mxu0 %v2610
      %v2881 = vpop.f32.mrf.mxu0
      %v2882 = vadd.f32 %v2737, %v2881
      %v2883 = vpop.f32.mrf.mxu0
      %2884 = vmatprep.mubr.f32.mxu0 0.0
      %2885 = vmatmul.mubr.f32.gmra.mxu0 %v2613
      %v2886 = vpop.f32.mrf.mxu0
      %v2887 = vadd.f32 %v2742, %v2886
      %v2888 = vpop.f32.mrf.mxu0
      %2889 = vmatprep.mubr.f32.mxu0 0.0
      %2890 = vmatmul.mubr.f32.gmra.mxu0 %v2616
      %v2891 = vpop.f32.mrf.mxu0
      %v2892 = vadd.f32 %v2747, %v2891
      %v2893 = vpop.f32.mrf.mxu0
      %2894 = vmatprep.mubr.f32.mxu0 0.0
      %2895 = vmatmul.mubr.f32.gmra.mxu0 %v2619
      %v2896 = vpop.f32.mrf.mxu0
      %v2897 = vadd.f32 %v2752, %v2896
      %v2898 = vpop.f32.mrf.mxu0
      %2899 = vmatprep.mubr.f32.mxu0 0.0
      %2900 = vmatmul.mubr.f32.gmra.mxu0 %v2622
      %v2901 = vpop.f32.mrf.mxu0
      %v2902 = vadd.f32 %v2757, %v2901
      %v2903 = vpop.f32.mrf.mxu0
      %2904 = vmatprep.mubr.f32.mxu0 0.0
      %2905 = vmatmul.mubr.f32.gmra.mxu0 %v2625
      %v2906 = vpop.f32.mrf.mxu0
      %v2907 = vadd.f32 %v2762, %v2906
      %v2908 = vpop.f32.mrf.mxu0
      %2909 = vmatprep.mubr.f32.mxu0 0.0
      %2910 = vmatmul.mubr.f32.gmra.mxu0 %v2628
      %v2911 = vpop.f32.mrf.mxu0
      %v2912 = vadd.f32 %v2767, %v2911
      %v2913 = vpop.f32.mrf.mxu0
      %2914 = vmatprep.mubr.f32.mxu0 0.0
      %2915 = vmatmul.mubr.f32.gmra.mxu0 %v2631
      %v2916 = vpop.f32.mrf.mxu0
      %v2917 = vadd.f32 %v2772, %v2916
      %v2918 = vpop.f32.mrf.mxu0
      %2919 = vmatprep.mubr.f32.mxu0 0.0
      %2920 = vmatmul.mubr.f32.gmra.mxu0 %v2634
      %v2921 = vpop.f32.mrf.mxu0
      %v2922 = vadd.f32 %v2777, %v2921
      %v2923 = vpop.f32.mrf.mxu0
      %2924 = vdwg.mxu0
      %2925 = vset.pattern.permute.xlu0 1
      %2926 = vperm.xlu0 %2925, %v1788
      %v2927 = vpop.permute.xlu0 %2926
      %2929 = vset.pattern.permute.xlu0 1
      %2930 = vperm.xlu0 %2929, %v1789
      %v2931 = vpop.permute.xlu0 %2930
      %2933 = vset.pattern.permute.xlu0 1
      %2934 = vperm.xlu0 %2933, %v1790
      %v2935 = vpop.permute.xlu0 %2934
      %2937 = vset.pattern.permute.xlu0 1
      %2938 = vperm.xlu0 %2937, %v1791
      %v2939 = vpop.permute.xlu0 %2938
      %2941 = vset.pattern.permute.xlu0 1
      %2942 = vperm.xlu0 %2941, %v1792
      %v2943 = vpop.permute.xlu0 %2942
      %2945 = vset.pattern.permute.xlu0 1
      %2946 = vperm.xlu0 %2945, %v1793
      %v2947 = vpop.permute.xlu0 %2946
      %2949 = vset.pattern.permute.xlu0 1
      %2950 = vperm.xlu0 %2949, %v1794
      %v2951 = vpop.permute.xlu0 %2950
      %2953 = vset.pattern.permute.xlu0 1
      %2954 = vperm.xlu0 %2953, %v1795
      %v2955 = vpop.permute.xlu0 %2954
      %2957 = vset.pattern.permute.xlu0 1
      %2958 = vperm.xlu0 %2957, %v1796
      %v2959 = vpop.permute.xlu0 %2958
      %2961 = vset.pattern.permute.xlu0 1
      %2962 = vperm.xlu0 %2961, %v1797
      %v2963 = vpop.permute.xlu0 %2962
      %2965 = vset.pattern.permute.xlu0 1
      %2966 = vperm.xlu0 %2965, %v1798
      %v2967 = vpop.permute.xlu0 %2966
      %2969 = vset.pattern.permute.xlu0 1
      %2970 = vperm.xlu0 %2969, %v1799
      %v2971 = vpop.permute.xlu0 %2970
      %2973 = vset.pattern.permute.xlu0 1
      %2974 = vperm.xlu0 %2973, %v1800
      %v2975 = vpop.permute.xlu0 %2974
      %2977 = vset.pattern.permute.xlu0 1
      %2978 = vperm.xlu0 %2977, %v1801
      %v2979 = vpop.permute.xlu0 %2978
      %2981 = vset.pattern.permute.xlu0 1
      %2982 = vperm.xlu0 %2981, %v1802
      %v2983 = vpop.permute.xlu0 %2982
      %2985 = vset.pattern.permute.xlu0 1
      %2986 = vperm.xlu0 %2985, %v1803
      %v2987 = vpop.permute.xlu0 %2986
      %v2989 = vlaneseq
      %v2990 = vshrl.u32 %v2989, 7
      %v2991 = vsub.s32 1, %v2990
      %v2992 = vrot.slane %v1804, %v2991
      %v2993 = vlaneseq
      %v2994 = vshrl.u32 %v2993, 7
      %v2995 = vsub.s32 5, %v2994
      %v2996 = vrot.slane %v1804, %v2995
      %v2997 = vlaneseq
      %v2998 = vshrl.u32 %v2997, 7
      %v2999 = vsub.s32 1, %v2998
      %v3000 = vrot.slane %v1805, %v2999
      %v3004 = vlaneseq
      %v3005 = vshrl.u32 %v3004, 7
      %v3006 = vsub.s32 1, %v3005
      %v3007 = vrot.slane %v2992, %v3006
      %v3008 = vlaneseq
      %v3009 = vshrl.u32 %v3008, 7
      %v3010 = vsub.s32 1, %v3009
      %v3011 = vrot.slane %v2996, %v3010
      %v3012 = vlaneseq
      %v3013 = vshrl.u32 %v3012, 7
      %v3014 = vsub.s32 1, %v3013
      %v3015 = vrot.slane %v3000, %v3014
      %v3016 = vadd.f32 %v2927, %v3007
      %v3017 = vadd.f32 %v2927, %v3011
      %v3018 = vadd.f32 %v2927, %v3015
      %v3019 = vadd.f32 %v2931, %v3007
      %v3020 = vadd.f32 %v2931, %v3011
      %v3021 = vadd.f32 %v2931, %v3015
      %v3022 = vadd.f32 %v2935, %v3007
      %v3023 = vadd.f32 %v2935, %v3011
      %v3024 = vadd.f32 %v2935, %v3015
      %v3025 = vadd.f32 %v2939, %v3007
      %v3026 = vadd.f32 %v2939, %v3011
      %v3027 = vadd.f32 %v2939, %v3015
      %v3028 = vadd.f32 %v2943, %v3007
      %v3029 = vadd.f32 %v2943, %v3011
      %v3030 = vadd.f32 %v2943, %v3015
      %v3031 = vadd.f32 %v2947, %v3007
      %v3032 = vadd.f32 %v2947, %v3011
      %v3033 = vadd.f32 %v2947, %v3015
      %v3034 = vadd.f32 %v2951, %v3007
      %v3035 = vadd.f32 %v2951, %v3011
      %v3036 = vadd.f32 %v2951, %v3015
      %v3037 = vadd.f32 %v2955, %v3007
      %v3038 = vadd.f32 %v2955, %v3011
      %v3039 = vadd.f32 %v2955, %v3015
      %v3040 = vadd.f32 %v2959, %v3007
      %v3041 = vadd.f32 %v2959, %v3011
      %v3042 = vadd.f32 %v2959, %v3015
      %v3043 = vadd.f32 %v2963, %v3007
      %v3044 = vadd.f32 %v2963, %v3011
      %v3045 = vadd.f32 %v2963, %v3015
      %v3046 = vadd.f32 %v2967, %v3007
      %v3047 = vadd.f32 %v2967, %v3011
      %v3048 = vadd.f32 %v2967, %v3015
      %v3049 = vadd.f32 %v2971, %v3007
      %v3050 = vadd.f32 %v2971, %v3011
      %v3051 = vadd.f32 %v2971, %v3015
      %v3052 = vadd.f32 %v2975, %v3007
      %v3053 = vadd.f32 %v2975, %v3011
      %v3054 = vadd.f32 %v2975, %v3015
      %v3055 = vadd.f32 %v2979, %v3007
      %v3056 = vadd.f32 %v2979, %v3011
      %v3057 = vadd.f32 %v2979, %v3015
      %v3058 = vadd.f32 %v2983, %v3007
      %v3059 = vadd.f32 %v2983, %v3011
      %v3060 = vadd.f32 %v2983, %v3015
      %v3061 = vadd.f32 %v2987, %v3007
      %v3062 = vadd.f32 %v2987, %v3011
      %v3063 = vadd.f32 %v2987, %v3015
      %vm3064 = vcmp.ge.f32.partialorder %v3016, 0.0
      %vm3065 = vcmp.ge.f32.partialorder %v3017, 0.0
      %vm3066 = vcmp.ge.f32.partialorder %v3018, 0.0
      %vm3067 = vcmp.ge.f32.partialorder %v3019, 0.0
      %vm3068 = vcmp.ge.f32.partialorder %v3020, 0.0
      %vm3069 = vcmp.ge.f32.partialorder %v3021, 0.0
      %vm3070 = vcmp.ge.f32.partialorder %v3022, 0.0
      %vm3071 = vcmp.ge.f32.partialorder %v3023, 0.0
      %vm3072 = vcmp.ge.f32.partialorder %v3024, 0.0
      %vm3073 = vcmp.ge.f32.partialorder %v3025, 0.0
      %vm3074 = vcmp.ge.f32.partialorder %v3026, 0.0
      %vm3075 = vcmp.ge.f32.partialorder %v3027, 0.0
      %vm3076 = vcmp.ge.f32.partialorder %v3028, 0.0
      %vm3077 = vcmp.ge.f32.partialorder %v3029, 0.0
      %vm3078 = vcmp.ge.f32.partialorder %v3030, 0.0
      %vm3079 = vcmp.ge.f32.partialorder %v3031, 0.0
      %vm3080 = vcmp.ge.f32.partialorder %v3032, 0.0
      %vm3081 = vcmp.ge.f32.partialorder %v3033, 0.0
      %vm3082 = vcmp.ge.f32.partialorder %v3034, 0.0
      %vm3083 = vcmp.ge.f32.partialorder %v3035, 0.0
      %vm3084 = vcmp.ge.f32.partialorder %v3036, 0.0
      %vm3085 = vcmp.ge.f32.partialorder %v3037, 0.0
      %vm3086 = vcmp.ge.f32.partialorder %v3038, 0.0
      %vm3087 = vcmp.ge.f32.partialorder %v3039, 0.0
      %vm3088 = vcmp.ge.f32.partialorder %v3040, 0.0
      %vm3089 = vcmp.ge.f32.partialorder %v3041, 0.0
      %vm3090 = vcmp.ge.f32.partialorder %v3042, 0.0
      %vm3091 = vcmp.ge.f32.partialorder %v3043, 0.0
      %vm3092 = vcmp.ge.f32.partialorder %v3044, 0.0
      %vm3093 = vcmp.ge.f32.partialorder %v3045, 0.0
      %vm3094 = vcmp.ge.f32.partialorder %v3046, 0.0
      %vm3095 = vcmp.ge.f32.partialorder %v3047, 0.0
      %vm3096 = vcmp.ge.f32.partialorder %v3048, 0.0
      %vm3097 = vcmp.ge.f32.partialorder %v3049, 0.0
      %vm3098 = vcmp.ge.f32.partialorder %v3050, 0.0
      %vm3099 = vcmp.ge.f32.partialorder %v3051, 0.0
      %vm3100 = vcmp.ge.f32.partialorder %v3052, 0.0
      %vm3101 = vcmp.ge.f32.partialorder %v3053, 0.0
      %vm3102 = vcmp.ge.f32.partialorder %v3054, 0.0
      %vm3103 = vcmp.ge.f32.partialorder %v3055, 0.0
      %vm3104 = vcmp.ge.f32.partialorder %v3056, 0.0
      %vm3105 = vcmp.ge.f32.partialorder %v3057, 0.0
      %vm3106 = vcmp.ge.f32.partialorder %v3058, 0.0
      %vm3107 = vcmp.ge.f32.partialorder %v3059, 0.0
      %vm3108 = vcmp.ge.f32.partialorder %v3060, 0.0
      %vm3109 = vcmp.ge.f32.partialorder %v3061, 0.0
      %vm3110 = vcmp.ge.f32.partialorder %v3062, 0.0
      %vm3111 = vcmp.ge.f32.partialorder %v3063, 0.0
      %v3112 = vmul.f32 %v3016, 0.2
      %v3113 = vmul.f32 %v3017, 0.2
      %v3114 = vmul.f32 %v3018, 0.2
      %v3115 = vmul.f32 %v3019, 0.2
      %v3116 = vmul.f32 %v3020, 0.2
      %v3117 = vmul.f32 %v3021, 0.2
      %v3118 = vmul.f32 %v3022, 0.2
      %v3119 = vmul.f32 %v3023, 0.2
      %v3120 = vmul.f32 %v3024, 0.2
      %v3121 = vmul.f32 %v3025, 0.2
      %v3122 = vmul.f32 %v3026, 0.2
      %v3123 = vmul.f32 %v3027, 0.2
      %v3124 = vmul.f32 %v3028, 0.2
      %v3125 = vmul.f32 %v3029, 0.2
      %v3126 = vmul.f32 %v3030, 0.2
      %v3127 = vmul.f32 %v3031, 0.2
      %v3128 = vmul.f32 %v3032, 0.2
      %v3129 = vmul.f32 %v3033, 0.2
      %v3130 = vmul.f32 %v3034, 0.2
      %v3131 = vmul.f32 %v3035, 0.2
      %v3132 = vmul.f32 %v3036, 0.2
      %v3133 = vmul.f32 %v3037, 0.2
      %v3134 = vmul.f32 %v3038, 0.2
      %v3135 = vmul.f32 %v3039, 0.2
      %v3136 = vmul.f32 %v3040, 0.2
      %v3137 = vmul.f32 %v3041, 0.2
      %v3138 = vmul.f32 %v3042, 0.2
      %v3139 = vmul.f32 %v3043, 0.2
      %v3140 = vmul.f32 %v3044, 0.2
      %v3141 = vmul.f32 %v3045, 0.2
      %v3142 = vmul.f32 %v3046, 0.2
      %v3143 = vmul.f32 %v3047, 0.2
      %v3144 = vmul.f32 %v3048, 0.2
      %v3145 = vmul.f32 %v3049, 0.2
      %v3146 = vmul.f32 %v3050, 0.2
      %v3147 = vmul.f32 %v3051, 0.2
      %v3148 = vmul.f32 %v3052, 0.2
      %v3149 = vmul.f32 %v3053, 0.2
      %v3150 = vmul.f32 %v3054, 0.2
      %v3151 = vmul.f32 %v3055, 0.2
      %v3152 = vmul.f32 %v3056, 0.2
      %v3153 = vmul.f32 %v3057, 0.2
      %v3154 = vmul.f32 %v3058, 0.2
      %v3155 = vmul.f32 %v3059, 0.2
      %v3156 = vmul.f32 %v3060, 0.2
      %v3157 = vmul.f32 %v3061, 0.2
      %v3158 = vmul.f32 %v3062, 0.2
      %v3159 = vmul.f32 %v3063, 0.2
      %v3160 = vsel %vm3064, %v3016, %v3112
      %v3161 = vsel %vm3065, %v3017, %v3113
      %v3162 = vsel %vm3066, %v3018, %v3114
      %v3163 = vsel %vm3067, %v3019, %v3115
      %v3164 = vsel %vm3068, %v3020, %v3116
      %v3165 = vsel %vm3069, %v3021, %v3117
      %v3166 = vsel %vm3070, %v3022, %v3118
      %v3167 = vsel %vm3071, %v3023, %v3119
      %v3168 = vsel %vm3072, %v3024, %v3120
      %v3169 = vsel %vm3073, %v3025, %v3121
      %v3170 = vsel %vm3074, %v3026, %v3122
      %v3171 = vsel %vm3075, %v3027, %v3123
      %v3172 = vsel %vm3076, %v3028, %v3124
      %v3173 = vsel %vm3077, %v3029, %v3125
      %v3174 = vsel %vm3078, %v3030, %v3126
      %v3175 = vsel %vm3079, %v3031, %v3127
      %v3176 = vsel %vm3080, %v3032, %v3128
      %v3177 = vsel %vm3081, %v3033, %v3129
      %v3178 = vsel %vm3082, %v3034, %v3130
      %v3179 = vsel %vm3083, %v3035, %v3131
      %v3180 = vsel %vm3084, %v3036, %v3132
      %v3181 = vsel %vm3085, %v3037, %v3133
      %v3182 = vsel %vm3086, %v3038, %v3134
      %v3183 = vsel %vm3087, %v3039, %v3135
      %v3184 = vsel %vm3088, %v3040, %v3136
      %v3185 = vsel %vm3089, %v3041, %v3137
      %v3186 = vsel %vm3090, %v3042, %v3138
      %v3187 = vsel %vm3091, %v3043, %v3139
      %v3188 = vsel %vm3092, %v3044, %v3140
      %v3189 = vsel %vm3093, %v3045, %v3141
      %v3190 = vsel %vm3094, %v3046, %v3142
      %v3191 = vsel %vm3095, %v3047, %v3143
      %v3192 = vsel %vm3096, %v3048, %v3144
      %v3193 = vsel %vm3097, %v3049, %v3145
      %v3194 = vsel %vm3098, %v3050, %v3146
      %v3195 = vsel %vm3099, %v3051, %v3147
      %v3196 = vsel %vm3100, %v3052, %v3148
      %v3197 = vsel %vm3101, %v3053, %v3149
      %v3198 = vsel %vm3102, %v3054, %v3150
      %v3199 = vsel %vm3103, %v3055, %v3151
      %v3200 = vsel %vm3104, %v3056, %v3152
      %v3201 = vsel %vm3105, %v3057, %v3153
      %v3202 = vsel %vm3106, %v3058, %v3154
      %v3203 = vsel %vm3107, %v3059, %v3155
      %v3204 = vsel %vm3108, %v3060, %v3156
      %v3205 = vsel %vm3109, %v3061, %v3157
      %v3206 = vsel %vm3110, %v3062, %v3158
      %v3207 = vsel %vm3111, %v3063, %v3159
      %v3208 = vadd.f32 %v3160, %v1739
      %v3209 = vadd.f32 %v3161, %v1740
      %v3210 = vadd.f32 %v3162, %v1741
      %v3211 = vadd.f32 %v3163, %v1742
      %v3212 = vadd.f32 %v3164, %v1743
      %v3213 = vadd.f32 %v3165, %v1744
      %v3214 = vadd.f32 %v3166, %v1745
      %v3215 = vadd.f32 %v3167, %v1746
      %v3216 = vadd.f32 %v3168, %v1747
      %v3217 = vadd.f32 %v3169, %v1748
      %v3218 = vadd.f32 %v3170, %v1749
      %v3219 = vadd.f32 %v3171, %v1750
      %v3220 = vadd.f32 %v3172, %v1751
      %v3221 = vadd.f32 %v3173, %v1752
      %v3222 = vadd.f32 %v3174, %v1753
      %v3223 = vadd.f32 %v3175, %v1754
      %v3224 = vadd.f32 %v3176, %v1755
      %v3225 = vadd.f32 %v3177, %v1756
      %v3226 = vadd.f32 %v3178, %v1757
      %v3227 = vadd.f32 %v3179, %v1758
      %v3228 = vadd.f32 %v3180, %v1759
      %v3229 = vadd.f32 %v3181, %v1760
      %v3230 = vadd.f32 %v3182, %v1761
      %v3231 = vadd.f32 %v3183, %v1762
      %v3232 = vadd.f32 %v3184, %v1763
      %v3233 = vadd.f32 %v3185, %v1764
      %v3234 = vadd.f32 %v3186, %v1765
      %v3235 = vadd.f32 %v3187, %v1766
      %v3236 = vadd.f32 %v3188, %v1767
      %v3237 = vadd.f32 %v3189, %v1768
      %v3238 = vadd.f32 %v3190, %v1769
      %v3239 = vadd.f32 %v3191, %v1770
      %v3240 = vadd.f32 %v3192, %v1771
      %v3241 = vadd.f32 %v3193, %v1772
      %v3242 = vadd.f32 %v3194, %v1773
      %v3243 = vadd.f32 %v3195, %v1774
      %v3244 = vadd.f32 %v3196, %v1775
      %v3245 = vadd.f32 %v3197, %v1776
      %v3246 = vadd.f32 %v3198, %v1777
      %v3247 = vadd.f32 %v3199, %v1778
      %v3248 = vadd.f32 %v3200, %v1779
      %v3249 = vadd.f32 %v3201, %v1780
      %v3250 = vadd.f32 %v3202, %v1781
      %v3251 = vadd.f32 %v3203, %v1782
      %v3252 = vadd.f32 %v3204, %v1783
      %v3253 = vadd.f32 %v3205, %v1784
      %v3254 = vadd.f32 %v3206, %v1785
      %v3255 = vadd.f32 %v3207, %v1786
      %v3256 = vmax.f32 %v3208, %v3209
      %v3257 = vmax.f32 %v3256, %v3210
      %3258 = vmax.xlane.f32.xlu0 %v3257
      %v3259 = vpop.xlane.xlu0 %3258
      %v3260 = vmax.f32 %v3211, %v3212
      %v3261 = vmax.f32 %v3260, %v3213
      %3262 = vmax.xlane.f32.xlu0 %v3261
      %v3263 = vpop.xlane.xlu0 %3262
      %v3264 = vmax.f32 %v3214, %v3215
      %v3265 = vmax.f32 %v3264, %v3216
      %3266 = vmax.xlane.f32.xlu0 %v3265
      %v3267 = vpop.xlane.xlu0 %3266
      %v3268 = vmax.f32 %v3217, %v3218
      %v3269 = vmax.f32 %v3268, %v3219
      %3270 = vmax.xlane.f32.xlu0 %v3269
      %v3271 = vpop.xlane.xlu0 %3270
      %v3272 = vmax.f32 %v3220, %v3221
      %v3273 = vmax.f32 %v3272, %v3222
      %3274 = vmax.xlane.f32.xlu0 %v3273
      %v3275 = vpop.xlane.xlu0 %3274
      %v3276 = vmax.f32 %v3223, %v3224
      %v3277 = vmax.f32 %v3276, %v3225
      %3278 = vmax.xlane.f32.xlu0 %v3277
      %v3279 = vpop.xlane.xlu0 %3278
      %v3280 = vmax.f32 %v3226, %v3227
      %v3281 = vmax.f32 %v3280, %v3228
      %3282 = vmax.xlane.f32.xlu0 %v3281
      %v3283 = vpop.xlane.xlu0 %3282
      %v3284 = vmax.f32 %v3229, %v3230
      %v3285 = vmax.f32 %v3284, %v3231
      %3286 = vmax.xlane.f32.xlu0 %v3285
      %v3287 = vpop.xlane.xlu0 %3286
      %v3288 = vmax.f32 %v3232, %v3233
      %v3289 = vmax.f32 %v3288, %v3234
      %3290 = vmax.xlane.f32.xlu0 %v3289
      %v3291 = vpop.xlane.xlu0 %3290
      %v3292 = vmax.f32 %v3235, %v3236
      %v3293 = vmax.f32 %v3292, %v3237
      %3294 = vmax.xlane.f32.xlu0 %v3293
      %v3295 = vpop.xlane.xlu0 %3294
      %v3296 = vmax.f32 %v3238, %v3239
      %v3297 = vmax.f32 %v3296, %v3240
      %3298 = vmax.xlane.f32.xlu0 %v3297
      %v3299 = vpop.xlane.xlu0 %3298
      %v3300 = vmax.f32 %v3241, %v3242
      %v3301 = vmax.f32 %v3300, %v3243
      %3302 = vmax.xlane.f32.xlu0 %v3301
      %v3303 = vpop.xlane.xlu0 %3302
      %v3304 = vmax.f32 %v3244, %v3245
      %v3305 = vmax.f32 %v3304, %v3246
      %3306 = vmax.xlane.f32.xlu0 %v3305
      %v3307 = vpop.xlane.xlu0 %3306
      %v3308 = vmax.f32 %v3247, %v3248
      %v3309 = vmax.f32 %v3308, %v3249
      %3310 = vmax.xlane.f32.xlu0 %v3309
      %v3311 = vpop.xlane.xlu0 %3310
      %v3312 = vmax.f32 %v3250, %v3251
      %v3313 = vmax.f32 %v3312, %v3252
      %3314 = vmax.xlane.f32.xlu0 %v3313
      %v3315 = vpop.xlane.xlu0 %3314
      %v3316 = vmax.f32 %v3253, %v3254
      %v3317 = vmax.f32 %v3316, %v3255
      %3318 = vmax.xlane.f32.xlu0 %v3317
      %v3319 = vpop.xlane.xlu0 %3318
      %v3320 = vsub.f32 %v3208, %v3259
      %v3321 = vsub.f32 %v3209, %v3259
      %v3322 = vsub.f32 %v3210, %v3259
      %v3323 = vsub.f32 %v3211, %v3263
      %v3324 = vsub.f32 %v3212, %v3263
      %v3325 = vsub.f32 %v3213, %v3263
      %v3326 = vsub.f32 %v3214, %v3267
      %v3327 = vsub.f32 %v3215, %v3267
      %v3328 = vsub.f32 %v3216, %v3267
      %v3329 = vsub.f32 %v3217, %v3271
      %v3330 = vsub.f32 %v3218, %v3271
      %v3331 = vsub.f32 %v3219, %v3271
      %v3332 = vsub.f32 %v3220, %v3275
      %v3333 = vsub.f32 %v3221, %v3275
      %v3334 = vsub.f32 %v3222, %v3275
      %v3335 = vsub.f32 %v3223, %v3279
      %v3336 = vsub.f32 %v3224, %v3279
      %v3337 = vsub.f32 %v3225, %v3279
      %v3338 = vsub.f32 %v3226, %v3283
      %v3339 = vsub.f32 %v3227, %v3283
      %v3340 = vsub.f32 %v3228, %v3283
      %v3341 = vsub.f32 %v3229, %v3287
      %v3342 = vsub.f32 %v3230, %v3287
      %v3343 = vsub.f32 %v3231, %v3287
      %v3344 = vsub.f32 %v3232, %v3291
      %v3345 = vsub.f32 %v3233, %v3291
      %v3346 = vsub.f32 %v3234, %v3291
      %v3347 = vsub.f32 %v3235, %v3295
      %v3348 = vsub.f32 %v3236, %v3295
      %v3349 = vsub.f32 %v3237, %v3295
      %v3350 = vsub.f32 %v3238, %v3299
      %v3351 = vsub.f32 %v3239, %v3299
      %v3352 = vsub.f32 %v3240, %v3299
      %v3353 = vsub.f32 %v3241, %v3303
      %v3354 = vsub.f32 %v3242, %v3303
      %v3355 = vsub.f32 %v3243, %v3303
      %v3356 = vsub.f32 %v3244, %v3307
      %v3357 = vsub.f32 %v3245, %v3307
      %v3358 = vsub.f32 %v3246, %v3307
      %v3359 = vsub.f32 %v3247, %v3311
      %v3360 = vsub.f32 %v3248, %v3311
      %v3361 = vsub.f32 %v3249, %v3311
      %v3362 = vsub.f32 %v3250, %v3315
      %v3363 = vsub.f32 %v3251, %v3315
      %v3364 = vsub.f32 %v3252, %v3315
      %v3365 = vsub.f32 %v3253, %v3319
      %v3366 = vsub.f32 %v3254, %v3319
      %v3367 = vsub.f32 %v3255, %v3319
      %v3368 = vmul.f32 %v3320, 1.442695
      %v3369 = vpow.pop %v3368
      %v3370 = vmul.f32 %v3321, 1.442695
      %v3371 = vpow.pop %v3370
      %v3372 = vmul.f32 %v3322, 1.442695
      %v3373 = vpow.pop %v3372
      %v3374 = vmul.f32 %v3323, 1.442695
      %v3375 = vpow.pop %v3374
      %v3376 = vmul.f32 %v3324, 1.442695
      %v3377 = vpow.pop %v3376
      %v3378 = vmul.f32 %v3325, 1.442695
      %v3379 = vpow.pop %v3378
      %v3380 = vmul.f32 %v3326, 1.442695
      %v3381 = vpow.pop %v3380
      %v3382 = vmul.f32 %v3327, 1.442695
      %v3383 = vpow.pop %v3382
      %v3384 = vmul.f32 %v3328, 1.442695
      %v3385 = vpow.pop %v3384
      %v3386 = vmul.f32 %v3329, 1.442695
      %v3387 = vpow.pop %v3386
      %v3388 = vmul.f32 %v3330, 1.442695
      %v3389 = vpow.pop %v3388
      %v3390 = vmul.f32 %v3331, 1.442695
      %v3391 = vpow.pop %v3390
      %v3392 = vmul.f32 %v3332, 1.442695
      %v3393 = vpow.pop %v3392
      %v3394 = vmul.f32 %v3333, 1.442695
      %v3395 = vpow.pop %v3394
      %v3396 = vmul.f32 %v3334, 1.442695
      %v3397 = vpow.pop %v3396
      %v3398 = vmul.f32 %v3335, 1.442695
      %v3399 = vpow.pop %v3398
      %v3400 = vmul.f32 %v3336, 1.442695
      %v3401 = vpow.pop %v3400
      %v3402 = vmul.f32 %v3337, 1.442695
      %v3403 = vpow.pop %v3402
      %v3404 = vmul.f32 %v3338, 1.442695
      %v3405 = vpow.pop %v3404
      %v3406 = vmul.f32 %v3339, 1.442695
      %v3407 = vpow.pop %v3406
      %v3408 = vmul.f32 %v3340, 1.442695
      %v3409 = vpow.pop %v3408
      %v3410 = vmul.f32 %v3341, 1.442695
      %v3411 = vpow.pop %v3410
      %v3412 = vmul.f32 %v3342, 1.442695
      %v3413 = vpow.pop %v3412
      %v3414 = vmul.f32 %v3343, 1.442695
      %v3415 = vpow.pop %v3414
      %v3416 = vmul.f32 %v3344, 1.442695
      %v3417 = vpow.pop %v3416
      %v3418 = vmul.f32 %v3345, 1.442695
      %v3419 = vpow.pop %v3418
      %v3420 = vmul.f32 %v3346, 1.442695
      %v3421 = vpow.pop %v3420
      %v3422 = vmul.f32 %v3347, 1.442695
      %v3423 = vpow.pop %v3422
      %v3424 = vmul.f32 %v3348, 1.442695
      %v3425 = vpow.pop %v3424
      %v3426 = vmul.f32 %v3349, 1.442695
      %v3427 = vpow.pop %v3426
      %v3428 = vmul.f32 %v3350, 1.442695
      %v3429 = vpow.pop %v3428
      %v3430 = vmul.f32 %v3351, 1.442695
      %v3431 = vpow.pop %v3430
      %v3432 = vmul.f32 %v3352, 1.442695
      %v3433 = vpow.pop %v3432
      %v3434 = vmul.f32 %v3353, 1.442695
      %v3435 = vpow.pop %v3434
      %v3436 = vmul.f32 %v3354, 1.442695
      %v3437 = vpow.pop %v3436
      %v3438 = vmul.f32 %v3355, 1.442695
      %v3439 = vpow.pop %v3438
      %v3440 = vmul.f32 %v3356, 1.442695
      %v3441 = vpow.pop %v3440
      %v3442 = vmul.f32 %v3357, 1.442695
      %v3443 = vpow.pop %v3442
      %v3444 = vmul.f32 %v3358, 1.442695
      %v3445 = vpow.pop %v3444
      %v3446 = vmul.f32 %v3359, 1.442695
      %v3447 = vpow.pop %v3446
      %v3448 = vmul.f32 %v3360, 1.442695
      %v3449 = vpow.pop %v3448
      %v3450 = vmul.f32 %v3361, 1.442695
      %v3451 = vpow.pop %v3450
      %v3452 = vmul.f32 %v3362, 1.442695
      %v3453 = vpow.pop %v3452
      %v3454 = vmul.f32 %v3363, 1.442695
      %v3455 = vpow.pop %v3454
      %v3456 = vmul.f32 %v3364, 1.442695
      %v3457 = vpow.pop %v3456
      %v3458 = vmul.f32 %v3365, 1.442695
      %v3459 = vpow.pop %v3458
      %v3460 = vmul.f32 %v3366, 1.442695
      %v3461 = vpow.pop %v3460
      %v3462 = vmul.f32 %v3367, 1.442695
      %v3463 = vpow.pop %v3462
      %v3464 = vmul.f32 %v3369, %v1643
      %v3465 = vmul.f32 %v3371, %v1644
      %v3466 = vmul.f32 %v3373, %v1645
      %v3467 = vmul.f32 %v3375, %v1646
      %v3468 = vmul.f32 %v3377, %v1647
      %v3469 = vmul.f32 %v3379, %v1648
      %v3470 = vmul.f32 %v3381, %v1649
      %v3471 = vmul.f32 %v3383, %v1650
      %v3472 = vmul.f32 %v3385, %v1651
      %v3473 = vmul.f32 %v3387, %v1652
      %v3474 = vmul.f32 %v3389, %v1653
      %v3475 = vmul.f32 %v3391, %v1654
      %v3476 = vmul.f32 %v3393, %v1655
      %v3477 = vmul.f32 %v3395, %v1656
      %v3478 = vmul.f32 %v3397, %v1657
      %v3479 = vmul.f32 %v3399, %v1658
      %v3480 = vmul.f32 %v3401, %v1659
      %v3481 = vmul.f32 %v3403, %v1660
      %v3482 = vmul.f32 %v3405, %v1661
      %v3483 = vmul.f32 %v3407, %v1662
      %v3484 = vmul.f32 %v3409, %v1663
      %v3485 = vmul.f32 %v3411, %v1664
      %v3486 = vmul.f32 %v3413, %v1665
      %v3487 = vmul.f32 %v3415, %v1666
      %v3488 = vmul.f32 %v3417, %v1667
      %v3489 = vmul.f32 %v3419, %v1668
      %v3490 = vmul.f32 %v3421, %v1669
      %v3491 = vmul.f32 %v3423, %v1670
      %v3492 = vmul.f32 %v3425, %v1671
      %v3493 = vmul.f32 %v3427, %v1672
      %v3494 = vmul.f32 %v3429, %v1673
      %v3495 = vmul.f32 %v3431, %v1674
      %v3496 = vmul.f32 %v3433, %v1675
      %v3497 = vmul.f32 %v3435, %v1676
      %v3498 = vmul.f32 %v3437, %v1677
      %v3499 = vmul.f32 %v3439, %v1678
      %v3500 = vmul.f32 %v3441, %v1679
      %v3501 = vmul.f32 %v3443, %v1680
      %v3502 = vmul.f32 %v3445, %v1681
      %v3503 = vmul.f32 %v3447, %v1682
      %v3504 = vmul.f32 %v3449, %v1683
      %v3505 = vmul.f32 %v3451, %v1684
      %v3506 = vmul.f32 %v3453, %v1685
      %v3507 = vmul.f32 %v3455, %v1686
      %v3508 = vmul.f32 %v3457, %v1687
      %v3509 = vmul.f32 %v3459, %v1688
      %v3510 = vmul.f32 %v3461, %v1689
      %v3511 = vmul.f32 %v3463, %v1690
      %v3512 = vadd.f32 %v3464, %v3465
      %v3513 = vadd.f32 %v3512, %v3466
      %3514 = vadd.xlane.f32.xlu0 %v3513
      %v3515 = vpop.xlane.xlu0 %3514
      %v3516 = vadd.f32 %v3467, %v3468
      %v3517 = vadd.f32 %v3516, %v3469
      %3518 = vadd.xlane.f32.xlu0 %v3517
      %v3519 = vpop.xlane.xlu0 %3518
      %v3520 = vadd.f32 %v3470, %v3471
      %v3521 = vadd.f32 %v3520, %v3472
      %3522 = vadd.xlane.f32.xlu0 %v3521
      %v3523 = vpop.xlane.xlu0 %3522
      %v3524 = vadd.f32 %v3473, %v3474
      %v3525 = vadd.f32 %v3524, %v3475
      %3526 = vadd.xlane.f32.xlu0 %v3525
      %v3527 = vpop.xlane.xlu0 %3526
      %v3528 = vadd.f32 %v3476, %v3477
      %v3529 = vadd.f32 %v3528, %v3478
      %3530 = vadd.xlane.f32.xlu0 %v3529
      %v3531 = vpop.xlane.xlu0 %3530
      %v3532 = vadd.f32 %v3479, %v3480
      %v3533 = vadd.f32 %v3532, %v3481
      %3534 = vadd.xlane.f32.xlu0 %v3533
      %v3535 = vpop.xlane.xlu0 %3534
      %v3536 = vadd.f32 %v3482, %v3483
      %v3537 = vadd.f32 %v3536, %v3484
      %3538 = vadd.xlane.f32.xlu0 %v3537
      %v3539 = vpop.xlane.xlu0 %3538
      %v3540 = vadd.f32 %v3485, %v3486
      %v3541 = vadd.f32 %v3540, %v3487
      %3542 = vadd.xlane.f32.xlu0 %v3541
      %v3543 = vpop.xlane.xlu0 %3542
      %v3544 = vadd.f32 %v3488, %v3489
      %v3545 = vadd.f32 %v3544, %v3490
      %3546 = vadd.xlane.f32.xlu0 %v3545
      %v3547 = vpop.xlane.xlu0 %3546
      %v3548 = vadd.f32 %v3491, %v3492
      %v3549 = vadd.f32 %v3548, %v3493
      %3550 = vadd.xlane.f32.xlu0 %v3549
      %v3551 = vpop.xlane.xlu0 %3550
      %v3552 = vadd.f32 %v3494, %v3495
      %v3553 = vadd.f32 %v3552, %v3496
      %3554 = vadd.xlane.f32.xlu0 %v3553
      %v3555 = vpop.xlane.xlu0 %3554
      %v3556 = vadd.f32 %v3497, %v3498
      %v3557 = vadd.f32 %v3556, %v3499
      %3558 = vadd.xlane.f32.xlu0 %v3557
      %v3559 = vpop.xlane.xlu0 %3558
      %v3560 = vadd.f32 %v3500, %v3501
      %v3561 = vadd.f32 %v3560, %v3502
      %3562 = vadd.xlane.f32.xlu0 %v3561
      %v3563 = vpop.xlane.xlu0 %3562
      %v3564 = vadd.f32 %v3503, %v3504
      %v3565 = vadd.f32 %v3564, %v3505
      %3566 = vadd.xlane.f32.xlu0 %v3565
      %v3567 = vpop.xlane.xlu0 %3566
      %v3568 = vadd.f32 %v3506, %v3507
      %v3569 = vadd.f32 %v3568, %v3508
      %3570 = vadd.xlane.f32.xlu0 %v3569
      %v3571 = vpop.xlane.xlu0 %3570
      %v3572 = vadd.f32 %v3509, %v3510
      %v3573 = vadd.f32 %v3572, %v3511
      %3574 = vadd.xlane.f32.xlu0 %v3573
      %v3575 = vpop.xlane.xlu0 %3574
      %v3576 = vmax.f32 %v3515, 1e-30
      %v3577 = vmax.f32 %v3519, 1e-30
      %v3578 = vmax.f32 %v3523, 1e-30
      %v3579 = vmax.f32 %v3527, 1e-30
      %v3580 = vmax.f32 %v3531, 1e-30
      %v3581 = vmax.f32 %v3535, 1e-30
      %v3582 = vmax.f32 %v3539, 1e-30
      %v3583 = vmax.f32 %v3543, 1e-30
      %v3584 = vmax.f32 %v3547, 1e-30
      %v3585 = vmax.f32 %v3551, 1e-30
      %v3586 = vmax.f32 %v3555, 1e-30
      %v3587 = vmax.f32 %v3559, 1e-30
      %v3588 = vmax.f32 %v3563, 1e-30
      %v3589 = vmax.f32 %v3567, 1e-30
      %v3590 = vmax.f32 %v3571, 1e-30
      %v3591 = vmax.f32 %v3575, 1e-30
      %v3592 = vrcp.pop %v3576
      %v3593 = vrcp.pop %v3577
      %v3594 = vrcp.pop %v3578
      %v3595 = vrcp.pop %v3579
      %v3596 = vrcp.pop %v3580
      %v3597 = vrcp.pop %v3581
      %v3598 = vrcp.pop %v3582
      %v3599 = vrcp.pop %v3583
      %v3600 = vrcp.pop %v3584
      %v3601 = vrcp.pop %v3585
      %v3602 = vrcp.pop %v3586
      %v3603 = vrcp.pop %v3587
      %v3604 = vrcp.pop %v3588
      %v3605 = vrcp.pop %v3589
      %v3606 = vrcp.pop %v3590
      %v3607 = vrcp.pop %v3591
      %vm3608 = vcmp.gt.f32.partialorder %v3515, 0.0
      %vm3609 = vcmp.gt.f32.partialorder %v3519, 0.0
      %vm3610 = vcmp.gt.f32.partialorder %v3523, 0.0
      %vm3611 = vcmp.gt.f32.partialorder %v3527, 0.0
      %vm3612 = vcmp.gt.f32.partialorder %v3531, 0.0
      %vm3613 = vcmp.gt.f32.partialorder %v3535, 0.0
      %vm3614 = vcmp.gt.f32.partialorder %v3539, 0.0
      %vm3615 = vcmp.gt.f32.partialorder %v3543, 0.0
      %vm3616 = vcmp.gt.f32.partialorder %v3547, 0.0
      %vm3617 = vcmp.gt.f32.partialorder %v3551, 0.0
      %vm3618 = vcmp.gt.f32.partialorder %v3555, 0.0
      %vm3619 = vcmp.gt.f32.partialorder %v3559, 0.0
      %vm3620 = vcmp.gt.f32.partialorder %v3563, 0.0
      %vm3621 = vcmp.gt.f32.partialorder %v3567, 0.0
      %vm3622 = vcmp.gt.f32.partialorder %v3571, 0.0
      %vm3623 = vcmp.gt.f32.partialorder %v3575, 0.0
      %v3624 = vsel %vm3608, %v3592, 0.0
      %v3625 = vsel %vm3609, %v3593, 0.0
      %v3626 = vsel %vm3610, %v3594, 0.0
      %v3627 = vsel %vm3611, %v3595, 0.0
      %v3628 = vsel %vm3612, %v3596, 0.0
      %v3629 = vsel %vm3613, %v3597, 0.0
      %v3630 = vsel %vm3614, %v3598, 0.0
      %v3631 = vsel %vm3615, %v3599, 0.0
      %v3632 = vsel %vm3616, %v3600, 0.0
      %v3633 = vsel %vm3617, %v3601, 0.0
      %v3634 = vsel %vm3618, %v3602, 0.0
      %v3635 = vsel %vm3619, %v3603, 0.0
      %v3636 = vsel %vm3620, %v3604, 0.0
      %v3637 = vsel %vm3621, %v3605, 0.0
      %v3638 = vsel %vm3622, %v3606, 0.0
      %v3639 = vsel %vm3623, %v3607, 0.0
      %v3640 = vmul.f32 %v3464, %v3624
      %v3641 = vmul.f32 %v3465, %v3624
      %v3642 = vmul.f32 %v3466, %v3624
      %v3643 = vmul.f32 %v3467, %v3625
      %v3644 = vmul.f32 %v3468, %v3625
      %v3645 = vmul.f32 %v3469, %v3625
      %v3646 = vmul.f32 %v3470, %v3626
      %v3647 = vmul.f32 %v3471, %v3626
      %v3648 = vmul.f32 %v3472, %v3626
      %v3649 = vmul.f32 %v3473, %v3627
      %v3650 = vmul.f32 %v3474, %v3627
      %v3651 = vmul.f32 %v3475, %v3627
      %v3652 = vmul.f32 %v3476, %v3628
      %v3653 = vmul.f32 %v3477, %v3628
      %v3654 = vmul.f32 %v3478, %v3628
      %v3655 = vmul.f32 %v3479, %v3629
      %v3656 = vmul.f32 %v3480, %v3629
      %v3657 = vmul.f32 %v3481, %v3629
      %v3658 = vmul.f32 %v3482, %v3630
      %v3659 = vmul.f32 %v3483, %v3630
      %v3660 = vmul.f32 %v3484, %v3630
      %v3661 = vmul.f32 %v3485, %v3631
      %v3662 = vmul.f32 %v3486, %v3631
      %v3663 = vmul.f32 %v3487, %v3631
      %v3664 = vmul.f32 %v3488, %v3632
      %v3665 = vmul.f32 %v3489, %v3632
      %v3666 = vmul.f32 %v3490, %v3632
      %v3667 = vmul.f32 %v3491, %v3633
      %v3668 = vmul.f32 %v3492, %v3633
      %v3669 = vmul.f32 %v3493, %v3633
      %v3670 = vmul.f32 %v3494, %v3634
      %v3671 = vmul.f32 %v3495, %v3634
      %v3672 = vmul.f32 %v3496, %v3634
      %v3673 = vmul.f32 %v3497, %v3635
      %v3674 = vmul.f32 %v3498, %v3635
      %v3675 = vmul.f32 %v3499, %v3635
      %v3676 = vmul.f32 %v3500, %v3636
      %v3677 = vmul.f32 %v3501, %v3636
      %v3678 = vmul.f32 %v3502, %v3636
      %v3679 = vmul.f32 %v3503, %v3637
      %v3680 = vmul.f32 %v3504, %v3637
      %v3681 = vmul.f32 %v3505, %v3637
      %v3682 = vmul.f32 %v3506, %v3638
      %v3683 = vmul.f32 %v3507, %v3638
      %v3684 = vmul.f32 %v3508, %v3638
      %v3685 = vmul.f32 %v3509, %v3639
      %v3686 = vmul.f32 %v3510, %v3639
      %v3687 = vmul.f32 %v3511, %v3639
      %3736 = vrot.lane.b32.xlu0 %v1806, 112
      %v3737 = vpop.permute.xlu0 %3736
      %3738 = vrot.lane.b32.xlu0 %v1807, 112
      %v3739 = vpop.permute.xlu0 %3738
      %3740 = vrot.lane.b32.xlu0 %v1808, 112
      %v3741 = vpop.permute.xlu0 %3740
      %3742 = vrot.lane.b32.xlu0 %v1809, 112
      %v3743 = vpop.permute.xlu0 %3742
      %3744 = vrot.lane.b32.xlu0 %v1810, 112
      %v3745 = vpop.permute.xlu0 %3744
      %3746 = vrot.lane.b32.xlu0 %v1811, 112
      %v3747 = vpop.permute.xlu0 %3746
      %3748 = vrot.lane.b32.xlu0 %v1812, 112
      %v3749 = vpop.permute.xlu0 %3748
      %3750 = vrot.lane.b32.xlu0 %v1813, 112
      %v3751 = vpop.permute.xlu0 %3750
      %3752 = vrot.lane.b32.xlu0 %v1814, 112
      %v3753 = vpop.permute.xlu0 %3752
      %3754 = vrot.lane.b32.xlu0 %v1815, 112
      %v3755 = vpop.permute.xlu0 %3754
      %3756 = vrot.lane.b32.xlu0 %v1816, 112
      %v3757 = vpop.permute.xlu0 %3756
      %3758 = vrot.lane.b32.xlu0 %v1817, 112
      %v3759 = vpop.permute.xlu0 %3758
      %3760 = vrot.lane.b32.xlu0 %v1818, 112
      %v3761 = vpop.permute.xlu0 %3760
      %3762 = vrot.lane.b32.xlu0 %v1819, 112
      %v3763 = vpop.permute.xlu0 %3762
      %3764 = vrot.lane.b32.xlu0 %v1820, 112
      %v3765 = vpop.permute.xlu0 %3764
      %3766 = vrot.lane.b32.xlu0 %v1821, 112
      %v3767 = vpop.permute.xlu0 %3766
      %3768 = vrot.lane.b32.xlu0 %v1822, 112
      %v3769 = vpop.permute.xlu0 %3768
      %3770 = vrot.lane.b32.xlu0 %v1823, 112
      %v3771 = vpop.permute.xlu0 %3770
      %3772 = vrot.lane.b32.xlu0 %v1824, 112
      %v3773 = vpop.permute.xlu0 %3772
      %3774 = vrot.lane.b32.xlu0 %v1825, 112
      %v3775 = vpop.permute.xlu0 %3774
      %3776 = vrot.lane.b32.xlu0 %v1826, 112
      %v3777 = vpop.permute.xlu0 %3776
      %3778 = vrot.lane.b32.xlu0 %v1827, 112
      %v3779 = vpop.permute.xlu0 %3778
      %3780 = vrot.lane.b32.xlu0 %v1828, 112
      %v3781 = vpop.permute.xlu0 %3780
      %3782 = vrot.lane.b32.xlu0 %v1829, 112
      %v3783 = vpop.permute.xlu0 %3782
      %3784 = vrot.lane.b32.xlu0 %v1830, 112
      %v3785 = vpop.permute.xlu0 %3784
      %3786 = vrot.lane.b32.xlu0 %v1831, 112
      %v3787 = vpop.permute.xlu0 %3786
      %3788 = vrot.lane.b32.xlu0 %v1832, 112
      %v3789 = vpop.permute.xlu0 %3788
      %3790 = vrot.lane.b32.xlu0 %v1833, 112
      %v3791 = vpop.permute.xlu0 %3790
      %3792 = vrot.lane.b32.xlu0 %v1834, 112
      %v3793 = vpop.permute.xlu0 %3792
      %3794 = vrot.lane.b32.xlu0 %v1835, 112
      %v3795 = vpop.permute.xlu0 %3794
      %3796 = vrot.lane.b32.xlu0 %v1836, 112
      %v3797 = vpop.permute.xlu0 %3796
      %3798 = vrot.lane.b32.xlu0 %v1837, 112
      %v3799 = vpop.permute.xlu0 %3798
      %3800 = vrot.lane.b32.xlu0 %v1838, 112
      %v3801 = vpop.permute.xlu0 %3800
      %3802 = vrot.lane.b32.xlu0 %v1839, 112
      %v3803 = vpop.permute.xlu0 %3802
      %3804 = vrot.lane.b32.xlu0 %v1840, 112
      %v3805 = vpop.permute.xlu0 %3804
      %3806 = vrot.lane.b32.xlu0 %v1841, 112
      %v3807 = vpop.permute.xlu0 %3806
      %3808 = vrot.lane.b32.xlu0 %v1842, 112
      %v3809 = vpop.permute.xlu0 %3808
      %3810 = vrot.lane.b32.xlu0 %v1843, 112
      %v3811 = vpop.permute.xlu0 %3810
      %3812 = vrot.lane.b32.xlu0 %v1844, 112
      %v3813 = vpop.permute.xlu0 %3812
      %3814 = vrot.lane.b32.xlu0 %v1845, 112
      %v3815 = vpop.permute.xlu0 %3814
      %3816 = vrot.lane.b32.xlu0 %v1846, 112
      %v3817 = vpop.permute.xlu0 %3816
      %3818 = vrot.lane.b32.xlu0 %v1847, 112
      %v3819 = vpop.permute.xlu0 %3818
      %3820 = vrot.lane.b32.xlu0 %v1848, 112
      %v3821 = vpop.permute.xlu0 %3820
      %3822 = vrot.lane.b32.xlu0 %v1849, 112
      %v3823 = vpop.permute.xlu0 %3822
      %3824 = vrot.lane.b32.xlu0 %v1850, 112
      %v3825 = vpop.permute.xlu0 %3824
      %3826 = vrot.lane.b32.xlu0 %v1851, 112
      %v3827 = vpop.permute.xlu0 %3826
      %3828 = vrot.lane.b32.xlu0 %v1852, 112
      %v3829 = vpop.permute.xlu0 %3828
      %3830 = vrot.lane.b32.xlu0 %v1853, 112
      %v3831 = vpop.permute.xlu0 %3830
      %3880 = vmatprep.subr.mxu0 0.0
      %3881 = vmatpush1.msra.mxu0 %v3767
      %3882 = vmatprep.subr.mxu0 0.0
      %3883 = vmatpush1.msra.mxu0 %v3765
      %3884 = vmatprep.subr.mxu0 0.0
      %3885 = vmatpush1.msra.mxu0 %v3763
      %3886 = vmatprep.subr.mxu0 0.0
      %3887 = vmatpush1.msra.mxu0 %v3761
      %3888 = vmatprep.subr.mxu0 0.0
      %3889 = vmatpush1.msra.mxu0 %v3759
      %3890 = vmatprep.subr.mxu0 0.0
      %3891 = vmatpush1.msra.mxu0 %v3757
      %3892 = vmatprep.subr.mxu0 0.0
      %3893 = vmatpush1.msra.mxu0 %v3755
      %3894 = vmatprep.subr.mxu0 0.0
      %3895 = vmatpush1.msra.mxu0 %v3753
      %3896 = vmatprep.subr.mxu0 0.0
      %3897 = vmatpush1.msra.mxu0 %v3751
      %3898 = vmatprep.subr.mxu0 0.0
      %3899 = vmatpush1.msra.mxu0 %v3749
      %3900 = vmatprep.subr.mxu0 0.0
      %3901 = vmatpush1.msra.mxu0 %v3747
      %3902 = vmatprep.subr.mxu0 0.0
      %3903 = vmatpush1.msra.mxu0 %v3745
      %3904 = vmatprep.subr.mxu0 0.0
      %3905 = vmatpush1.msra.mxu0 %v3743
      %3906 = vmatprep.subr.mxu0 0.0
      %3907 = vmatpush1.msra.mxu0 %v3741
      %3908 = vmatprep.subr.mxu0 0.0
      %3909 = vmatpush1.msra.mxu0 %v3739
      %3910 = vmatprep.subr.mxu0 0.0
      %3911 = vmatpush1.msra.mxu0 %v3737
      %3912 = vmatprep.subr.mxu0 0.0
      %3913 = vmatpush2.msra.mxu0 %v3799
      %3914 = vmatprep.subr.mxu0 0.0
      %3915 = vmatpush2.msra.mxu0 %v3797
      %3916 = vmatprep.subr.mxu0 0.0
      %3917 = vmatpush2.msra.mxu0 %v3795
      %3918 = vmatprep.subr.mxu0 0.0
      %3919 = vmatpush2.msra.mxu0 %v3793
      %3920 = vmatprep.subr.mxu0 0.0
      %3921 = vmatpush2.msra.mxu0 %v3791
      %3922 = vmatprep.subr.mxu0 0.0
      %3923 = vmatpush2.msra.mxu0 %v3789
      %3924 = vmatprep.subr.mxu0 0.0
      %3925 = vmatpush2.msra.mxu0 %v3787
      %3926 = vmatprep.subr.mxu0 0.0
      %3927 = vmatpush2.msra.mxu0 %v3785
      %3928 = vmatprep.subr.mxu0 0.0
      %3929 = vmatpush2.msra.mxu0 %v3783
      %3930 = vmatprep.subr.mxu0 0.0
      %3931 = vmatpush2.msra.mxu0 %v3781
      %3932 = vmatprep.subr.mxu0 0.0
      %3933 = vmatpush2.msra.mxu0 %v3779
      %3934 = vmatprep.subr.mxu0 0.0
      %3935 = vmatpush2.msra.mxu0 %v3777
      %3936 = vmatprep.subr.mxu0 0.0
      %3937 = vmatpush2.msra.mxu0 %v3775
      %3938 = vmatprep.subr.mxu0 0.0
      %3939 = vmatpush2.msra.mxu0 %v3773
      %3940 = vmatprep.subr.mxu0 0.0
      %3941 = vmatpush2.msra.mxu0 %v3771
      %3942 = vmatprep.subr.mxu0 0.0
      %3943 = vmatpush2.msra.mxu0 %v3769
      %3944 = vmatprep.mubr.f32.mxu0 %v3641
      %3945 = vmatmul.mubr.f32.gmra.mxu0 %v3640
      %v3946 = vpop.f32.mrf.mxu0
      %v3947 = vadd.f32 0.0, %v3946
      %v3948 = vpop.f32.mrf.mxu0
      %3949 = vmatprep.mubr.f32.mxu0 %v3644
      %3950 = vmatmul.mubr.f32.gmra.mxu0 %v3643
      %v3951 = vpop.f32.mrf.mxu0
      %v3952 = vadd.f32 0.0, %v3951
      %v3953 = vpop.f32.mrf.mxu0
      %3954 = vmatprep.mubr.f32.mxu0 %v3647
      %3955 = vmatmul.mubr.f32.gmra.mxu0 %v3646
      %v3956 = vpop.f32.mrf.mxu0
      %v3957 = vadd.f32 0.0, %v3956
      %v3958 = vpop.f32.mrf.mxu0
      %3959 = vmatprep.mubr.f32.mxu0 %v3650
      %3960 = vmatmul.mubr.f32.gmra.mxu0 %v3649
      %v3961 = vpop.f32.mrf.mxu0
      %v3962 = vadd.f32 0.0, %v3961
      %v3963 = vpop.f32.mrf.mxu0
      %3964 = vmatprep.mubr.f32.mxu0 %v3653
      %3965 = vmatmul.mubr.f32.gmra.mxu0 %v3652
      %v3966 = vpop.f32.mrf.mxu0
      %v3967 = vadd.f32 0.0, %v3966
      %v3968 = vpop.f32.mrf.mxu0
      %3969 = vmatprep.mubr.f32.mxu0 %v3656
      %3970 = vmatmul.mubr.f32.gmra.mxu0 %v3655
      %v3971 = vpop.f32.mrf.mxu0
      %v3972 = vadd.f32 0.0, %v3971
      %v3973 = vpop.f32.mrf.mxu0
      %3974 = vmatprep.mubr.f32.mxu0 %v3659
      %3975 = vmatmul.mubr.f32.gmra.mxu0 %v3658
      %v3976 = vpop.f32.mrf.mxu0
      %v3977 = vadd.f32 0.0, %v3976
      %v3978 = vpop.f32.mrf.mxu0
      %3979 = vmatprep.mubr.f32.mxu0 %v3662
      %3980 = vmatmul.mubr.f32.gmra.mxu0 %v3661
      %v3981 = vpop.f32.mrf.mxu0
      %v3982 = vadd.f32 0.0, %v3981
      %v3983 = vpop.f32.mrf.mxu0
      %3984 = vmatprep.mubr.f32.mxu0 %v3665
      %3985 = vmatmul.mubr.f32.gmra.mxu0 %v3664
      %v3986 = vpop.f32.mrf.mxu0
      %v3987 = vadd.f32 0.0, %v3986
      %v3988 = vpop.f32.mrf.mxu0
      %3989 = vmatprep.mubr.f32.mxu0 %v3668
      %3990 = vmatmul.mubr.f32.gmra.mxu0 %v3667
      %v3991 = vpop.f32.mrf.mxu0
      %v3992 = vadd.f32 0.0, %v3991
      %v3993 = vpop.f32.mrf.mxu0
      %3994 = vmatprep.mubr.f32.mxu0 %v3671
      %3995 = vmatmul.mubr.f32.gmra.mxu0 %v3670
      %v3996 = vpop.f32.mrf.mxu0
      %v3997 = vadd.f32 0.0, %v3996
      %v3998 = vpop.f32.mrf.mxu0
      %3999 = vmatprep.mubr.f32.mxu0 %v3674
      %4000 = vmatmul.mubr.f32.gmra.mxu0 %v3673
      %v4001 = vpop.f32.mrf.mxu0
      %v4002 = vadd.f32 0.0, %v4001
      %v4003 = vpop.f32.mrf.mxu0
      %4004 = vmatprep.mubr.f32.mxu0 %v3677
      %4005 = vmatmul.mubr.f32.gmra.mxu0 %v3676
      %v4006 = vpop.f32.mrf.mxu0
      %v4007 = vadd.f32 0.0, %v4006
      %v4008 = vpop.f32.mrf.mxu0
      %4009 = vmatprep.mubr.f32.mxu0 %v3680
      %4010 = vmatmul.mubr.f32.gmra.mxu0 %v3679
      %v4011 = vpop.f32.mrf.mxu0
      %v4012 = vadd.f32 0.0, %v4011
      %v4013 = vpop.f32.mrf.mxu0
      %4014 = vmatprep.mubr.f32.mxu0 %v3683
      %4015 = vmatmul.mubr.f32.gmra.mxu0 %v3682
      %v4016 = vpop.f32.mrf.mxu0
      %v4017 = vadd.f32 0.0, %v4016
      %v4018 = vpop.f32.mrf.mxu0
      %4019 = vmatprep.mubr.f32.mxu0 %v3686
      %4020 = vmatmul.mubr.f32.gmra.mxu0 %v3685
      %v4021 = vpop.f32.mrf.mxu0
      %v4022 = vadd.f32 0.0, %v4021
      %v4023 = vpop.f32.mrf.mxu0
      %4024 = vdwg.mxu0
      %4025 = vmatprep.subr.mxu0 0.0
      %4026 = vmatpush1.msra.mxu0 %v3831
      %4027 = vmatprep.subr.mxu0 0.0
      %4028 = vmatpush1.msra.mxu0 %v3829
      %4029 = vmatprep.subr.mxu0 0.0
      %4030 = vmatpush1.msra.mxu0 %v3827
      %4031 = vmatprep.subr.mxu0 0.0
      %4032 = vmatpush1.msra.mxu0 %v3825
      %4033 = vmatprep.subr.mxu0 0.0
      %4034 = vmatpush1.msra.mxu0 %v3823
      %4035 = vmatprep.subr.mxu0 0.0
      %4036 = vmatpush1.msra.mxu0 %v3821
      %4037 = vmatprep.subr.mxu0 0.0
      %4038 = vmatpush1.msra.mxu0 %v3819
      %4039 = vmatprep.subr.mxu0 0.0
      %4040 = vmatpush1.msra.mxu0 %v3817
      %4041 = vmatprep.subr.mxu0 0.0
      %4042 = vmatpush1.msra.mxu0 %v3815
      %4043 = vmatprep.subr.mxu0 0.0
      %4044 = vmatpush1.msra.mxu0 %v3813
      %4045 = vmatprep.subr.mxu0 0.0
      %4046 = vmatpush1.msra.mxu0 %v3811
      %4047 = vmatprep.subr.mxu0 0.0
      %4048 = vmatpush1.msra.mxu0 %v3809
      %4049 = vmatprep.subr.mxu0 0.0
      %4050 = vmatpush1.msra.mxu0 %v3807
      %4051 = vmatprep.subr.mxu0 0.0
      %4052 = vmatpush1.msra.mxu0 %v3805
      %4053 = vmatprep.subr.mxu0 0.0
      %4054 = vmatpush1.msra.mxu0 %v3803
      %4055 = vmatprep.subr.mxu0 0.0
      %4056 = vmatpush1.msra.mxu0 %v3801
      %4057 = vmatprep.subr.mxu0 0.0
      %4058 = vmatpush2.msra.mxu0 0.0
      %4059 = vmatprep.subr.mxu0 0.0
      %4060 = vmatpush2.msra.mxu0 0.0
      %4061 = vmatprep.subr.mxu0 0.0
      %4062 = vmatpush2.msra.mxu0 0.0
      %4063 = vmatprep.subr.mxu0 0.0
      %4064 = vmatpush2.msra.mxu0 0.0
      %4065 = vmatprep.subr.mxu0 0.0
      %4066 = vmatpush2.msra.mxu0 0.0
      %4067 = vmatprep.subr.mxu0 0.0
      %4068 = vmatpush2.msra.mxu0 0.0
      %4069 = vmatprep.subr.mxu0 0.0
      %4070 = vmatpush2.msra.mxu0 0.0
      %4071 = vmatprep.subr.mxu0 0.0
      %4072 = vmatpush2.msra.mxu0 0.0
      %4073 = vmatprep.subr.mxu0 0.0
      %4074 = vmatpush2.msra.mxu0 0.0
      %4075 = vmatprep.subr.mxu0 0.0
      %4076 = vmatpush2.msra.mxu0 0.0
      %4077 = vmatprep.subr.mxu0 0.0
      %4078 = vmatpush2.msra.mxu0 0.0
      %4079 = vmatprep.subr.mxu0 0.0
      %4080 = vmatpush2.msra.mxu0 0.0
      %4081 = vmatprep.subr.mxu0 0.0
      %4082 = vmatpush2.msra.mxu0 0.0
      %4083 = vmatprep.subr.mxu0 0.0
      %4084 = vmatpush2.msra.mxu0 0.0
      %4085 = vmatprep.subr.mxu0 0.0
      %4086 = vmatpush2.msra.mxu0 0.0
      %4087 = vmatprep.subr.mxu0 0.0
      %4088 = vmatpush2.msra.mxu0 0.0
      %4089 = vmatprep.mubr.f32.mxu0 0.0
      %4090 = vmatmul.mubr.f32.gmra.mxu0 %v3642
      %v4091 = vpop.f32.mrf.mxu0
      %v4092 = vadd.f32 %v3947, %v4091
      %v4093 = vpop.f32.mrf.mxu0
      %4094 = vmatprep.mubr.f32.mxu0 0.0
      %4095 = vmatmul.mubr.f32.gmra.mxu0 %v3645
      %v4096 = vpop.f32.mrf.mxu0
      %v4097 = vadd.f32 %v3952, %v4096
      %v4098 = vpop.f32.mrf.mxu0
      %4099 = vmatprep.mubr.f32.mxu0 0.0
      %4100 = vmatmul.mubr.f32.gmra.mxu0 %v3648
      %v4101 = vpop.f32.mrf.mxu0
      %v4102 = vadd.f32 %v3957, %v4101
      %v4103 = vpop.f32.mrf.mxu0
      %4104 = vmatprep.mubr.f32.mxu0 0.0
      %4105 = vmatmul.mubr.f32.gmra.mxu0 %v3651
      %v4106 = vpop.f32.mrf.mxu0
      %v4107 = vadd.f32 %v3962, %v4106
      %v4108 = vpop.f32.mrf.mxu0
      %4109 = vmatprep.mubr.f32.mxu0 0.0
      %4110 = vmatmul.mubr.f32.gmra.mxu0 %v3654
      %v4111 = vpop.f32.mrf.mxu0
      %v4112 = vadd.f32 %v3967, %v4111
      %v4113 = vpop.f32.mrf.mxu0
      %4114 = vmatprep.mubr.f32.mxu0 0.0
      %4115 = vmatmul.mubr.f32.gmra.mxu0 %v3657
      %v4116 = vpop.f32.mrf.mxu0
      %v4117 = vadd.f32 %v3972, %v4116
      %v4118 = vpop.f32.mrf.mxu0
      %4119 = vmatprep.mubr.f32.mxu0 0.0
      %4120 = vmatmul.mubr.f32.gmra.mxu0 %v3660
      %v4121 = vpop.f32.mrf.mxu0
      %v4122 = vadd.f32 %v3977, %v4121
      %v4123 = vpop.f32.mrf.mxu0
      %4124 = vmatprep.mubr.f32.mxu0 0.0
      %4125 = vmatmul.mubr.f32.gmra.mxu0 %v3663
      %v4126 = vpop.f32.mrf.mxu0
      %v4127 = vadd.f32 %v3982, %v4126
      %v4128 = vpop.f32.mrf.mxu0
      %4129 = vmatprep.mubr.f32.mxu0 0.0
      %4130 = vmatmul.mubr.f32.gmra.mxu0 %v3666
      %v4131 = vpop.f32.mrf.mxu0
      %v4132 = vadd.f32 %v3987, %v4131
      %v4133 = vpop.f32.mrf.mxu0
      %4134 = vmatprep.mubr.f32.mxu0 0.0
      %4135 = vmatmul.mubr.f32.gmra.mxu0 %v3669
      %v4136 = vpop.f32.mrf.mxu0
      %v4137 = vadd.f32 %v3992, %v4136
      %v4138 = vpop.f32.mrf.mxu0
      %4139 = vmatprep.mubr.f32.mxu0 0.0
      %4140 = vmatmul.mubr.f32.gmra.mxu0 %v3672
      %v4141 = vpop.f32.mrf.mxu0
      %v4142 = vadd.f32 %v3997, %v4141
      %v4143 = vpop.f32.mrf.mxu0
      %4144 = vmatprep.mubr.f32.mxu0 0.0
      %4145 = vmatmul.mubr.f32.gmra.mxu0 %v3675
      %v4146 = vpop.f32.mrf.mxu0
      %v4147 = vadd.f32 %v4002, %v4146
      %v4148 = vpop.f32.mrf.mxu0
      %4149 = vmatprep.mubr.f32.mxu0 0.0
      %4150 = vmatmul.mubr.f32.gmra.mxu0 %v3678
      %v4151 = vpop.f32.mrf.mxu0
      %v4152 = vadd.f32 %v4007, %v4151
      %v4153 = vpop.f32.mrf.mxu0
      %4154 = vmatprep.mubr.f32.mxu0 0.0
      %4155 = vmatmul.mubr.f32.gmra.mxu0 %v3681
      %v4156 = vpop.f32.mrf.mxu0
      %v4157 = vadd.f32 %v4012, %v4156
      %v4158 = vpop.f32.mrf.mxu0
      %4159 = vmatprep.mubr.f32.mxu0 0.0
      %4160 = vmatmul.mubr.f32.gmra.mxu0 %v3684
      %v4161 = vpop.f32.mrf.mxu0
      %v4162 = vadd.f32 %v4017, %v4161
      %v4163 = vpop.f32.mrf.mxu0
      %4164 = vmatprep.mubr.f32.mxu0 0.0
      %4165 = vmatmul.mubr.f32.gmra.mxu0 %v3687
      %v4166 = vpop.f32.mrf.mxu0
      %v4167 = vadd.f32 %v4022, %v4166
      %v4168 = vpop.f32.mrf.mxu0
      %4169 = vdwg.mxu0
      %4170 = vset.pattern.permute.xlu0 2
      %4171 = vperm.xlu0 %4170, %v1788
      %v4172 = vpop.permute.xlu0 %4171
      %4174 = vset.pattern.permute.xlu0 2
      %4175 = vperm.xlu0 %4174, %v1789
      %v4176 = vpop.permute.xlu0 %4175
      %4178 = vset.pattern.permute.xlu0 2
      %4179 = vperm.xlu0 %4178, %v1790
      %v4180 = vpop.permute.xlu0 %4179
      %4182 = vset.pattern.permute.xlu0 2
      %4183 = vperm.xlu0 %4182, %v1791
      %v4184 = vpop.permute.xlu0 %4183
      %4186 = vset.pattern.permute.xlu0 2
      %4187 = vperm.xlu0 %4186, %v1792
      %v4188 = vpop.permute.xlu0 %4187
      %4190 = vset.pattern.permute.xlu0 2
      %4191 = vperm.xlu0 %4190, %v1793
      %v4192 = vpop.permute.xlu0 %4191
      %4194 = vset.pattern.permute.xlu0 2
      %4195 = vperm.xlu0 %4194, %v1794
      %v4196 = vpop.permute.xlu0 %4195
      %4198 = vset.pattern.permute.xlu0 2
      %4199 = vperm.xlu0 %4198, %v1795
      %v4200 = vpop.permute.xlu0 %4199
      %4202 = vset.pattern.permute.xlu0 2
      %4203 = vperm.xlu0 %4202, %v1796
      %v4204 = vpop.permute.xlu0 %4203
      %4206 = vset.pattern.permute.xlu0 2
      %4207 = vperm.xlu0 %4206, %v1797
      %v4208 = vpop.permute.xlu0 %4207
      %4210 = vset.pattern.permute.xlu0 2
      %4211 = vperm.xlu0 %4210, %v1798
      %v4212 = vpop.permute.xlu0 %4211
      %4214 = vset.pattern.permute.xlu0 2
      %4215 = vperm.xlu0 %4214, %v1799
      %v4216 = vpop.permute.xlu0 %4215
      %4218 = vset.pattern.permute.xlu0 2
      %4219 = vperm.xlu0 %4218, %v1800
      %v4220 = vpop.permute.xlu0 %4219
      %4222 = vset.pattern.permute.xlu0 2
      %4223 = vperm.xlu0 %4222, %v1801
      %v4224 = vpop.permute.xlu0 %4223
      %4226 = vset.pattern.permute.xlu0 2
      %4227 = vperm.xlu0 %4226, %v1802
      %v4228 = vpop.permute.xlu0 %4227
      %4230 = vset.pattern.permute.xlu0 2
      %4231 = vperm.xlu0 %4230, %v1803
      %v4232 = vpop.permute.xlu0 %4231
      %v4234 = vlaneseq
      %v4235 = vshrl.u32 %v4234, 7
      %v4236 = vsub.s32 2, %v4235
      %v4237 = vrot.slane %v1804, %v4236
      %v4238 = vlaneseq
      %v4239 = vshrl.u32 %v4238, 7
      %v4240 = vsub.s32 6, %v4239
      %v4241 = vrot.slane %v1804, %v4240
      %v4242 = vlaneseq
      %v4243 = vshrl.u32 %v4242, 7
      %v4244 = vsub.s32 2, %v4243
      %v4245 = vrot.slane %v1805, %v4244
      %v4249 = vlaneseq
      %v4250 = vshrl.u32 %v4249, 7
      %v4251 = vsub.s32 2, %v4250
      %v4252 = vrot.slane %v4237, %v4251
      %v4253 = vlaneseq
      %v4254 = vshrl.u32 %v4253, 7
      %v4255 = vsub.s32 2, %v4254
      %v4256 = vrot.slane %v4241, %v4255
      %v4257 = vlaneseq
      %v4258 = vshrl.u32 %v4257, 7
      %v4259 = vsub.s32 2, %v4258
      %v4260 = vrot.slane %v4245, %v4259
      %v4261 = vadd.f32 %v4172, %v4252
      %v4262 = vadd.f32 %v4172, %v4256
      %v4263 = vadd.f32 %v4172, %v4260
      %v4264 = vadd.f32 %v4176, %v4252
      %v4265 = vadd.f32 %v4176, %v4256
      %v4266 = vadd.f32 %v4176, %v4260
      %v4267 = vadd.f32 %v4180, %v4252
      %v4268 = vadd.f32 %v4180, %v4256
      %v4269 = vadd.f32 %v4180, %v4260
      %v4270 = vadd.f32 %v4184, %v4252
      %v4271 = vadd.f32 %v4184, %v4256
      %v4272 = vadd.f32 %v4184, %v4260
      %v4273 = vadd.f32 %v4188, %v4252
      %v4274 = vadd.f32 %v4188, %v4256
      %v4275 = vadd.f32 %v4188, %v4260
      %v4276 = vadd.f32 %v4192, %v4252
      %v4277 = vadd.f32 %v4192, %v4256
      %v4278 = vadd.f32 %v4192, %v4260
      %v4279 = vadd.f32 %v4196, %v4252
      %v4280 = vadd.f32 %v4196, %v4256
      %v4281 = vadd.f32 %v4196, %v4260
      %v4282 = vadd.f32 %v4200, %v4252
      %v4283 = vadd.f32 %v4200, %v4256
      %v4284 = vadd.f32 %v4200, %v4260
      %v4285 = vadd.f32 %v4204, %v4252
      %v4286 = vadd.f32 %v4204, %v4256
      %v4287 = vadd.f32 %v4204, %v4260
      %v4288 = vadd.f32 %v4208, %v4252
      %v4289 = vadd.f32 %v4208, %v4256
      %v4290 = vadd.f32 %v4208, %v4260
      %v4291 = vadd.f32 %v4212, %v4252
      %v4292 = vadd.f32 %v4212, %v4256
      %v4293 = vadd.f32 %v4212, %v4260
      %v4294 = vadd.f32 %v4216, %v4252
      %v4295 = vadd.f32 %v4216, %v4256
      %v4296 = vadd.f32 %v4216, %v4260
      %v4297 = vadd.f32 %v4220, %v4252
      %v4298 = vadd.f32 %v4220, %v4256
      %v4299 = vadd.f32 %v4220, %v4260
      %v4300 = vadd.f32 %v4224, %v4252
      %v4301 = vadd.f32 %v4224, %v4256
      %v4302 = vadd.f32 %v4224, %v4260
      %v4303 = vadd.f32 %v4228, %v4252
      %v4304 = vadd.f32 %v4228, %v4256
      %v4305 = vadd.f32 %v4228, %v4260
      %v4306 = vadd.f32 %v4232, %v4252
      %v4307 = vadd.f32 %v4232, %v4256
      %v4308 = vadd.f32 %v4232, %v4260
      %vm4309 = vcmp.ge.f32.partialorder %v4261, 0.0
      %vm4310 = vcmp.ge.f32.partialorder %v4262, 0.0
      %vm4311 = vcmp.ge.f32.partialorder %v4263, 0.0
      %vm4312 = vcmp.ge.f32.partialorder %v4264, 0.0
      %vm4313 = vcmp.ge.f32.partialorder %v4265, 0.0
      %vm4314 = vcmp.ge.f32.partialorder %v4266, 0.0
      %vm4315 = vcmp.ge.f32.partialorder %v4267, 0.0
      %vm4316 = vcmp.ge.f32.partialorder %v4268, 0.0
      %vm4317 = vcmp.ge.f32.partialorder %v4269, 0.0
      %vm4318 = vcmp.ge.f32.partialorder %v4270, 0.0
      %vm4319 = vcmp.ge.f32.partialorder %v4271, 0.0
      %vm4320 = vcmp.ge.f32.partialorder %v4272, 0.0
      %vm4321 = vcmp.ge.f32.partialorder %v4273, 0.0
      %vm4322 = vcmp.ge.f32.partialorder %v4274, 0.0
      %vm4323 = vcmp.ge.f32.partialorder %v4275, 0.0
      %vm4324 = vcmp.ge.f32.partialorder %v4276, 0.0
      %vm4325 = vcmp.ge.f32.partialorder %v4277, 0.0
      %vm4326 = vcmp.ge.f32.partialorder %v4278, 0.0
      %vm4327 = vcmp.ge.f32.partialorder %v4279, 0.0
      %vm4328 = vcmp.ge.f32.partialorder %v4280, 0.0
      %vm4329 = vcmp.ge.f32.partialorder %v4281, 0.0
      %vm4330 = vcmp.ge.f32.partialorder %v4282, 0.0
      %vm4331 = vcmp.ge.f32.partialorder %v4283, 0.0
      %vm4332 = vcmp.ge.f32.partialorder %v4284, 0.0
      %vm4333 = vcmp.ge.f32.partialorder %v4285, 0.0
      %vm4334 = vcmp.ge.f32.partialorder %v4286, 0.0
      %vm4335 = vcmp.ge.f32.partialorder %v4287, 0.0
      %vm4336 = vcmp.ge.f32.partialorder %v4288, 0.0
      %vm4337 = vcmp.ge.f32.partialorder %v4289, 0.0
      %vm4338 = vcmp.ge.f32.partialorder %v4290, 0.0
      %vm4339 = vcmp.ge.f32.partialorder %v4291, 0.0
      %vm4340 = vcmp.ge.f32.partialorder %v4292, 0.0
      %vm4341 = vcmp.ge.f32.partialorder %v4293, 0.0
      %vm4342 = vcmp.ge.f32.partialorder %v4294, 0.0
      %vm4343 = vcmp.ge.f32.partialorder %v4295, 0.0
      %vm4344 = vcmp.ge.f32.partialorder %v4296, 0.0
      %vm4345 = vcmp.ge.f32.partialorder %v4297, 0.0
      %vm4346 = vcmp.ge.f32.partialorder %v4298, 0.0
      %vm4347 = vcmp.ge.f32.partialorder %v4299, 0.0
      %vm4348 = vcmp.ge.f32.partialorder %v4300, 0.0
      %vm4349 = vcmp.ge.f32.partialorder %v4301, 0.0
      %vm4350 = vcmp.ge.f32.partialorder %v4302, 0.0
      %vm4351 = vcmp.ge.f32.partialorder %v4303, 0.0
      %vm4352 = vcmp.ge.f32.partialorder %v4304, 0.0
      %vm4353 = vcmp.ge.f32.partialorder %v4305, 0.0
      %vm4354 = vcmp.ge.f32.partialorder %v4306, 0.0
      %vm4355 = vcmp.ge.f32.partialorder %v4307, 0.0
      %vm4356 = vcmp.ge.f32.partialorder %v4308, 0.0
      %v4357 = vmul.f32 %v4261, 0.2
      %v4358 = vmul.f32 %v4262, 0.2
      %v4359 = vmul.f32 %v4263, 0.2
      %v4360 = vmul.f32 %v4264, 0.2
      %v4361 = vmul.f32 %v4265, 0.2
      %v4362 = vmul.f32 %v4266, 0.2
      %v4363 = vmul.f32 %v4267, 0.2
      %v4364 = vmul.f32 %v4268, 0.2
      %v4365 = vmul.f32 %v4269, 0.2
      %v4366 = vmul.f32 %v4270, 0.2
      %v4367 = vmul.f32 %v4271, 0.2
      %v4368 = vmul.f32 %v4272, 0.2
      %v4369 = vmul.f32 %v4273, 0.2
      %v4370 = vmul.f32 %v4274, 0.2
      %v4371 = vmul.f32 %v4275, 0.2
      %v4372 = vmul.f32 %v4276, 0.2
      %v4373 = vmul.f32 %v4277, 0.2
      %v4374 = vmul.f32 %v4278, 0.2
      %v4375 = vmul.f32 %v4279, 0.2
      %v4376 = vmul.f32 %v4280, 0.2
      %v4377 = vmul.f32 %v4281, 0.2
      %v4378 = vmul.f32 %v4282, 0.2
      %v4379 = vmul.f32 %v4283, 0.2
      %v4380 = vmul.f32 %v4284, 0.2
      %v4381 = vmul.f32 %v4285, 0.2
      %v4382 = vmul.f32 %v4286, 0.2
      %v4383 = vmul.f32 %v4287, 0.2
      %v4384 = vmul.f32 %v4288, 0.2
      %v4385 = vmul.f32 %v4289, 0.2
      %v4386 = vmul.f32 %v4290, 0.2
      %v4387 = vmul.f32 %v4291, 0.2
      %v4388 = vmul.f32 %v4292, 0.2
      %v4389 = vmul.f32 %v4293, 0.2
      %v4390 = vmul.f32 %v4294, 0.2
      %v4391 = vmul.f32 %v4295, 0.2
      %v4392 = vmul.f32 %v4296, 0.2
      %v4393 = vmul.f32 %v4297, 0.2
      %v4394 = vmul.f32 %v4298, 0.2
      %v4395 = vmul.f32 %v4299, 0.2
      %v4396 = vmul.f32 %v4300, 0.2
      %v4397 = vmul.f32 %v4301, 0.2
      %v4398 = vmul.f32 %v4302, 0.2
      %v4399 = vmul.f32 %v4303, 0.2
      %v4400 = vmul.f32 %v4304, 0.2
      %v4401 = vmul.f32 %v4305, 0.2
      %v4402 = vmul.f32 %v4306, 0.2
      %v4403 = vmul.f32 %v4307, 0.2
      %v4404 = vmul.f32 %v4308, 0.2
      %v4405 = vsel %vm4309, %v4261, %v4357
      %v4406 = vsel %vm4310, %v4262, %v4358
      %v4407 = vsel %vm4311, %v4263, %v4359
      %v4408 = vsel %vm4312, %v4264, %v4360
      %v4409 = vsel %vm4313, %v4265, %v4361
      %v4410 = vsel %vm4314, %v4266, %v4362
      %v4411 = vsel %vm4315, %v4267, %v4363
      %v4412 = vsel %vm4316, %v4268, %v4364
      %v4413 = vsel %vm4317, %v4269, %v4365
      %v4414 = vsel %vm4318, %v4270, %v4366
      %v4415 = vsel %vm4319, %v4271, %v4367
      %v4416 = vsel %vm4320, %v4272, %v4368
      %v4417 = vsel %vm4321, %v4273, %v4369
      %v4418 = vsel %vm4322, %v4274, %v4370
      %v4419 = vsel %vm4323, %v4275, %v4371
      %v4420 = vsel %vm4324, %v4276, %v4372
      %v4421 = vsel %vm4325, %v4277, %v4373
      %v4422 = vsel %vm4326, %v4278, %v4374
      %v4423 = vsel %vm4327, %v4279, %v4375
      %v4424 = vsel %vm4328, %v4280, %v4376
      %v4425 = vsel %vm4329, %v4281, %v4377
      %v4426 = vsel %vm4330, %v4282, %v4378
      %v4427 = vsel %vm4331, %v4283, %v4379
      %v4428 = vsel %vm4332, %v4284, %v4380
      %v4429 = vsel %vm4333, %v4285, %v4381
      %v4430 = vsel %vm4334, %v4286, %v4382
      %v4431 = vsel %vm4335, %v4287, %v4383
      %v4432 = vsel %vm4336, %v4288, %v4384
      %v4433 = vsel %vm4337, %v4289, %v4385
      %v4434 = vsel %vm4338, %v4290, %v4386
      %v4435 = vsel %vm4339, %v4291, %v4387
      %v4436 = vsel %vm4340, %v4292, %v4388
      %v4437 = vsel %vm4341, %v4293, %v4389
      %v4438 = vsel %vm4342, %v4294, %v4390
      %v4439 = vsel %vm4343, %v4295, %v4391
      %v4440 = vsel %vm4344, %v4296, %v4392
      %v4441 = vsel %vm4345, %v4297, %v4393
      %v4442 = vsel %vm4346, %v4298, %v4394
      %v4443 = vsel %vm4347, %v4299, %v4395
      %v4444 = vsel %vm4348, %v4300, %v4396
      %v4445 = vsel %vm4349, %v4301, %v4397
      %v4446 = vsel %vm4350, %v4302, %v4398
      %v4447 = vsel %vm4351, %v4303, %v4399
      %v4448 = vsel %vm4352, %v4304, %v4400
      %v4449 = vsel %vm4353, %v4305, %v4401
      %v4450 = vsel %vm4354, %v4306, %v4402
      %v4451 = vsel %vm4355, %v4307, %v4403
      %v4452 = vsel %vm4356, %v4308, %v4404
      %v4453 = vadd.f32 %v4405, %v1739
      %v4454 = vadd.f32 %v4406, %v1740
      %v4455 = vadd.f32 %v4407, %v1741
      %v4456 = vadd.f32 %v4408, %v1742
      %v4457 = vadd.f32 %v4409, %v1743
      %v4458 = vadd.f32 %v4410, %v1744
      %v4459 = vadd.f32 %v4411, %v1745
      %v4460 = vadd.f32 %v4412, %v1746
      %v4461 = vadd.f32 %v4413, %v1747
      %v4462 = vadd.f32 %v4414, %v1748
      %v4463 = vadd.f32 %v4415, %v1749
      %v4464 = vadd.f32 %v4416, %v1750
      %v4465 = vadd.f32 %v4417, %v1751
      %v4466 = vadd.f32 %v4418, %v1752
      %v4467 = vadd.f32 %v4419, %v1753
      %v4468 = vadd.f32 %v4420, %v1754
      %v4469 = vadd.f32 %v4421, %v1755
      %v4470 = vadd.f32 %v4422, %v1756
      %v4471 = vadd.f32 %v4423, %v1757
      %v4472 = vadd.f32 %v4424, %v1758
      %v4473 = vadd.f32 %v4425, %v1759
      %v4474 = vadd.f32 %v4426, %v1760
      %v4475 = vadd.f32 %v4427, %v1761
      %v4476 = vadd.f32 %v4428, %v1762
      %v4477 = vadd.f32 %v4429, %v1763
      %v4478 = vadd.f32 %v4430, %v1764
      %v4479 = vadd.f32 %v4431, %v1765
      %v4480 = vadd.f32 %v4432, %v1766
      %v4481 = vadd.f32 %v4433, %v1767
      %v4482 = vadd.f32 %v4434, %v1768
      %v4483 = vadd.f32 %v4435, %v1769
      %v4484 = vadd.f32 %v4436, %v1770
      %v4485 = vadd.f32 %v4437, %v1771
      %v4486 = vadd.f32 %v4438, %v1772
      %v4487 = vadd.f32 %v4439, %v1773
      %v4488 = vadd.f32 %v4440, %v1774
      %v4489 = vadd.f32 %v4441, %v1775
      %v4490 = vadd.f32 %v4442, %v1776
      %v4491 = vadd.f32 %v4443, %v1777
      %v4492 = vadd.f32 %v4444, %v1778
      %v4493 = vadd.f32 %v4445, %v1779
      %v4494 = vadd.f32 %v4446, %v1780
      %v4495 = vadd.f32 %v4447, %v1781
      %v4496 = vadd.f32 %v4448, %v1782
      %v4497 = vadd.f32 %v4449, %v1783
      %v4498 = vadd.f32 %v4450, %v1784
      %v4499 = vadd.f32 %v4451, %v1785
      %v4500 = vadd.f32 %v4452, %v1786
      %v4501 = vmax.f32 %v4453, %v4454
      %v4502 = vmax.f32 %v4501, %v4455
      %4503 = vmax.xlane.f32.xlu0 %v4502
      %v4504 = vpop.xlane.xlu0 %4503
      %v4505 = vmax.f32 %v4456, %v4457
      %v4506 = vmax.f32 %v4505, %v4458
      %4507 = vmax.xlane.f32.xlu0 %v4506
      %v4508 = vpop.xlane.xlu0 %4507
      %v4509 = vmax.f32 %v4459, %v4460
      %v4510 = vmax.f32 %v4509, %v4461
      %4511 = vmax.xlane.f32.xlu0 %v4510
      %v4512 = vpop.xlane.xlu0 %4511
      %v4513 = vmax.f32 %v4462, %v4463
      %v4514 = vmax.f32 %v4513, %v4464
      %4515 = vmax.xlane.f32.xlu0 %v4514
      %v4516 = vpop.xlane.xlu0 %4515
      %v4517 = vmax.f32 %v4465, %v4466
      %v4518 = vmax.f32 %v4517, %v4467
      %4519 = vmax.xlane.f32.xlu0 %v4518
      %v4520 = vpop.xlane.xlu0 %4519
      %v4521 = vmax.f32 %v4468, %v4469
      %v4522 = vmax.f32 %v4521, %v4470
      %4523 = vmax.xlane.f32.xlu0 %v4522
      %v4524 = vpop.xlane.xlu0 %4523
      %v4525 = vmax.f32 %v4471, %v4472
      %v4526 = vmax.f32 %v4525, %v4473
      %4527 = vmax.xlane.f32.xlu0 %v4526
      %v4528 = vpop.xlane.xlu0 %4527
      %v4529 = vmax.f32 %v4474, %v4475
      %v4530 = vmax.f32 %v4529, %v4476
      %4531 = vmax.xlane.f32.xlu0 %v4530
      %v4532 = vpop.xlane.xlu0 %4531
      %v4533 = vmax.f32 %v4477, %v4478
      %v4534 = vmax.f32 %v4533, %v4479
      %4535 = vmax.xlane.f32.xlu0 %v4534
      %v4536 = vpop.xlane.xlu0 %4535
      %v4537 = vmax.f32 %v4480, %v4481
      %v4538 = vmax.f32 %v4537, %v4482
      %4539 = vmax.xlane.f32.xlu0 %v4538
      %v4540 = vpop.xlane.xlu0 %4539
      %v4541 = vmax.f32 %v4483, %v4484
      %v4542 = vmax.f32 %v4541, %v4485
      %4543 = vmax.xlane.f32.xlu0 %v4542
      %v4544 = vpop.xlane.xlu0 %4543
      %v4545 = vmax.f32 %v4486, %v4487
      %v4546 = vmax.f32 %v4545, %v4488
      %4547 = vmax.xlane.f32.xlu0 %v4546
      %v4548 = vpop.xlane.xlu0 %4547
      %v4549 = vmax.f32 %v4489, %v4490
      %v4550 = vmax.f32 %v4549, %v4491
      %4551 = vmax.xlane.f32.xlu0 %v4550
      %v4552 = vpop.xlane.xlu0 %4551
      %v4553 = vmax.f32 %v4492, %v4493
      %v4554 = vmax.f32 %v4553, %v4494
      %4555 = vmax.xlane.f32.xlu0 %v4554
      %v4556 = vpop.xlane.xlu0 %4555
      %v4557 = vmax.f32 %v4495, %v4496
      %v4558 = vmax.f32 %v4557, %v4497
      %4559 = vmax.xlane.f32.xlu0 %v4558
      %v4560 = vpop.xlane.xlu0 %4559
      %v4561 = vmax.f32 %v4498, %v4499
      %v4562 = vmax.f32 %v4561, %v4500
      %4563 = vmax.xlane.f32.xlu0 %v4562
      %v4564 = vpop.xlane.xlu0 %4563
      %v4565 = vsub.f32 %v4453, %v4504
      %v4566 = vsub.f32 %v4454, %v4504
      %v4567 = vsub.f32 %v4455, %v4504
      %v4568 = vsub.f32 %v4456, %v4508
      %v4569 = vsub.f32 %v4457, %v4508
      %v4570 = vsub.f32 %v4458, %v4508
      %v4571 = vsub.f32 %v4459, %v4512
      %v4572 = vsub.f32 %v4460, %v4512
      %v4573 = vsub.f32 %v4461, %v4512
      %v4574 = vsub.f32 %v4462, %v4516
      %v4575 = vsub.f32 %v4463, %v4516
      %v4576 = vsub.f32 %v4464, %v4516
      %v4577 = vsub.f32 %v4465, %v4520
      %v4578 = vsub.f32 %v4466, %v4520
      %v4579 = vsub.f32 %v4467, %v4520
      %v4580 = vsub.f32 %v4468, %v4524
      %v4581 = vsub.f32 %v4469, %v4524
      %v4582 = vsub.f32 %v4470, %v4524
      %v4583 = vsub.f32 %v4471, %v4528
      %v4584 = vsub.f32 %v4472, %v4528
      %v4585 = vsub.f32 %v4473, %v4528
      %v4586 = vsub.f32 %v4474, %v4532
      %v4587 = vsub.f32 %v4475, %v4532
      %v4588 = vsub.f32 %v4476, %v4532
      %v4589 = vsub.f32 %v4477, %v4536
      %v4590 = vsub.f32 %v4478, %v4536
      %v4591 = vsub.f32 %v4479, %v4536
      %v4592 = vsub.f32 %v4480, %v4540
      %v4593 = vsub.f32 %v4481, %v4540
      %v4594 = vsub.f32 %v4482, %v4540
      %v4595 = vsub.f32 %v4483, %v4544
      %v4596 = vsub.f32 %v4484, %v4544
      %v4597 = vsub.f32 %v4485, %v4544
      %v4598 = vsub.f32 %v4486, %v4548
      %v4599 = vsub.f32 %v4487, %v4548
      %v4600 = vsub.f32 %v4488, %v4548
      %v4601 = vsub.f32 %v4489, %v4552
      %v4602 = vsub.f32 %v4490, %v4552
      %v4603 = vsub.f32 %v4491, %v4552
      %v4604 = vsub.f32 %v4492, %v4556
      %v4605 = vsub.f32 %v4493, %v4556
      %v4606 = vsub.f32 %v4494, %v4556
      %v4607 = vsub.f32 %v4495, %v4560
      %v4608 = vsub.f32 %v4496, %v4560
      %v4609 = vsub.f32 %v4497, %v4560
      %v4610 = vsub.f32 %v4498, %v4564
      %v4611 = vsub.f32 %v4499, %v4564
      %v4612 = vsub.f32 %v4500, %v4564
      %v4613 = vmul.f32 %v4565, 1.442695
      %v4614 = vpow.pop %v4613
      %v4615 = vmul.f32 %v4566, 1.442695
      %v4616 = vpow.pop %v4615
      %v4617 = vmul.f32 %v4567, 1.442695
      %v4618 = vpow.pop %v4617
      %v4619 = vmul.f32 %v4568, 1.442695
      %v4620 = vpow.pop %v4619
      %v4621 = vmul.f32 %v4569, 1.442695
      %v4622 = vpow.pop %v4621
      %v4623 = vmul.f32 %v4570, 1.442695
      %v4624 = vpow.pop %v4623
      %v4625 = vmul.f32 %v4571, 1.442695
      %v4626 = vpow.pop %v4625
      %v4627 = vmul.f32 %v4572, 1.442695
      %v4628 = vpow.pop %v4627
      %v4629 = vmul.f32 %v4573, 1.442695
      %v4630 = vpow.pop %v4629
      %v4631 = vmul.f32 %v4574, 1.442695
      %v4632 = vpow.pop %v4631
      %v4633 = vmul.f32 %v4575, 1.442695
      %v4634 = vpow.pop %v4633
      %v4635 = vmul.f32 %v4576, 1.442695
      %v4636 = vpow.pop %v4635
      %v4637 = vmul.f32 %v4577, 1.442695
      %v4638 = vpow.pop %v4637
      %v4639 = vmul.f32 %v4578, 1.442695
      %v4640 = vpow.pop %v4639
      %v4641 = vmul.f32 %v4579, 1.442695
      %v4642 = vpow.pop %v4641
      %v4643 = vmul.f32 %v4580, 1.442695
      %v4644 = vpow.pop %v4643
      %v4645 = vmul.f32 %v4581, 1.442695
      %v4646 = vpow.pop %v4645
      %v4647 = vmul.f32 %v4582, 1.442695
      %v4648 = vpow.pop %v4647
      %v4649 = vmul.f32 %v4583, 1.442695
      %v4650 = vpow.pop %v4649
      %v4651 = vmul.f32 %v4584, 1.442695
      %v4652 = vpow.pop %v4651
      %v4653 = vmul.f32 %v4585, 1.442695
      %v4654 = vpow.pop %v4653
      %v4655 = vmul.f32 %v4586, 1.442695
      %v4656 = vpow.pop %v4655
      %v4657 = vmul.f32 %v4587, 1.442695
      %v4658 = vpow.pop %v4657
      %v4659 = vmul.f32 %v4588, 1.442695
      %v4660 = vpow.pop %v4659
      %v4661 = vmul.f32 %v4589, 1.442695
      %v4662 = vpow.pop %v4661
      %v4663 = vmul.f32 %v4590, 1.442695
      %v4664 = vpow.pop %v4663
      %v4665 = vmul.f32 %v4591, 1.442695
      %v4666 = vpow.pop %v4665
      %v4667 = vmul.f32 %v4592, 1.442695
      %v4668 = vpow.pop %v4667
      %v4669 = vmul.f32 %v4593, 1.442695
      %v4670 = vpow.pop %v4669
      %v4671 = vmul.f32 %v4594, 1.442695
      %v4672 = vpow.pop %v4671
      %v4673 = vmul.f32 %v4595, 1.442695
      %v4674 = vpow.pop %v4673
      %v4675 = vmul.f32 %v4596, 1.442695
      %v4676 = vpow.pop %v4675
      %v4677 = vmul.f32 %v4597, 1.442695
      %v4678 = vpow.pop %v4677
      %v4679 = vmul.f32 %v4598, 1.442695
      %v4680 = vpow.pop %v4679
      %v4681 = vmul.f32 %v4599, 1.442695
      %v4682 = vpow.pop %v4681
      %v4683 = vmul.f32 %v4600, 1.442695
      %v4684 = vpow.pop %v4683
      %v4685 = vmul.f32 %v4601, 1.442695
      %v4686 = vpow.pop %v4685
      %v4687 = vmul.f32 %v4602, 1.442695
      %v4688 = vpow.pop %v4687
      %v4689 = vmul.f32 %v4603, 1.442695
      %v4690 = vpow.pop %v4689
      %v4691 = vmul.f32 %v4604, 1.442695
      %v4692 = vpow.pop %v4691
      %v4693 = vmul.f32 %v4605, 1.442695
      %v4694 = vpow.pop %v4693
      %v4695 = vmul.f32 %v4606, 1.442695
      %v4696 = vpow.pop %v4695
      %v4697 = vmul.f32 %v4607, 1.442695
      %v4698 = vpow.pop %v4697
      %v4699 = vmul.f32 %v4608, 1.442695
      %v4700 = vpow.pop %v4699
      %v4701 = vmul.f32 %v4609, 1.442695
      %v4702 = vpow.pop %v4701
      %v4703 = vmul.f32 %v4610, 1.442695
      %v4704 = vpow.pop %v4703
      %v4705 = vmul.f32 %v4611, 1.442695
      %v4706 = vpow.pop %v4705
      %v4707 = vmul.f32 %v4612, 1.442695
      %v4708 = vpow.pop %v4707
      %v4709 = vmul.f32 %v4614, %v1643
      %v4710 = vmul.f32 %v4616, %v1644
      %v4711 = vmul.f32 %v4618, %v1645
      %v4712 = vmul.f32 %v4620, %v1646
      %v4713 = vmul.f32 %v4622, %v1647
      %v4714 = vmul.f32 %v4624, %v1648
      %v4715 = vmul.f32 %v4626, %v1649
      %v4716 = vmul.f32 %v4628, %v1650
      %v4717 = vmul.f32 %v4630, %v1651
      %v4718 = vmul.f32 %v4632, %v1652
      %v4719 = vmul.f32 %v4634, %v1653
      %v4720 = vmul.f32 %v4636, %v1654
      %v4721 = vmul.f32 %v4638, %v1655
      %v4722 = vmul.f32 %v4640, %v1656
      %v4723 = vmul.f32 %v4642, %v1657
      %v4724 = vmul.f32 %v4644, %v1658
      %v4725 = vmul.f32 %v4646, %v1659
      %v4726 = vmul.f32 %v4648, %v1660
      %v4727 = vmul.f32 %v4650, %v1661
      %v4728 = vmul.f32 %v4652, %v1662
      %v4729 = vmul.f32 %v4654, %v1663
      %v4730 = vmul.f32 %v4656, %v1664
      %v4731 = vmul.f32 %v4658, %v1665
      %v4732 = vmul.f32 %v4660, %v1666
      %v4733 = vmul.f32 %v4662, %v1667
      %v4734 = vmul.f32 %v4664, %v1668
      %v4735 = vmul.f32 %v4666, %v1669
      %v4736 = vmul.f32 %v4668, %v1670
      %v4737 = vmul.f32 %v4670, %v1671
      %v4738 = vmul.f32 %v4672, %v1672
      %v4739 = vmul.f32 %v4674, %v1673
      %v4740 = vmul.f32 %v4676, %v1674
      %v4741 = vmul.f32 %v4678, %v1675
      %v4742 = vmul.f32 %v4680, %v1676
      %v4743 = vmul.f32 %v4682, %v1677
      %v4744 = vmul.f32 %v4684, %v1678
      %v4745 = vmul.f32 %v4686, %v1679
      %v4746 = vmul.f32 %v4688, %v1680
      %v4747 = vmul.f32 %v4690, %v1681
      %v4748 = vmul.f32 %v4692, %v1682
      %v4749 = vmul.f32 %v4694, %v1683
      %v4750 = vmul.f32 %v4696, %v1684
      %v4751 = vmul.f32 %v4698, %v1685
      %v4752 = vmul.f32 %v4700, %v1686
      %v4753 = vmul.f32 %v4702, %v1687
      %v4754 = vmul.f32 %v4704, %v1688
      %v4755 = vmul.f32 %v4706, %v1689
      %v4756 = vmul.f32 %v4708, %v1690
      %v4757 = vadd.f32 %v4709, %v4710
      %v4758 = vadd.f32 %v4757, %v4711
      %4759 = vadd.xlane.f32.xlu0 %v4758
      %v4760 = vpop.xlane.xlu0 %4759
      %v4761 = vadd.f32 %v4712, %v4713
      %v4762 = vadd.f32 %v4761, %v4714
      %4763 = vadd.xlane.f32.xlu0 %v4762
      %v4764 = vpop.xlane.xlu0 %4763
      %v4765 = vadd.f32 %v4715, %v4716
      %v4766 = vadd.f32 %v4765, %v4717
      %4767 = vadd.xlane.f32.xlu0 %v4766
      %v4768 = vpop.xlane.xlu0 %4767
      %v4769 = vadd.f32 %v4718, %v4719
      %v4770 = vadd.f32 %v4769, %v4720
      %4771 = vadd.xlane.f32.xlu0 %v4770
      %v4772 = vpop.xlane.xlu0 %4771
      %v4773 = vadd.f32 %v4721, %v4722
      %v4774 = vadd.f32 %v4773, %v4723
      %4775 = vadd.xlane.f32.xlu0 %v4774
      %v4776 = vpop.xlane.xlu0 %4775
      %v4777 = vadd.f32 %v4724, %v4725
      %v4778 = vadd.f32 %v4777, %v4726
      %4779 = vadd.xlane.f32.xlu0 %v4778
      %v4780 = vpop.xlane.xlu0 %4779
      %v4781 = vadd.f32 %v4727, %v4728
      %v4782 = vadd.f32 %v4781, %v4729
      %4783 = vadd.xlane.f32.xlu0 %v4782
      %v4784 = vpop.xlane.xlu0 %4783
      %v4785 = vadd.f32 %v4730, %v4731
      %v4786 = vadd.f32 %v4785, %v4732
      %4787 = vadd.xlane.f32.xlu0 %v4786
      %v4788 = vpop.xlane.xlu0 %4787
      %v4789 = vadd.f32 %v4733, %v4734
      %v4790 = vadd.f32 %v4789, %v4735
      %4791 = vadd.xlane.f32.xlu0 %v4790
      %v4792 = vpop.xlane.xlu0 %4791
      %v4793 = vadd.f32 %v4736, %v4737
      %v4794 = vadd.f32 %v4793, %v4738
      %4795 = vadd.xlane.f32.xlu0 %v4794
      %v4796 = vpop.xlane.xlu0 %4795
      %v4797 = vadd.f32 %v4739, %v4740
      %v4798 = vadd.f32 %v4797, %v4741
      %4799 = vadd.xlane.f32.xlu0 %v4798
      %v4800 = vpop.xlane.xlu0 %4799
      %v4801 = vadd.f32 %v4742, %v4743
      %v4802 = vadd.f32 %v4801, %v4744
      %4803 = vadd.xlane.f32.xlu0 %v4802
      %v4804 = vpop.xlane.xlu0 %4803
      %v4805 = vadd.f32 %v4745, %v4746
      %v4806 = vadd.f32 %v4805, %v4747
      %4807 = vadd.xlane.f32.xlu0 %v4806
      %v4808 = vpop.xlane.xlu0 %4807
      %v4809 = vadd.f32 %v4748, %v4749
      %v4810 = vadd.f32 %v4809, %v4750
      %4811 = vadd.xlane.f32.xlu0 %v4810
      %v4812 = vpop.xlane.xlu0 %4811
      %v4813 = vadd.f32 %v4751, %v4752
      %v4814 = vadd.f32 %v4813, %v4753
      %4815 = vadd.xlane.f32.xlu0 %v4814
      %v4816 = vpop.xlane.xlu0 %4815
      %v4817 = vadd.f32 %v4754, %v4755
      %v4818 = vadd.f32 %v4817, %v4756
      %4819 = vadd.xlane.f32.xlu0 %v4818
      %v4820 = vpop.xlane.xlu0 %4819
      %v4821 = vmax.f32 %v4760, 1e-30
      %v4822 = vmax.f32 %v4764, 1e-30
      %v4823 = vmax.f32 %v4768, 1e-30
      %v4824 = vmax.f32 %v4772, 1e-30
      %v4825 = vmax.f32 %v4776, 1e-30
      %v4826 = vmax.f32 %v4780, 1e-30
      %v4827 = vmax.f32 %v4784, 1e-30
      %v4828 = vmax.f32 %v4788, 1e-30
      %v4829 = vmax.f32 %v4792, 1e-30
      %v4830 = vmax.f32 %v4796, 1e-30
      %v4831 = vmax.f32 %v4800, 1e-30
      %v4832 = vmax.f32 %v4804, 1e-30
      %v4833 = vmax.f32 %v4808, 1e-30
      %v4834 = vmax.f32 %v4812, 1e-30
      %v4835 = vmax.f32 %v4816, 1e-30
      %v4836 = vmax.f32 %v4820, 1e-30
      %v4837 = vrcp.pop %v4821
      %v4838 = vrcp.pop %v4822
      %v4839 = vrcp.pop %v4823
      %v4840 = vrcp.pop %v4824
      %v4841 = vrcp.pop %v4825
      %v4842 = vrcp.pop %v4826
      %v4843 = vrcp.pop %v4827
      %v4844 = vrcp.pop %v4828
      %v4845 = vrcp.pop %v4829
      %v4846 = vrcp.pop %v4830
      %v4847 = vrcp.pop %v4831
      %v4848 = vrcp.pop %v4832
      %v4849 = vrcp.pop %v4833
      %v4850 = vrcp.pop %v4834
      %v4851 = vrcp.pop %v4835
      %v4852 = vrcp.pop %v4836
      %vm4853 = vcmp.gt.f32.partialorder %v4760, 0.0
      %vm4854 = vcmp.gt.f32.partialorder %v4764, 0.0
      %vm4855 = vcmp.gt.f32.partialorder %v4768, 0.0
      %vm4856 = vcmp.gt.f32.partialorder %v4772, 0.0
      %vm4857 = vcmp.gt.f32.partialorder %v4776, 0.0
      %vm4858 = vcmp.gt.f32.partialorder %v4780, 0.0
      %vm4859 = vcmp.gt.f32.partialorder %v4784, 0.0
      %vm4860 = vcmp.gt.f32.partialorder %v4788, 0.0
      %vm4861 = vcmp.gt.f32.partialorder %v4792, 0.0
      %vm4862 = vcmp.gt.f32.partialorder %v4796, 0.0
      %vm4863 = vcmp.gt.f32.partialorder %v4800, 0.0
      %vm4864 = vcmp.gt.f32.partialorder %v4804, 0.0
      %vm4865 = vcmp.gt.f32.partialorder %v4808, 0.0
      %vm4866 = vcmp.gt.f32.partialorder %v4812, 0.0
      %vm4867 = vcmp.gt.f32.partialorder %v4816, 0.0
      %vm4868 = vcmp.gt.f32.partialorder %v4820, 0.0
      %v4869 = vsel %vm4853, %v4837, 0.0
      %v4870 = vsel %vm4854, %v4838, 0.0
      %v4871 = vsel %vm4855, %v4839, 0.0
      %v4872 = vsel %vm4856, %v4840, 0.0
      %v4873 = vsel %vm4857, %v4841, 0.0
      %v4874 = vsel %vm4858, %v4842, 0.0
      %v4875 = vsel %vm4859, %v4843, 0.0
      %v4876 = vsel %vm4860, %v4844, 0.0
      %v4877 = vsel %vm4861, %v4845, 0.0
      %v4878 = vsel %vm4862, %v4846, 0.0
      %v4879 = vsel %vm4863, %v4847, 0.0
      %v4880 = vsel %vm4864, %v4848, 0.0
      %v4881 = vsel %vm4865, %v4849, 0.0
      %v4882 = vsel %vm4866, %v4850, 0.0
      %v4883 = vsel %vm4867, %v4851, 0.0
      %v4884 = vsel %vm4868, %v4852, 0.0
      %v4885 = vmul.f32 %v4709, %v4869
      %v4886 = vmul.f32 %v4710, %v4869
      %v4887 = vmul.f32 %v4711, %v4869
      %v4888 = vmul.f32 %v4712, %v4870
      %v4889 = vmul.f32 %v4713, %v4870
      %v4890 = vmul.f32 %v4714, %v4870
      %v4891 = vmul.f32 %v4715, %v4871
      %v4892 = vmul.f32 %v4716, %v4871
      %v4893 = vmul.f32 %v4717, %v4871
      %v4894 = vmul.f32 %v4718, %v4872
      %v4895 = vmul.f32 %v4719, %v4872
      %v4896 = vmul.f32 %v4720, %v4872
      %v4897 = vmul.f32 %v4721, %v4873
      %v4898 = vmul.f32 %v4722, %v4873
      %v4899 = vmul.f32 %v4723, %v4873
      %v4900 = vmul.f32 %v4724, %v4874
      %v4901 = vmul.f32 %v4725, %v4874
      %v4902 = vmul.f32 %v4726, %v4874
      %v4903 = vmul.f32 %v4727, %v4875
      %v4904 = vmul.f32 %v4728, %v4875
      %v4905 = vmul.f32 %v4729, %v4875
      %v4906 = vmul.f32 %v4730, %v4876
      %v4907 = vmul.f32 %v4731, %v4876
      %v4908 = vmul.f32 %v4732, %v4876
      %v4909 = vmul.f32 %v4733, %v4877
      %v4910 = vmul.f32 %v4734, %v4877
      %v4911 = vmul.f32 %v4735, %v4877
      %v4912 = vmul.f32 %v4736, %v4878
      %v4913 = vmul.f32 %v4737, %v4878
      %v4914 = vmul.f32 %v4738, %v4878
      %v4915 = vmul.f32 %v4739, %v4879
      %v4916 = vmul.f32 %v4740, %v4879
      %v4917 = vmul.f32 %v4741, %v4879
      %v4918 = vmul.f32 %v4742, %v4880
      %v4919 = vmul.f32 %v4743, %v4880
      %v4920 = vmul.f32 %v4744, %v4880
      %v4921 = vmul.f32 %v4745, %v4881
      %v4922 = vmul.f32 %v4746, %v4881
      %v4923 = vmul.f32 %v4747, %v4881
      %v4924 = vmul.f32 %v4748, %v4882
      %v4925 = vmul.f32 %v4749, %v4882
      %v4926 = vmul.f32 %v4750, %v4882
      %v4927 = vmul.f32 %v4751, %v4883
      %v4928 = vmul.f32 %v4752, %v4883
      %v4929 = vmul.f32 %v4753, %v4883
      %v4930 = vmul.f32 %v4754, %v4884
      %v4931 = vmul.f32 %v4755, %v4884
      %v4932 = vmul.f32 %v4756, %v4884
      %4933 = vrot.lane.b32.xlu0 %v1806, 96
      %v4934 = vpop.permute.xlu0 %4933
      %4935 = vrot.lane.b32.xlu0 %v1807, 96
      %v4936 = vpop.permute.xlu0 %4935
      %4937 = vrot.lane.b32.xlu0 %v1808, 96
      %v4938 = vpop.permute.xlu0 %4937
      %4939 = vrot.lane.b32.xlu0 %v1809, 96
      %v4940 = vpop.permute.xlu0 %4939
      %4941 = vrot.lane.b32.xlu0 %v1810, 96
      %v4942 = vpop.permute.xlu0 %4941
      %4943 = vrot.lane.b32.xlu0 %v1811, 96
      %v4944 = vpop.permute.xlu0 %4943
      %4945 = vrot.lane.b32.xlu0 %v1812, 96
      %v4946 = vpop.permute.xlu0 %4945
      %4947 = vrot.lane.b32.xlu0 %v1813, 96
      %v4948 = vpop.permute.xlu0 %4947
      %4949 = vrot.lane.b32.xlu0 %v1814, 96
      %v4950 = vpop.permute.xlu0 %4949
      %4951 = vrot.lane.b32.xlu0 %v1815, 96
      %v4952 = vpop.permute.xlu0 %4951
      %4953 = vrot.lane.b32.xlu0 %v1816, 96
      %v4954 = vpop.permute.xlu0 %4953
      %4955 = vrot.lane.b32.xlu0 %v1817, 96
      %v4956 = vpop.permute.xlu0 %4955
      %4957 = vrot.lane.b32.xlu0 %v1818, 96
      %v4958 = vpop.permute.xlu0 %4957
      %4959 = vrot.lane.b32.xlu0 %v1819, 96
      %v4960 = vpop.permute.xlu0 %4959
      %4961 = vrot.lane.b32.xlu0 %v1820, 96
      %v4962 = vpop.permute.xlu0 %4961
      %4963 = vrot.lane.b32.xlu0 %v1821, 96
      %v4964 = vpop.permute.xlu0 %4963
      %4965 = vrot.lane.b32.xlu0 %v1822, 96
      %v4966 = vpop.permute.xlu0 %4965
      %4967 = vrot.lane.b32.xlu0 %v1823, 96
      %v4968 = vpop.permute.xlu0 %4967
      %4969 = vrot.lane.b32.xlu0 %v1824, 96
      %v4970 = vpop.permute.xlu0 %4969
      %4971 = vrot.lane.b32.xlu0 %v1825, 96
      %v4972 = vpop.permute.xlu0 %4971
      %4973 = vrot.lane.b32.xlu0 %v1826, 96
      %v4974 = vpop.permute.xlu0 %4973
      %4975 = vrot.lane.b32.xlu0 %v1827, 96
      %v4976 = vpop.permute.xlu0 %4975
      %4977 = vrot.lane.b32.xlu0 %v1828, 96
      %v4978 = vpop.permute.xlu0 %4977
      %4979 = vrot.lane.b32.xlu0 %v1829, 96
      %v4980 = vpop.permute.xlu0 %4979
      %4981 = vrot.lane.b32.xlu0 %v1830, 96
      %v4982 = vpop.permute.xlu0 %4981
      %4983 = vrot.lane.b32.xlu0 %v1831, 96
      %v4984 = vpop.permute.xlu0 %4983
      %4985 = vrot.lane.b32.xlu0 %v1832, 96
      %v4986 = vpop.permute.xlu0 %4985
      %4987 = vrot.lane.b32.xlu0 %v1833, 96
      %v4988 = vpop.permute.xlu0 %4987
      %4989 = vrot.lane.b32.xlu0 %v1834, 96
      %v4990 = vpop.permute.xlu0 %4989
      %4991 = vrot.lane.b32.xlu0 %v1835, 96
      %v4992 = vpop.permute.xlu0 %4991
      %4993 = vrot.lane.b32.xlu0 %v1836, 96
      %v4994 = vpop.permute.xlu0 %4993
      %4995 = vrot.lane.b32.xlu0 %v1837, 96
      %v4996 = vpop.permute.xlu0 %4995
      %4997 = vrot.lane.b32.xlu0 %v1838, 96
      %v4998 = vpop.permute.xlu0 %4997
      %4999 = vrot.lane.b32.xlu0 %v1839, 96
      %v5000 = vpop.permute.xlu0 %4999
      %5001 = vrot.lane.b32.xlu0 %v1840, 96
      %v5002 = vpop.permute.xlu0 %5001
      %5003 = vrot.lane.b32.xlu0 %v1841, 96
      %v5004 = vpop.permute.xlu0 %5003
      %5005 = vrot.lane.b32.xlu0 %v1842, 96
      %v5006 = vpop.permute.xlu0 %5005
      %5007 = vrot.lane.b32.xlu0 %v1843, 96
      %v5008 = vpop.permute.xlu0 %5007
      %5009 = vrot.lane.b32.xlu0 %v1844, 96
      %v5010 = vpop.permute.xlu0 %5009
      %5011 = vrot.lane.b32.xlu0 %v1845, 96
      %v5012 = vpop.permute.xlu0 %5011
      %5013 = vrot.lane.b32.xlu0 %v1846, 96
      %v5014 = vpop.permute.xlu0 %5013
      %5015 = vrot.lane.b32.xlu0 %v1847, 96
      %v5016 = vpop.permute.xlu0 %5015
      %5017 = vrot.lane.b32.xlu0 %v1848, 96
      %v5018 = vpop.permute.xlu0 %5017
      %5019 = vrot.lane.b32.xlu0 %v1849, 96
      %v5020 = vpop.permute.xlu0 %5019
      %5021 = vrot.lane.b32.xlu0 %v1850, 96
      %v5022 = vpop.permute.xlu0 %5021
      %5023 = vrot.lane.b32.xlu0 %v1851, 96
      %v5024 = vpop.permute.xlu0 %5023
      %5025 = vrot.lane.b32.xlu0 %v1852, 96
      %v5026 = vpop.permute.xlu0 %5025
      %5027 = vrot.lane.b32.xlu0 %v1853, 96
      %v5028 = vpop.permute.xlu0 %5027
      %5077 = vmatprep.subr.mxu0 0.0
      %5078 = vmatpush1.msra.mxu0 %v4964
      %5079 = vmatprep.subr.mxu0 0.0
      %5080 = vmatpush1.msra.mxu0 %v4962
      %5081 = vmatprep.subr.mxu0 0.0
      %5082 = vmatpush1.msra.mxu0 %v4960
      %5083 = vmatprep.subr.mxu0 0.0
      %5084 = vmatpush1.msra.mxu0 %v4958
      %5085 = vmatprep.subr.mxu0 0.0
      %5086 = vmatpush1.msra.mxu0 %v4956
      %5087 = vmatprep.subr.mxu0 0.0
      %5088 = vmatpush1.msra.mxu0 %v4954
      %5089 = vmatprep.subr.mxu0 0.0
      %5090 = vmatpush1.msra.mxu0 %v4952
      %5091 = vmatprep.subr.mxu0 0.0
      %5092 = vmatpush1.msra.mxu0 %v4950
      %5093 = vmatprep.subr.mxu0 0.0
      %5094 = vmatpush1.msra.mxu0 %v4948
      %5095 = vmatprep.subr.mxu0 0.0
      %5096 = vmatpush1.msra.mxu0 %v4946
      %5097 = vmatprep.subr.mxu0 0.0
      %5098 = vmatpush1.msra.mxu0 %v4944
      %5099 = vmatprep.subr.mxu0 0.0
      %5100 = vmatpush1.msra.mxu0 %v4942
      %5101 = vmatprep.subr.mxu0 0.0
      %5102 = vmatpush1.msra.mxu0 %v4940
      %5103 = vmatprep.subr.mxu0 0.0
      %5104 = vmatpush1.msra.mxu0 %v4938
      %5105 = vmatprep.subr.mxu0 0.0
      %5106 = vmatpush1.msra.mxu0 %v4936
      %5107 = vmatprep.subr.mxu0 0.0
      %5108 = vmatpush1.msra.mxu0 %v4934
      %5109 = vmatprep.subr.mxu0 0.0
      %5110 = vmatpush2.msra.mxu0 %v4996
      %5111 = vmatprep.subr.mxu0 0.0
      %5112 = vmatpush2.msra.mxu0 %v4994
      %5113 = vmatprep.subr.mxu0 0.0
      %5114 = vmatpush2.msra.mxu0 %v4992
      %5115 = vmatprep.subr.mxu0 0.0
      %5116 = vmatpush2.msra.mxu0 %v4990
      %5117 = vmatprep.subr.mxu0 0.0
      %5118 = vmatpush2.msra.mxu0 %v4988
      %5119 = vmatprep.subr.mxu0 0.0
      %5120 = vmatpush2.msra.mxu0 %v4986
      %5121 = vmatprep.subr.mxu0 0.0
      %5122 = vmatpush2.msra.mxu0 %v4984
      %5123 = vmatprep.subr.mxu0 0.0
      %5124 = vmatpush2.msra.mxu0 %v4982
      %5125 = vmatprep.subr.mxu0 0.0
      %5126 = vmatpush2.msra.mxu0 %v4980
      %5127 = vmatprep.subr.mxu0 0.0
      %5128 = vmatpush2.msra.mxu0 %v4978
      %5129 = vmatprep.subr.mxu0 0.0
      %5130 = vmatpush2.msra.mxu0 %v4976
      %5131 = vmatprep.subr.mxu0 0.0
      %5132 = vmatpush2.msra.mxu0 %v4974
      %5133 = vmatprep.subr.mxu0 0.0
      %5134 = vmatpush2.msra.mxu0 %v4972
      %5135 = vmatprep.subr.mxu0 0.0
      %5136 = vmatpush2.msra.mxu0 %v4970
      %5137 = vmatprep.subr.mxu0 0.0
      %5138 = vmatpush2.msra.mxu0 %v4968
      %5139 = vmatprep.subr.mxu0 0.0
      %5140 = vmatpush2.msra.mxu0 %v4966
      %5141 = vmatprep.mubr.f32.mxu0 %v4886
      %5142 = vmatmul.mubr.f32.gmra.mxu0 %v4885
      %v5143 = vpop.f32.mrf.mxu0
      %v5144 = vadd.f32 0.0, %v5143
      %v5145 = vpop.f32.mrf.mxu0
      %5146 = vmatprep.mubr.f32.mxu0 %v4889
      %5147 = vmatmul.mubr.f32.gmra.mxu0 %v4888
      %v5148 = vpop.f32.mrf.mxu0
      %v5149 = vadd.f32 0.0, %v5148
      %v5150 = vpop.f32.mrf.mxu0
      %5151 = vmatprep.mubr.f32.mxu0 %v4892
      %5152 = vmatmul.mubr.f32.gmra.mxu0 %v4891
      %v5153 = vpop.f32.mrf.mxu0
      %v5154 = vadd.f32 0.0, %v5153
      %v5155 = vpop.f32.mrf.mxu0
      %5156 = vmatprep.mubr.f32.mxu0 %v4895
      %5157 = vmatmul.mubr.f32.gmra.mxu0 %v4894
      %v5158 = vpop.f32.mrf.mxu0
      %v5159 = vadd.f32 0.0, %v5158
      %v5160 = vpop.f32.mrf.mxu0
      %5161 = vmatprep.mubr.f32.mxu0 %v4898
      %5162 = vmatmul.mubr.f32.gmra.mxu0 %v4897
      %v5163 = vpop.f32.mrf.mxu0
      %v5164 = vadd.f32 0.0, %v5163
      %v5165 = vpop.f32.mrf.mxu0
      %5166 = vmatprep.mubr.f32.mxu0 %v4901
      %5167 = vmatmul.mubr.f32.gmra.mxu0 %v4900
      %v5168 = vpop.f32.mrf.mxu0
      %v5169 = vadd.f32 0.0, %v5168
      %v5170 = vpop.f32.mrf.mxu0
      %5171 = vmatprep.mubr.f32.mxu0 %v4904
      %5172 = vmatmul.mubr.f32.gmra.mxu0 %v4903
      %v5173 = vpop.f32.mrf.mxu0
      %v5174 = vadd.f32 0.0, %v5173
      %v5175 = vpop.f32.mrf.mxu0
      %5176 = vmatprep.mubr.f32.mxu0 %v4907
      %5177 = vmatmul.mubr.f32.gmra.mxu0 %v4906
      %v5178 = vpop.f32.mrf.mxu0
      %v5179 = vadd.f32 0.0, %v5178
      %v5180 = vpop.f32.mrf.mxu0
      %5181 = vmatprep.mubr.f32.mxu0 %v4910
      %5182 = vmatmul.mubr.f32.gmra.mxu0 %v4909
      %v5183 = vpop.f32.mrf.mxu0
      %v5184 = vadd.f32 0.0, %v5183
      %v5185 = vpop.f32.mrf.mxu0
      %5186 = vmatprep.mubr.f32.mxu0 %v4913
      %5187 = vmatmul.mubr.f32.gmra.mxu0 %v4912
      %v5188 = vpop.f32.mrf.mxu0
      %v5189 = vadd.f32 0.0, %v5188
      %v5190 = vpop.f32.mrf.mxu0
      %5191 = vmatprep.mubr.f32.mxu0 %v4916
      %5192 = vmatmul.mubr.f32.gmra.mxu0 %v4915
      %v5193 = vpop.f32.mrf.mxu0
      %v5194 = vadd.f32 0.0, %v5193
      %v5195 = vpop.f32.mrf.mxu0
      %5196 = vmatprep.mubr.f32.mxu0 %v4919
      %5197 = vmatmul.mubr.f32.gmra.mxu0 %v4918
      %v5198 = vpop.f32.mrf.mxu0
      %v5199 = vadd.f32 0.0, %v5198
      %v5200 = vpop.f32.mrf.mxu0
      %5201 = vmatprep.mubr.f32.mxu0 %v4922
      %5202 = vmatmul.mubr.f32.gmra.mxu0 %v4921
      %v5203 = vpop.f32.mrf.mxu0
      %v5204 = vadd.f32 0.0, %v5203
      %v5205 = vpop.f32.mrf.mxu0
      %5206 = vmatprep.mubr.f32.mxu0 %v4925
      %5207 = vmatmul.mubr.f32.gmra.mxu0 %v4924
      %v5208 = vpop.f32.mrf.mxu0
      %v5209 = vadd.f32 0.0, %v5208
      %v5210 = vpop.f32.mrf.mxu0
      %5211 = vmatprep.mubr.f32.mxu0 %v4928
      %5212 = vmatmul.mubr.f32.gmra.mxu0 %v4927
      %v5213 = vpop.f32.mrf.mxu0
      %v5214 = vadd.f32 0.0, %v5213
      %v5215 = vpop.f32.mrf.mxu0
      %5216 = vmatprep.mubr.f32.mxu0 %v4931
      %5217 = vmatmul.mubr.f32.gmra.mxu0 %v4930
      %v5218 = vpop.f32.mrf.mxu0
      %v5219 = vadd.f32 0.0, %v5218
      %v5220 = vpop.f32.mrf.mxu0
      %5221 = vdwg.mxu0
      %5222 = vmatprep.subr.mxu0 0.0
      %5223 = vmatpush1.msra.mxu0 %v5028
      %5224 = vmatprep.subr.mxu0 0.0
      %5225 = vmatpush1.msra.mxu0 %v5026
      %5226 = vmatprep.subr.mxu0 0.0
      %5227 = vmatpush1.msra.mxu0 %v5024
      %5228 = vmatprep.subr.mxu0 0.0
      %5229 = vmatpush1.msra.mxu0 %v5022
      %5230 = vmatprep.subr.mxu0 0.0
      %5231 = vmatpush1.msra.mxu0 %v5020
      %5232 = vmatprep.subr.mxu0 0.0
      %5233 = vmatpush1.msra.mxu0 %v5018
      %5234 = vmatprep.subr.mxu0 0.0
      %5235 = vmatpush1.msra.mxu0 %v5016
      %5236 = vmatprep.subr.mxu0 0.0
      %5237 = vmatpush1.msra.mxu0 %v5014
      %5238 = vmatprep.subr.mxu0 0.0
      %5239 = vmatpush1.msra.mxu0 %v5012
      %5240 = vmatprep.subr.mxu0 0.0
      %5241 = vmatpush1.msra.mxu0 %v5010
      %5242 = vmatprep.subr.mxu0 0.0
      %5243 = vmatpush1.msra.mxu0 %v5008
      %5244 = vmatprep.subr.mxu0 0.0
      %5245 = vmatpush1.msra.mxu0 %v5006
      %5246 = vmatprep.subr.mxu0 0.0
      %5247 = vmatpush1.msra.mxu0 %v5004
      %5248 = vmatprep.subr.mxu0 0.0
      %5249 = vmatpush1.msra.mxu0 %v5002
      %5250 = vmatprep.subr.mxu0 0.0
      %5251 = vmatpush1.msra.mxu0 %v5000
      %5252 = vmatprep.subr.mxu0 0.0
      %5253 = vmatpush1.msra.mxu0 %v4998
      %5254 = vmatprep.subr.mxu0 0.0
      %5255 = vmatpush2.msra.mxu0 0.0
      %5256 = vmatprep.subr.mxu0 0.0
      %5257 = vmatpush2.msra.mxu0 0.0
      %5258 = vmatprep.subr.mxu0 0.0
      %5259 = vmatpush2.msra.mxu0 0.0
      %5260 = vmatprep.subr.mxu0 0.0
      %5261 = vmatpush2.msra.mxu0 0.0
      %5262 = vmatprep.subr.mxu0 0.0
      %5263 = vmatpush2.msra.mxu0 0.0
      %5264 = vmatprep.subr.mxu0 0.0
      %5265 = vmatpush2.msra.mxu0 0.0
      %5266 = vmatprep.subr.mxu0 0.0
      %5267 = vmatpush2.msra.mxu0 0.0
      %5268 = vmatprep.subr.mxu0 0.0
      %5269 = vmatpush2.msra.mxu0 0.0
      %5270 = vmatprep.subr.mxu0 0.0
      %5271 = vmatpush2.msra.mxu0 0.0
      %5272 = vmatprep.subr.mxu0 0.0
      %5273 = vmatpush2.msra.mxu0 0.0
      %5274 = vmatprep.subr.mxu0 0.0
      %5275 = vmatpush2.msra.mxu0 0.0
      %5276 = vmatprep.subr.mxu0 0.0
      %5277 = vmatpush2.msra.mxu0 0.0
      %5278 = vmatprep.subr.mxu0 0.0
      %5279 = vmatpush2.msra.mxu0 0.0
      %5280 = vmatprep.subr.mxu0 0.0
      %5281 = vmatpush2.msra.mxu0 0.0
      %5282 = vmatprep.subr.mxu0 0.0
      %5283 = vmatpush2.msra.mxu0 0.0
      %5284 = vmatprep.subr.mxu0 0.0
      %5285 = vmatpush2.msra.mxu0 0.0
      %5286 = vmatprep.mubr.f32.mxu0 0.0
      %5287 = vmatmul.mubr.f32.gmra.mxu0 %v4887
      %v5288 = vpop.f32.mrf.mxu0
      %v5289 = vadd.f32 %v5144, %v5288
      %v5290 = vpop.f32.mrf.mxu0
      %5291 = vmatprep.mubr.f32.mxu0 0.0
      %5292 = vmatmul.mubr.f32.gmra.mxu0 %v4890
      %v5293 = vpop.f32.mrf.mxu0
      %v5294 = vadd.f32 %v5149, %v5293
      %v5295 = vpop.f32.mrf.mxu0
      %5296 = vmatprep.mubr.f32.mxu0 0.0
      %5297 = vmatmul.mubr.f32.gmra.mxu0 %v4893
      %v5298 = vpop.f32.mrf.mxu0
      %v5299 = vadd.f32 %v5154, %v5298
      %v5300 = vpop.f32.mrf.mxu0
      %5301 = vmatprep.mubr.f32.mxu0 0.0
      %5302 = vmatmul.mubr.f32.gmra.mxu0 %v4896
      %v5303 = vpop.f32.mrf.mxu0
      %v5304 = vadd.f32 %v5159, %v5303
      %v5305 = vpop.f32.mrf.mxu0
      %5306 = vmatprep.mubr.f32.mxu0 0.0
      %5307 = vmatmul.mubr.f32.gmra.mxu0 %v4899
      %v5308 = vpop.f32.mrf.mxu0
      %v5309 = vadd.f32 %v5164, %v5308
      %v5310 = vpop.f32.mrf.mxu0
      %5311 = vmatprep.mubr.f32.mxu0 0.0
      %5312 = vmatmul.mubr.f32.gmra.mxu0 %v4902
      %v5313 = vpop.f32.mrf.mxu0
      %v5314 = vadd.f32 %v5169, %v5313
      %v5315 = vpop.f32.mrf.mxu0
      %5316 = vmatprep.mubr.f32.mxu0 0.0
      %5317 = vmatmul.mubr.f32.gmra.mxu0 %v4905
      %v5318 = vpop.f32.mrf.mxu0
      %v5319 = vadd.f32 %v5174, %v5318
      %v5320 = vpop.f32.mrf.mxu0
      %5321 = vmatprep.mubr.f32.mxu0 0.0
      %5322 = vmatmul.mubr.f32.gmra.mxu0 %v4908
      %v5323 = vpop.f32.mrf.mxu0
      %v5324 = vadd.f32 %v5179, %v5323
      %v5325 = vpop.f32.mrf.mxu0
      %5326 = vmatprep.mubr.f32.mxu0 0.0
      %5327 = vmatmul.mubr.f32.gmra.mxu0 %v4911
      %v5328 = vpop.f32.mrf.mxu0
      %v5329 = vadd.f32 %v5184, %v5328
      %v5330 = vpop.f32.mrf.mxu0
      %5331 = vmatprep.mubr.f32.mxu0 0.0
      %5332 = vmatmul.mubr.f32.gmra.mxu0 %v4914
      %v5333 = vpop.f32.mrf.mxu0
      %v5334 = vadd.f32 %v5189, %v5333
      %v5335 = vpop.f32.mrf.mxu0
      %5336 = vmatprep.mubr.f32.mxu0 0.0
      %5337 = vmatmul.mubr.f32.gmra.mxu0 %v4917
      %v5338 = vpop.f32.mrf.mxu0
      %v5339 = vadd.f32 %v5194, %v5338
      %v5340 = vpop.f32.mrf.mxu0
      %5341 = vmatprep.mubr.f32.mxu0 0.0
      %5342 = vmatmul.mubr.f32.gmra.mxu0 %v4920
      %v5343 = vpop.f32.mrf.mxu0
      %v5344 = vadd.f32 %v5199, %v5343
      %v5345 = vpop.f32.mrf.mxu0
      %5346 = vmatprep.mubr.f32.mxu0 0.0
      %5347 = vmatmul.mubr.f32.gmra.mxu0 %v4923
      %v5348 = vpop.f32.mrf.mxu0
      %v5349 = vadd.f32 %v5204, %v5348
      %v5350 = vpop.f32.mrf.mxu0
      %5351 = vmatprep.mubr.f32.mxu0 0.0
      %5352 = vmatmul.mubr.f32.gmra.mxu0 %v4926
      %v5353 = vpop.f32.mrf.mxu0
      %v5354 = vadd.f32 %v5209, %v5353
      %v5355 = vpop.f32.mrf.mxu0
      %5356 = vmatprep.mubr.f32.mxu0 0.0
      %5357 = vmatmul.mubr.f32.gmra.mxu0 %v4929
      %v5358 = vpop.f32.mrf.mxu0
      %v5359 = vadd.f32 %v5214, %v5358
      %v5360 = vpop.f32.mrf.mxu0
      %5361 = vmatprep.mubr.f32.mxu0 0.0
      %5362 = vmatmul.mubr.f32.gmra.mxu0 %v4932
      %v5363 = vpop.f32.mrf.mxu0
      %v5364 = vadd.f32 %v5219, %v5363
      %v5365 = vpop.f32.mrf.mxu0
      %5366 = vdwg.mxu0
      %5367 = vset.pattern.permute.xlu0 3
      %5368 = vperm.xlu0 %5367, %v1788
      %v5369 = vpop.permute.xlu0 %5368
      %5371 = vset.pattern.permute.xlu0 3
      %5372 = vperm.xlu0 %5371, %v1789
      %v5373 = vpop.permute.xlu0 %5372
      %5375 = vset.pattern.permute.xlu0 3
      %5376 = vperm.xlu0 %5375, %v1790
      %v5377 = vpop.permute.xlu0 %5376
      %5379 = vset.pattern.permute.xlu0 3
      %5380 = vperm.xlu0 %5379, %v1791
      %v5381 = vpop.permute.xlu0 %5380
      %5383 = vset.pattern.permute.xlu0 3
      %5384 = vperm.xlu0 %5383, %v1792
      %v5385 = vpop.permute.xlu0 %5384
      %5387 = vset.pattern.permute.xlu0 3
      %5388 = vperm.xlu0 %5387, %v1793
      %v5389 = vpop.permute.xlu0 %5388
      %5391 = vset.pattern.permute.xlu0 3
      %5392 = vperm.xlu0 %5391, %v1794
      %v5393 = vpop.permute.xlu0 %5392
      %5395 = vset.pattern.permute.xlu0 3
      %5396 = vperm.xlu0 %5395, %v1795
      %v5397 = vpop.permute.xlu0 %5396
      %5399 = vset.pattern.permute.xlu0 3
      %5400 = vperm.xlu0 %5399, %v1796
      %v5401 = vpop.permute.xlu0 %5400
      %5403 = vset.pattern.permute.xlu0 3
      %5404 = vperm.xlu0 %5403, %v1797
      %v5405 = vpop.permute.xlu0 %5404
      %5407 = vset.pattern.permute.xlu0 3
      %5408 = vperm.xlu0 %5407, %v1798
      %v5409 = vpop.permute.xlu0 %5408
      %5411 = vset.pattern.permute.xlu0 3
      %5412 = vperm.xlu0 %5411, %v1799
      %v5413 = vpop.permute.xlu0 %5412
      %5415 = vset.pattern.permute.xlu0 3
      %5416 = vperm.xlu0 %5415, %v1800
      %v5417 = vpop.permute.xlu0 %5416
      %5419 = vset.pattern.permute.xlu0 3
      %5420 = vperm.xlu0 %5419, %v1801
      %v5421 = vpop.permute.xlu0 %5420
      %5423 = vset.pattern.permute.xlu0 3
      %5424 = vperm.xlu0 %5423, %v1802
      %v5425 = vpop.permute.xlu0 %5424
      %5427 = vset.pattern.permute.xlu0 3
      %5428 = vperm.xlu0 %5427, %v1803
      %v5429 = vpop.permute.xlu0 %5428
      %v5431 = vlaneseq
      %v5432 = vshrl.u32 %v5431, 7
      %v5433 = vsub.s32 3, %v5432
      %v5434 = vrot.slane %v1804, %v5433
      %v5435 = vlaneseq
      %v5436 = vshrl.u32 %v5435, 7
      %v5437 = vsub.s32 7, %v5436
      %v5438 = vrot.slane %v1804, %v5437
      %v5439 = vlaneseq
      %v5440 = vshrl.u32 %v5439, 7
      %v5441 = vsub.s32 3, %v5440
      %v5442 = vrot.slane %v1805, %v5441
      %v5446 = vlaneseq
      %v5447 = vshrl.u32 %v5446, 7
      %v5448 = vsub.s32 3, %v5447
      %v5449 = vrot.slane %v5434, %v5448
      %v5450 = vlaneseq
      %v5451 = vshrl.u32 %v5450, 7
      %v5452 = vsub.s32 3, %v5451
      %v5453 = vrot.slane %v5438, %v5452
      %v5454 = vlaneseq
      %v5455 = vshrl.u32 %v5454, 7
      %v5456 = vsub.s32 3, %v5455
      %v5457 = vrot.slane %v5442, %v5456
      %v5458 = vadd.f32 %v5369, %v5449
      %v5459 = vadd.f32 %v5369, %v5453
      %v5460 = vadd.f32 %v5369, %v5457
      %v5461 = vadd.f32 %v5373, %v5449
      %v5462 = vadd.f32 %v5373, %v5453
      %v5463 = vadd.f32 %v5373, %v5457
      %v5464 = vadd.f32 %v5377, %v5449
      %v5465 = vadd.f32 %v5377, %v5453
      %v5466 = vadd.f32 %v5377, %v5457
      %v5467 = vadd.f32 %v5381, %v5449
      %v5468 = vadd.f32 %v5381, %v5453
      %v5469 = vadd.f32 %v5381, %v5457
      %v5470 = vadd.f32 %v5385, %v5449
      %v5471 = vadd.f32 %v5385, %v5453
      %v5472 = vadd.f32 %v5385, %v5457
      %v5473 = vadd.f32 %v5389, %v5449
      %v5474 = vadd.f32 %v5389, %v5453
      %v5475 = vadd.f32 %v5389, %v5457
      %v5476 = vadd.f32 %v5393, %v5449
      %v5477 = vadd.f32 %v5393, %v5453
      %v5478 = vadd.f32 %v5393, %v5457
      %v5479 = vadd.f32 %v5397, %v5449
      %v5480 = vadd.f32 %v5397, %v5453
      %v5481 = vadd.f32 %v5397, %v5457
      %v5482 = vadd.f32 %v5401, %v5449
      %v5483 = vadd.f32 %v5401, %v5453
      %v5484 = vadd.f32 %v5401, %v5457
      %v5485 = vadd.f32 %v5405, %v5449
      %v5486 = vadd.f32 %v5405, %v5453
      %v5487 = vadd.f32 %v5405, %v5457
      %v5488 = vadd.f32 %v5409, %v5449
      %v5489 = vadd.f32 %v5409, %v5453
      %v5490 = vadd.f32 %v5409, %v5457
      %v5491 = vadd.f32 %v5413, %v5449
      %v5492 = vadd.f32 %v5413, %v5453
      %v5493 = vadd.f32 %v5413, %v5457
      %v5494 = vadd.f32 %v5417, %v5449
      %v5495 = vadd.f32 %v5417, %v5453
      %v5496 = vadd.f32 %v5417, %v5457
      %v5497 = vadd.f32 %v5421, %v5449
      %v5498 = vadd.f32 %v5421, %v5453
      %v5499 = vadd.f32 %v5421, %v5457
      %v5500 = vadd.f32 %v5425, %v5449
      %v5501 = vadd.f32 %v5425, %v5453
      %v5502 = vadd.f32 %v5425, %v5457
      %v5503 = vadd.f32 %v5429, %v5449
      %v5504 = vadd.f32 %v5429, %v5453
      %v5505 = vadd.f32 %v5429, %v5457
      %vm5506 = vcmp.ge.f32.partialorder %v5458, 0.0
      %vm5507 = vcmp.ge.f32.partialorder %v5459, 0.0
      %vm5508 = vcmp.ge.f32.partialorder %v5460, 0.0
      %vm5509 = vcmp.ge.f32.partialorder %v5461, 0.0
      %vm5510 = vcmp.ge.f32.partialorder %v5462, 0.0
      %vm5511 = vcmp.ge.f32.partialorder %v5463, 0.0
      %vm5512 = vcmp.ge.f32.partialorder %v5464, 0.0
      %vm5513 = vcmp.ge.f32.partialorder %v5465, 0.0
      %vm5514 = vcmp.ge.f32.partialorder %v5466, 0.0
      %vm5515 = vcmp.ge.f32.partialorder %v5467, 0.0
      %vm5516 = vcmp.ge.f32.partialorder %v5468, 0.0
      %vm5517 = vcmp.ge.f32.partialorder %v5469, 0.0
      %vm5518 = vcmp.ge.f32.partialorder %v5470, 0.0
      %vm5519 = vcmp.ge.f32.partialorder %v5471, 0.0
      %vm5520 = vcmp.ge.f32.partialorder %v5472, 0.0
      %vm5521 = vcmp.ge.f32.partialorder %v5473, 0.0
      %vm5522 = vcmp.ge.f32.partialorder %v5474, 0.0
      %vm5523 = vcmp.ge.f32.partialorder %v5475, 0.0
      %vm5524 = vcmp.ge.f32.partialorder %v5476, 0.0
      %vm5525 = vcmp.ge.f32.partialorder %v5477, 0.0
      %vm5526 = vcmp.ge.f32.partialorder %v5478, 0.0
      %vm5527 = vcmp.ge.f32.partialorder %v5479, 0.0
      %vm5528 = vcmp.ge.f32.partialorder %v5480, 0.0
      %vm5529 = vcmp.ge.f32.partialorder %v5481, 0.0
      %vm5530 = vcmp.ge.f32.partialorder %v5482, 0.0
      %vm5531 = vcmp.ge.f32.partialorder %v5483, 0.0
      %vm5532 = vcmp.ge.f32.partialorder %v5484, 0.0
      %vm5533 = vcmp.ge.f32.partialorder %v5485, 0.0
      %vm5534 = vcmp.ge.f32.partialorder %v5486, 0.0
      %vm5535 = vcmp.ge.f32.partialorder %v5487, 0.0
      %vm5536 = vcmp.ge.f32.partialorder %v5488, 0.0
      %vm5537 = vcmp.ge.f32.partialorder %v5489, 0.0
      %vm5538 = vcmp.ge.f32.partialorder %v5490, 0.0
      %vm5539 = vcmp.ge.f32.partialorder %v5491, 0.0
      %vm5540 = vcmp.ge.f32.partialorder %v5492, 0.0
      %vm5541 = vcmp.ge.f32.partialorder %v5493, 0.0
      %vm5542 = vcmp.ge.f32.partialorder %v5494, 0.0
      %vm5543 = vcmp.ge.f32.partialorder %v5495, 0.0
      %vm5544 = vcmp.ge.f32.partialorder %v5496, 0.0
      %vm5545 = vcmp.ge.f32.partialorder %v5497, 0.0
      %vm5546 = vcmp.ge.f32.partialorder %v5498, 0.0
      %vm5547 = vcmp.ge.f32.partialorder %v5499, 0.0
      %vm5548 = vcmp.ge.f32.partialorder %v5500, 0.0
      %vm5549 = vcmp.ge.f32.partialorder %v5501, 0.0
      %vm5550 = vcmp.ge.f32.partialorder %v5502, 0.0
      %vm5551 = vcmp.ge.f32.partialorder %v5503, 0.0
      %vm5552 = vcmp.ge.f32.partialorder %v5504, 0.0
      %vm5553 = vcmp.ge.f32.partialorder %v5505, 0.0
      %v5554 = vmul.f32 %v5458, 0.2
      %v5555 = vmul.f32 %v5459, 0.2
      %v5556 = vmul.f32 %v5460, 0.2
      %v5557 = vmul.f32 %v5461, 0.2
      %v5558 = vmul.f32 %v5462, 0.2
      %v5559 = vmul.f32 %v5463, 0.2
      %v5560 = vmul.f32 %v5464, 0.2
      %v5561 = vmul.f32 %v5465, 0.2
      %v5562 = vmul.f32 %v5466, 0.2
      %v5563 = vmul.f32 %v5467, 0.2
      %v5564 = vmul.f32 %v5468, 0.2
      %v5565 = vmul.f32 %v5469, 0.2
      %v5566 = vmul.f32 %v5470, 0.2
      %v5567 = vmul.f32 %v5471, 0.2
      %v5568 = vmul.f32 %v5472, 0.2
      %v5569 = vmul.f32 %v5473, 0.2
      %v5570 = vmul.f32 %v5474, 0.2
      %v5571 = vmul.f32 %v5475, 0.2
      %v5572 = vmul.f32 %v5476, 0.2
      %v5573 = vmul.f32 %v5477, 0.2
      %v5574 = vmul.f32 %v5478, 0.2
      %v5575 = vmul.f32 %v5479, 0.2
      %v5576 = vmul.f32 %v5480, 0.2
      %v5577 = vmul.f32 %v5481, 0.2
      %v5578 = vmul.f32 %v5482, 0.2
      %v5579 = vmul.f32 %v5483, 0.2
      %v5580 = vmul.f32 %v5484, 0.2
      %v5581 = vmul.f32 %v5485, 0.2
      %v5582 = vmul.f32 %v5486, 0.2
      %v5583 = vmul.f32 %v5487, 0.2
      %v5584 = vmul.f32 %v5488, 0.2
      %v5585 = vmul.f32 %v5489, 0.2
      %v5586 = vmul.f32 %v5490, 0.2
      %v5587 = vmul.f32 %v5491, 0.2
      %v5588 = vmul.f32 %v5492, 0.2
      %v5589 = vmul.f32 %v5493, 0.2
      %v5590 = vmul.f32 %v5494, 0.2
      %v5591 = vmul.f32 %v5495, 0.2
      %v5592 = vmul.f32 %v5496, 0.2
      %v5593 = vmul.f32 %v5497, 0.2
      %v5594 = vmul.f32 %v5498, 0.2
      %v5595 = vmul.f32 %v5499, 0.2
      %v5596 = vmul.f32 %v5500, 0.2
      %v5597 = vmul.f32 %v5501, 0.2
      %v5598 = vmul.f32 %v5502, 0.2
      %v5599 = vmul.f32 %v5503, 0.2
      %v5600 = vmul.f32 %v5504, 0.2
      %v5601 = vmul.f32 %v5505, 0.2
      %v5602 = vsel %vm5506, %v5458, %v5554
      %v5603 = vsel %vm5507, %v5459, %v5555
      %v5604 = vsel %vm5508, %v5460, %v5556
      %v5605 = vsel %vm5509, %v5461, %v5557
      %v5606 = vsel %vm5510, %v5462, %v5558
      %v5607 = vsel %vm5511, %v5463, %v5559
      %v5608 = vsel %vm5512, %v5464, %v5560
      %v5609 = vsel %vm5513, %v5465, %v5561
      %v5610 = vsel %vm5514, %v5466, %v5562
      %v5611 = vsel %vm5515, %v5467, %v5563
      %v5612 = vsel %vm5516, %v5468, %v5564
      %v5613 = vsel %vm5517, %v5469, %v5565
      %v5614 = vsel %vm5518, %v5470, %v5566
      %v5615 = vsel %vm5519, %v5471, %v5567
      %v5616 = vsel %vm5520, %v5472, %v5568
      %v5617 = vsel %vm5521, %v5473, %v5569
      %v5618 = vsel %vm5522, %v5474, %v5570
      %v5619 = vsel %vm5523, %v5475, %v5571
      %v5620 = vsel %vm5524, %v5476, %v5572
      %v5621 = vsel %vm5525, %v5477, %v5573
      %v5622 = vsel %vm5526, %v5478, %v5574
      %v5623 = vsel %vm5527, %v5479, %v5575
      %v5624 = vsel %vm5528, %v5480, %v5576
      %v5625 = vsel %vm5529, %v5481, %v5577
      %v5626 = vsel %vm5530, %v5482, %v5578
      %v5627 = vsel %vm5531, %v5483, %v5579
      %v5628 = vsel %vm5532, %v5484, %v5580
      %v5629 = vsel %vm5533, %v5485, %v5581
      %v5630 = vsel %vm5534, %v5486, %v5582
      %v5631 = vsel %vm5535, %v5487, %v5583
      %v5632 = vsel %vm5536, %v5488, %v5584
      %v5633 = vsel %vm5537, %v5489, %v5585
      %v5634 = vsel %vm5538, %v5490, %v5586
      %v5635 = vsel %vm5539, %v5491, %v5587
      %v5636 = vsel %vm5540, %v5492, %v5588
      %v5637 = vsel %vm5541, %v5493, %v5589
      %v5638 = vsel %vm5542, %v5494, %v5590
      %v5639 = vsel %vm5543, %v5495, %v5591
      %v5640 = vsel %vm5544, %v5496, %v5592
      %v5641 = vsel %vm5545, %v5497, %v5593
      %v5642 = vsel %vm5546, %v5498, %v5594
      %v5643 = vsel %vm5547, %v5499, %v5595
      %v5644 = vsel %vm5548, %v5500, %v5596
      %v5645 = vsel %vm5549, %v5501, %v5597
      %v5646 = vsel %vm5550, %v5502, %v5598
      %v5647 = vsel %vm5551, %v5503, %v5599
      %v5648 = vsel %vm5552, %v5504, %v5600
      %v5649 = vsel %vm5553, %v5505, %v5601
      %v5650 = vadd.f32 %v5602, %v1739
      %v5651 = vadd.f32 %v5603, %v1740
      %v5652 = vadd.f32 %v5604, %v1741
      %v5653 = vadd.f32 %v5605, %v1742
      %v5654 = vadd.f32 %v5606, %v1743
      %v5655 = vadd.f32 %v5607, %v1744
      %v5656 = vadd.f32 %v5608, %v1745
      %v5657 = vadd.f32 %v5609, %v1746
      %v5658 = vadd.f32 %v5610, %v1747
      %v5659 = vadd.f32 %v5611, %v1748
      %v5660 = vadd.f32 %v5612, %v1749
      %v5661 = vadd.f32 %v5613, %v1750
      %v5662 = vadd.f32 %v5614, %v1751
      %v5663 = vadd.f32 %v5615, %v1752
      %v5664 = vadd.f32 %v5616, %v1753
      %v5665 = vadd.f32 %v5617, %v1754
      %v5666 = vadd.f32 %v5618, %v1755
      %v5667 = vadd.f32 %v5619, %v1756
      %v5668 = vadd.f32 %v5620, %v1757
      %v5669 = vadd.f32 %v5621, %v1758
      %v5670 = vadd.f32 %v5622, %v1759
      %v5671 = vadd.f32 %v5623, %v1760
      %v5672 = vadd.f32 %v5624, %v1761
      %v5673 = vadd.f32 %v5625, %v1762
      %v5674 = vadd.f32 %v5626, %v1763
      %v5675 = vadd.f32 %v5627, %v1764
      %v5676 = vadd.f32 %v5628, %v1765
      %v5677 = vadd.f32 %v5629, %v1766
      %v5678 = vadd.f32 %v5630, %v1767
      %v5679 = vadd.f32 %v5631, %v1768
      %v5680 = vadd.f32 %v5632, %v1769
      %v5681 = vadd.f32 %v5633, %v1770
      %v5682 = vadd.f32 %v5634, %v1771
      %v5683 = vadd.f32 %v5635, %v1772
      %v5684 = vadd.f32 %v5636, %v1773
      %v5685 = vadd.f32 %v5637, %v1774
      %v5686 = vadd.f32 %v5638, %v1775
      %v5687 = vadd.f32 %v5639, %v1776
      %v5688 = vadd.f32 %v5640, %v1777
      %v5689 = vadd.f32 %v5641, %v1778
      %v5690 = vadd.f32 %v5642, %v1779
      %v5691 = vadd.f32 %v5643, %v1780
      %v5692 = vadd.f32 %v5644, %v1781
      %v5693 = vadd.f32 %v5645, %v1782
      %v5694 = vadd.f32 %v5646, %v1783
      %v5695 = vadd.f32 %v5647, %v1784
      %v5696 = vadd.f32 %v5648, %v1785
      %v5697 = vadd.f32 %v5649, %v1786
      %v5698 = vmax.f32 %v5650, %v5651
      %v5699 = vmax.f32 %v5698, %v5652
      %5700 = vmax.xlane.f32.xlu0 %v5699
      %v5701 = vpop.xlane.xlu0 %5700
      %v5702 = vmax.f32 %v5653, %v5654
      %v5703 = vmax.f32 %v5702, %v5655
      %5704 = vmax.xlane.f32.xlu0 %v5703
      %v5705 = vpop.xlane.xlu0 %5704
      %v5706 = vmax.f32 %v5656, %v5657
      %v5707 = vmax.f32 %v5706, %v5658
      %5708 = vmax.xlane.f32.xlu0 %v5707
      %v5709 = vpop.xlane.xlu0 %5708
      %v5710 = vmax.f32 %v5659, %v5660
      %v5711 = vmax.f32 %v5710, %v5661
      %5712 = vmax.xlane.f32.xlu0 %v5711
      %v5713 = vpop.xlane.xlu0 %5712
      %v5714 = vmax.f32 %v5662, %v5663
      %v5715 = vmax.f32 %v5714, %v5664
      %5716 = vmax.xlane.f32.xlu0 %v5715
      %v5717 = vpop.xlane.xlu0 %5716
      %v5718 = vmax.f32 %v5665, %v5666
      %v5719 = vmax.f32 %v5718, %v5667
      %5720 = vmax.xlane.f32.xlu0 %v5719
      %v5721 = vpop.xlane.xlu0 %5720
      %v5722 = vmax.f32 %v5668, %v5669
      %v5723 = vmax.f32 %v5722, %v5670
      %5724 = vmax.xlane.f32.xlu0 %v5723
      %v5725 = vpop.xlane.xlu0 %5724
      %v5726 = vmax.f32 %v5671, %v5672
      %v5727 = vmax.f32 %v5726, %v5673
      %5728 = vmax.xlane.f32.xlu0 %v5727
      %v5729 = vpop.xlane.xlu0 %5728
      %v5730 = vmax.f32 %v5674, %v5675
      %v5731 = vmax.f32 %v5730, %v5676
      %5732 = vmax.xlane.f32.xlu0 %v5731
      %v5733 = vpop.xlane.xlu0 %5732
      %v5734 = vmax.f32 %v5677, %v5678
      %v5735 = vmax.f32 %v5734, %v5679
      %5736 = vmax.xlane.f32.xlu0 %v5735
      %v5737 = vpop.xlane.xlu0 %5736
      %v5738 = vmax.f32 %v5680, %v5681
      %v5739 = vmax.f32 %v5738, %v5682
      %5740 = vmax.xlane.f32.xlu0 %v5739
      %v5741 = vpop.xlane.xlu0 %5740
      %v5742 = vmax.f32 %v5683, %v5684
      %v5743 = vmax.f32 %v5742, %v5685
      %5744 = vmax.xlane.f32.xlu0 %v5743
      %v5745 = vpop.xlane.xlu0 %5744
      %v5746 = vmax.f32 %v5686, %v5687
      %v5747 = vmax.f32 %v5746, %v5688
      %5748 = vmax.xlane.f32.xlu0 %v5747
      %v5749 = vpop.xlane.xlu0 %5748
      %v5750 = vmax.f32 %v5689, %v5690
      %v5751 = vmax.f32 %v5750, %v5691
      %5752 = vmax.xlane.f32.xlu0 %v5751
      %v5753 = vpop.xlane.xlu0 %5752
      %v5754 = vmax.f32 %v5692, %v5693
      %v5755 = vmax.f32 %v5754, %v5694
      %5756 = vmax.xlane.f32.xlu0 %v5755
      %v5757 = vpop.xlane.xlu0 %5756
      %v5758 = vmax.f32 %v5695, %v5696
      %v5759 = vmax.f32 %v5758, %v5697
      %5760 = vmax.xlane.f32.xlu0 %v5759
      %v5761 = vpop.xlane.xlu0 %5760
      %v5762 = vsub.f32 %v5650, %v5701
      %v5763 = vsub.f32 %v5651, %v5701
      %v5764 = vsub.f32 %v5652, %v5701
      %v5765 = vsub.f32 %v5653, %v5705
      %v5766 = vsub.f32 %v5654, %v5705
      %v5767 = vsub.f32 %v5655, %v5705
      %v5768 = vsub.f32 %v5656, %v5709
      %v5769 = vsub.f32 %v5657, %v5709
      %v5770 = vsub.f32 %v5658, %v5709
      %v5771 = vsub.f32 %v5659, %v5713
      %v5772 = vsub.f32 %v5660, %v5713
      %v5773 = vsub.f32 %v5661, %v5713
      %v5774 = vsub.f32 %v5662, %v5717
      %v5775 = vsub.f32 %v5663, %v5717
      %v5776 = vsub.f32 %v5664, %v5717
      %v5777 = vsub.f32 %v5665, %v5721
      %v5778 = vsub.f32 %v5666, %v5721
      %v5779 = vsub.f32 %v5667, %v5721
      %v5780 = vsub.f32 %v5668, %v5725
      %v5781 = vsub.f32 %v5669, %v5725
      %v5782 = vsub.f32 %v5670, %v5725
      %v5783 = vsub.f32 %v5671, %v5729
      %v5784 = vsub.f32 %v5672, %v5729
      %v5785 = vsub.f32 %v5673, %v5729
      %v5786 = vsub.f32 %v5674, %v5733
      %v5787 = vsub.f32 %v5675, %v5733
      %v5788 = vsub.f32 %v5676, %v5733
      %v5789 = vsub.f32 %v5677, %v5737
      %v5790 = vsub.f32 %v5678, %v5737
      %v5791 = vsub.f32 %v5679, %v5737
      %v5792 = vsub.f32 %v5680, %v5741
      %v5793 = vsub.f32 %v5681, %v5741
      %v5794 = vsub.f32 %v5682, %v5741
      %v5795 = vsub.f32 %v5683, %v5745
      %v5796 = vsub.f32 %v5684, %v5745
      %v5797 = vsub.f32 %v5685, %v5745
      %v5798 = vsub.f32 %v5686, %v5749
      %v5799 = vsub.f32 %v5687, %v5749
      %v5800 = vsub.f32 %v5688, %v5749
      %v5801 = vsub.f32 %v5689, %v5753
      %v5802 = vsub.f32 %v5690, %v5753
      %v5803 = vsub.f32 %v5691, %v5753
      %v5804 = vsub.f32 %v5692, %v5757
      %v5805 = vsub.f32 %v5693, %v5757
      %v5806 = vsub.f32 %v5694, %v5757
      %v5807 = vsub.f32 %v5695, %v5761
      %v5808 = vsub.f32 %v5696, %v5761
      %v5809 = vsub.f32 %v5697, %v5761
      %v5810 = vmul.f32 %v5762, 1.442695
      %v5811 = vpow.pop %v5810
      %v5812 = vmul.f32 %v5763, 1.442695
      %v5813 = vpow.pop %v5812
      %v5814 = vmul.f32 %v5764, 1.442695
      %v5815 = vpow.pop %v5814
      %v5816 = vmul.f32 %v5765, 1.442695
      %v5817 = vpow.pop %v5816
      %v5818 = vmul.f32 %v5766, 1.442695
      %v5819 = vpow.pop %v5818
      %v5820 = vmul.f32 %v5767, 1.442695
      %v5821 = vpow.pop %v5820
      %v5822 = vmul.f32 %v5768, 1.442695
      %v5823 = vpow.pop %v5822
      %v5824 = vmul.f32 %v5769, 1.442695
      %v5825 = vpow.pop %v5824
      %v5826 = vmul.f32 %v5770, 1.442695
      %v5827 = vpow.pop %v5826
      %v5828 = vmul.f32 %v5771, 1.442695
      %v5829 = vpow.pop %v5828
      %v5830 = vmul.f32 %v5772, 1.442695
      %v5831 = vpow.pop %v5830
      %v5832 = vmul.f32 %v5773, 1.442695
      %v5833 = vpow.pop %v5832
      %v5834 = vmul.f32 %v5774, 1.442695
      %v5835 = vpow.pop %v5834
      %v5836 = vmul.f32 %v5775, 1.442695
      %v5837 = vpow.pop %v5836
      %v5838 = vmul.f32 %v5776, 1.442695
      %v5839 = vpow.pop %v5838
      %v5840 = vmul.f32 %v5777, 1.442695
      %v5841 = vpow.pop %v5840
      %v5842 = vmul.f32 %v5778, 1.442695
      %v5843 = vpow.pop %v5842
      %v5844 = vmul.f32 %v5779, 1.442695
      %v5845 = vpow.pop %v5844
      %v5846 = vmul.f32 %v5780, 1.442695
      %v5847 = vpow.pop %v5846
      %v5848 = vmul.f32 %v5781, 1.442695
      %v5849 = vpow.pop %v5848
      %v5850 = vmul.f32 %v5782, 1.442695
      %v5851 = vpow.pop %v5850
      %v5852 = vmul.f32 %v5783, 1.442695
      %v5853 = vpow.pop %v5852
      %v5854 = vmul.f32 %v5784, 1.442695
      %v5855 = vpow.pop %v5854
      %v5856 = vmul.f32 %v5785, 1.442695
      %v5857 = vpow.pop %v5856
      %v5858 = vmul.f32 %v5786, 1.442695
      %v5859 = vpow.pop %v5858
      %v5860 = vmul.f32 %v5787, 1.442695
      %v5861 = vpow.pop %v5860
      %v5862 = vmul.f32 %v5788, 1.442695
      %v5863 = vpow.pop %v5862
      %v5864 = vmul.f32 %v5789, 1.442695
      %v5865 = vpow.pop %v5864
      %v5866 = vmul.f32 %v5790, 1.442695
      %v5867 = vpow.pop %v5866
      %v5868 = vmul.f32 %v5791, 1.442695
      %v5869 = vpow.pop %v5868
      %v5870 = vmul.f32 %v5792, 1.442695
      %v5871 = vpow.pop %v5870
      %v5872 = vmul.f32 %v5793, 1.442695
      %v5873 = vpow.pop %v5872
      %v5874 = vmul.f32 %v5794, 1.442695
      %v5875 = vpow.pop %v5874
      %v5876 = vmul.f32 %v5795, 1.442695
      %v5877 = vpow.pop %v5876
      %v5878 = vmul.f32 %v5796, 1.442695
      %v5879 = vpow.pop %v5878
      %v5880 = vmul.f32 %v5797, 1.442695
      %v5881 = vpow.pop %v5880
      %v5882 = vmul.f32 %v5798, 1.442695
      %v5883 = vpow.pop %v5882
      %v5884 = vmul.f32 %v5799, 1.442695
      %v5885 = vpow.pop %v5884
      %v5886 = vmul.f32 %v5800, 1.442695
      %v5887 = vpow.pop %v5886
      %v5888 = vmul.f32 %v5801, 1.442695
      %v5889 = vpow.pop %v5888
      %v5890 = vmul.f32 %v5802, 1.442695
      %v5891 = vpow.pop %v5890
      %v5892 = vmul.f32 %v5803, 1.442695
      %v5893 = vpow.pop %v5892
      %v5894 = vmul.f32 %v5804, 1.442695
      %v5895 = vpow.pop %v5894
      %v5896 = vmul.f32 %v5805, 1.442695
      %v5897 = vpow.pop %v5896
      %v5898 = vmul.f32 %v5806, 1.442695
      %v5899 = vpow.pop %v5898
      %v5900 = vmul.f32 %v5807, 1.442695
      %v5901 = vpow.pop %v5900
      %v5902 = vmul.f32 %v5808, 1.442695
      %v5903 = vpow.pop %v5902
      %v5904 = vmul.f32 %v5809, 1.442695
      %v5905 = vpow.pop %v5904
      %v5906 = vmul.f32 %v5811, %v1643
      %v5907 = vmul.f32 %v5813, %v1644
      %v5908 = vmul.f32 %v5815, %v1645
      %v5909 = vmul.f32 %v5817, %v1646
      %v5910 = vmul.f32 %v5819, %v1647
      %v5911 = vmul.f32 %v5821, %v1648
      %v5912 = vmul.f32 %v5823, %v1649
      %v5913 = vmul.f32 %v5825, %v1650
      %v5914 = vmul.f32 %v5827, %v1651
      %v5915 = vmul.f32 %v5829, %v1652
      %v5916 = vmul.f32 %v5831, %v1653
      %v5917 = vmul.f32 %v5833, %v1654
      %v5918 = vmul.f32 %v5835, %v1655
      %v5919 = vmul.f32 %v5837, %v1656
      %v5920 = vmul.f32 %v5839, %v1657
      %v5921 = vmul.f32 %v5841, %v1658
      %v5922 = vmul.f32 %v5843, %v1659
      %v5923 = vmul.f32 %v5845, %v1660
      %v5924 = vmul.f32 %v5847, %v1661
      %v5925 = vmul.f32 %v5849, %v1662
      %v5926 = vmul.f32 %v5851, %v1663
      %v5927 = vmul.f32 %v5853, %v1664
      %v5928 = vmul.f32 %v5855, %v1665
      %v5929 = vmul.f32 %v5857, %v1666
      %v5930 = vmul.f32 %v5859, %v1667
      %v5931 = vmul.f32 %v5861, %v1668
      %v5932 = vmul.f32 %v5863, %v1669
      %v5933 = vmul.f32 %v5865, %v1670
      %v5934 = vmul.f32 %v5867, %v1671
      %v5935 = vmul.f32 %v5869, %v1672
      %v5936 = vmul.f32 %v5871, %v1673
      %v5937 = vmul.f32 %v5873, %v1674
      %v5938 = vmul.f32 %v5875, %v1675
      %v5939 = vmul.f32 %v5877, %v1676
      %v5940 = vmul.f32 %v5879, %v1677
      %v5941 = vmul.f32 %v5881, %v1678
      %v5942 = vmul.f32 %v5883, %v1679
      %v5943 = vmul.f32 %v5885, %v1680
      %v5944 = vmul.f32 %v5887, %v1681
      %v5945 = vmul.f32 %v5889, %v1682
      %v5946 = vmul.f32 %v5891, %v1683
      %v5947 = vmul.f32 %v5893, %v1684
      %v5948 = vmul.f32 %v5895, %v1685
      %v5949 = vmul.f32 %v5897, %v1686
      %v5950 = vmul.f32 %v5899, %v1687
      %v5951 = vmul.f32 %v5901, %v1688
      %v5952 = vmul.f32 %v5903, %v1689
      %v5953 = vmul.f32 %v5905, %v1690
      %v5954 = vadd.f32 %v5906, %v5907
      %v5955 = vadd.f32 %v5954, %v5908
      %5956 = vadd.xlane.f32.xlu0 %v5955
      %v5957 = vpop.xlane.xlu0 %5956
      %v5958 = vadd.f32 %v5909, %v5910
      %v5959 = vadd.f32 %v5958, %v5911
      %5960 = vadd.xlane.f32.xlu0 %v5959
      %v5961 = vpop.xlane.xlu0 %5960
      %v5962 = vadd.f32 %v5912, %v5913
      %v5963 = vadd.f32 %v5962, %v5914
      %5964 = vadd.xlane.f32.xlu0 %v5963
      %v5965 = vpop.xlane.xlu0 %5964
      %v5966 = vadd.f32 %v5915, %v5916
      %v5967 = vadd.f32 %v5966, %v5917
      %5968 = vadd.xlane.f32.xlu0 %v5967
      %v5969 = vpop.xlane.xlu0 %5968
      %v5970 = vadd.f32 %v5918, %v5919
      %v5971 = vadd.f32 %v5970, %v5920
      %5972 = vadd.xlane.f32.xlu0 %v5971
      %v5973 = vpop.xlane.xlu0 %5972
      %v5974 = vadd.f32 %v5921, %v5922
      %v5975 = vadd.f32 %v5974, %v5923
      %5976 = vadd.xlane.f32.xlu0 %v5975
      %v5977 = vpop.xlane.xlu0 %5976
      %v5978 = vadd.f32 %v5924, %v5925
      %v5979 = vadd.f32 %v5978, %v5926
      %5980 = vadd.xlane.f32.xlu0 %v5979
      %v5981 = vpop.xlane.xlu0 %5980
      %v5982 = vadd.f32 %v5927, %v5928
      %v5983 = vadd.f32 %v5982, %v5929
      %5984 = vadd.xlane.f32.xlu0 %v5983
      %v5985 = vpop.xlane.xlu0 %5984
      %v5986 = vadd.f32 %v5930, %v5931
      %v5987 = vadd.f32 %v5986, %v5932
      %5988 = vadd.xlane.f32.xlu0 %v5987
      %v5989 = vpop.xlane.xlu0 %5988
      %v5990 = vadd.f32 %v5933, %v5934
      %v5991 = vadd.f32 %v5990, %v5935
      %5992 = vadd.xlane.f32.xlu0 %v5991
      %v5993 = vpop.xlane.xlu0 %5992
      %v5994 = vadd.f32 %v5936, %v5937
      %v5995 = vadd.f32 %v5994, %v5938
      %5996 = vadd.xlane.f32.xlu0 %v5995
      %v5997 = vpop.xlane.xlu0 %5996
      %v5998 = vadd.f32 %v5939, %v5940
      %v5999 = vadd.f32 %v5998, %v5941
      %6000 = vadd.xlane.f32.xlu0 %v5999
      %v6001 = vpop.xlane.xlu0 %6000
      %v6002 = vadd.f32 %v5942, %v5943
      %v6003 = vadd.f32 %v6002, %v5944
      %6004 = vadd.xlane.f32.xlu0 %v6003
      %v6005 = vpop.xlane.xlu0 %6004
      %v6006 = vadd.f32 %v5945, %v5946
      %v6007 = vadd.f32 %v6006, %v5947
      %6008 = vadd.xlane.f32.xlu0 %v6007
      %v6009 = vpop.xlane.xlu0 %6008
      %v6010 = vadd.f32 %v5948, %v5949
      %v6011 = vadd.f32 %v6010, %v5950
      %6012 = vadd.xlane.f32.xlu0 %v6011
      %v6013 = vpop.xlane.xlu0 %6012
      %v6014 = vadd.f32 %v5951, %v5952
      %v6015 = vadd.f32 %v6014, %v5953
      %6016 = vadd.xlane.f32.xlu0 %v6015
      %v6017 = vpop.xlane.xlu0 %6016
      %v6018 = vmax.f32 %v5957, 1e-30
      %v6019 = vmax.f32 %v5961, 1e-30
      %v6020 = vmax.f32 %v5965, 1e-30
      %v6021 = vmax.f32 %v5969, 1e-30
      %v6022 = vmax.f32 %v5973, 1e-30
      %v6023 = vmax.f32 %v5977, 1e-30
      %v6024 = vmax.f32 %v5981, 1e-30
      %v6025 = vmax.f32 %v5985, 1e-30
      %v6026 = vmax.f32 %v5989, 1e-30
      %v6027 = vmax.f32 %v5993, 1e-30
      %v6028 = vmax.f32 %v5997, 1e-30
      %v6029 = vmax.f32 %v6001, 1e-30
      %v6030 = vmax.f32 %v6005, 1e-30
      %v6031 = vmax.f32 %v6009, 1e-30
      %v6032 = vmax.f32 %v6013, 1e-30
      %v6033 = vmax.f32 %v6017, 1e-30
      %v6034 = vrcp.pop %v6018
      %v6035 = vrcp.pop %v6019
      %v6036 = vrcp.pop %v6020
      %v6037 = vrcp.pop %v6021
      %v6038 = vrcp.pop %v6022
      %v6039 = vrcp.pop %v6023
      %v6040 = vrcp.pop %v6024
      %v6041 = vrcp.pop %v6025
      %v6042 = vrcp.pop %v6026
      %v6043 = vrcp.pop %v6027
      %v6044 = vrcp.pop %v6028
      %v6045 = vrcp.pop %v6029
      %v6046 = vrcp.pop %v6030
      %v6047 = vrcp.pop %v6031
      %v6048 = vrcp.pop %v6032
      %v6049 = vrcp.pop %v6033
      %vm6050 = vcmp.gt.f32.partialorder %v5957, 0.0
      %vm6051 = vcmp.gt.f32.partialorder %v5961, 0.0
      %vm6052 = vcmp.gt.f32.partialorder %v5965, 0.0
      %vm6053 = vcmp.gt.f32.partialorder %v5969, 0.0
      %vm6054 = vcmp.gt.f32.partialorder %v5973, 0.0
      %vm6055 = vcmp.gt.f32.partialorder %v5977, 0.0
      %vm6056 = vcmp.gt.f32.partialorder %v5981, 0.0
      %vm6057 = vcmp.gt.f32.partialorder %v5985, 0.0
      %vm6058 = vcmp.gt.f32.partialorder %v5989, 0.0
      %vm6059 = vcmp.gt.f32.partialorder %v5993, 0.0
      %vm6060 = vcmp.gt.f32.partialorder %v5997, 0.0
      %vm6061 = vcmp.gt.f32.partialorder %v6001, 0.0
      %vm6062 = vcmp.gt.f32.partialorder %v6005, 0.0
      %vm6063 = vcmp.gt.f32.partialorder %v6009, 0.0
      %vm6064 = vcmp.gt.f32.partialorder %v6013, 0.0
      %vm6065 = vcmp.gt.f32.partialorder %v6017, 0.0
      %v6066 = vsel %vm6050, %v6034, 0.0
      %v6067 = vsel %vm6051, %v6035, 0.0
      %v6068 = vsel %vm6052, %v6036, 0.0
      %v6069 = vsel %vm6053, %v6037, 0.0
      %v6070 = vsel %vm6054, %v6038, 0.0
      %v6071 = vsel %vm6055, %v6039, 0.0
      %v6072 = vsel %vm6056, %v6040, 0.0
      %v6073 = vsel %vm6057, %v6041, 0.0
      %v6074 = vsel %vm6058, %v6042, 0.0
      %v6075 = vsel %vm6059, %v6043, 0.0
      %v6076 = vsel %vm6060, %v6044, 0.0
      %v6077 = vsel %vm6061, %v6045, 0.0
      %v6078 = vsel %vm6062, %v6046, 0.0
      %v6079 = vsel %vm6063, %v6047, 0.0
      %v6080 = vsel %vm6064, %v6048, 0.0
      %v6081 = vsel %vm6065, %v6049, 0.0
      %v6082 = vmul.f32 %v5906, %v6066
      %v6083 = vmul.f32 %v5907, %v6066
      %v6084 = vmul.f32 %v5908, %v6066
      %v6085 = vmul.f32 %v5909, %v6067
      %v6086 = vmul.f32 %v5910, %v6067
      %v6087 = vmul.f32 %v5911, %v6067
      %v6088 = vmul.f32 %v5912, %v6068
      %v6089 = vmul.f32 %v5913, %v6068
      %v6090 = vmul.f32 %v5914, %v6068
      %v6091 = vmul.f32 %v5915, %v6069
      %v6092 = vmul.f32 %v5916, %v6069
      %v6093 = vmul.f32 %v5917, %v6069
      %v6094 = vmul.f32 %v5918, %v6070
      %v6095 = vmul.f32 %v5919, %v6070
      %v6096 = vmul.f32 %v5920, %v6070
      %v6097 = vmul.f32 %v5921, %v6071
      %v6098 = vmul.f32 %v5922, %v6071
      %v6099 = vmul.f32 %v5923, %v6071
      %v6100 = vmul.f32 %v5924, %v6072
      %v6101 = vmul.f32 %v5925, %v6072
      %v6102 = vmul.f32 %v5926, %v6072
      %v6103 = vmul.f32 %v5927, %v6073
      %v6104 = vmul.f32 %v5928, %v6073
      %v6105 = vmul.f32 %v5929, %v6073
      %v6106 = vmul.f32 %v5930, %v6074
      %v6107 = vmul.f32 %v5931, %v6074
      %v6108 = vmul.f32 %v5932, %v6074
      %v6109 = vmul.f32 %v5933, %v6075
      %v6110 = vmul.f32 %v5934, %v6075
      %v6111 = vmul.f32 %v5935, %v6075
      %v6112 = vmul.f32 %v5936, %v6076
      %v6113 = vmul.f32 %v5937, %v6076
      %v6114 = vmul.f32 %v5938, %v6076
      %v6115 = vmul.f32 %v5939, %v6077
      %v6116 = vmul.f32 %v5940, %v6077
      %v6117 = vmul.f32 %v5941, %v6077
      %v6118 = vmul.f32 %v5942, %v6078
      %v6119 = vmul.f32 %v5943, %v6078
      %v6120 = vmul.f32 %v5944, %v6078
      %v6121 = vmul.f32 %v5945, %v6079
      %v6122 = vmul.f32 %v5946, %v6079
      %v6123 = vmul.f32 %v5947, %v6079
      %v6124 = vmul.f32 %v5948, %v6080
      %v6125 = vmul.f32 %v5949, %v6080
      %v6126 = vmul.f32 %v5950, %v6080
      %v6127 = vmul.f32 %v5951, %v6081
      %v6128 = vmul.f32 %v5952, %v6081
      %v6129 = vmul.f32 %v5953, %v6081
      %6130 = vrot.lane.b32.xlu0 %v1806, 80
      %v6131 = vpop.permute.xlu0 %6130
      %6132 = vrot.lane.b32.xlu0 %v1807, 80
      %v6133 = vpop.permute.xlu0 %6132
      %6134 = vrot.lane.b32.xlu0 %v1808, 80
      %v6135 = vpop.permute.xlu0 %6134
      %6136 = vrot.lane.b32.xlu0 %v1809, 80
      %v6137 = vpop.permute.xlu0 %6136
      %6138 = vrot.lane.b32.xlu0 %v1810, 80
      %v6139 = vpop.permute.xlu0 %6138
      %6140 = vrot.lane.b32.xlu0 %v1811, 80
      %v6141 = vpop.permute.xlu0 %6140
      %6142 = vrot.lane.b32.xlu0 %v1812, 80
      %v6143 = vpop.permute.xlu0 %6142
      %6144 = vrot.lane.b32.xlu0 %v1813, 80
      %v6145 = vpop.permute.xlu0 %6144
      %6146 = vrot.lane.b32.xlu0 %v1814, 80
      %v6147 = vpop.permute.xlu0 %6146
      %6148 = vrot.lane.b32.xlu0 %v1815, 80
      %v6149 = vpop.permute.xlu0 %6148
      %6150 = vrot.lane.b32.xlu0 %v1816, 80
      %v6151 = vpop.permute.xlu0 %6150
      %6152 = vrot.lane.b32.xlu0 %v1817, 80
      %v6153 = vpop.permute.xlu0 %6152
      %6154 = vrot.lane.b32.xlu0 %v1818, 80
      %v6155 = vpop.permute.xlu0 %6154
      %6156 = vrot.lane.b32.xlu0 %v1819, 80
      %v6157 = vpop.permute.xlu0 %6156
      %6158 = vrot.lane.b32.xlu0 %v1820, 80
      %v6159 = vpop.permute.xlu0 %6158
      %6160 = vrot.lane.b32.xlu0 %v1821, 80
      %v6161 = vpop.permute.xlu0 %6160
      %6162 = vrot.lane.b32.xlu0 %v1822, 80
      %v6163 = vpop.permute.xlu0 %6162
      %6164 = vrot.lane.b32.xlu0 %v1823, 80
      %v6165 = vpop.permute.xlu0 %6164
      %6166 = vrot.lane.b32.xlu0 %v1824, 80
      %v6167 = vpop.permute.xlu0 %6166
      %6168 = vrot.lane.b32.xlu0 %v1825, 80
      %v6169 = vpop.permute.xlu0 %6168
      %6170 = vrot.lane.b32.xlu0 %v1826, 80
      %v6171 = vpop.permute.xlu0 %6170
      %6172 = vrot.lane.b32.xlu0 %v1827, 80
      %v6173 = vpop.permute.xlu0 %6172
      %6174 = vrot.lane.b32.xlu0 %v1828, 80
      %v6175 = vpop.permute.xlu0 %6174
      %6176 = vrot.lane.b32.xlu0 %v1829, 80
      %v6177 = vpop.permute.xlu0 %6176
      %6178 = vrot.lane.b32.xlu0 %v1830, 80
      %v6179 = vpop.permute.xlu0 %6178
      %6180 = vrot.lane.b32.xlu0 %v1831, 80
      %v6181 = vpop.permute.xlu0 %6180
      %6182 = vrot.lane.b32.xlu0 %v1832, 80
      %v6183 = vpop.permute.xlu0 %6182
      %6184 = vrot.lane.b32.xlu0 %v1833, 80
      %v6185 = vpop.permute.xlu0 %6184
      %6186 = vrot.lane.b32.xlu0 %v1834, 80
      %v6187 = vpop.permute.xlu0 %6186
      %6188 = vrot.lane.b32.xlu0 %v1835, 80
      %v6189 = vpop.permute.xlu0 %6188
      %6190 = vrot.lane.b32.xlu0 %v1836, 80
      %v6191 = vpop.permute.xlu0 %6190
      %6192 = vrot.lane.b32.xlu0 %v1837, 80
      %v6193 = vpop.permute.xlu0 %6192
      %6194 = vrot.lane.b32.xlu0 %v1838, 80
      %v6195 = vpop.permute.xlu0 %6194
      %6196 = vrot.lane.b32.xlu0 %v1839, 80
      %v6197 = vpop.permute.xlu0 %6196
      %6198 = vrot.lane.b32.xlu0 %v1840, 80
      %v6199 = vpop.permute.xlu0 %6198
      %6200 = vrot.lane.b32.xlu0 %v1841, 80
      %v6201 = vpop.permute.xlu0 %6200
      %6202 = vrot.lane.b32.xlu0 %v1842, 80
      %v6203 = vpop.permute.xlu0 %6202
      %6204 = vrot.lane.b32.xlu0 %v1843, 80
      %v6205 = vpop.permute.xlu0 %6204
      %6206 = vrot.lane.b32.xlu0 %v1844, 80
      %v6207 = vpop.permute.xlu0 %6206
      %6208 = vrot.lane.b32.xlu0 %v1845, 80
      %v6209 = vpop.permute.xlu0 %6208
      %6210 = vrot.lane.b32.xlu0 %v1846, 80
      %v6211 = vpop.permute.xlu0 %6210
      %6212 = vrot.lane.b32.xlu0 %v1847, 80
      %v6213 = vpop.permute.xlu0 %6212
      %6214 = vrot.lane.b32.xlu0 %v1848, 80
      %v6215 = vpop.permute.xlu0 %6214
      %6216 = vrot.lane.b32.xlu0 %v1849, 80
      %v6217 = vpop.permute.xlu0 %6216
      %6218 = vrot.lane.b32.xlu0 %v1850, 80
      %v6219 = vpop.permute.xlu0 %6218
      %6220 = vrot.lane.b32.xlu0 %v1851, 80
      %v6221 = vpop.permute.xlu0 %6220
      %6222 = vrot.lane.b32.xlu0 %v1852, 80
      %v6223 = vpop.permute.xlu0 %6222
      %6224 = vrot.lane.b32.xlu0 %v1853, 80
      %v6225 = vpop.permute.xlu0 %6224
      %6274 = vmatprep.subr.mxu0 0.0
      %6275 = vmatpush1.msra.mxu0 %v6161
      %6276 = vmatprep.subr.mxu0 0.0
      %6277 = vmatpush1.msra.mxu0 %v6159
      %6278 = vmatprep.subr.mxu0 0.0
      %6279 = vmatpush1.msra.mxu0 %v6157
      %6280 = vmatprep.subr.mxu0 0.0
      %6281 = vmatpush1.msra.mxu0 %v6155
      %6282 = vmatprep.subr.mxu0 0.0
      %6283 = vmatpush1.msra.mxu0 %v6153
      %6284 = vmatprep.subr.mxu0 0.0
      %6285 = vmatpush1.msra.mxu0 %v6151
      %6286 = vmatprep.subr.mxu0 0.0
      %6287 = vmatpush1.msra.mxu0 %v6149
      %6288 = vmatprep.subr.mxu0 0.0
      %6289 = vmatpush1.msra.mxu0 %v6147
      %6290 = vmatprep.subr.mxu0 0.0
      %6291 = vmatpush1.msra.mxu0 %v6145
      %6292 = vmatprep.subr.mxu0 0.0
      %6293 = vmatpush1.msra.mxu0 %v6143
      %6294 = vmatprep.subr.mxu0 0.0
      %6295 = vmatpush1.msra.mxu0 %v6141
      %6296 = vmatprep.subr.mxu0 0.0
      %6297 = vmatpush1.msra.mxu0 %v6139
      %6298 = vmatprep.subr.mxu0 0.0
      %6299 = vmatpush1.msra.mxu0 %v6137
      %6300 = vmatprep.subr.mxu0 0.0
      %6301 = vmatpush1.msra.mxu0 %v6135
      %6302 = vmatprep.subr.mxu0 0.0
      %6303 = vmatpush1.msra.mxu0 %v6133
      %6304 = vmatprep.subr.mxu0 0.0
      %6305 = vmatpush1.msra.mxu0 %v6131
      %6306 = vmatprep.subr.mxu0 0.0
      %6307 = vmatpush2.msra.mxu0 %v6193
      %6308 = vmatprep.subr.mxu0 0.0
      %6309 = vmatpush2.msra.mxu0 %v6191
      %6310 = vmatprep.subr.mxu0 0.0
      %6311 = vmatpush2.msra.mxu0 %v6189
      %6312 = vmatprep.subr.mxu0 0.0
      %6313 = vmatpush2.msra.mxu0 %v6187
      %6314 = vmatprep.subr.mxu0 0.0
      %6315 = vmatpush2.msra.mxu0 %v6185
      %6316 = vmatprep.subr.mxu0 0.0
      %6317 = vmatpush2.msra.mxu0 %v6183
      %6318 = vmatprep.subr.mxu0 0.0
      %6319 = vmatpush2.msra.mxu0 %v6181
      %6320 = vmatprep.subr.mxu0 0.0
      %6321 = vmatpush2.msra.mxu0 %v6179
      %6322 = vmatprep.subr.mxu0 0.0
      %6323 = vmatpush2.msra.mxu0 %v6177
      %6324 = vmatprep.subr.mxu0 0.0
      %6325 = vmatpush2.msra.mxu0 %v6175
      %6326 = vmatprep.subr.mxu0 0.0
      %6327 = vmatpush2.msra.mxu0 %v6173
      %6328 = vmatprep.subr.mxu0 0.0
      %6329 = vmatpush2.msra.mxu0 %v6171
      %6330 = vmatprep.subr.mxu0 0.0
      %6331 = vmatpush2.msra.mxu0 %v6169
      %6332 = vmatprep.subr.mxu0 0.0
      %6333 = vmatpush2.msra.mxu0 %v6167
      %6334 = vmatprep.subr.mxu0 0.0
      %6335 = vmatpush2.msra.mxu0 %v6165
      %6336 = vmatprep.subr.mxu0 0.0
      %6337 = vmatpush2.msra.mxu0 %v6163
      %6338 = vmatprep.mubr.f32.mxu0 %v6083
      %6339 = vmatmul.mubr.f32.gmra.mxu0 %v6082
      %v6340 = vpop.f32.mrf.mxu0
      %v6341 = vadd.f32 0.0, %v6340
      %v6342 = vpop.f32.mrf.mxu0
      %6343 = vmatprep.mubr.f32.mxu0 %v6086
      %6344 = vmatmul.mubr.f32.gmra.mxu0 %v6085
      %v6345 = vpop.f32.mrf.mxu0
      %v6346 = vadd.f32 0.0, %v6345
      %v6347 = vpop.f32.mrf.mxu0
      %6348 = vmatprep.mubr.f32.mxu0 %v6089
      %6349 = vmatmul.mubr.f32.gmra.mxu0 %v6088
      %v6350 = vpop.f32.mrf.mxu0
      %v6351 = vadd.f32 0.0, %v6350
      %v6352 = vpop.f32.mrf.mxu0
      %6353 = vmatprep.mubr.f32.mxu0 %v6092
      %6354 = vmatmul.mubr.f32.gmra.mxu0 %v6091
      %v6355 = vpop.f32.mrf.mxu0
      %v6356 = vadd.f32 0.0, %v6355
      %v6357 = vpop.f32.mrf.mxu0
      %6358 = vmatprep.mubr.f32.mxu0 %v6095
      %6359 = vmatmul.mubr.f32.gmra.mxu0 %v6094
      %v6360 = vpop.f32.mrf.mxu0
      %v6361 = vadd.f32 0.0, %v6360
      %v6362 = vpop.f32.mrf.mxu0
      %6363 = vmatprep.mubr.f32.mxu0 %v6098
      %6364 = vmatmul.mubr.f32.gmra.mxu0 %v6097
      %v6365 = vpop.f32.mrf.mxu0
      %v6366 = vadd.f32 0.0, %v6365
      %v6367 = vpop.f32.mrf.mxu0
      %6368 = vmatprep.mubr.f32.mxu0 %v6101
      %6369 = vmatmul.mubr.f32.gmra.mxu0 %v6100
      %v6370 = vpop.f32.mrf.mxu0
      %v6371 = vadd.f32 0.0, %v6370
      %v6372 = vpop.f32.mrf.mxu0
      %6373 = vmatprep.mubr.f32.mxu0 %v6104
      %6374 = vmatmul.mubr.f32.gmra.mxu0 %v6103
      %v6375 = vpop.f32.mrf.mxu0
      %v6376 = vadd.f32 0.0, %v6375
      %v6377 = vpop.f32.mrf.mxu0
      %6378 = vmatprep.mubr.f32.mxu0 %v6107
      %6379 = vmatmul.mubr.f32.gmra.mxu0 %v6106
      %v6380 = vpop.f32.mrf.mxu0
      %v6381 = vadd.f32 0.0, %v6380
      %v6382 = vpop.f32.mrf.mxu0
      %6383 = vmatprep.mubr.f32.mxu0 %v6110
      %6384 = vmatmul.mubr.f32.gmra.mxu0 %v6109
      %v6385 = vpop.f32.mrf.mxu0
      %v6386 = vadd.f32 0.0, %v6385
      %v6387 = vpop.f32.mrf.mxu0
      %6388 = vmatprep.mubr.f32.mxu0 %v6113
      %6389 = vmatmul.mubr.f32.gmra.mxu0 %v6112
      %v6390 = vpop.f32.mrf.mxu0
      %v6391 = vadd.f32 0.0, %v6390
      %v6392 = vpop.f32.mrf.mxu0
      %6393 = vmatprep.mubr.f32.mxu0 %v6116
      %6394 = vmatmul.mubr.f32.gmra.mxu0 %v6115
      %v6395 = vpop.f32.mrf.mxu0
      %v6396 = vadd.f32 0.0, %v6395
      %v6397 = vpop.f32.mrf.mxu0
      %6398 = vmatprep.mubr.f32.mxu0 %v6119
      %6399 = vmatmul.mubr.f32.gmra.mxu0 %v6118
      %v6400 = vpop.f32.mrf.mxu0
      %v6401 = vadd.f32 0.0, %v6400
      %v6402 = vpop.f32.mrf.mxu0
      %6403 = vmatprep.mubr.f32.mxu0 %v6122
      %6404 = vmatmul.mubr.f32.gmra.mxu0 %v6121
      %v6405 = vpop.f32.mrf.mxu0
      %v6406 = vadd.f32 0.0, %v6405
      %v6407 = vpop.f32.mrf.mxu0
      %6408 = vmatprep.mubr.f32.mxu0 %v6125
      %6409 = vmatmul.mubr.f32.gmra.mxu0 %v6124
      %v6410 = vpop.f32.mrf.mxu0
      %v6411 = vadd.f32 0.0, %v6410
      %v6412 = vpop.f32.mrf.mxu0
      %6413 = vmatprep.mubr.f32.mxu0 %v6128
      %6414 = vmatmul.mubr.f32.gmra.mxu0 %v6127
      %v6415 = vpop.f32.mrf.mxu0
      %v6416 = vadd.f32 0.0, %v6415
      %v6417 = vpop.f32.mrf.mxu0
      %6418 = vdwg.mxu0
      %6419 = vmatprep.subr.mxu0 0.0
      %6420 = vmatpush1.msra.mxu0 %v6225
      %6421 = vmatprep.subr.mxu0 0.0
      %6422 = vmatpush1.msra.mxu0 %v6223
      %6423 = vmatprep.subr.mxu0 0.0
      %6424 = vmatpush1.msra.mxu0 %v6221
      %6425 = vmatprep.subr.mxu0 0.0
      %6426 = vmatpush1.msra.mxu0 %v6219
      %6427 = vmatprep.subr.mxu0 0.0
      %6428 = vmatpush1.msra.mxu0 %v6217
      %6429 = vmatprep.subr.mxu0 0.0
      %6430 = vmatpush1.msra.mxu0 %v6215
      %6431 = vmatprep.subr.mxu0 0.0
      %6432 = vmatpush1.msra.mxu0 %v6213
      %6433 = vmatprep.subr.mxu0 0.0
      %6434 = vmatpush1.msra.mxu0 %v6211
      %6435 = vmatprep.subr.mxu0 0.0
      %6436 = vmatpush1.msra.mxu0 %v6209
      %6437 = vmatprep.subr.mxu0 0.0
      %6438 = vmatpush1.msra.mxu0 %v6207
      %6439 = vmatprep.subr.mxu0 0.0
      %6440 = vmatpush1.msra.mxu0 %v6205
      %6441 = vmatprep.subr.mxu0 0.0
      %6442 = vmatpush1.msra.mxu0 %v6203
      %6443 = vmatprep.subr.mxu0 0.0
      %6444 = vmatpush1.msra.mxu0 %v6201
      %6445 = vmatprep.subr.mxu0 0.0
      %6446 = vmatpush1.msra.mxu0 %v6199
      %6447 = vmatprep.subr.mxu0 0.0
      %6448 = vmatpush1.msra.mxu0 %v6197
      %6449 = vmatprep.subr.mxu0 0.0
      %6450 = vmatpush1.msra.mxu0 %v6195
      %6451 = vmatprep.subr.mxu0 0.0
      %6452 = vmatpush2.msra.mxu0 0.0
      %6453 = vmatprep.subr.mxu0 0.0
      %6454 = vmatpush2.msra.mxu0 0.0
      %6455 = vmatprep.subr.mxu0 0.0
      %6456 = vmatpush2.msra.mxu0 0.0
      %6457 = vmatprep.subr.mxu0 0.0
      %6458 = vmatpush2.msra.mxu0 0.0
      %6459 = vmatprep.subr.mxu0 0.0
      %6460 = vmatpush2.msra.mxu0 0.0
      %6461 = vmatprep.subr.mxu0 0.0
      %6462 = vmatpush2.msra.mxu0 0.0
      %6463 = vmatprep.subr.mxu0 0.0
      %6464 = vmatpush2.msra.mxu0 0.0
      %6465 = vmatprep.subr.mxu0 0.0
      %6466 = vmatpush2.msra.mxu0 0.0
      %6467 = vmatprep.subr.mxu0 0.0
      %6468 = vmatpush2.msra.mxu0 0.0
      %6469 = vmatprep.subr.mxu0 0.0
      %6470 = vmatpush2.msra.mxu0 0.0
      %6471 = vmatprep.subr.mxu0 0.0
      %6472 = vmatpush2.msra.mxu0 0.0
      %6473 = vmatprep.subr.mxu0 0.0
      %6474 = vmatpush2.msra.mxu0 0.0
      %6475 = vmatprep.subr.mxu0 0.0
      %6476 = vmatpush2.msra.mxu0 0.0
      %6477 = vmatprep.subr.mxu0 0.0
      %6478 = vmatpush2.msra.mxu0 0.0
      %6479 = vmatprep.subr.mxu0 0.0
      %6480 = vmatpush2.msra.mxu0 0.0
      %6481 = vmatprep.subr.mxu0 0.0
      %6482 = vmatpush2.msra.mxu0 0.0
      %6483 = vmatprep.mubr.f32.mxu0 0.0
      %6484 = vmatmul.mubr.f32.gmra.mxu0 %v6084
      %v6485 = vpop.f32.mrf.mxu0
      %v6486 = vadd.f32 %v6341, %v6485
      %v6487 = vpop.f32.mrf.mxu0
      %6488 = vmatprep.mubr.f32.mxu0 0.0
      %6489 = vmatmul.mubr.f32.gmra.mxu0 %v6087
      %v6490 = vpop.f32.mrf.mxu0
      %v6491 = vadd.f32 %v6346, %v6490
      %v6492 = vpop.f32.mrf.mxu0
      %6493 = vmatprep.mubr.f32.mxu0 0.0
      %6494 = vmatmul.mubr.f32.gmra.mxu0 %v6090
      %v6495 = vpop.f32.mrf.mxu0
      %v6496 = vadd.f32 %v6351, %v6495
      %v6497 = vpop.f32.mrf.mxu0
      %6498 = vmatprep.mubr.f32.mxu0 0.0
      %6499 = vmatmul.mubr.f32.gmra.mxu0 %v6093
      %v6500 = vpop.f32.mrf.mxu0
      %v6501 = vadd.f32 %v6356, %v6500
      %v6502 = vpop.f32.mrf.mxu0
      %6503 = vmatprep.mubr.f32.mxu0 0.0
      %6504 = vmatmul.mubr.f32.gmra.mxu0 %v6096
      %v6505 = vpop.f32.mrf.mxu0
      %v6506 = vadd.f32 %v6361, %v6505
      %v6507 = vpop.f32.mrf.mxu0
      %6508 = vmatprep.mubr.f32.mxu0 0.0
      %6509 = vmatmul.mubr.f32.gmra.mxu0 %v6099
      %v6510 = vpop.f32.mrf.mxu0
      %v6511 = vadd.f32 %v6366, %v6510
      %v6512 = vpop.f32.mrf.mxu0
      %6513 = vmatprep.mubr.f32.mxu0 0.0
      %6514 = vmatmul.mubr.f32.gmra.mxu0 %v6102
      %v6515 = vpop.f32.mrf.mxu0
      %v6516 = vadd.f32 %v6371, %v6515
      %v6517 = vpop.f32.mrf.mxu0
      %6518 = vmatprep.mubr.f32.mxu0 0.0
      %6519 = vmatmul.mubr.f32.gmra.mxu0 %v6105
      %v6520 = vpop.f32.mrf.mxu0
      %v6521 = vadd.f32 %v6376, %v6520
      %v6522 = vpop.f32.mrf.mxu0
      %6523 = vmatprep.mubr.f32.mxu0 0.0
      %6524 = vmatmul.mubr.f32.gmra.mxu0 %v6108
      %v6525 = vpop.f32.mrf.mxu0
      %v6526 = vadd.f32 %v6381, %v6525
      %v6527 = vpop.f32.mrf.mxu0
      %6528 = vmatprep.mubr.f32.mxu0 0.0
      %6529 = vmatmul.mubr.f32.gmra.mxu0 %v6111
      %v6530 = vpop.f32.mrf.mxu0
      %v6531 = vadd.f32 %v6386, %v6530
      %v6532 = vpop.f32.mrf.mxu0
      %6533 = vmatprep.mubr.f32.mxu0 0.0
      %6534 = vmatmul.mubr.f32.gmra.mxu0 %v6114
      %v6535 = vpop.f32.mrf.mxu0
      %v6536 = vadd.f32 %v6391, %v6535
      %v6537 = vpop.f32.mrf.mxu0
      %6538 = vmatprep.mubr.f32.mxu0 0.0
      %6539 = vmatmul.mubr.f32.gmra.mxu0 %v6117
      %v6540 = vpop.f32.mrf.mxu0
      %v6541 = vadd.f32 %v6396, %v6540
      %v6542 = vpop.f32.mrf.mxu0
      %6543 = vmatprep.mubr.f32.mxu0 0.0
      %6544 = vmatmul.mubr.f32.gmra.mxu0 %v6120
      %v6545 = vpop.f32.mrf.mxu0
      %v6546 = vadd.f32 %v6401, %v6545
      %v6547 = vpop.f32.mrf.mxu0
      %6548 = vmatprep.mubr.f32.mxu0 0.0
      %6549 = vmatmul.mubr.f32.gmra.mxu0 %v6123
      %v6550 = vpop.f32.mrf.mxu0
      %v6551 = vadd.f32 %v6406, %v6550
      %v6552 = vpop.f32.mrf.mxu0
      %6553 = vmatprep.mubr.f32.mxu0 0.0
      %6554 = vmatmul.mubr.f32.gmra.mxu0 %v6126
      %v6555 = vpop.f32.mrf.mxu0
      %v6556 = vadd.f32 %v6411, %v6555
      %v6557 = vpop.f32.mrf.mxu0
      %6558 = vmatprep.mubr.f32.mxu0 0.0
      %6559 = vmatmul.mubr.f32.gmra.mxu0 %v6129
      %v6560 = vpop.f32.mrf.mxu0
      %v6561 = vadd.f32 %v6416, %v6560
      %v6562 = vpop.f32.mrf.mxu0
      %6563 = vdwg.mxu0
      %6580 = vrot.lane.b32.xlu0 %v4092, 16
      %v6581 = vpop.permute.xlu0 %6580
      %6582 = vrot.lane.b32.xlu0 %v4097, 16
      %v6583 = vpop.permute.xlu0 %6582
      %6584 = vrot.lane.b32.xlu0 %v4102, 16
      %v6585 = vpop.permute.xlu0 %6584
      %6586 = vrot.lane.b32.xlu0 %v4107, 16
      %v6587 = vpop.permute.xlu0 %6586
      %6588 = vrot.lane.b32.xlu0 %v4112, 16
      %v6589 = vpop.permute.xlu0 %6588
      %6590 = vrot.lane.b32.xlu0 %v4117, 16
      %v6591 = vpop.permute.xlu0 %6590
      %6592 = vrot.lane.b32.xlu0 %v4122, 16
      %v6593 = vpop.permute.xlu0 %6592
      %6594 = vrot.lane.b32.xlu0 %v4127, 16
      %v6595 = vpop.permute.xlu0 %6594
      %6596 = vrot.lane.b32.xlu0 %v4132, 16
      %v6597 = vpop.permute.xlu0 %6596
      %6598 = vrot.lane.b32.xlu0 %v4137, 16
      %v6599 = vpop.permute.xlu0 %6598
      %6600 = vrot.lane.b32.xlu0 %v4142, 16
      %v6601 = vpop.permute.xlu0 %6600
      %6602 = vrot.lane.b32.xlu0 %v4147, 16
      %v6603 = vpop.permute.xlu0 %6602
      %6604 = vrot.lane.b32.xlu0 %v4152, 16
      %v6605 = vpop.permute.xlu0 %6604
      %6606 = vrot.lane.b32.xlu0 %v4157, 16
      %v6607 = vpop.permute.xlu0 %6606
      %6608 = vrot.lane.b32.xlu0 %v4162, 16
      %v6609 = vpop.permute.xlu0 %6608
      %6610 = vrot.lane.b32.xlu0 %v4167, 16
      %v6611 = vpop.permute.xlu0 %6610
      %6644 = vrot.lane.b32.xlu0 %v5289, 32
      %v6645 = vpop.permute.xlu0 %6644
      %6646 = vrot.lane.b32.xlu0 %v5294, 32
      %v6647 = vpop.permute.xlu0 %6646
      %6648 = vrot.lane.b32.xlu0 %v5299, 32
      %v6649 = vpop.permute.xlu0 %6648
      %6650 = vrot.lane.b32.xlu0 %v5304, 32
      %v6651 = vpop.permute.xlu0 %6650
      %6652 = vrot.lane.b32.xlu0 %v5309, 32
      %v6653 = vpop.permute.xlu0 %6652
      %6654 = vrot.lane.b32.xlu0 %v5314, 32
      %v6655 = vpop.permute.xlu0 %6654
      %6656 = vrot.lane.b32.xlu0 %v5319, 32
      %v6657 = vpop.permute.xlu0 %6656
      %6658 = vrot.lane.b32.xlu0 %v5324, 32
      %v6659 = vpop.permute.xlu0 %6658
      %6660 = vrot.lane.b32.xlu0 %v5329, 32
      %v6661 = vpop.permute.xlu0 %6660
      %6662 = vrot.lane.b32.xlu0 %v5334, 32
      %v6663 = vpop.permute.xlu0 %6662
      %6664 = vrot.lane.b32.xlu0 %v5339, 32
      %v6665 = vpop.permute.xlu0 %6664
      %6666 = vrot.lane.b32.xlu0 %v5344, 32
      %v6667 = vpop.permute.xlu0 %6666
      %6668 = vrot.lane.b32.xlu0 %v5349, 32
      %v6669 = vpop.permute.xlu0 %6668
      %6670 = vrot.lane.b32.xlu0 %v5354, 32
      %v6671 = vpop.permute.xlu0 %6670
      %6672 = vrot.lane.b32.xlu0 %v5359, 32
      %v6673 = vpop.permute.xlu0 %6672
      %6674 = vrot.lane.b32.xlu0 %v5364, 32
      %v6675 = vpop.permute.xlu0 %6674
      %6708 = vrot.lane.b32.xlu0 %v6486, 48
      %v6709 = vpop.permute.xlu0 %6708
      %6710 = vrot.lane.b32.xlu0 %v6491, 48
      %v6711 = vpop.permute.xlu0 %6710
      %6712 = vrot.lane.b32.xlu0 %v6496, 48
      %v6713 = vpop.permute.xlu0 %6712
      %6714 = vrot.lane.b32.xlu0 %v6501, 48
      %v6715 = vpop.permute.xlu0 %6714
      %6716 = vrot.lane.b32.xlu0 %v6506, 48
      %v6717 = vpop.permute.xlu0 %6716
      %6718 = vrot.lane.b32.xlu0 %v6511, 48
      %v6719 = vpop.permute.xlu0 %6718
      %6720 = vrot.lane.b32.xlu0 %v6516, 48
      %v6721 = vpop.permute.xlu0 %6720
      %6722 = vrot.lane.b32.xlu0 %v6521, 48
      %v6723 = vpop.permute.xlu0 %6722
      %6724 = vrot.lane.b32.xlu0 %v6526, 48
      %v6725 = vpop.permute.xlu0 %6724
      %6726 = vrot.lane.b32.xlu0 %v6531, 48
      %v6727 = vpop.permute.xlu0 %6726
      %6728 = vrot.lane.b32.xlu0 %v6536, 48
      %v6729 = vpop.permute.xlu0 %6728
      %6730 = vrot.lane.b32.xlu0 %v6541, 48
      %v6731 = vpop.permute.xlu0 %6730
      %6732 = vrot.lane.b32.xlu0 %v6546, 48
      %v6733 = vpop.permute.xlu0 %6732
      %6734 = vrot.lane.b32.xlu0 %v6551, 48
      %v6735 = vpop.permute.xlu0 %6734
      %6736 = vrot.lane.b32.xlu0 %v6556, 48
      %v6737 = vpop.permute.xlu0 %6736
      %6738 = vrot.lane.b32.xlu0 %v6561, 48
      %v6739 = vpop.permute.xlu0 %6738
      %vm6756 = vcmask 130048
      %v6757 = vsel %vm6756, %v2847, %v6581
      %v6758 = vsel %vm6756, %v2852, %v6583
      %v6759 = vsel %vm6756, %v2857, %v6585
      %v6760 = vsel %vm6756, %v2862, %v6587
      %v6761 = vsel %vm6756, %v2867, %v6589
      %v6762 = vsel %vm6756, %v2872, %v6591
      %v6763 = vsel %vm6756, %v2877, %v6593
      %v6764 = vsel %vm6756, %v2882, %v6595
      %v6765 = vsel %vm6756, %v2887, %v6597
      %v6766 = vsel %vm6756, %v2892, %v6599
      %v6767 = vsel %vm6756, %v2897, %v6601
      %v6768 = vsel %vm6756, %v2902, %v6603
      %v6769 = vsel %vm6756, %v2907, %v6605
      %v6770 = vsel %vm6756, %v2912, %v6607
      %v6771 = vsel %vm6756, %v2917, %v6609
      %v6772 = vsel %vm6756, %v2922, %v6611
      %vm6773 = vcmask 261120
      %v6774 = vsel %vm6773, %v6757, %v6645
      %v6775 = vsel %vm6773, %v6758, %v6647
      %v6776 = vsel %vm6773, %v6759, %v6649
      %v6777 = vsel %vm6773, %v6760, %v6651
      %v6778 = vsel %vm6773, %v6761, %v6653
      %v6779 = vsel %vm6773, %v6762, %v6655
      %v6780 = vsel %vm6773, %v6763, %v6657
      %v6781 = vsel %vm6773, %v6764, %v6659
      %v6782 = vsel %vm6773, %v6765, %v6661
      %v6783 = vsel %vm6773, %v6766, %v6663
      %v6784 = vsel %vm6773, %v6767, %v6665
      %v6785 = vsel %vm6773, %v6768, %v6667
      %v6786 = vsel %vm6773, %v6769, %v6669
      %v6787 = vsel %vm6773, %v6770, %v6671
      %v6788 = vsel %vm6773, %v6771, %v6673
      %v6789 = vsel %vm6773, %v6772, %v6675
      %vm6790 = vcmask 392192
      %v6791 = vsel %vm6790, %v6774, %v6709
      %v6792 = vsel %vm6790, %v6775, %v6711
      %v6793 = vsel %vm6790, %v6776, %v6713
      %v6794 = vsel %vm6790, %v6777, %v6715
      %v6795 = vsel %vm6790, %v6778, %v6717
      %v6796 = vsel %vm6790, %v6779, %v6719
      %v6797 = vsel %vm6790, %v6780, %v6721
      %v6798 = vsel %vm6790, %v6781, %v6723
      %v6799 = vsel %vm6790, %v6782, %v6725
      %v6800 = vsel %vm6790, %v6783, %v6727
      %v6801 = vsel %vm6790, %v6784, %v6729
      %v6802 = vsel %vm6790, %v6785, %v6731
      %v6803 = vsel %vm6790, %v6786, %v6733
      %v6804 = vsel %vm6790, %v6787, %v6735
      %v6805 = vsel %vm6790, %v6788, %v6737
      %v6806 = vsel %vm6790, %v6789, %v6739
      %v6807 = vld [vmem:[%s5] sm:$0x1]
      %v6809 = vlaneseq
      %v6810 = vshrl.u32 %v6809, 7
      %v6811 = vsub.s32 0, %v6810
      %v6812 = vrot.slane %v6807, %v6811
      %v6814 = vadd.f32 %v6791, %v6812
      %v6815 = vadd.f32 %v6792, %v6812
      %v6816 = vadd.f32 %v6793, %v6812
      %v6817 = vadd.f32 %v6794, %v6812
      %v6818 = vadd.f32 %v6795, %v6812
      %v6819 = vadd.f32 %v6796, %v6812
      %v6820 = vadd.f32 %v6797, %v6812
      %v6821 = vadd.f32 %v6798, %v6812
      %v6822 = vadd.f32 %v6799, %v6812
      %v6823 = vadd.f32 %v6800, %v6812
      %v6824 = vadd.f32 %v6801, %v6812
      %v6825 = vadd.f32 %v6802, %v6812
      %v6826 = vadd.f32 %v6803, %v6812
      %v6827 = vadd.f32 %v6804, %v6812
      %v6828 = vadd.f32 %v6805, %v6812
      %v6829 = vadd.f32 %v6806, %v6812
      %vm6830 = vcmp.ge.f32.partialorder %v6814, 0.0
      %vm6831 = vcmp.ge.f32.partialorder %v6815, 0.0
      %vm6832 = vcmp.ge.f32.partialorder %v6816, 0.0
      %vm6833 = vcmp.ge.f32.partialorder %v6817, 0.0
      %vm6834 = vcmp.ge.f32.partialorder %v6818, 0.0
      %vm6835 = vcmp.ge.f32.partialorder %v6819, 0.0
      %vm6836 = vcmp.ge.f32.partialorder %v6820, 0.0
      %vm6837 = vcmp.ge.f32.partialorder %v6821, 0.0
      %vm6838 = vcmp.ge.f32.partialorder %v6822, 0.0
      %vm6839 = vcmp.ge.f32.partialorder %v6823, 0.0
      %vm6840 = vcmp.ge.f32.partialorder %v6824, 0.0
      %vm6841 = vcmp.ge.f32.partialorder %v6825, 0.0
      %vm6842 = vcmp.ge.f32.partialorder %v6826, 0.0
      %vm6843 = vcmp.ge.f32.partialorder %v6827, 0.0
      %vm6844 = vcmp.ge.f32.partialorder %v6828, 0.0
      %vm6845 = vcmp.ge.f32.partialorder %v6829, 0.0
      %v6846 = vstv %s1582
      %v6847 = vmul.f32 %v6846, %v6814
      %v6848 = vmul.f32 %v6846, %v6815
      %v6849 = vmul.f32 %v6846, %v6816
      %v6850 = vmul.f32 %v6846, %v6817
      %v6851 = vmul.f32 %v6846, %v6818
      %v6852 = vmul.f32 %v6846, %v6819
      %v6853 = vmul.f32 %v6846, %v6820
      %v6854 = vmul.f32 %v6846, %v6821
      %v6855 = vmul.f32 %v6846, %v6822
      %v6856 = vmul.f32 %v6846, %v6823
      %v6857 = vmul.f32 %v6846, %v6824
      %v6858 = vmul.f32 %v6846, %v6825
      %v6859 = vmul.f32 %v6846, %v6826
      %v6860 = vmul.f32 %v6846, %v6827
      %v6861 = vmul.f32 %v6846, %v6828
      %v6862 = vmul.f32 %v6846, %v6829
      %v6863 = vsel %vm6830, %v6814, %v6847
      %v6864 = vsel %vm6831, %v6815, %v6848
      %v6865 = vsel %vm6832, %v6816, %v6849
      %v6866 = vsel %vm6833, %v6817, %v6850
      %v6867 = vsel %vm6834, %v6818, %v6851
      %v6868 = vsel %vm6835, %v6819, %v6852
      %v6869 = vsel %vm6836, %v6820, %v6853
      %v6870 = vsel %vm6837, %v6821, %v6854
      %v6871 = vsel %vm6838, %v6822, %v6855
      %v6872 = vsel %vm6839, %v6823, %v6856
      %v6873 = vsel %vm6840, %v6824, %v6857
      %v6874 = vsel %vm6841, %v6825, %v6858
      %v6875 = vsel %vm6842, %v6826, %v6859
      %v6876 = vsel %vm6843, %v6827, %v6860
      %v6877 = vsel %vm6844, %v6828, %v6861
      %v6878 = vsel %vm6845, %v6829, %v6862
      %vm6879 = vcmask 523264
      %6880 = vst.msk [vmem:[%s311] sm:$0xff] %vm6879, %v6863
      %6881 = vst.msk [vmem:[%s311 + $0x8] sm:$0xff] %vm6879, %v6864
      %6882 = vst.msk [vmem:[%s311 + $0x10] sm:$0xff] %vm6879, %v6865
      %6883 = vst.msk [vmem:[%s311 + $0x18] sm:$0xff] %vm6879, %v6866
      %6884 = vst.msk [vmem:[%s311 + $0x20] sm:$0xff] %vm6879, %v6867
      %6885 = vst.msk [vmem:[%s311 + $0x28] sm:$0xff] %vm6879, %v6868
      %6886 = vst.msk [vmem:[%s311 + $0x30] sm:$0xff] %vm6879, %v6869
      %6887 = vst.msk [vmem:[%s311 + $0x38] sm:$0xff] %vm6879, %v6870
      %6888 = vst.msk [vmem:[%s311 + $0x40] sm:$0xff] %vm6879, %v6871
      %6889 = vst.msk [vmem:[%s311 + $0x48] sm:$0xff] %vm6879, %v6872
      %6890 = vst.msk [vmem:[%s311 + $0x50] sm:$0xff] %vm6879, %v6873
      %6891 = vst.msk [vmem:[%s311 + $0x58] sm:$0xff] %vm6879, %v6874
      %6892 = vst.msk [vmem:[%s311 + $0x60] sm:$0xff] %vm6879, %v6875
      %6893 = vst.msk [vmem:[%s311 + $0x68] sm:$0xff] %vm6879, %v6876
      %6894 = vst.msk [vmem:[%s311 + $0x70] sm:$0xff] %vm6879, %v6877
      %6895 = vst.msk [vmem:[%s311 + $0x78] sm:$0xff] %vm6879, %v6878
      %s6896 = smul.u32 16, %s20
      %p6897 = scmp.lt.s32.totalorder %s6896, 47
      %s6898 = scalar_select %p6897, %s6896, 47
      %s6899 = smul.addr %s6898, 8
      %s6900 = scalar_lea.vmem %s8, %s6899
      // Predicated region
      $region57: #{tpu_custom_call.1} parent=51 // pred_check
        %p6901 = pneg %p211
      $region58: #{tpu_custom_call.1} parent=51 // pred_check_branch
        %6903 = sbr.rel (%p6901) target = $region60
      $region59: #{tpu_custom_call.1} parent=51 // pred_region
        %s6904 = smul.u32 16, %s20
      $region60: #{tpu_custom_call.1} parent=51 // pred_fallthru
        _
    $region52: #{tpu_custom_call.1} parent=5 // pred_fallthru
      _
    %p6905 = scmp.le.s32.totalorder 2, %s15
    // Predicated region
    $region61: #{tpu_custom_call.1} parent=5 // pred_check
      %p6906 = pneg %p6905
    $region62: #{tpu_custom_call.1} parent=5 // pred_check_branch
      %6908 = sbr.rel (%p6906) target = $region64
    $region63: #{tpu_custom_call.1} parent=5 // pred_region
      %s6909 = ssub.s32 %s15, 2
      // Predicated region
      $region65: #{tpu_custom_call.1} parent=63 // pred_check
        %p6910 = pneg %p217
      $region66: #{tpu_custom_call.1} parent=63 // pred_check_branch
        %6912 = sbr.rel (%p6910) target = $region68
      $region67: #{tpu_custom_call.1} parent=63 // pred_region
        %s6913 = smul.u32 16, %s21
        %p6914 = scmp.lt.s32.totalorder %s6913, 47
        %s6915 = scalar_select %p6914, %s6913, 47
        %s6916 = smul.addr %s6915, 8
        %s6917 = scalar_lea.vmem %s8, %s6916
      $region68: #{tpu_custom_call.1} parent=63 // pred_fallthru
        _
    $region64: #{tpu_custom_call.1} parent=5 // pred_fallthru
      _
  $region6: #{tpu_custom_call.1} parent=0 // loop_footer
    %s19 = sadd.s32 1, %s15
  $region7: #{tpu_custom_call.1} parent=0 // loop_footer_branch
    %14 = sbr.rel target = $region3
  $region8: #{tpu_custom_call.1} parent=0 // loop_exit
    _

</llo_original>
